<compile_context>
chip_gen: v7x
topology: tpu7x:2x2x1
jax: 0.10.0
libtpu: 0.0.40
codegen_flags: <defaults>
</compile_context>

<pallas_src>
import functools
from itertools import product

import numpy as np
import jax
import jax.numpy as jnp
from jax.experimental import pallas as pl
from jax.experimental.pallas import tpu as pltpu


# -----------------------------------------------------------------------------
# helpers
# -----------------------------------------------------------------------------
def _round_up(x, m):
    return (x + m - 1) // m * m


def _m_blocks(M):
    """Choose an M tile (multiple of 8) and padded M.  Single block for M<=256,
    otherwise a few blocks so v7x's two TensorCores both get work."""
    if M <= 256:
        tm = _round_up(M, 8)
        return tm, tm
    nb = -(-M // 256)
    tm = _round_up(-(-M // nb), 8)
    return tm, tm * nb


# -----------------------------------------------------------------------------
# Pallas kernels
# -----------------------------------------------------------------------------
def _mm_kernel(x_ref, w_ref, o_ref, *, slope):
    acc = jnp.dot(x_ref[...], w_ref[...], preferred_element_type=jnp.float32)
    if slope is not None:
        acc = jnp.where(acc >= 0, acc, slope * acc)
    o_ref[...] = acc


def _mm_bias_kernel(x_ref, w_ref, b_ref, o_ref, *, slope):
    acc = jnp.dot(x_ref[...], w_ref[...], preferred_element_type=jnp.float32)
    acc = acc + b_ref[...]
    if slope is not None:
        acc = jnp.where(acc >= 0, acc, slope * acc)
    o_ref[...] = acc


def _block_head_kernel(xflat_ref, patch_ref,
                       wc_ref, bc_ref,
                       w1a_ref, w1b_ref, b1_ref,
                       w2_ref, b2_ref,
                       w3_ref, b3_ref,
                       o_ref):
    """Fused: non_local = leaky(conv(im2col patches)); m = MLP([x | non_local]).
    All intermediates stay in VMEM; bf16 MXU operands, f32 accumulate/epilogue."""
    nl = jnp.dot(patch_ref[...], wc_ref[...], preferred_element_type=jnp.float32)
    nl = nl + bc_ref[...]
    nl = jnp.where(nl >= 0, nl, 0.01 * nl)

    h1 = (jnp.dot(xflat_ref[...], w1a_ref[...], preferred_element_type=jnp.float32)
          + jnp.dot(nl.astype(jnp.bfloat16), w1b_ref[...],
                    preferred_element_type=jnp.float32)
          + b1_ref[...])
    h1 = jnp.where(h1 >= 0, h1, 0.01 * h1)

    h2 = jnp.dot(h1.astype(jnp.bfloat16), w2_ref[...],
                 preferred_element_type=jnp.float32) + b2_ref[...]
    h2 = jnp.where(h2 >= 0, h2, 0.01 * h2)

    o_ref[...] = (jnp.dot(h2.astype(jnp.bfloat16), w3_ref[...],
                          preferred_element_type=jnp.float32) + b3_ref[...])


# -----------------------------------------------------------------------------
# Pallas wrappers
# -----------------------------------------------------------------------------
def linear_pallas(x, w_bf16, b=None, *, leaky_slope=None):
    """x: [M, K] (any float), w_bf16: [K, N] bf16, b: [1, N] f32 -> [M, N] f32."""
    M, K = x.shape
    K2, N = w_bf16.shape
    assert K == K2
    tm, Mp = _m_blocks(M)

    xb = x.astype(jnp.bfloat16)
    if Mp != M:
        xb = jnp.pad(xb, ((0, Mp - M), (0, 0)))

    full = lambda shape: pl.BlockSpec(shape, lambda i: (0, 0))
    if b is None:
        kernel = functools.partial(_mm_kernel, slope=leaky_slope)
        in_specs = [pl.BlockSpec((tm, K), lambda i: (i, 0)), full((K, N))]
        args = (xb, w_bf16)
    else:
        kernel = functools.partial(_mm_bias_kernel, slope=leaky_slope)
        in_specs = [pl.BlockSpec((tm, K), lambda i: (i, 0)), full((K, N)),
                    full((1, N))]
        args = (xb, w_bf16, b)

    out = pl.pallas_call(
        kernel,
        out_shape=jax.ShapeDtypeStruct((Mp, N), jnp.float32),
        grid_spec=pltpu.PrefetchScalarGridSpec(
            num_scalar_prefetch=0,
            grid=(Mp // tm,),
            in_specs=in_specs,
            out_specs=pl.BlockSpec((tm, N), lambda i: (i, 0)),
        ),
        compiler_params=pltpu.CompilerParams(
            dimension_semantics=("parallel",),
            vmem_limit_bytes=64 * 1024 * 1024),
    )(*args)
    return out[:M] if Mp != M else out


def fused_head_pallas(xflat, patches, p):
    """Fused conv(im2col)+BN+LeakyReLU and 3-layer MLP head. Returns [M, target]."""
    M, F_ = xflat.shape
    Kc = patches.shape[1]
    E_nl = p["conv_w"].shape[1]
    N1 = p["w1a"].shape[1]
    N2 = p["w2"].shape[1]
    N3 = p["w3"].shape[1]

    tm, Mp = _m_blocks(M)
    xb = xflat.astype(jnp.bfloat16)
    pb = patches.astype(jnp.bfloat16)
    if Mp != M:
        xb = jnp.pad(xb, ((0, Mp - M), (0, 0)))
        pb = jnp.pad(pb, ((0, Mp - M), (0, 0)))

    full = lambda shape: pl.BlockSpec(shape, lambda i: (0, 0))
    out = pl.pallas_call(
        _block_head_kernel,
        out_shape=jax.ShapeDtypeStruct((Mp, N3), jnp.float32),
        grid_spec=pltpu.PrefetchScalarGridSpec(
            num_scalar_prefetch=0,
            grid=(Mp // tm,),
            in_specs=[
                pl.BlockSpec((tm, F_), lambda i: (i, 0)),
                pl.BlockSpec((tm, Kc), lambda i: (i, 0)),
                full((Kc, E_nl)), full((1, E_nl)),
                full((F_, N1)), full((E_nl, N1)), full((1, N1)),
                full((N1, N2)), full((1, N2)),
                full((N2, N3)), full((1, N3)),
            ],
            out_specs=pl.BlockSpec((tm, N3), lambda i: (i, 0)),
        ),
        compiler_params=pltpu.CompilerParams(
            dimension_semantics=("parallel",),
            vmem_limit_bytes=64 * 1024 * 1024),
    )(xb, pb, p["conv_w"], p["conv_b"],
      p["w1a"], p["w1b"], p["b1"],
      p["w2"], p["b2"], p["w3"], p["b3"])
    return out[:M] if Mp != M else out


# -----------------------------------------------------------------------------
# Graph construction (mirrors model.create_edge_features / expend_graph)
# -----------------------------------------------------------------------------
def create_edge_features(H, W):
    grid_index = np.arange(2, 2 + H * W).reshape(H, W)
    pad = np.zeros((H + 2, W + 2), dtype=np.int64)
    pad[1:-1, 1:-1] = grid_index
    pad[1:-1, 0] = grid_index[:, -1]
    pad[1:-1, -1] = grid_index[:, 0]
    pad[0, :] = 0
    pad[-1, :] = 1
    directions = [(-1, 0), (0, -1), (0, 1), (1, 0)]
    edge_start, edge_end = [], []
    for h, w in product(range(H), range(W)):
        for r, c in directions:
            edge_start.append(pad[h + 1, w + 1])
            edge_end.append(pad[h + 1 + r, w + 1 + c])
    return np.stack([np.array(edge_start), np.array(edge_end)], axis=0)


def expend_graph(graph, B, H, W):
    nodes_count = H * W + 2
    g = np.repeat(graph[None], B, axis=0)                     # [B, 2, E]
    g = g + (np.arange(B) * nodes_count).reshape(B, 1, 1)
    g = np.transpose(g, (1, 0, 2)).reshape(2, -1)             # 'b n e -> n (b e)'
    return jnp.asarray(g, dtype=jnp.int32)


def get_edge_features(x, u_ind, v_ind):
    B, _, H, W = x.shape
    u = x[:, u_ind]                                            # [B, 8, H, W]
    v = x[:, v_ind]
    u_r = jnp.transpose(u, (0, 2, 3, 1)).reshape(B * H * W, 1, u.shape[1])
    v_r = jnp.transpose(v, (0, 2, 3, 1)).reshape(B * H * W, 1, v.shape[1])
    ef = jnp.concatenate([v_r, -u_r, u_r, -v_r], axis=1)       # [BHW, 4, 8]
    return ef.reshape(-1, ef.shape[-1])                        # [(BHW*4), 8]


# -----------------------------------------------------------------------------
# GATConv (torch_geometric semantics, eval mode) + GATLayer
# -----------------------------------------------------------------------------
def gat_conv(x_nodes, edge_index, edge_attr, p, num_nodes):
    F_ = p["bias"].shape[0]
    heads = (p["w_lin_aug"].shape[1] - F_) // 2
    hid = F_ // heads

    # node projection with folded attention columns: [xp | alpha_src | alpha_dst]
    proj = linear_pallas(x_nodes, p["w_lin_aug"])              # [N, F + 2*heads]
    xp = proj[:, :F_].reshape(num_nodes, heads, hid)
    alpha_src = proj[:, F_:F_ + heads]
    alpha_dst = proj[:, F_ + heads:]

    src, dst = edge_index[0], edge_index[1]
    # add_self_loops with fill_value='mean' on the edge attributes
    loop_sum = jax.ops.segment_sum(edge_attr, dst, num_segments=num_nodes)
    counts = jax.ops.segment_sum(jnp.ones((edge_attr.shape[0],), jnp.float32),
                                 dst, num_segments=num_nodes)
    loop_attr = loop_sum / jnp.maximum(counts, 1.0)[:, None]
    node_ids = jnp.arange(num_nodes, dtype=src.dtype)
    src_full = jnp.concatenate([src, node_ids])
    dst_full = jnp.concatenate([dst, node_ids])
    eattr_full = jnp.concatenate([edge_attr, loop_attr], axis=0)

    # edge attention (projection + att reduction folded into one tiny matmul)
    alpha_edge = linear_pallas(eattr_full, p["w_edge_att"])    # [E, heads]

    alpha = alpha_src[src_full] + alpha_dst[dst_full] + alpha_edge
    alpha = jnp.where(alpha >= 0, alpha, 0.2 * alpha)          # leaky_relu(0.2)
    # TODO(synk): sparse per-target softmax + scatter aggregation stays in JAX.
    amax = jax.ops.segment_max(alpha, dst_full, num_segments=num_nodes)
    alpha = jnp.exp(alpha - amax[dst_full])
    denom = jax.ops.segment_sum(alpha, dst_full, num_segments=num_nodes)
    alpha = alpha / (denom[dst_full] + 1e-16)

    msg = xp[src_full] * alpha[:, :, None]                     # [E, heads, hid]
    out = jax.ops.segment_sum(msg, dst_full, num_segments=num_nodes)
    return out.reshape(num_nodes, F_) + p["bias"][None]


def gat_layer(x_nodes, edge_index, edge_attr, p, num_nodes):
    out = gat_conv(x_nodes, edge_index, edge_attr, p, num_nodes)
    return jnp.where(out >= 0, out, 0.01 * out)                # LeakyReLU; dropout=eval


# -----------------------------------------------------------------------------
# Block
# -----------------------------------------------------------------------------
def construct_local_map(h, B, H, W):
    F_ = h.shape[-1]
    xg = jnp.transpose(h.reshape(B, H, W, F_), (0, 3, 1, 2))   # b c h w
    lm = jnp.pad(xg, ((0, 0), (0, 0), (1, 1), (1, 1)))
    lm = lm.at[:, :, :, 0].set(lm[:, :, :, -2])
    lm = lm.at[:, :, :, -1].set(lm[:, :, :, 1])
    top = jnp.concatenate([xg[:, :, 1, W // 2 - 1:], xg[:, :, 1, :W // 2 + 1]], axis=-1)
    bot = jnp.concatenate([xg[:, :, -2, W // 2 - 1:], xg[:, :, -2, :W // 2 + 1]], axis=-1)
    lm = lm.at[:, :, 0, :].set(top)
    lm = lm.at[:, :, -1, :].set(bot)
    return lm, xg


def block_forward(x, x_cons, edge_index, edge_attr, p, target_dim):
    B, _, H, W = x.shape
    current = x
    xin = jnp.concatenate([x, x_cons], axis=1)

    # graph_convert: prepend 2 zero "pole" nodes per batch element
    feats = jnp.transpose(xin, (0, 2, 3, 1)).reshape(B, H * W, -1)
    poles = jnp.zeros((B, 2, feats.shape[-1]), feats.dtype)
    nodes = jnp.concatenate([poles, feats], axis=1).reshape(B * (H * W + 2), -1)
    num_nodes = B * (H * W + 2)

    h = nodes
    for lp in p["gat"]:
        h = gat_layer(h, edge_index, edge_attr, lp, num_nodes)
    h = h.reshape(B, H * W + 2, -1)[:, 2:, :]                  # drop poles -> [B, HW, F]
    F_ = h.shape[-1]

    # conv branch: construct_local_map -> im2col patches; the conv matmul itself,
    # its BN+LeakyReLU epilogue and the 3-layer MLP head run in ONE fused Pallas
    # kernel (intermediates never touch HBM).
    lm, _ = construct_local_map(h, B, H, W)
    patches = jnp.stack([lm[:, :, kh:kh + H, kw:kw + W]
                         for kh in range(3) for kw in range(3)], axis=-1)  # [B,C,H,W,9]
    patches = jnp.transpose(patches, (0, 2, 3, 1, 4)).reshape(B * H * W, F_ * 9)
    xflat = h.reshape(B * H * W, F_)

    m = fused_head_pallas(xflat, patches, p)                   # [BHW, target_dim]
    delta = jnp.transpose(m.reshape(B, H, W, target_dim), (0, 3, 1, 2))
    return delta + current[:, -target_dim:]


# -----------------------------------------------------------------------------
# Full model forward (metric=None path -> (None, x))
# -----------------------------------------------------------------------------
def model_forward(x, x_cons, time_embedding, params, graph_info, u_ind, v_ind, Vo):
    B, _, H, W = x.shape
    te = -jnp.cos(2.0 * jnp.pi * time_embedding / 8760.0)
    te = te.reshape(B, 1, 1, 1) * jnp.ones((1, 1, H, W), x.dtype)
    input_cons = jnp.concatenate([x_cons, te], axis=1)
    edge_feats = get_edge_features(x, u_ind, v_ind)

    out = x
    n_blocks = len(params["blocks"])
    for i, bp in enumerate(params["blocks"]):
        tdim = 3 * Vo if i < n_blocks - 1 else Vo
        out = block_forward(out, input_cons, graph_info, edge_feats, bp, tdim)
    return None, out


# -----------------------------------------------------------------------------
# Deterministic parameter init (raw, PyTorch-like) and one-time preparation
# -----------------------------------------------------------------------------
def init_block_params(key, in_dim, hidden, heads, edge_dim, non_local_embed,
                      target_dim, n_layers):
    F_ = hidden * heads
    keys = iter(jax.random.split(key, 64))

    def nrm(shape, scale=0.1):
        return scale * jax.random.normal(next(keys), shape, dtype=jnp.float32)

    gat = []
    d = in_dim
    for _ in range(n_layers):
        gat.append(dict(
            w_lin=nrm((d, F_)),
            att_src=nrm((heads, hidden)),
            att_dst=nrm((heads, hidden)),
            att_edge=nrm((heads, hidden)),
            w_edge=nrm((edge_dim, F_)),
            bias=nrm((F_,)),
        ))
        d = F_
    return dict(
        gat=gat,
        conv_w=nrm((non_local_embed, F_, 3, 3)),
        conv_b=nrm((non_local_embed,)),
        bn_gamma=jnp.ones((non_local_embed,), jnp.float32) + nrm((non_local_embed,), 0.01),
        bn_beta=nrm((non_local_embed,)),
        bn_mean=jnp.zeros((non_local_embed,), jnp.float32),
        bn_var=jnp.ones((non_local_embed,), jnp.float32),
        mlp_w1=nrm((F_ + non_local_embed, 512)),
        mlp_b1=nrm((512,)),
        mlp_w2=nrm((512, 256)),
        mlp_b2=nrm((256,)),
        mlp_w3=nrm((256, target_dim)),
        mlp_b3=nrm((target_dim,)),
    )


def prepare_block_params(bp):
    """One-time folding: BN into conv, attention vectors into projection weights,
    mlp_w1 split, bf16 weight casts. Runs ONCE outside the forward hot path."""
    heads, hid = bp["gat"][0]["att_src"].shape
    F_ = heads * hid

    gat_prepared = []
    for lp in bp["gat"]:
        w_lin = lp["w_lin"]                                   # [d, F_]
        d = w_lin.shape[0]
        w_src = (w_lin.reshape(d, heads, hid) * lp["att_src"][None]).sum(-1)  # [d, heads]
        w_dst = (w_lin.reshape(d, heads, hid) * lp["att_dst"][None]).sum(-1)
        w_lin_aug = jnp.concatenate([w_lin, w_src, w_dst], axis=1).astype(jnp.bfloat16)
        w_edge = lp["w_edge"]                                 # [edge_dim, F_]
        de = w_edge.shape[0]
        w_edge_att = (w_edge.reshape(de, heads, hid)
                      * lp["att_edge"][None]).sum(-1).astype(jnp.bfloat16)    # [de, heads]
        gat_prepared.append(dict(w_lin_aug=w_lin_aug,
                                 w_edge_att=w_edge_att,
                                 bias=lp["bias"].astype(jnp.float32)))

    e_nl = bp["conv_w"].shape[0]
    bn_scale = bp["bn_gamma"] / jnp.sqrt(bp["bn_var"] + 1e-5)
    w_fold = (bp["conv_w"].reshape(e_nl, F_ * 9).T * bn_scale[None, :]).astype(jnp.bfloat16)
    b_fold = ((bp["conv_b"] - bp["bn_mean"]) * bn_scale + bp["bn_beta"]).reshape(1, -1)

    w1 = bp["mlp_w1"]
    return dict(
        gat=gat_prepared,
        conv_w=w_fold, conv_b=b_fold.astype(jnp.float32),
        w1a=w1[:F_].astype(jnp.bfloat16),
        w1b=w1[F_:].astype(jnp.bfloat16),
        b1=bp["mlp_b1"].reshape(1, -1).astype(jnp.float32),
        w2=bp["mlp_w2"].astype(jnp.bfloat16),
        b2=bp["mlp_b2"].reshape(1, -1).astype(jnp.float32),
        w3=bp["mlp_w3"].astype(jnp.bfloat16),
        b3=bp["mlp_b3"].reshape(1, -1).astype(jnp.float32),
    )


if __name__ == "__main__":
    # Small synthetic configuration
    B, H, W = 2, 8, 8
    Vo = 16                      # len(traced_vars); needs >= 16 for the 8 u + 8 v winds
    N_CONS = 2                   # len(constant_vars)
    HIDDEN, HEADS, EDGE_DIM = 8, 4, 8
    N_LAYERS, N_BLOCKS, NON_LOCAL = 2, 2, 16
    input_dim = 3 * Vo + N_CONS + 1   # + time embedding

    # synthetic vars_table: u winds = traced vars [0..7], v winds = [8..15]
    u_ind = jnp.asarray(2 * Vo + np.arange(8), dtype=jnp.int32)
    v_ind = jnp.asarray(2 * Vo + 8 + np.arange(8), dtype=jnp.int32)

    key = jax.random.PRNGKey(0)
    kx, kc, kt, kp = jax.random.split(key, 4)
    x = jax.random.normal(kx, (B, 3 * Vo, H, W), jnp.float32)
    x_cons = jax.random.normal(kc, (B, N_CONS, H, W), jnp.float32)
    time_embedding = jax.random.uniform(kt, (B,), jnp.float32) * 8760.0

    block_keys = jax.random.split(kp, N_BLOCKS)
    blocks = []
    for i in range(N_BLOCKS):
        tdim = 3 * Vo if i < N_BLOCKS - 1 else Vo
        raw = init_block_params(block_keys[i], input_dim, HIDDEN, HEADS,
                                EDGE_DIM, NON_LOCAL, tdim, N_LAYERS)
        blocks.append(prepare_block_params(raw))      # one-time weight folding
    params = dict(blocks=blocks)

    graph = create_edge_features(H, W)
    graph_info = expend_graph(graph, B, H, W)

    fwd = jax.jit(functools.partial(model_forward, Vo=Vo))
    loss, out = fwd(x, x_cons, time_embedding, params, graph_info, u_ind, v_ind)
    out = jax.block_until_ready(out)
    assert loss is None
    assert out.shape == (B, Vo, H, W), out.shape
    assert bool(jnp.all(jnp.isfinite(out)))
    print("KERNEL_OK")
</pallas_src>

<mosaic_0001>
module attributes {stable_mosaic.version = 11 : i64} {
  func.func private @main(%arg0: i32) attributes {dimension_semantics = [#tpu.dimension_semantics<core_parallel>], iteration_bounds = array<i64: 2>, tpu.core_type = #tpu.core_type<sc_scalar_subcore>, window_params = []} {
    return
  }
}

module attributes {stable_mosaic.version = 11 : i64} {
  func.func private @main(%arg0: i32) attributes {dimension_semantics = [#tpu.dimension_semantics<core_parallel>], iteration_bounds = array<i64: 2>, tpu.core_type = #tpu.core_type<sc_scalar_subcore>, window_params = []} {
    return
  }
}

module attributes {stable_mosaic.version = 11 : i64} {
  func.func @_mm_kernel(%arg0: i32, %arg1: memref<136x51xbf16, #tpu.memory_space<vmem>>, %arg2: memref<51x40xbf16, #tpu.memory_space<vmem>>, %arg3: memref<136x40xf32, #tpu.memory_space<vmem>>) attributes {dimension_semantics = [#tpu.dimension_semantics<parallel>], iteration_bounds = array<i64: 1>, scalar_prefetch = 0 : i64, scratch_operands = 0 : i64, tpu.core_type = #tpu.core_type<tc>, window_params = [{transform_indices = @transform_0, window_bounds = array<i64: 136, 51>}, {pipeline_mode = #tpu.pipeline_mode<synchronous>, transform_indices = @transform_1, window_bounds = array<i64: 51, 40>}, {transform_indices = @transform_2, window_bounds = array<i64: 136, 40>}]} {
    %c0 = arith.constant 0 : index
    %c0_0 = arith.constant 0 : index
    %0 = vector.load %arg1[%c0, %c0_0] : memref<136x51xbf16, #tpu.memory_space<vmem>>, vector<136x51xbf16>
    %c0_1 = arith.constant 0 : index
    %c0_2 = arith.constant 0 : index
    %1 = vector.load %arg2[%c0_1, %c0_2] : memref<51x40xbf16, #tpu.memory_space<vmem>>, vector<51x40xbf16>
    %cst = arith.constant dense<0.000000e+00> : vector<136x40xf32>
    %2 = tpu.matmul %0, %1, %cst {dimension_numbers = #tpu.dot_dimension_numbers<[1], [0], [0], [1], [0, 0, 1, 1], [], []>} : vector<136x51xbf16>, vector<51x40xbf16>, vector<136x40xf32> -> vector<136x40xf32>
    %c0_3 = arith.constant 0 : index
    %c0_4 = arith.constant 0 : index
    %3 = vector.load %arg3[%c0_3, %c0_4] : memref<136x40xf32, #tpu.memory_space<vmem>>, vector<136x40xf32>
    tpu.vector_store %arg3[%c0_3, %c0_4], %2 {strides = array<i32>} : memref<136x40xf32, #tpu.memory_space<vmem>>, vector<136x40xf32>,
    return
  }
  func.func @transform_0(%arg0: i32) -> (i32, i32) {
    %c0_i32 = arith.constant 0 : i32
    %c0_i32_0 = arith.constant 0 : i32
    return %arg0, %c0_i32 : i32, i32
  }
  func.func @transform_1(%arg0: i32) -> (i32, i32) {
    %c0_i32 = arith.constant 0 : i32
    %c0_i32_0 = arith.constant 0 : i32
    %c0_i32_1 = arith.constant 0 : i32
    return %c0_i32, %c0_i32_0 : i32, i32
  }
  func.func @transform_2(%arg0: i32) -> (i32, i32) {
    %c0_i32 = arith.constant 0 : i32
    %c0_i32_0 = arith.constant 0 : i32
    return %arg0, %c0_i32 : i32, i32
  }
}

module attributes {stable_mosaic.version = 11 : i64} {
  func.func @_mm_kernel(%arg0: i32, %arg1: memref<216x8xbf16, #tpu.memory_space<vmem>>, %arg2: memref<8x4xbf16, #tpu.memory_space<vmem>>, %arg3: memref<216x4xf32, #tpu.memory_space<vmem>>) attributes {dimension_semantics = [#tpu.dimension_semantics<parallel>], iteration_bounds = array<i64: 3>, scalar_prefetch = 0 : i64, scratch_operands = 0 : i64, tpu.core_type = #tpu.core_type<tc>, window_params = [{transform_indices = @transform_0, window_bounds = array<i64: 216, 8>}, {pipeline_mode = #tpu.pipeline_mode<synchronous>, transform_indices = @transform_1, window_bounds = array<i64: 8, 4>}, {transform_indices = @transform_2, window_bounds = array<i64: 216, 4>}]} {
    %c0 = arith.constant 0 : index
    %c0_0 = arith.constant 0 : index
    %0 = vector.load %arg1[%c0, %c0_0] : memref<216x8xbf16, #tpu.memory_space<vmem>>, vector<216x8xbf16>
    %c0_1 = arith.constant 0 : index
    %c0_2 = arith.constant 0 : index
    %1 = vector.load %arg2[%c0_1, %c0_2] : memref<8x4xbf16, #tpu.memory_space<vmem>>, vector<8x4xbf16>
    %cst = arith.constant dense<0.000000e+00> : vector<216x4xf32>
    %2 = tpu.matmul %0, %1, %cst {dimension_numbers = #tpu.dot_dimension_numbers<[1], [0], [0], [1], [0, 0, 1, 1], [], []>} : vector<216x8xbf16>, vector<8x4xbf16>, vector<216x4xf32> -> vector<216x4xf32>
    %c0_3 = arith.constant 0 : index
    %c0_4 = arith.constant 0 : index
    %3 = vector.load %arg3[%c0_3, %c0_4] : memref<216x4xf32, #tpu.memory_space<vmem>>, vector<216x4xf32>
    tpu.vector_store %arg3[%c0_3, %c0_4], %2 {strides = array<i32>} : memref<216x4xf32, #tpu.memory_space<vmem>>, vector<216x4xf32>,
    return
  }
  func.func @transform_0(%arg0: i32) -> (i32, i32) {
    %c0_i32 = arith.constant 0 : i32
    %c0_i32_0 = arith.constant 0 : i32
    return %arg0, %c0_i32 : i32, i32
  }
  func.func @transform_1(%arg0: i32) -> (i32, i32) {
    %c0_i32 = arith.constant 0 : i32
    %c0_i32_0 = arith.constant 0 : i32
    %c0_i32_1 = arith.constant 0 : i32
    return %c0_i32, %c0_i32_0 : i32, i32
  }
  func.func @transform_2(%arg0: i32) -> (i32, i32) {
    %c0_i32 = arith.constant 0 : i32
    %c0_i32_0 = arith.constant 0 : i32
    return %arg0, %c0_i32 : i32, i32
  }
}

module attributes {stable_mosaic.version = 11 : i64} {
  func.func @_mm_kernel(%arg0: i32, %arg1: memref<136x32xbf16, #tpu.memory_space<vmem>>, %arg2: memref<32x40xbf16, #tpu.memory_space<vmem>>, %arg3: memref<136x40xf32, #tpu.memory_space<vmem>>) attributes {dimension_semantics = [#tpu.dimension_semantics<parallel>], iteration_bounds = array<i64: 1>, scalar_prefetch = 0 : i64, scratch_operands = 0 : i64, tpu.core_type = #tpu.core_type<tc>, window_params = [{transform_indices = @transform_0, window_bounds = array<i64: 136, 32>}, {pipeline_mode = #tpu.pipeline_mode<synchronous>, transform_indices = @transform_1, window_bounds = array<i64: 32, 40>}, {transform_indices = @transform_2, window_bounds = array<i64: 136, 40>}]} {
    %c0 = arith.constant 0 : index
    %c0_0 = arith.constant 0 : index
    %0 = vector.load %arg1[%c0, %c0_0] : memref<136x32xbf16, #tpu.memory_space<vmem>>, vector<136x32xbf16>
    %c0_1 = arith.constant 0 : index
    %c0_2 = arith.constant 0 : index
    %1 = vector.load %arg2[%c0_1, %c0_2] : memref<32x40xbf16, #tpu.memory_space<vmem>>, vector<32x40xbf16>
    %cst = arith.constant dense<0.000000e+00> : vector<136x40xf32>
    %2 = tpu.matmul %0, %1, %cst {dimension_numbers = #tpu.dot_dimension_numbers<[1], [0], [0], [1], [0, 0, 1, 1], [], []>} : vector<136x32xbf16>, vector<32x40xbf16>, vector<136x40xf32> -> vector<136x40xf32>
    %c0_3 = arith.constant 0 : index
    %c0_4 = arith.constant 0 : index
    %3 = vector.load %arg3[%c0_3, %c0_4] : memref<136x40xf32, #tpu.memory_space<vmem>>, vector<136x40xf32>
    tpu.vector_store %arg3[%c0_3, %c0_4], %2 {strides = array<i32>} : memref<136x40xf32, #tpu.memory_space<vmem>>, vector<136x40xf32>,
    return
  }
  func.func @transform_0(%arg0: i32) -> (i32, i32) {
    %c0_i32 = arith.constant 0 : i32
    %c0_i32_0 = arith.constant 0 : i32
    return %arg0, %c0_i32 : i32, i32
  }
  func.func @transform_1(%arg0: i32) -> (i32, i32) {
    %c0_i32 = arith.constant 0 : i32
    %c0_i32_0 = arith.constant 0 : i32
    %c0_i32_1 = arith.constant 0 : i32
    return %c0_i32, %c0_i32_0 : i32, i32
  }
  func.func @transform_2(%arg0: i32) -> (i32, i32) {
    %c0_i32 = arith.constant 0 : i32
    %c0_i32_0 = arith.constant 0 : i32
    return %arg0, %c0_i32 : i32, i32
  }
}

module attributes {stable_mosaic.version = 11 : i64} {
  func.func @_block_head_kernel(%arg0: i32, %arg1: memref<128x32xbf16, #tpu.memory_space<vmem>>, %arg2: memref<128x288xbf16, #tpu.memory_space<vmem>>, %arg3: memref<288x16xbf16, #tpu.memory_space<vmem>>, %arg4: memref<1x16xf32, #tpu.memory_space<vmem>>, %arg5: memref<32x512xbf16, #tpu.memory_space<vmem>>, %arg6: memref<16x512xbf16, #tpu.memory_space<vmem>>, %arg7: memref<1x512xf32, #tpu.memory_space<vmem>>, %arg8: memref<512x256xbf16, #tpu.memory_space<vmem>>, %arg9: memref<1x256xf32, #tpu.memory_space<vmem>>, %arg10: memref<256x48xbf16, #tpu.memory_space<vmem>>, %arg11: memref<1x48xf32, #tpu.memory_space<vmem>>, %arg12: memref<128x48xf32, #tpu.memory_space<vmem>>) attributes {dimension_semantics = [#tpu.dimension_semantics<parallel>], iteration_bounds = array<i64: 1>, scalar_prefetch = 0 : i64, scratch_operands = 0 : i64, tpu.core_type = #tpu.core_type<tc>, window_params = [{transform_indices = @transform_0, window_bounds = array<i64: 128, 32>}, {transform_indices = @transform_1, window_bounds = array<i64: 128, 288>}, {pipeline_mode = #tpu.pipeline_mode<synchronous>, transform_indices = @transform_2, window_bounds = array<i64: 288, 16>}, {pipeline_mode = #tpu.pipeline_mode<synchronous>, transform_indices = @transform_3, window_bounds = array<i64: 1, 16>}, {pipeline_mode = #tpu.pipeline_mode<synchronous>, transform_indices = @transform_4, window_bounds = array<i64: 32, 512>}, {pipeline_mode = #tpu.pipeline_mode<synchronous>, transform_indices = @transform_5, window_bounds = array<i64: 16, 512>}, {pipeline_mode = #tpu.pipeline_mode<synchronous>, transform_indices = @transform_6, window_bounds = array<i64: 1, 512>}, {pipeline_mode = #tpu.pipeline_mode<synchronous>, transform_indices = @transform_7, window_bounds = array<i64: 512, 256>}, {pipeline_mode = #tpu.pipeline_mode<synchronous>, transform_indices = @transform_8, window_bounds = array<i64: 1, 256>}, {pipeline_mode = #tpu.pipeline_mode<synchronous>, transform_indices = @transform_9, window_bounds = array<i64: 256, 48>}, {pipeline_mode = #tpu.pipeline_mode<synchronous>, transform_indices = @transform_10, window_bounds = array<i64: 1, 48>}, {transform_indices = @transform_11, window_bounds = array<i64: 128, 48>}]} {
    %c0 = arith.constant 0 : index
    %c0_0 = arith.constant 0 : index
    %0 = vector.load %arg2[%c0, %c0_0] : memref<128x288xbf16, #tpu.memory_space<vmem>>, vector<128x288xbf16>
    %c0_1 = arith.constant 0 : index
    %c0_2 = arith.constant 0 : index
    %1 = vector.load %arg3[%c0_1, %c0_2] : memref<288x16xbf16, #tpu.memory_space<vmem>>, vector<288x16xbf16>
    %cst = arith.constant dense<0.000000e+00> : vector<128x16xf32>
    %2 = tpu.matmul %0, %1, %cst {dimension_numbers = #tpu.dot_dimension_numbers<[1], [0], [0], [1], [0, 0, 1, 1], [], []>} : vector<128x288xbf16>, vector<288x16xbf16>, vector<128x16xf32> -> vector<128x16xf32>
    %c0_3 = arith.constant 0 : index
    %c0_4 = arith.constant 0 : index
    %3 = vector.load %arg4[%c0_3, %c0_4] : memref<1x16xf32, #tpu.memory_space<vmem>>, vector<1x16xf32>
    %4 = vector.broadcast %3 : vector<1x16xf32> to vector<128x16xf32>
    %5 = arith.addf %2, %4 : vector<128x16xf32>
    %cst_5 = arith.constant 0.000000e+00 : f32
    %6 = vector.broadcast %cst_5 : f32 to vector<128x16xf32>
    %7 = arith.cmpf oge, %5, %6 : vector<128x16xf32>
    %cst_6 = arith.constant 0.00999999977 : f32
    %8 = vector.broadcast %cst_6 : f32 to vector<128x16xf32>
    %9 = arith.mulf %8, %5 : vector<128x16xf32>
    %10 = arith.select %7, %5, %9 : vector<128x16xi1>, vector<128x16xf32>
    %c0_7 = arith.constant 0 : index
    %c0_8 = arith.constant 0 : index
    %11 = vector.load %arg1[%c0_7, %c0_8] : memref<128x32xbf16, #tpu.memory_space<vmem>>, vector<128x32xbf16>
    %c0_9 = arith.constant 0 : index
    %c0_10 = arith.constant 0 : index
    %12 = vector.load %arg5[%c0_9, %c0_10] : memref<32x512xbf16, #tpu.memory_space<vmem>>, vector<32x512xbf16>
    %cst_11 = arith.constant dense<0.000000e+00> : vector<128x512xf32>
    %13 = tpu.matmul %11, %12, %cst_11 {dimension_numbers = #tpu.dot_dimension_numbers<[1], [0], [0], [1], [0, 0, 1, 1], [], []>} : vector<128x32xbf16>, vector<32x512xbf16>, vector<128x512xf32> -> vector<128x512xf32>
    %14 = arith.truncf %10 : vector<128x16xf32> to vector<128x16xbf16>
    %c0_12 = arith.constant 0 : index
    %c0_13 = arith.constant 0 : index
    %15 = vector.load %arg6[%c0_12, %c0_13] : memref<16x512xbf16, #tpu.memory_space<vmem>>, vector<16x512xbf16>
    %cst_14 = arith.constant dense<0.000000e+00> : vector<128x512xf32>
    %16 = tpu.matmul %14, %15, %cst_14 {dimension_numbers = #tpu.dot_dimension_numbers<[1], [0], [0], [1], [0, 0, 1, 1], [], []>} : vector<128x16xbf16>, vector<16x512xbf16>, vector<128x512xf32> -> vector<128x512xf32>
    %17 = arith.addf %13, %16 : vector<128x512xf32>
    %c0_15 = arith.constant 0 : index
    %c0_16 = arith.constant 0 : index
    %18 = vector.load %arg7[%c0_15, %c0_16] : memref<1x512xf32, #tpu.memory_space<vmem>>, vector<1x512xf32>
    %19 = vector.broadcast %18 : vector<1x512xf32> to vector<128x512xf32>
    %20 = arith.addf %17, %19 : vector<128x512xf32>
    %cst_17 = arith.constant 0.000000e+00 : f32
    %21 = vector.broadcast %cst_17 : f32 to vector<128x512xf32>
    %22 = arith.cmpf oge, %20, %21 : vector<128x512xf32>
    %cst_18 = arith.constant 0.00999999977 : f32
    %23 = vector.broadcast %cst_18 : f32 to vector<128x512xf32>
    %24 = arith.mulf %23, %20 : vector<128x512xf32>
    %25 = arith.select %22, %20, %24 : vector<128x512xi1>, vector<128x512xf32>
    %26 = arith.truncf %25 : vector<128x512xf32> to vector<128x512xbf16>
    %c0_19 = arith.constant 0 : index
    %c0_20 = arith.constant 0 : index
    %27 = vector.load %arg8[%c0_19, %c0_20] : memref<512x256xbf16, #tpu.memory_space<vmem>>, vector<512x256xbf16>
    %cst_21 = arith.constant dense<0.000000e+00> : vector<128x256xf32>
    %28 = tpu.matmul %26, %27, %cst_21 {dimension_numbers = #tpu.dot_dimension_numbers<[1], [0], [0], [1], [0, 0, 1, 1], [], []>} : vector<128x512xbf16>, vector<512x256xbf16>, vector<128x256xf32> -> vector<128x256xf32>
    %c0_22 = arith.constant 0 : index
    %c0_23 = arith.constant 0 : index
    %29 = vector.load %arg9[%c0_22, %c0_23] : memref<1x256xf32, #tpu.memory_space<vmem>>, vector<1x256xf32>
    %30 = vector.broadcast %29 : vector<1x256xf32> to vector<128x256xf32>
    %31 = arith.addf %28, %30 : vector<128x256xf32>
    %cst_24 = arith.constant 0.000000e+00 : f32
    %32 = vector.broadcast %cst_24 : f32 to vector<128x256xf32>
    %33 = arith.cmpf oge, %31, %32 : vector<128x256xf32>
    %cst_25 = arith.constant 0.00999999977 : f32
    %34 = vector.broadcast %cst_25 : f32 to vector<128x256xf32>
    %35 = arith.mulf %34, %31 : vector<128x256xf32>
    %36 = arith.select %33, %31, %35 : vector<128x256xi1>, vector<128x256xf32>
    %37 = arith.truncf %36 : vector<128x256xf32> to vector<128x256xbf16>
    %c0_26 = arith.constant 0 : index
    %c0_27 = arith.constant 0 : index
    %38 = vector.load %arg10[%c0_26, %c0_27] : memref<256x48xbf16, #tpu.memory_space<vmem>>, vector<256x48xbf16>
    %cst_28 = arith.constant dense<0.000000e+00> : vector<128x48xf32>
    %39 = tpu.matmul %37, %38, %cst_28 {dimension_numbers = #tpu.dot_dimension_numbers<[1], [0], [0], [1], [0, 0, 1, 1], [], []>} : vector<128x256xbf16>, vector<256x48xbf16>, vector<128x48xf32> -> vector<128x48xf32>
    %c0_29 = arith.constant 0 : index
    %c0_30 = arith.constant 0 : index
    %40 = vector.load %arg11[%c0_29, %c0_30] : memref<1x48xf32, #tpu.memory_space<vmem>>, vector<1x48xf32>
    %41 = vector.broadcast %40 : vector<1x48xf32> to vector<128x48xf32>
    %42 = arith.addf %39, %41 : vector<128x48xf32>
    %c0_31 = arith.constant 0 : index
    %c0_32 = arith.constant 0 : index
    %43 = vector.load %arg12[%c0_31, %c0_32] : memref<128x48xf32, #tpu.memory_space<vmem>>, vector<128x48xf32>
    tpu.vector_store %arg12[%c0_31, %c0_32], %42 {strides = array<i32>} : memref<128x48xf32, #tpu.memory_space<vmem>>, vector<128x48xf32>,
    return
  }
  func.func @transform_0(%arg0: i32) -> (i32, i32) {
    %c0_i32 = arith.constant 0 : i32
    %c0_i32_0 = arith.constant 0 : i32
    return %arg0, %c0_i32 : i32, i32
  }
  func.func @transform_1(%arg0: i32) -> (i32, i32) {
    %c0_i32 = arith.constant 0 : i32
    %c0_i32_0 = arith.constant 0 : i32
    return %arg0, %c0_i32 : i32, i32
  }
  func.func @transform_2(%arg0: i32) -> (i32, i32) {
    %c0_i32 = arith.constant 0 : i32
    %c0_i32_0 = arith.constant 0 : i32
    %c0_i32_1 = arith.constant 0 : i32
    return %c0_i32, %c0_i32_0 : i32, i32
  }
  func.func @transform_3(%arg0: i32) -> (i32, i32) {
    %c0_i32 = arith.constant 0 : i32
    %c0_i32_0 = arith.constant 0 : i32
    %c0_i32_1 = arith.constant 0 : i32
    return %c0_i32, %c0_i32_0 : i32, i32
  }
  func.func @transform_4(%arg0: i32) -> (i32, i32) {
    %c0_i32 = arith.constant 0 : i32
    %c0_i32_0 = arith.constant 0 : i32
    %c0_i32_1 = arith.constant 0 : i32
    return %c0_i32, %c0_i32_0 : i32, i32
  }
  func.func @transform_5(%arg0: i32) -> (i32, i32) {
    %c0_i32 = arith.constant 0 : i32
    %c0_i32_0 = arith.constant 0 : i32
    %c0_i32_1 = arith.constant 0 : i32
    return %c0_i32, %c0_i32_0 : i32, i32
  }
  func.func @transform_6(%arg0: i32) -> (i32, i32) {
    %c0_i32 = arith.constant 0 : i32
    %c0_i32_0 = arith.constant 0 : i32
    %c0_i32_1 = arith.constant 0 : i32
    return %c0_i32, %c0_i32_0 : i32, i32
  }
  func.func @transform_7(%arg0: i32) -> (i32, i32) {
    %c0_i32 = arith.constant 0 : i32
    %c0_i32_0 = arith.constant 0 : i32
    %c0_i32_1 = arith.constant 0 : i32
    return %c0_i32, %c0_i32_0 : i32, i32
  }
  func.func @transform_8(%arg0: i32) -> (i32, i32) {
    %c0_i32 = arith.constant 0 : i32
    %c0_i32_0 = arith.constant 0 : i32
    %c0_i32_1 = arith.constant 0 : i32
    return %c0_i32, %c0_i32_0 : i32, i32
  }
  func.func @transform_9(%arg0: i32) -> (i32, i32) {
    %c0_i32 = arith.constant 0 : i32
    %c0_i32_0 = arith.constant 0 : i32
    %c0_i32_1 = arith.constant 0 : i32
    return %c0_i32, %c0_i32_0 : i32, i32
  }
  func.func @transform_10(%arg0: i32) -> (i32, i32) {
    %c0_i32 = arith.constant 0 : i32
    %c0_i32_0 = arith.constant 0 : i32
    %c0_i32_1 = arith.constant 0 : i32
    return %c0_i32, %c0_i32_0 : i32, i32
  }
  func.func @transform_11(%arg0: i32) -> (i32, i32) {
    %c0_i32 = arith.constant 0 : i32
    %c0_i32_0 = arith.constant 0 : i32
    return %arg0, %c0_i32 : i32, i32
  }
}

module attributes {stable_mosaic.version = 11 : i64} {
  func.func @_block_head_kernel(%arg0: i32, %arg1: memref<128x32xbf16, #tpu.memory_space<vmem>>, %arg2: memref<128x288xbf16, #tpu.memory_space<vmem>>, %arg3: memref<288x16xbf16, #tpu.memory_space<vmem>>, %arg4: memref<1x16xf32, #tpu.memory_space<vmem>>, %arg5: memref<32x512xbf16, #tpu.memory_space<vmem>>, %arg6: memref<16x512xbf16, #tpu.memory_space<vmem>>, %arg7: memref<1x512xf32, #tpu.memory_space<vmem>>, %arg8: memref<512x256xbf16, #tpu.memory_space<vmem>>, %arg9: memref<1x256xf32, #tpu.memory_space<vmem>>, %arg10: memref<256x16xbf16, #tpu.memory_space<vmem>>, %arg11: memref<1x16xf32, #tpu.memory_space<vmem>>, %arg12: memref<128x16xf32, #tpu.memory_space<vmem>>) attributes {dimension_semantics = [#tpu.dimension_semantics<parallel>], iteration_bounds = array<i64: 1>, scalar_prefetch = 0 : i64, scratch_operands = 0 : i64, tpu.core_type = #tpu.core_type<tc>, window_params = [{transform_indices = @transform_0, window_bounds = array<i64: 128, 32>}, {transform_indices = @transform_1, window_bounds = array<i64: 128, 288>}, {pipeline_mode = #tpu.pipeline_mode<synchronous>, transform_indices = @transform_2, window_bounds = array<i64: 288, 16>}, {pipeline_mode = #tpu.pipeline_mode<synchronous>, transform_indices = @transform_3, window_bounds = array<i64: 1, 16>}, {pipeline_mode = #tpu.pipeline_mode<synchronous>, transform_indices = @transform_4, window_bounds = array<i64: 32, 512>}, {pipeline_mode = #tpu.pipeline_mode<synchronous>, transform_indices = @transform_5, window_bounds = array<i64: 16, 512>}, {pipeline_mode = #tpu.pipeline_mode<synchronous>, transform_indices = @transform_6, window_bounds = array<i64: 1, 512>}, {pipeline_mode = #tpu.pipeline_mode<synchronous>, transform_indices = @transform_7, window_bounds = array<i64: 512, 256>}, {pipeline_mode = #tpu.pipeline_mode<synchronous>, transform_indices = @transform_8, window_bounds = array<i64: 1, 256>}, {pipeline_mode = #tpu.pipeline_mode<synchronous>, transform_indices = @transform_9, window_bounds = array<i64: 256, 16>}, {pipeline_mode = #tpu.pipeline_mode<synchronous>, transform_indices = @transform_10, window_bounds = array<i64: 1, 16>}, {transform_indices = @transform_11, window_bounds = array<i64: 128, 16>}]} {
    %c0 = arith.constant 0 : index
    %c0_0 = arith.constant 0 : index
    %0 = vector.load %arg2[%c0, %c0_0] : memref<128x288xbf16, #tpu.memory_space<vmem>>, vector<128x288xbf16>
    %c0_1 = arith.constant 0 : index
    %c0_2 = arith.constant 0 : index
    %1 = vector.load %arg3[%c0_1, %c0_2] : memref<288x16xbf16, #tpu.memory_space<vmem>>, vector<288x16xbf16>
    %cst = arith.constant dense<0.000000e+00> : vector<128x16xf32>
    %2 = tpu.matmul %0, %1, %cst {dimension_numbers = #tpu.dot_dimension_numbers<[1], [0], [0], [1], [0, 0, 1, 1], [], []>} : vector<128x288xbf16>, vector<288x16xbf16>, vector<128x16xf32> -> vector<128x16xf32>
    %c0_3 = arith.constant 0 : index
    %c0_4 = arith.constant 0 : index
    %3 = vector.load %arg4[%c0_3, %c0_4] : memref<1x16xf32, #tpu.memory_space<vmem>>, vector<1x16xf32>
    %4 = vector.broadcast %3 : vector<1x16xf32> to vector<128x16xf32>
    %5 = arith.addf %2, %4 : vector<128x16xf32>
    %cst_5 = arith.constant 0.000000e+00 : f32
    %6 = vector.broadcast %cst_5 : f32 to vector<128x16xf32>
    %7 = arith.cmpf oge, %5, %6 : vector<128x16xf32>
    %cst_6 = arith.constant 0.00999999977 : f32
    %8 = vector.broadcast %cst_6 : f32 to vector<128x16xf32>
    %9 = arith.mulf %8, %5 : vector<128x16xf32>
    %10 = arith.select %7, %5, %9 : vector<128x16xi1>, vector<128x16xf32>
    %c0_7 = arith.constant 0 : index
    %c0_8 = arith.constant 0 : index
    %11 = vector.load %arg1[%c0_7, %c0_8] : memref<128x32xbf16, #tpu.memory_space<vmem>>, vector<128x32xbf16>
    %c0_9 = arith.constant 0 : index
    %c0_10 = arith.constant 0 : index
    %12 = vector.load %arg5[%c0_9, %c0_10] : memref<32x512xbf16, #tpu.memory_space<vmem>>, vector<32x512xbf16>
    %cst_11 = arith.constant dense<0.000000e+00> : vector<128x512xf32>
    %13 = tpu.matmul %11, %12, %cst_11 {dimension_numbers = #tpu.dot_dimension_numbers<[1], [0], [0], [1], [0, 0, 1, 1], [], []>} : vector<128x32xbf16>, vector<32x512xbf16>, vector<128x512xf32> -> vector<128x512xf32>
    %14 = arith.truncf %10 : vector<128x16xf32> to vector<128x16xbf16>
    %c0_12 = arith.constant 0 : index
    %c0_13 = arith.constant 0 : index
    %15 = vector.load %arg6[%c0_12, %c0_13] : memref<16x512xbf16, #tpu.memory_space<vmem>>, vector<16x512xbf16>
    %cst_14 = arith.constant dense<0.000000e+00> : vector<128x512xf32>
    %16 = tpu.matmul %14, %15, %cst_14 {dimension_numbers = #tpu.dot_dimension_numbers<[1], [0], [0], [1], [0, 0, 1, 1], [], []>} : vector<128x16xbf16>, vector<16x512xbf16>, vector<128x512xf32> -> vector<128x512xf32>
    %17 = arith.addf %13, %16 : vector<128x512xf32>
    %c0_15 = arith.constant 0 : index
    %c0_16 = arith.constant 0 : index
    %18 = vector.load %arg7[%c0_15, %c0_16] : memref<1x512xf32, #tpu.memory_space<vmem>>, vector<1x512xf32>
    %19 = vector.broadcast %18 : vector<1x512xf32> to vector<128x512xf32>
    %20 = arith.addf %17, %19 : vector<128x512xf32>
    %cst_17 = arith.constant 0.000000e+00 : f32
    %21 = vector.broadcast %cst_17 : f32 to vector<128x512xf32>
    %22 = arith.cmpf oge, %20, %21 : vector<128x512xf32>
    %cst_18 = arith.constant 0.00999999977 : f32
    %23 = vector.broadcast %cst_18 : f32 to vector<128x512xf32>
    %24 = arith.mulf %23, %20 : vector<128x512xf32>
    %25 = arith.select %22, %20, %24 : vector<128x512xi1>, vector<128x512xf32>
    %26 = arith.truncf %25 : vector<128x512xf32> to vector<128x512xbf16>
    %c0_19 = arith.constant 0 : index
    %c0_20 = arith.constant 0 : index
    %27 = vector.load %arg8[%c0_19, %c0_20] : memref<512x256xbf16, #tpu.memory_space<vmem>>, vector<512x256xbf16>
    %cst_21 = arith.constant dense<0.000000e+00> : vector<128x256xf32>
    %28 = tpu.matmul %26, %27, %cst_21 {dimension_numbers = #tpu.dot_dimension_numbers<[1], [0], [0], [1], [0, 0, 1, 1], [], []>} : vector<128x512xbf16>, vector<512x256xbf16>, vector<128x256xf32> -> vector<128x256xf32>
    %c0_22 = arith.constant 0 : index
    %c0_23 = arith.constant 0 : index
    %29 = vector.load %arg9[%c0_22, %c0_23] : memref<1x256xf32, #tpu.memory_space<vmem>>, vector<1x256xf32>
    %30 = vector.broadcast %29 : vector<1x256xf32> to vector<128x256xf32>
    %31 = arith.addf %28, %30 : vector<128x256xf32>
    %cst_24 = arith.constant 0.000000e+00 : f32
    %32 = vector.broadcast %cst_24 : f32 to vector<128x256xf32>
    %33 = arith.cmpf oge, %31, %32 : vector<128x256xf32>
    %cst_25 = arith.constant 0.00999999977 : f32
    %34 = vector.broadcast %cst_25 : f32 to vector<128x256xf32>
    %35 = arith.mulf %34, %31 : vector<128x256xf32>
    %36 = arith.select %33, %31, %35 : vector<128x256xi1>, vector<128x256xf32>
    %37 = arith.truncf %36 : vector<128x256xf32> to vector<128x256xbf16>
    %c0_26 = arith.constant 0 : index
    %c0_27 = arith.constant 0 : index
    %38 = vector.load %arg10[%c0_26, %c0_27] : memref<256x16xbf16, #tpu.memory_space<vmem>>, vector<256x16xbf16>
    %cst_28 = arith.constant dense<0.000000e+00> : vector<128x16xf32>
    %39 = tpu.matmul %37, %38, %cst_28 {dimension_numbers = #tpu.dot_dimension_numbers<[1], [0], [0], [1], [0, 0, 1, 1], [], []>} : vector<128x256xbf16>, vector<256x16xbf16>, vector<128x16xf32> -> vector<128x16xf32>
    %c0_29 = arith.constant 0 : index
    %c0_30 = arith.constant 0 : index
    %40 = vector.load %arg11[%c0_29, %c0_30] : memref<1x16xf32, #tpu.memory_space<vmem>>, vector<1x16xf32>
    %41 = vector.broadcast %40 : vector<1x16xf32> to vector<128x16xf32>
    %42 = arith.addf %39, %41 : vector<128x16xf32>
    %c0_31 = arith.constant 0 : index
    %c0_32 = arith.constant 0 : index
    %43 = vector.load %arg12[%c0_31, %c0_32] : memref<128x16xf32, #tpu.memory_space<vmem>>, vector<128x16xf32>
    tpu.vector_store %arg12[%c0_31, %c0_32], %42 {strides = array<i32>} : memref<128x16xf32, #tpu.memory_space<vmem>>, vector<128x16xf32>,
    return
  }
  func.func @transform_0(%arg0: i32) -> (i32, i32) {
    %c0_i32 = arith.constant 0 : i32
    %c0_i32_0 = arith.constant 0 : i32
    return %arg0, %c0_i32 : i32, i32
  }
  func.func @transform_1(%arg0: i32) -> (i32, i32) {
    %c0_i32 = arith.constant 0 : i32
    %c0_i32_0 = arith.constant 0 : i32
    return %arg0, %c0_i32 : i32, i32
  }
  func.func @transform_2(%arg0: i32) -> (i32, i32) {
    %c0_i32 = arith.constant 0 : i32
    %c0_i32_0 = arith.constant 0 : i32
    %c0_i32_1 = arith.constant 0 : i32
    return %c0_i32, %c0_i32_0 : i32, i32
  }
  func.func @transform_3(%arg0: i32) -> (i32, i32) {
    %c0_i32 = arith.constant 0 : i32
    %c0_i32_0 = arith.constant 0 : i32
    %c0_i32_1 = arith.constant 0 : i32
    return %c0_i32, %c0_i32_0 : i32, i32
  }
  func.func @transform_4(%arg0: i32) -> (i32, i32) {
    %c0_i32 = arith.constant 0 : i32
    %c0_i32_0 = arith.constant 0 : i32
    %c0_i32_1 = arith.constant 0 : i32
    return %c0_i32, %c0_i32_0 : i32, i32
  }
  func.func @transform_5(%arg0: i32) -> (i32, i32) {
    %c0_i32 = arith.constant 0 : i32
    %c0_i32_0 = arith.constant 0 : i32
    %c0_i32_1 = arith.constant 0 : i32
    return %c0_i32, %c0_i32_0 : i32, i32
  }
  func.func @transform_6(%arg0: i32) -> (i32, i32) {
    %c0_i32 = arith.constant 0 : i32
    %c0_i32_0 = arith.constant 0 : i32
    %c0_i32_1 = arith.constant 0 : i32
    return %c0_i32, %c0_i32_0 : i32, i32
  }
  func.func @transform_7(%arg0: i32) -> (i32, i32) {
    %c0_i32 = arith.constant 0 : i32
    %c0_i32_0 = arith.constant 0 : i32
    %c0_i32_1 = arith.constant 0 : i32
    return %c0_i32, %c0_i32_0 : i32, i32
  }
  func.func @transform_8(%arg0: i32) -> (i32, i32) {
    %c0_i32 = arith.constant 0 : i32
    %c0_i32_0 = arith.constant 0 : i32
    %c0_i32_1 = arith.constant 0 : i32
    return %c0_i32, %c0_i32_0 : i32, i32
  }
  func.func @transform_9(%arg0: i32) -> (i32, i32) {
    %c0_i32 = arith.constant 0 : i32
    %c0_i32_0 = arith.constant 0 : i32
    %c0_i32_1 = arith.constant 0 : i32
    return %c0_i32, %c0_i32_0 : i32, i32
  }
  func.func @transform_10(%arg0: i32) -> (i32, i32) {
    %c0_i32 = arith.constant 0 : i32
    %c0_i32_0 = arith.constant 0 : i32
    %c0_i32_1 = arith.constant 0 : i32
    return %c0_i32, %c0_i32_0 : i32, i32
  }
  func.func @transform_11(%arg0: i32) -> (i32, i32) {
    %c0_i32 = arith.constant 0 : i32
    %c0_i32_0 = arith.constant 0 : i32
    return %arg0, %c0_i32 : i32, i32
  }
}

</mosaic_0001>

<llo_original>
// kernel: neg.17
$region0: #{neg.17}
  #allocation0 [shape = 's32[1]{0}', space=sflag, size = 0x4, scoped, tag = 'scoped memory for neg.17']
  %s0 = inlined_call_operand.vmem [shape: f32[128,1,8], index: 0, kind: input, shape index: {}]
  %s1 = inlined_call_operand.vmem [shape: f32[128,1,8], index: 1, kind: output, shape index: {}]
  %v2 = vld [vmem:[%s0] sm:$0xff]
  %3 = xla_tuple %v2
  %4 = xla_tuple %3
  %v5 = vxor.u32 %v2, 2147483648
  %6 = xla_tuple %v5
  %7 = vst [vmem:[%s1] sm:$0xff] %v5

// kernel: model_forward.10
$region0: #{model_forward.10}
  #allocation0 [shape = 'u32[]', space=smem, size = 0x4, offset = 0x4, fixed_abs, tag = 'smem constant byte address 0x4 - core index']
  #allocation1 [shape = 'u32[144,128]{1,0:T(1,128)}', space=vmem, size = 0x12000, scoped, tag = 'internal scratch']
  %s0 = inlined_call_operand.hbm [shape: bf16[136,51], index: 0, kind: input, shape index: {}]
  %s1 = inlined_call_operand.hbm [shape: bf16[51,40], index: 1, kind: input, shape index: {}]
  %s2 = inlined_call_operand.hbm [shape: f32[136,40], index: 2, kind: output, shape index: {}]
  %s3 = sld [smem:[#allocation0]]
  $region26: #{model_forward.10} parent=0
    _
  %s5 = ssub.s32 1, %s3
  %s6 = scalar_select 0, %s5, %s3
  $region1: #{model_forward.10} parent=0
    #allocation2 [shape = 'u8[34816]{0}', space=vmem, size = 0x8800, scoped, tag = 'input window, operand 0, single buffered']
    #allocation3 [shape = 's32[1]{0}', space=sflag, size = 0x4, scoped, tag = 'scoped memory for model_forward.10']
    #allocation4 [shape = 's32[1]{0}', space=sflag, size = 0x4, scoped, tag = 'scoped memory for model_forward.10']
    #allocation5 [shape = 'u8[14336]{0}', space=vmem, size = 0x3800, scoped, tag = 'input window, operand 1, single buffered']
    #allocation6 [shape = 's32[1]{0}', space=sflag, size = 0x4, scoped, tag = 'scoped memory for model_forward.10']
    #allocation7 [shape = 'u8[69632]{0}', space=vmem, size = 0x11000, scoped, tag = 'output window, operand 0, single buffered']
    %7 = vsyncpa [#allocation3], 0
    %8 = vsyncpa [#allocation6], 0
    %9 = vsyncpa [#allocation4], 0
    // Predicated region
    $region2: #{model_forward.10} parent=1 // pred_check
      _
    $region3: #{model_forward.10} parent=1 // pred_check_branch
      %11 = sbr.rel (0) target = $region5
    $region4: #{model_forward.10} parent=1 // pred_region
      %s13 = ssub.s32 1088, 1088
      %14 = vsyncadd [#allocation3], %s13
      %s15 = sshll.u32 [#allocation2], 4
      %s16 = int_to_ptr.vmem [resolvable:$true] %s15
      %21 = dma.hbm_to_vmem [thread:$0]  %s0, 1088, %s16, [#allocation3], 64, 64, 4
    $region5: #{model_forward.10} parent=1 // pred_fallthru
      _
    // Predicated region
    $region6: #{model_forward.10} parent=1 // pred_check
      _
    $region7: #{model_forward.10} parent=1 // pred_check_branch
      %23 = sbr.rel (0) target = $region9
    $region8: #{model_forward.10} parent=1 // pred_region
      %s25 = ssub.s32 448, 448
      %26 = vsyncadd [#allocation6], %s25
      %s27 = sshll.u32 [#allocation5], 4
      %s28 = int_to_ptr.vmem [resolvable:$true] %s27
      %33 = dma.hbm_to_vmem [thread:$0]  %s1, 448, %s28, [#allocation6], 64, 64, 4
    $region9: #{model_forward.10} parent=1 // pred_fallthru
      _
    // Predicated region
    $region10: #{model_forward.10} parent=1 // pred_check
      _
    $region11: #{model_forward.10} parent=1 // pred_check_branch
      %35 = sbr.rel (0) target = $region13
    $region12: #{model_forward.10} parent=1 // pred_region
      %36 = dma.done [#allocation3], 1088
    $region13: #{model_forward.10} parent=1 // pred_fallthru
      _
    // Predicated region
    $region14: #{model_forward.10} parent=1 // pred_check
      _
    $region15: #{model_forward.10} parent=1 // pred_check_branch
      %38 = sbr.rel (0) target = $region17
    $region16: #{model_forward.10} parent=1 // pred_region
      %39 = dma.done [#allocation6], 448
    $region17: #{model_forward.10} parent=1 // pred_fallthru
      _
    %v41 = vld [vmem:[#allocation2] sm:$0xf]
    %v42 = vld [vmem:[#allocation2 + $0x4] sm:$0xf]
    %v43 = vld [vmem:[#allocation2 + $0x8] sm:$0xf]
    %v44 = vld [vmem:[#allocation2 + $0xc] sm:$0xf]
    %v45 = vld [vmem:[#allocation2 + $0x10] sm:$0xf]
    %v46 = vld [vmem:[#allocation2 + $0x14] sm:$0xf]
    %v47 = vld [vmem:[#allocation2 + $0x18] sm:$0xf]
    %v48 = vld [vmem:[#allocation2 + $0x1c] sm:$0xf]
    %v49 = vld [vmem:[#allocation2 + $0x20] sm:$0xf]
    %v50 = vld [vmem:[#allocation2 + $0x24] sm:$0xf]
    %v51 = vld [vmem:[#allocation2 + $0x28] sm:$0xf]
    %v52 = vld [vmem:[#allocation2 + $0x2c] sm:$0xf]
    %v53 = vld [vmem:[#allocation2 + $0x30] sm:$0xf]
    %v54 = vld [vmem:[#allocation2 + $0x34] sm:$0xf]
    %v55 = vld [vmem:[#allocation2 + $0x38] sm:$0xf]
    %v56 = vld [vmem:[#allocation2 + $0x3c] sm:$0xf]
    %v57 = vld [vmem:[#allocation2 + $0x40] sm:$0xf]
    %v58 = vld [vmem:[#allocation5] sm:$0xf]
    %v59 = vld [vmem:[#allocation5 + $0x4] sm:$0xf]
    %v60 = vld [vmem:[#allocation5 + $0x8] sm:$0xf]
    %v61 = vld [vmem:[#allocation5 + $0xc] sm:$0xf]
    %v62 = vld [vmem:[#allocation5 + $0x10] sm:$0xf]
    %v63 = vld [vmem:[#allocation5 + $0x14] sm:$0xf]
    %v64 = vld [vmem:[#allocation5 + $0x18] sm:$0x3]
    %v82 = vunpack.c.l.b16 %v41
    %v83 = vunpack.c.l.b16 %v42
    %v84 = vunpack.c.l.b16 %v43
    %v85 = vunpack.c.l.b16 %v44
    %v86 = vunpack.c.l.b16 %v45
    %v87 = vunpack.c.l.b16 %v46
    %v88 = vunpack.c.l.b16 %v47
    %v89 = vunpack.c.l.b16 %v48
    %v90 = vunpack.c.l.b16 %v49
    %v91 = vunpack.c.l.b16 %v50
    %v92 = vunpack.c.l.b16 %v51
    %v93 = vunpack.c.l.b16 %v52
    %v94 = vunpack.c.l.b16 %v53
    %v95 = vunpack.c.l.b16 %v54
    %v96 = vunpack.c.l.b16 %v55
    %v97 = vunpack.c.l.b16 %v56
    %v98 = vunpack.c.l.b16 %v57
    %v99 = vpack.c.b16 %v83, %v82
    %v100 = vpack.c.b16 %v85, %v84
    %v101 = vpack.c.b16 %v87, %v86
    %v102 = vpack.c.b16 %v89, %v88
    %v103 = vpack.c.b16 %v91, %v90
    %v104 = vpack.c.b16 %v93, %v92
    %v105 = vpack.c.b16 %v95, %v94
    %v106 = vpack.c.b16 %v97, %v96
    %v107 = vpack.c.b16 %v98, %v98
    %v115 = vunpack.c.l.b16 %v58
    %v116 = vunpack.c.l.b16 %v59
    %v117 = vunpack.c.l.b16 %v60
    %v118 = vunpack.c.l.b16 %v61
    %v119 = vunpack.c.l.b16 %v62
    %v120 = vunpack.c.l.b16 %v63
    %v121 = vunpack.c.l.b16 %v64
    %v122 = vpack.c.b16 %v116, %v115
    %v123 = vpack.c.b16 %v118, %v117
    %v124 = vpack.c.b16 %v120, %v119
    %v125 = vpack.c.b16 %v121, %v121
    %vm129 = vcmask 416768
    %v131 = vsel %vm129, %v99, 0
    %v134 = vsel %vm129, %v100, 0
    %v137 = vsel %vm129, %v101, 0
    %v140 = vsel %vm129, %v102, 0
    %v143 = vsel %vm129, %v103, 0
    %v146 = vsel %vm129, %v104, 0
    %v149 = vsel %vm129, %v105, 0
    %v152 = vsel %vm129, %v106, 0
    %v155 = vsel %vm129, %v107, 0
    %vm157 = vcmask 1040384
    %vm158 = vcmask 1041408
    %v159 = vsel %vm157, 4294967295, 65535
    %v160 = vsel %vm158, %v159, 0
    %v162 = vand.u32 %v125, %v160
    %164 = vmatprep.subr.bf16.mxu0 0
    %165 = vmatpush1.bf16.msra.mxu0 %v122
    %166 = vmatprep.subr.bf16.mxu0 0
    %167 = vmatpush1.bf16.msra.mxu0 %v123
    %168 = vmatprep.subr.bf16.mxu0 0
    %169 = vmatpush1.bf16.msra.mxu0 %v124
    %170 = vmatprep.subr.bf16.mxu0 0
    %171 = vmatpush1.bf16.msra.mxu0 %v162
    %172 = vmatprep.subr.bf16.mxu0 0
    %173 = vmatpush1.bf16.msra.mxu0 0
    %174 = vmatprep.subr.bf16.mxu0 0
    %175 = vmatpush1.bf16.msra.mxu0 0
    %176 = vmatprep.subr.bf16.mxu0 0
    %177 = vmatpush1.bf16.msra.mxu0 0
    %178 = vmatprep.subr.bf16.mxu0 0
    %179 = vmatpush1.bf16.msra.mxu0 0
    %180 = vmatprep.subr.bf16.mxu0 0
    %181 = vmatpush1.bf16.msra.mxu0 0
    %182 = vmatprep.subr.bf16.mxu0 0
    %183 = vmatpush1.bf16.msra.mxu0 0
    %184 = vmatprep.subr.bf16.mxu0 0
    %185 = vmatpush1.bf16.msra.mxu0 0
    %186 = vmatprep.subr.bf16.mxu0 0
    %187 = vmatpush1.bf16.msra.mxu0 0
    %188 = vmatprep.subr.bf16.mxu0 0
    %189 = vmatpush1.bf16.msra.mxu0 0
    %190 = vmatprep.subr.bf16.mxu0 0
    %191 = vmatpush1.bf16.msra.mxu0 0
    %192 = vmatprep.subr.bf16.mxu0 0
    %193 = vmatpush1.bf16.msra.mxu0 0
    %194 = vmatprep.subr.bf16.mxu0 0
    %195 = vmatpush1.bf16.msra.mxu0 0
    %196 = vmatprep.mubr.bf16.mxu0 0
    %197 = vmatmul.mubr.bf16.gmra.mrb[0].mxu0 %v131
    %v198 = vpop.f32.mrb[0].mxu0
    %v199 = vadd.f32 0.0, %v198
    %v200 = vpop.f32.mrb[0].mxu0
    %v201 = vpop.f32.mrb[0].mxu0
    %v202 = vadd.f32 0.0, %v201
    %v203 = vpop.f32.mrb[0].mxu0
    %204 = vmatprep.mubr.bf16.mxu0 0
    %205 = vmatmul.mubr.bf16.gmra.mrb[0].mxu0 %v134
    %v206 = vpop.f32.mrb[0].mxu0
    %v207 = vadd.f32 0.0, %v206
    %v208 = vpop.f32.mrb[0].mxu0
    %v209 = vpop.f32.mrb[0].mxu0
    %v210 = vadd.f32 0.0, %v209
    %v211 = vpop.f32.mrb[0].mxu0
    %212 = vmatprep.mubr.bf16.mxu0 0
    %213 = vmatmul.mubr.bf16.gmra.mrb[0].mxu0 %v137
    %v214 = vpop.f32.mrb[0].mxu0
    %v215 = vadd.f32 0.0, %v214
    %v216 = vpop.f32.mrb[0].mxu0
    %v217 = vpop.f32.mrb[0].mxu0
    %v218 = vadd.f32 0.0, %v217
    %v219 = vpop.f32.mrb[0].mxu0
    %220 = vmatprep.mubr.bf16.mxu0 0
    %221 = vmatmul.mubr.bf16.gmra.mrb[0].mxu0 %v140
    %v222 = vpop.f32.mrb[0].mxu0
    %v223 = vadd.f32 0.0, %v222
    %v224 = vpop.f32.mrb[0].mxu0
    %v225 = vpop.f32.mrb[0].mxu0
    %v226 = vadd.f32 0.0, %v225
    %v227 = vpop.f32.mrb[0].mxu0
    %228 = vmatprep.mubr.bf16.mxu0 0
    %229 = vmatmul.mubr.bf16.gmra.mrb[0].mxu0 %v143
    %v230 = vpop.f32.mrb[0].mxu0
    %v231 = vadd.f32 0.0, %v230
    %v232 = vpop.f32.mrb[0].mxu0
    %v233 = vpop.f32.mrb[0].mxu0
    %v234 = vadd.f32 0.0, %v233
    %v235 = vpop.f32.mrb[0].mxu0
    %236 = vmatprep.mubr.bf16.mxu0 0
    %237 = vmatmul.mubr.bf16.gmra.mrb[0].mxu0 %v146
    %v238 = vpop.f32.mrb[0].mxu0
    %v239 = vadd.f32 0.0, %v238
    %v240 = vpop.f32.mrb[0].mxu0
    %v241 = vpop.f32.mrb[0].mxu0
    %v242 = vadd.f32 0.0, %v241
    %v243 = vpop.f32.mrb[0].mxu0
    %244 = vmatprep.mubr.bf16.mxu0 0
    %245 = vmatmul.mubr.bf16.gmra.mrb[0].mxu0 %v149
    %v246 = vpop.f32.mrb[0].mxu0
    %v247 = vadd.f32 0.0, %v246
    %v248 = vpop.f32.mrb[0].mxu0
    %v249 = vpop.f32.mrb[0].mxu0
    %v250 = vadd.f32 0.0, %v249
    %v251 = vpop.f32.mrb[0].mxu0
    %252 = vmatprep.mubr.bf16.mxu0 0
    %253 = vmatmul.mubr.bf16.gmra.mrb[0].mxu0 %v152
    %v254 = vpop.f32.mrb[0].mxu0
    %v255 = vadd.f32 0.0, %v254
    %v256 = vpop.f32.mrb[0].mxu0
    %v257 = vpop.f32.mrb[0].mxu0
    %v258 = vadd.f32 0.0, %v257
    %v259 = vpop.f32.mrb[0].mxu0
    %260 = vmatprep.mubr.bf16.mxu0 0
    %261 = vmatmul.mubr.bf16.gmra.mrb[0].mxu0 %v155
    %v262 = vpop.f32.mrb[0].mxu0
    %v263 = vadd.f32 0.0, %v262
    %v264 = vpop.f32.mrb[0].mxu0
    %v265 = vpop.f32.mrb[0].mxu0
    %v266 = vpop.f32.mrb[0].mxu0
    %267 = vdwg.mxu0
    %vm268 = vcmask 326656
    %269 = vst.msk [vmem:[#allocation7] sm:$0xff] %vm268, %v199
    %270 = vst.msk [vmem:[#allocation7 + $0x8] sm:$0xff] %vm268, %v202
    %271 = vst.msk [vmem:[#allocation7 + $0x10] sm:$0xff] %vm268, %v207
    %272 = vst.msk [vmem:[#allocation7 + $0x18] sm:$0xff] %vm268, %v210
    %273 = vst.msk [vmem:[#allocation7 + $0x20] sm:$0xff] %vm268, %v215
    %274 = vst.msk [vmem:[#allocation7 + $0x28] sm:$0xff] %vm268, %v218
    %275 = vst.msk [vmem:[#allocation7 + $0x30] sm:$0xff] %vm268, %v223
    %276 = vst.msk [vmem:[#allocation7 + $0x38] sm:$0xff] %vm268, %v226
    %277 = vst.msk [vmem:[#allocation7 + $0x40] sm:$0xff] %vm268, %v231
    %278 = vst.msk [vmem:[#allocation7 + $0x48] sm:$0xff] %vm268, %v234
    %279 = vst.msk [vmem:[#allocation7 + $0x50] sm:$0xff] %vm268, %v239
    %280 = vst.msk [vmem:[#allocation7 + $0x58] sm:$0xff] %vm268, %v242
    %281 = vst.msk [vmem:[#allocation7 + $0x60] sm:$0xff] %vm268, %v247
    %282 = vst.msk [vmem:[#allocation7 + $0x68] sm:$0xff] %vm268, %v250
    %283 = vst.msk [vmem:[#allocation7 + $0x70] sm:$0xff] %vm268, %v255
    %284 = vst.msk [vmem:[#allocation7 + $0x78] sm:$0xff] %vm268, %v258
    %285 = vst.msk [vmem:[#allocation7 + $0x80] sm:$0xff] %vm268, %v263
    // Predicated region
    $region18: #{model_forward.10} parent=1 // pred_check
      _
    $region19: #{model_forward.10} parent=1 // pred_check_branch
      %287 = sbr.rel (0) target = $region21
    $region20: #{model_forward.10} parent=1 // pred_region
      %s289 = ssub.s32 2176, 2176
      %290 = vsyncadd [#allocation4], %s289
      %s291 = sshll.u32 [#allocation7], 4
      %s292 = int_to_ptr.vmem [resolvable:$true] %s291
      %297 = dma.vmem_to_hbm [thread:$0]  %s292, 2176, %s2, [#allocation4], 128, 128, 8
    $region21: #{model_forward.10} parent=1 // pred_fallthru
      _
    // Predicated region
    $region22: #{model_forward.10} parent=1 // pred_check
      _
    $region23: #{model_forward.10} parent=1 // pred_check_branch
      %299 = sbr.rel (0) target = $region25
    $region24: #{model_forward.10} parent=1 // pred_region
      %300 = dma.done [#allocation4], 2176
    $region25: #{model_forward.10} parent=1 // pred_fallthru
      _
    %301 = vsyncpa [#allocation3], 1
    %302 = vsyncpa [#allocation6], 1
    %303 = vsyncpa [#allocation4], 1

// kernel: model_forward.11
$region0: #{model_forward.11}
  #allocation0 [shape = 'u32[]', space=smem, size = 0x4, offset = 0x4, fixed_abs, tag = 'smem constant byte address 0x4 - core index']
  #allocation1 [shape = 'u32[144,128]{1,0:T(1,128)}', space=vmem, size = 0x12000, scoped, tag = 'internal scratch']
  %s0 = inlined_call_operand.hbm [shape: bf16[648,8], index: 0, kind: input, shape index: {}]
  %s1 = inlined_call_operand.hbm [shape: bf16[8,4], index: 1, kind: input, shape index: {}]
  %s2 = inlined_call_operand.hbm [shape: f32[648,4], index: 2, kind: output, shape index: {}]
  %s3 = sld [smem:[#allocation0]]
  $region49: #{model_forward.11} parent=0
    _
  %s5 = ssub.s32 1, %s3
  %s6 = scalar_select 0, %s5, %s3
  $region1: #{model_forward.11} parent=0
    #allocation2 [shape = 'u8[110592]{0}', space=vmem, size = 0x1b000, scoped, tag = 'input window, operand 0']
    #allocation3 [shape = 's32[2]{0}', space=sflag, size = 0x8, scoped, tag = 'scoped memory for model_forward.11']
    #allocation4 [shape = 's32[2]{0}', space=sflag, size = 0x8, scoped, tag = 'scoped memory for model_forward.11']
    #allocation5 [shape = 'u8[2048]{0}', space=vmem, size = 0x800, scoped, tag = 'input window, operand 1, single buffered']
    #allocation6 [shape = 's32[1]{0}', space=sflag, size = 0x4, scoped, tag = 'scoped memory for model_forward.11']
    #allocation7 [shape = 'u8[221184]{0}', space=vmem, size = 0x36000, scoped, tag = 'output window, operand 0']
    %7 = vsyncpa [#allocation3], 0
    %s8 = scalar_lea.sflag [#allocation3], 1
    %9 = vsyncpa %s8, 0
    %10 = vsyncpa [#allocation6], 0
    %11 = vsyncpa [#allocation4], 0
    %s12 = scalar_lea.sflag [#allocation4], 1
    %13 = vsyncpa %s12, 0
    loop: start=0, step=1, limit=5
    $region2: #{model_forward.11} parent=1 // loop_pre_header
      _
    $region3: #{model_forward.11} parent=1 // loop_header
      %s15 = sphi 0, %s19
      %p16 = scmp.ge.s32.totalorder %s15, 5
      %s25 = sphi 0, %s27
      %s28 = sphi 0, %s25
      %s29 = sphi 0, %s28
      %s45 = sphi 0, %s29
      %s49 = sphi 0, %s49
      %s51 = sphi 0, %s49
      %s52 = sphi 0, %s51
      %s66 = sphi 0, %s52
      %s72 = sphi 0, %s74
      %s75 = sphi 0, %s72
      %s76 = sphi 0, %s75
      %s92 = sphi 0, %s76
    $region4: #{model_forward.11} parent=1 // loop_header_branch
      %18 = sbr.rel (%p16) target = $region8
    $region5: #{model_forward.11} parent=1 // loop_body
      %s20 = ssub.s32 %s15, 1
      %s21 = ssub.s32 %s15, 2
      %s22 = sadd.s32 %s15, 1
      %s23 = ssub.s32 %s15, %s22
      %p24 = scmp.eq.s32.totalorder %s23, 0
      %s26 = sadd.s32 %s25, 1
      %s27 = scalar_select %p24, %s25, %s26
      %p30 = pneg %p24
      %p31 = scmp.eq.s32.totalorder %s15, 2
      %p32 = por %p30, %p31
      %p33 = scmp.ne.s32.totalorder %s25, %s28
      %p34 = scmp.eq.s32.totalorder %s15, 0
      %p35 = por %p33, %p34
      %p36 = scmp.ne.s32.totalorder %s25, %s28
      %p37 = scmp.eq.s32.totalorder %s20, 2
      %p38 = por %p36, %p37
      %p39 = scmp.ne.s32.totalorder %s28, %s29
      %p40 = scmp.eq.s32.totalorder %s20, 0
      %p41 = por %p39, %p40
      %p42 = scmp.ne.s32.totalorder %s28, %s29
      %p43 = scmp.eq.s32.totalorder %s21, 2
      %p44 = por %p42, %p43
      %p46 = scmp.ne.s32.totalorder %s29, %s45
      %p47 = scmp.eq.s32.totalorder %s21, 0
      %p48 = por %p46, %p47
      %s50 = sadd.s32 %s49, 1
      %p53 = scmp.eq.s32.totalorder %s15, 2
      %p54 = scmp.ne.s32.totalorder %s49, %s51
      %p55 = scmp.eq.s32.totalorder %s15, 0
      %p56 = por %p54, %p55
      %p57 = scmp.ne.s32.totalorder %s49, %s51
      %p58 = scmp.eq.s32.totalorder %s20, 2
      %p59 = por %p57, %p58
      %p60 = scmp.ne.s32.totalorder %s51, %s52
      %p61 = scmp.eq.s32.totalorder %s20, 0
      %p62 = por %p60, %p61
      %p63 = scmp.ne.s32.totalorder %s51, %s52
      %p64 = scmp.eq.s32.totalorder %s21, 2
      %p65 = por %p63, %p64
      %p67 = scmp.ne.s32.totalorder %s52, %s66
      %p68 = scmp.eq.s32.totalorder %s21, 0
      %p69 = por %p67, %p68
      %s70 = ssub.s32 %s15, %s22
      %p71 = scmp.eq.s32.totalorder %s70, 0
      %s73 = sadd.s32 %s72, 1
      %s74 = scalar_select %p71, %s72, %s73
      %p77 = pneg %p71
      %p78 = scmp.eq.s32.totalorder %s15, 2
      %p79 = por %p77, %p78
      %p80 = scmp.ne.s32.totalorder %s72, %s75
      %p81 = scmp.eq.s32.totalorder %s15, 0
      %p82 = por %p80, %p81
      %p83 = scmp.ne.s32.totalorder %s72, %s75
      %p84 = scmp.eq.s32.totalorder %s20, 2
      %p85 = por %p83, %p84
      %p86 = scmp.ne.s32.totalorder %s75, %s76
      %p87 = scmp.eq.s32.totalorder %s20, 0
      %p88 = por %p86, %p87
      %p89 = scmp.ne.s32.totalorder %s75, %s76
      %p90 = scmp.eq.s32.totalorder %s21, 2
      %p91 = por %p89, %p90
      %p93 = scmp.ne.s32.totalorder %s76, %s92
      %p94 = scmp.eq.s32.totalorder %s21, 0
      %p95 = por %p93, %p94
      %p96 = scmp.le.s32.totalorder 1, %s15
      %p97 = scmp.lt.s32.totalorder %s15, 4
      %p98 = pnand %p96, %p97
      %p99 = pneg %p98
      // Predicated region
      $region9: #{model_forward.11} parent=5 // pred_check
        _
      $region10: #{model_forward.11} parent=5 // pred_check_branch
        %101 = sbr.rel (%p98) target = $region12
      $region11: #{model_forward.11} parent=5 // pred_region
        %s102 = ssub.s32 %s15, 1
        // Predicated region
        $region13: #{model_forward.11} parent=11 // pred_check
          %p103 = pneg %p62
        $region14: #{model_forward.11} parent=11 // pred_check_branch
          %105 = sbr.rel (%p103) target = $region16
        $region15: #{model_forward.11} parent=11 // pred_region
          %s107 = ssub.s32 64, 64
          %108 = vsyncadd [#allocation6], %s107
          %s110 = sshll.u32 [#allocation5], 4
          %s111 = int_to_ptr.vmem [resolvable:$true] %s110
          %113 = dma.hbm_to_vmem [thread:$0]  %s1, 64, %s111, [#allocation6]
        $region16: #{model_forward.11} parent=11 // pred_fallthru
          _
      $region12: #{model_forward.11} parent=5 // pred_fallthru
        _
      %p114 = scmp.lt.s32.totalorder %s15, 3
      // Predicated region
      $region17: #{model_forward.11} parent=5 // pred_check
        %p115 = pneg %p114
      $region18: #{model_forward.11} parent=5 // pred_check_branch
        %117 = sbr.rel (%p115) target = $region20
      $region19: #{model_forward.11} parent=5 // pred_region
        // Predicated region
        $region21: #{model_forward.11} parent=19 // pred_check
          %p118 = pneg %p35
        $region22: #{model_forward.11} parent=19 // pred_check_branch
          %120 = sbr.rel (%p118) target = $region24
        $region23: #{model_forward.11} parent=19 // pred_region
          %s121 = sand.u32 %s25, 1
          %s122 = scalar_lea.sflag [#allocation3], %s121
          %s123 = sand.u32 %s25, 1
          %s124 = smul.addr %s123, 108
          %s125 = scalar_lea.vmem [#allocation2], %s124
          %s126 = smul.u32 27, %s15
          %s128 = ssub.s32 1728, 1728
          %129 = vsyncadd %s122, %s128
          %s130 = smul.addr %s126, 64
          %s131 = scalar_lea.hbm %s0, %s130
          %s132 = sshll.u32 %s125, 4
          %s133 = int_to_ptr.vmem [resolvable:$true] %s132
          %138 = dma.hbm_to_vmem [thread:$0]  %s131, 1728, %s133, %s122, 64, 64, 4
        $region24: #{model_forward.11} parent=19 // pred_fallthru
          _
      $region20: #{model_forward.11} parent=5 // pred_fallthru
        _
      %p139 = scmp.le.s32.totalorder 1, %s15
      %p140 = scmp.lt.s32.totalorder %s15, 4
      %p141 = pnand %p139, %p140
      %p142 = pneg %p141
      // Predicated region
      $region25: #{model_forward.11} parent=5 // pred_check
        _
      $region26: #{model_forward.11} parent=5 // pred_check_branch
        %144 = sbr.rel (%p141) target = $region28
      $region27: #{model_forward.11} parent=5 // pred_region
        %s145 = ssub.s32 %s15, 1
        %s146 = sand.u32 %s28, 1
        %s147 = scalar_lea.sflag [#allocation3], %s146
        %s148 = sand.u32 %s28, 1
        %s149 = smul.addr %s148, 108
        %s150 = scalar_lea.vmem [#allocation2], %s149
        // Predicated region
        $region29: #{model_forward.11} parent=27 // pred_check
          %p151 = pneg %p41
        $region30: #{model_forward.11} parent=27 // pred_check_branch
          %153 = sbr.rel (%p151) target = $region32
        $region31: #{model_forward.11} parent=27 // pred_region
          %154 = dma.done %s147, 1728
        $region32: #{model_forward.11} parent=27 // pred_fallthru
          _
        // Predicated region
        $region33: #{model_forward.11} parent=27 // pred_check
          %p155 = pneg %p62
        $region34: #{model_forward.11} parent=27 // pred_check_branch
          %157 = sbr.rel (%p155) target = $region36
        $region35: #{model_forward.11} parent=27 // pred_region
          %158 = dma.done [#allocation6], 64
        $region36: #{model_forward.11} parent=27 // pred_fallthru
          _
        %s159 = sand.u32 %s28, 1
        %s160 = scalar_lea.sflag [#allocation3], %s159
        %s161 = sand.u32 %s28, 1
        %s162 = smul.addr %s161, 108
        %s163 = scalar_lea.vmem [#allocation2], %s162
        %p164 = pneg %p41
        %p165 = pneg %p38
        %p166 = pneg %p62
        %p167 = pneg %p59
        %p168 = pneg %p88
        %p169 = pneg %p85
        %s170 = sand.u32 %s75, 1
        %s171 = scalar_lea.sflag [#allocation4], %s170
        %s172 = sand.u32 %s75, 1
        %s173 = smul.addr %s172, 216
        %s174 = scalar_lea.vmem [#allocation7], %s173
        %s175 = smul.u32 27, %s20
        %s176 = smul.u32 27, %s20
        %v178 = vld [vmem:[%s150] sm:$0xf]
        %v179 = vld [vmem:[%s150 + $0x4] sm:$0xf]
        %v180 = vld [vmem:[%s150 + $0x8] sm:$0xf]
        %v181 = vld [vmem:[%s150 + $0xc] sm:$0xf]
        %v182 = vld [vmem:[%s150 + $0x10] sm:$0xf]
        %v183 = vld [vmem:[%s150 + $0x14] sm:$0xf]
        %v184 = vld [vmem:[%s150 + $0x18] sm:$0xf]
        %v185 = vld [vmem:[%s150 + $0x1c] sm:$0xf]
        %v186 = vld [vmem:[%s150 + $0x20] sm:$0xf]
        %v187 = vld [vmem:[%s150 + $0x24] sm:$0xf]
        %v188 = vld [vmem:[%s150 + $0x28] sm:$0xf]
        %v189 = vld [vmem:[%s150 + $0x2c] sm:$0xf]
        %v190 = vld [vmem:[%s150 + $0x30] sm:$0xf]
        %v191 = vld [vmem:[%s150 + $0x34] sm:$0xf]
        %v192 = vld [vmem:[%s150 + $0x38] sm:$0xf]
        %v193 = vld [vmem:[%s150 + $0x3c] sm:$0xf]
        %v194 = vld [vmem:[%s150 + $0x40] sm:$0xf]
        %v195 = vld [vmem:[%s150 + $0x44] sm:$0xf]
        %v196 = vld [vmem:[%s150 + $0x48] sm:$0xf]
        %v197 = vld [vmem:[%s150 + $0x4c] sm:$0xf]
        %v198 = vld [vmem:[%s150 + $0x50] sm:$0xf]
        %v199 = vld [vmem:[%s150 + $0x54] sm:$0xf]
        %v200 = vld [vmem:[%s150 + $0x58] sm:$0xf]
        %v201 = vld [vmem:[%s150 + $0x5c] sm:$0xf]
        %v202 = vld [vmem:[%s150 + $0x60] sm:$0xf]
        %v203 = vld [vmem:[%s150 + $0x64] sm:$0xf]
        %v204 = vld [vmem:[%s150 + $0x68] sm:$0xf]
        %v205 = vld [vmem:[#allocation5] sm:$0xf]
        %v233 = vunpack.c.l.b16 %v178
        %v234 = vunpack.c.l.b16 %v179
        %v235 = vunpack.c.l.b16 %v180
        %v236 = vunpack.c.l.b16 %v181
        %v237 = vunpack.c.l.b16 %v182
        %v238 = vunpack.c.l.b16 %v183
        %v239 = vunpack.c.l.b16 %v184
        %v240 = vunpack.c.l.b16 %v185
        %v241 = vunpack.c.l.b16 %v186
        %v242 = vunpack.c.l.b16 %v187
        %v243 = vunpack.c.l.b16 %v188
        %v244 = vunpack.c.l.b16 %v189
        %v245 = vunpack.c.l.b16 %v190
        %v246 = vunpack.c.l.b16 %v191
        %v247 = vunpack.c.l.b16 %v192
        %v248 = vunpack.c.l.b16 %v193
        %v249 = vunpack.c.l.b16 %v194
        %v250 = vunpack.c.l.b16 %v195
        %v251 = vunpack.c.l.b16 %v196
        %v252 = vunpack.c.l.b16 %v197
        %v253 = vunpack.c.l.b16 %v198
        %v254 = vunpack.c.l.b16 %v199
        %v255 = vunpack.c.l.b16 %v200
        %v256 = vunpack.c.l.b16 %v201
        %v257 = vunpack.c.l.b16 %v202
        %v258 = vunpack.c.l.b16 %v203
        %v259 = vunpack.c.l.b16 %v204
        %v260 = vpack.c.b16 %v234, %v233
        %v261 = vpack.c.b16 %v236, %v235
        %v262 = vpack.c.b16 %v238, %v237
        %v263 = vpack.c.b16 %v240, %v239
        %v264 = vpack.c.b16 %v242, %v241
        %v265 = vpack.c.b16 %v244, %v243
        %v266 = vpack.c.b16 %v246, %v245
        %v267 = vpack.c.b16 %v248, %v247
        %v268 = vpack.c.b16 %v250, %v249
        %v269 = vpack.c.b16 %v252, %v251
        %v270 = vpack.c.b16 %v254, %v253
        %v271 = vpack.c.b16 %v256, %v255
        %v272 = vpack.c.b16 %v258, %v257
        %v273 = vpack.c.b16 %v259, %v259
        %vm274 = vcmask 64512
        %v276 = vsel %vm274, %v260, 0
        %v279 = vsel %vm274, %v261, 0
        %v282 = vsel %vm274, %v262, 0
        %v285 = vsel %vm274, %v263, 0
        %v288 = vsel %vm274, %v264, 0
        %v291 = vsel %vm274, %v265, 0
        %v294 = vsel %vm274, %v266, 0
        %v297 = vsel %vm274, %v267, 0
        %v300 = vsel %vm274, %v268, 0
        %v303 = vsel %vm274, %v269, 0
        %v306 = vsel %vm274, %v270, 0
        %v309 = vsel %vm274, %v271, 0
        %v312 = vsel %vm274, %v272, 0
        %v315 = vsel %vm274, %v273, 0
        %vm317 = vcmask 1043456
        %v319 = vsel %vm317, %v205, 0
        %321 = vmatprep.subr.bf16.mxu0 0
        %322 = vmatpush1.bf16.msra.mxu0 %v319
        %323 = vmatprep.subr.bf16.mxu0 0
        %324 = vmatpush1.bf16.msra.mxu0 0
        %325 = vmatprep.subr.bf16.mxu0 0
        %326 = vmatpush1.bf16.msra.mxu0 0
        %327 = vmatprep.subr.bf16.mxu0 0
        %328 = vmatpush1.bf16.msra.mxu0 0
        %329 = vmatprep.subr.bf16.mxu0 0
        %330 = vmatpush1.bf16.msra.mxu0 0
        %331 = vmatprep.subr.bf16.mxu0 0
        %332 = vmatpush1.bf16.msra.mxu0 0
        %333 = vmatprep.subr.bf16.mxu0 0
        %334 = vmatpush1.bf16.msra.mxu0 0
        %335 = vmatprep.subr.bf16.mxu0 0
        %336 = vmatpush1.bf16.msra.mxu0 0
        %337 = vmatprep.subr.bf16.mxu0 0
        %338 = vmatpush1.bf16.msra.mxu0 0
        %339 = vmatprep.subr.bf16.mxu0 0
        %340 = vmatpush1.bf16.msra.mxu0 0
        %341 = vmatprep.subr.bf16.mxu0 0
        %342 = vmatpush1.bf16.msra.mxu0 0
        %343 = vmatprep.subr.bf16.mxu0 0
        %344 = vmatpush1.bf16.msra.mxu0 0
        %345 = vmatprep.subr.bf16.mxu0 0
        %346 = vmatpush1.bf16.msra.mxu0 0
        %347 = vmatprep.subr.bf16.mxu0 0
        %348 = vmatpush1.bf16.msra.mxu0 0
        %349 = vmatprep.subr.bf16.mxu0 0
        %350 = vmatpush1.bf16.msra.mxu0 0
        %351 = vmatprep.subr.bf16.mxu0 0
        %352 = vmatpush1.bf16.msra.mxu0 0
        %353 = vmatprep.mubr.bf16.mxu0 0
        %354 = vmatmul.mubr.bf16.gmra.mrb[0].mxu0 %v276
        %v355 = vpop.f32.mrb[0].mxu0
        %v356 = vadd.f32 0.0, %v355
        %v357 = vpop.f32.mrb[0].mxu0
        %v358 = vpop.f32.mrb[0].mxu0
        %v359 = vadd.f32 0.0, %v358
        %v360 = vpop.f32.mrb[0].mxu0
        %361 = vmatprep.mubr.bf16.mxu0 0
        %362 = vmatmul.mubr.bf16.gmra.mrb[0].mxu0 %v279
        %v363 = vpop.f32.mrb[0].mxu0
        %v364 = vadd.f32 0.0, %v363
        %v365 = vpop.f32.mrb[0].mxu0
        %v366 = vpop.f32.mrb[0].mxu0
        %v367 = vadd.f32 0.0, %v366
        %v368 = vpop.f32.mrb[0].mxu0
        %369 = vmatprep.mubr.bf16.mxu0 0
        %370 = vmatmul.mubr.bf16.gmra.mrb[0].mxu0 %v282
        %v371 = vpop.f32.mrb[0].mxu0
        %v372 = vadd.f32 0.0, %v371
        %v373 = vpop.f32.mrb[0].mxu0
        %v374 = vpop.f32.mrb[0].mxu0
        %v375 = vadd.f32 0.0, %v374
        %v376 = vpop.f32.mrb[0].mxu0
        %377 = vmatprep.mubr.bf16.mxu0 0
        %378 = vmatmul.mubr.bf16.gmra.mrb[0].mxu0 %v285
        %v379 = vpop.f32.mrb[0].mxu0
        %v380 = vadd.f32 0.0, %v379
        %v381 = vpop.f32.mrb[0].mxu0
        %v382 = vpop.f32.mrb[0].mxu0
        %v383 = vadd.f32 0.0, %v382
        %v384 = vpop.f32.mrb[0].mxu0
        %385 = vmatprep.mubr.bf16.mxu0 0
        %386 = vmatmul.mubr.bf16.gmra.mrb[0].mxu0 %v288
        %v387 = vpop.f32.mrb[0].mxu0
        %v388 = vadd.f32 0.0, %v387
        %v389 = vpop.f32.mrb[0].mxu0
        %v390 = vpop.f32.mrb[0].mxu0
        %v391 = vadd.f32 0.0, %v390
        %v392 = vpop.f32.mrb[0].mxu0
        %393 = vmatprep.mubr.bf16.mxu0 0
        %394 = vmatmul.mubr.bf16.gmra.mrb[0].mxu0 %v291
        %v395 = vpop.f32.mrb[0].mxu0
        %v396 = vadd.f32 0.0, %v395
        %v397 = vpop.f32.mrb[0].mxu0
        %v398 = vpop.f32.mrb[0].mxu0
        %v399 = vadd.f32 0.0, %v398
        %v400 = vpop.f32.mrb[0].mxu0
        %401 = vmatprep.mubr.bf16.mxu0 0
        %402 = vmatmul.mubr.bf16.gmra.mrb[0].mxu0 %v294
        %v403 = vpop.f32.mrb[0].mxu0
        %v404 = vadd.f32 0.0, %v403
        %v405 = vpop.f32.mrb[0].mxu0
        %v406 = vpop.f32.mrb[0].mxu0
        %v407 = vadd.f32 0.0, %v406
        %v408 = vpop.f32.mrb[0].mxu0
        %409 = vmatprep.mubr.bf16.mxu0 0
        %410 = vmatmul.mubr.bf16.gmra.mrb[0].mxu0 %v297
        %v411 = vpop.f32.mrb[0].mxu0
        %v412 = vadd.f32 0.0, %v411
        %v413 = vpop.f32.mrb[0].mxu0
        %v414 = vpop.f32.mrb[0].mxu0
        %v415 = vadd.f32 0.0, %v414
        %v416 = vpop.f32.mrb[0].mxu0
        %417 = vmatprep.mubr.bf16.mxu0 0
        %418 = vmatmul.mubr.bf16.gmra.mrb[0].mxu0 %v300
        %v419 = vpop.f32.mrb[0].mxu0
        %v420 = vadd.f32 0.0, %v419
        %v421 = vpop.f32.mrb[0].mxu0
        %v422 = vpop.f32.mrb[0].mxu0
        %v423 = vadd.f32 0.0, %v422
        %v424 = vpop.f32.mrb[0].mxu0
        %425 = vmatprep.mubr.bf16.mxu0 0
        %426 = vmatmul.mubr.bf16.gmra.mrb[0].mxu0 %v303
        %v427 = vpop.f32.mrb[0].mxu0
        %v428 = vadd.f32 0.0, %v427
        %v429 = vpop.f32.mrb[0].mxu0
        %v430 = vpop.f32.mrb[0].mxu0
        %v431 = vadd.f32 0.0, %v430
        %v432 = vpop.f32.mrb[0].mxu0
        %433 = vmatprep.mubr.bf16.mxu0 0
        %434 = vmatmul.mubr.bf16.gmra.mrb[0].mxu0 %v306
        %v435 = vpop.f32.mrb[0].mxu0
        %v436 = vadd.f32 0.0, %v435
        %v437 = vpop.f32.mrb[0].mxu0
        %v438 = vpop.f32.mrb[0].mxu0
        %v439 = vadd.f32 0.0, %v438
        %v440 = vpop.f32.mrb[0].mxu0
        %441 = vmatprep.mubr.bf16.mxu0 0
        %442 = vmatmul.mubr.bf16.gmra.mrb[0].mxu0 %v309
        %v443 = vpop.f32.mrb[0].mxu0
        %v444 = vadd.f32 0.0, %v443
        %v445 = vpop.f32.mrb[0].mxu0
        %v446 = vpop.f32.mrb[0].mxu0
        %v447 = vadd.f32 0.0, %v446
        %v448 = vpop.f32.mrb[0].mxu0
        %449 = vmatprep.mubr.bf16.mxu0 0
        %450 = vmatmul.mubr.bf16.gmra.mrb[0].mxu0 %v312
        %v451 = vpop.f32.mrb[0].mxu0
        %v452 = vadd.f32 0.0, %v451
        %v453 = vpop.f32.mrb[0].mxu0
        %v454 = vpop.f32.mrb[0].mxu0
        %v455 = vadd.f32 0.0, %v454
        %v456 = vpop.f32.mrb[0].mxu0
        %457 = vmatprep.mubr.bf16.mxu0 0
        %458 = vmatmul.mubr.bf16.gmra.mrb[0].mxu0 %v315
        %v459 = vpop.f32.mrb[0].mxu0
        %v460 = vadd.f32 0.0, %v459
        %v461 = vpop.f32.mrb[0].mxu0
        %v462 = vpop.f32.mrb[0].mxu0
        %v463 = vpop.f32.mrb[0].mxu0
        %464 = vdwg.mxu0
        %vm465 = vcmask 31744
        %466 = vst.msk [vmem:[%s174] sm:$0xff] %vm465, %v356
        %467 = vst.msk [vmem:[%s174 + $0x8] sm:$0xff] %vm465, %v359
        %468 = vst.msk [vmem:[%s174 + $0x10] sm:$0xff] %vm465, %v364
        %469 = vst.msk [vmem:[%s174 + $0x18] sm:$0xff] %vm465, %v367
        %470 = vst.msk [vmem:[%s174 + $0x20] sm:$0xff] %vm465, %v372
        %471 = vst.msk [vmem:[%s174 + $0x28] sm:$0xff] %vm465, %v375
        %472 = vst.msk [vmem:[%s174 + $0x30] sm:$0xff] %vm465, %v380
        %473 = vst.msk [vmem:[%s174 + $0x38] sm:$0xff] %vm465, %v383
        %474 = vst.msk [vmem:[%s174 + $0x40] sm:$0xff] %vm465, %v388
        %475 = vst.msk [vmem:[%s174 + $0x48] sm:$0xff] %vm465, %v391
        %476 = vst.msk [vmem:[%s174 + $0x50] sm:$0xff] %vm465, %v396
        %477 = vst.msk [vmem:[%s174 + $0x58] sm:$0xff] %vm465, %v399
        %478 = vst.msk [vmem:[%s174 + $0x60] sm:$0xff] %vm465, %v404
        %479 = vst.msk [vmem:[%s174 + $0x68] sm:$0xff] %vm465, %v407
        %480 = vst.msk [vmem:[%s174 + $0x70] sm:$0xff] %vm465, %v412
        %481 = vst.msk [vmem:[%s174 + $0x78] sm:$0xff] %vm465, %v415
        %482 = vst.msk [vmem:[%s174 + $0x80] sm:$0xff] %vm465, %v420
        %483 = vst.msk [vmem:[%s174 + $0x88] sm:$0xff] %vm465, %v423
        %484 = vst.msk [vmem:[%s174 + $0x90] sm:$0xff] %vm465, %v428
        %485 = vst.msk [vmem:[%s174 + $0x98] sm:$0xff] %vm465, %v431
        %486 = vst.msk [vmem:[%s174 + $0xa0] sm:$0xff] %vm465, %v436
        %487 = vst.msk [vmem:[%s174 + $0xa8] sm:$0xff] %vm465, %v439
        %488 = vst.msk [vmem:[%s174 + $0xb0] sm:$0xff] %vm465, %v444
        %489 = vst.msk [vmem:[%s174 + $0xb8] sm:$0xff] %vm465, %v447
        %490 = vst.msk [vmem:[%s174 + $0xc0] sm:$0xff] %vm465, %v452
        %491 = vst.msk [vmem:[%s174 + $0xc8] sm:$0xff] %vm465, %v455
        %492 = vst.msk [vmem:[%s174 + $0xd0] sm:$0xff] %vm465, %v460
        %s493 = sand.u32 %s75, 1
        %s494 = scalar_lea.sflag [#allocation4], %s493
        %s495 = sand.u32 %s75, 1
        %s496 = smul.addr %s495, 216
        %s497 = scalar_lea.vmem [#allocation7], %s496
        // Predicated region
        $region37: #{model_forward.11} parent=27 // pred_check
          %p498 = pneg %p85
        $region38: #{model_forward.11} parent=27 // pred_check_branch
          %500 = sbr.rel (%p498) target = $region40
        $region39: #{model_forward.11} parent=27 // pred_region
          %s501 = smul.u32 27, %s20
          %s503 = ssub.s32 3456, 3456
          %504 = vsyncadd %s494, %s503
          %s505 = smul.addr %s501, 128
          %s506 = scalar_lea.hbm %s2, %s505
          %s507 = sshll.u32 %s497, 4
          %s508 = int_to_ptr.vmem [resolvable:$true] %s507
          %513 = dma.vmem_to_hbm [thread:$0]  %s508, 3456, %s506, %s494, 128, 128, 8
        $region40: #{model_forward.11} parent=27 // pred_fallthru
          _
      $region28: #{model_forward.11} parent=5 // pred_fallthru
        _
      %p514 = scmp.le.s32.totalorder 2, %s15
      // Predicated region
      $region41: #{model_forward.11} parent=5 // pred_check
        %p515 = pneg %p514
      $region42: #{model_forward.11} parent=5 // pred_check_branch
        %517 = sbr.rel (%p515) target = $region44
      $region43: #{model_forward.11} parent=5 // pred_region
        %s518 = ssub.s32 %s15, 2
        // Predicated region
        $region45: #{model_forward.11} parent=43 // pred_check
          %p519 = pneg %p91
        $region46: #{model_forward.11} parent=43 // pred_check_branch
          %521 = sbr.rel (%p519) target = $region48
        $region47: #{model_forward.11} parent=43 // pred_region
          %s522 = sand.u32 %s76, 1
          %s523 = scalar_lea.sflag [#allocation4], %s522
          %s524 = sand.u32 %s76, 1
          %s525 = smul.addr %s524, 216
          %s526 = scalar_lea.vmem [#allocation7], %s525
          %527 = dma.done %s523, 3456
        $region48: #{model_forward.11} parent=43 // pred_fallthru
          _
      $region44: #{model_forward.11} parent=5 // pred_fallthru
        _
    $region6: #{model_forward.11} parent=1 // loop_footer
      %s19 = sadd.s32 1, %s15
    $region7: #{model_forward.11} parent=1 // loop_footer_branch
      %14 = sbr.rel target = $region3
    $region8: #{model_forward.11} parent=1 // loop_exit
      _
    %528 = vsyncpa [#allocation3], 1
    %s529 = scalar_lea.sflag [#allocation3], 1
    %530 = vsyncpa %s529, 1
    %531 = vsyncpa [#allocation6], 1
    %532 = vsyncpa [#allocation4], 1
    %s533 = scalar_lea.sflag [#allocation4], 1
    %534 = vsyncpa %s533, 1

// kernel: model_forward.12
$region0: #{model_forward.12}
  #allocation0 [shape = 'u32[]', space=smem, size = 0x4, offset = 0x4, fixed_abs, tag = 'smem constant byte address 0x4 - core index']
  #allocation1 [shape = 'u32[144,128]{1,0:T(1,128)}', space=vmem, size = 0x12000, scoped, tag = 'internal scratch']
  %s0 = inlined_call_operand.hbm [shape: bf16[136,32], index: 0, kind: input, shape index: {}]
  %s1 = inlined_call_operand.hbm [shape: bf16[32,40], index: 1, kind: input, shape index: {}]
  %s2 = inlined_call_operand.hbm [shape: f32[136,40], index: 2, kind: output, shape index: {}]
  %s3 = sld [smem:[#allocation0]]
  $region26: #{model_forward.12} parent=0
    _
  %s5 = ssub.s32 1, %s3
  %s6 = scalar_select 0, %s5, %s3
  $region1: #{model_forward.12} parent=0
    #allocation2 [shape = 'u8[34816]{0}', space=vmem, size = 0x8800, scoped, tag = 'input window, operand 0, single buffered']
    #allocation3 [shape = 's32[1]{0}', space=sflag, size = 0x4, scoped, tag = 'scoped memory for model_forward.12']
    #allocation4 [shape = 's32[1]{0}', space=sflag, size = 0x4, scoped, tag = 'scoped memory for model_forward.12']
    #allocation5 [shape = 'u8[8192]{0}', space=vmem, size = 0x2000, scoped, tag = 'input window, operand 1, single buffered']
    #allocation6 [shape = 's32[1]{0}', space=sflag, size = 0x4, scoped, tag = 'scoped memory for model_forward.12']
    #allocation7 [shape = 'u8[69632]{0}', space=vmem, size = 0x11000, scoped, tag = 'output window, operand 0, single buffered']
    %7 = vsyncpa [#allocation3], 0
    %8 = vsyncpa [#allocation6], 0
    %9 = vsyncpa [#allocation4], 0
    // Predicated region
    $region2: #{model_forward.12} parent=1 // pred_check
      _
    $region3: #{model_forward.12} parent=1 // pred_check_branch
      %11 = sbr.rel (0) target = $region5
    $region4: #{model_forward.12} parent=1 // pred_region
      %s13 = ssub.s32 1088, 1088
      %14 = vsyncadd [#allocation3], %s13
      %s15 = sshll.u32 [#allocation2], 4
      %s16 = int_to_ptr.vmem [resolvable:$true] %s15
      %21 = dma.hbm_to_vmem [thread:$0]  %s0, 1088, %s16, [#allocation3], 64, 64, 4
    $region5: #{model_forward.12} parent=1 // pred_fallthru
      _
    // Predicated region
    $region6: #{model_forward.12} parent=1 // pred_check
      _
    $region7: #{model_forward.12} parent=1 // pred_check_branch
      %23 = sbr.rel (0) target = $region9
    $region8: #{model_forward.12} parent=1 // pred_region
      %s25 = ssub.s32 256, 256
      %26 = vsyncadd [#allocation6], %s25
      %s27 = sshll.u32 [#allocation5], 4
      %s28 = int_to_ptr.vmem [resolvable:$true] %s27
      %33 = dma.hbm_to_vmem [thread:$0]  %s1, 256, %s28, [#allocation6], 64, 64, 4
    $region9: #{model_forward.12} parent=1 // pred_fallthru
      _
    // Predicated region
    $region10: #{model_forward.12} parent=1 // pred_check
      _
    $region11: #{model_forward.12} parent=1 // pred_check_branch
      %35 = sbr.rel (0) target = $region13
    $region12: #{model_forward.12} parent=1 // pred_region
      %36 = dma.done [#allocation3], 1088
    $region13: #{model_forward.12} parent=1 // pred_fallthru
      _
    // Predicated region
    $region14: #{model_forward.12} parent=1 // pred_check
      _
    $region15: #{model_forward.12} parent=1 // pred_check_branch
      %38 = sbr.rel (0) target = $region17
    $region16: #{model_forward.12} parent=1 // pred_region
      %39 = dma.done [#allocation6], 256
    $region17: #{model_forward.12} parent=1 // pred_fallthru
      _
    %v41 = vld [vmem:[#allocation2] sm:$0xf]
    %v42 = vld [vmem:[#allocation2 + $0x4] sm:$0xf]
    %v43 = vld [vmem:[#allocation2 + $0x8] sm:$0xf]
    %v44 = vld [vmem:[#allocation2 + $0xc] sm:$0xf]
    %v45 = vld [vmem:[#allocation2 + $0x10] sm:$0xf]
    %v46 = vld [vmem:[#allocation2 + $0x14] sm:$0xf]
    %v47 = vld [vmem:[#allocation2 + $0x18] sm:$0xf]
    %v48 = vld [vmem:[#allocation2 + $0x1c] sm:$0xf]
    %v49 = vld [vmem:[#allocation2 + $0x20] sm:$0xf]
    %v50 = vld [vmem:[#allocation2 + $0x24] sm:$0xf]
    %v51 = vld [vmem:[#allocation2 + $0x28] sm:$0xf]
    %v52 = vld [vmem:[#allocation2 + $0x2c] sm:$0xf]
    %v53 = vld [vmem:[#allocation2 + $0x30] sm:$0xf]
    %v54 = vld [vmem:[#allocation2 + $0x34] sm:$0xf]
    %v55 = vld [vmem:[#allocation2 + $0x38] sm:$0xf]
    %v56 = vld [vmem:[#allocation2 + $0x3c] sm:$0xf]
    %v57 = vld [vmem:[#allocation2 + $0x40] sm:$0xf]
    %v58 = vld [vmem:[#allocation5] sm:$0xf]
    %v59 = vld [vmem:[#allocation5 + $0x4] sm:$0xf]
    %v60 = vld [vmem:[#allocation5 + $0x8] sm:$0xf]
    %v61 = vld [vmem:[#allocation5 + $0xc] sm:$0xf]
    %v79 = vunpack.c.l.b16 %v41
    %v80 = vunpack.c.l.b16 %v42
    %v81 = vunpack.c.l.b16 %v43
    %v82 = vunpack.c.l.b16 %v44
    %v83 = vunpack.c.l.b16 %v45
    %v84 = vunpack.c.l.b16 %v46
    %v85 = vunpack.c.l.b16 %v47
    %v86 = vunpack.c.l.b16 %v48
    %v87 = vunpack.c.l.b16 %v49
    %v88 = vunpack.c.l.b16 %v50
    %v89 = vunpack.c.l.b16 %v51
    %v90 = vunpack.c.l.b16 %v52
    %v91 = vunpack.c.l.b16 %v53
    %v92 = vunpack.c.l.b16 %v54
    %v93 = vunpack.c.l.b16 %v55
    %v94 = vunpack.c.l.b16 %v56
    %v95 = vunpack.c.l.b16 %v57
    %v96 = vpack.c.b16 %v80, %v79
    %v97 = vpack.c.b16 %v82, %v81
    %v98 = vpack.c.b16 %v84, %v83
    %v99 = vpack.c.b16 %v86, %v85
    %v100 = vpack.c.b16 %v88, %v87
    %v101 = vpack.c.b16 %v90, %v89
    %v102 = vpack.c.b16 %v92, %v91
    %v103 = vpack.c.b16 %v94, %v93
    %v104 = vpack.c.b16 %v95, %v95
    %v109 = vunpack.c.l.b16 %v58
    %v110 = vunpack.c.l.b16 %v59
    %v111 = vunpack.c.l.b16 %v60
    %v112 = vunpack.c.l.b16 %v61
    %v113 = vpack.c.b16 %v110, %v109
    %v114 = vpack.c.b16 %v112, %v111
    %vm117 = vcmask 261120
    %v119 = vsel %vm117, %v96, 0
    %v122 = vsel %vm117, %v97, 0
    %v125 = vsel %vm117, %v98, 0
    %v128 = vsel %vm117, %v99, 0
    %v131 = vsel %vm117, %v100, 0
    %v134 = vsel %vm117, %v101, 0
    %v137 = vsel %vm117, %v102, 0
    %v140 = vsel %vm117, %v103, 0
    %v143 = vsel %vm117, %v104, 0
    %145 = vmatprep.subr.bf16.mxu0 0
    %146 = vmatpush1.bf16.msra.mxu0 %v113
    %147 = vmatprep.subr.bf16.mxu0 0
    %148 = vmatpush1.bf16.msra.mxu0 %v114
    %149 = vmatprep.subr.bf16.mxu0 0
    %150 = vmatpush1.bf16.msra.mxu0 0
    %151 = vmatprep.subr.bf16.mxu0 0
    %152 = vmatpush1.bf16.msra.mxu0 0
    %153 = vmatprep.subr.bf16.mxu0 0
    %154 = vmatpush1.bf16.msra.mxu0 0
    %155 = vmatprep.subr.bf16.mxu0 0
    %156 = vmatpush1.bf16.msra.mxu0 0
    %157 = vmatprep.subr.bf16.mxu0 0
    %158 = vmatpush1.bf16.msra.mxu0 0
    %159 = vmatprep.subr.bf16.mxu0 0
    %160 = vmatpush1.bf16.msra.mxu0 0
    %161 = vmatprep.subr.bf16.mxu0 0
    %162 = vmatpush1.bf16.msra.mxu0 0
    %163 = vmatprep.subr.bf16.mxu0 0
    %164 = vmatpush1.bf16.msra.mxu0 0
    %165 = vmatprep.subr.bf16.mxu0 0
    %166 = vmatpush1.bf16.msra.mxu0 0
    %167 = vmatprep.subr.bf16.mxu0 0
    %168 = vmatpush1.bf16.msra.mxu0 0
    %169 = vmatprep.subr.bf16.mxu0 0
    %170 = vmatpush1.bf16.msra.mxu0 0
    %171 = vmatprep.subr.bf16.mxu0 0
    %172 = vmatpush1.bf16.msra.mxu0 0
    %173 = vmatprep.subr.bf16.mxu0 0
    %174 = vmatpush1.bf16.msra.mxu0 0
    %175 = vmatprep.subr.bf16.mxu0 0
    %176 = vmatpush1.bf16.msra.mxu0 0
    %177 = vmatprep.mubr.bf16.mxu0 0
    %178 = vmatmul.mubr.bf16.gmra.mrb[0].mxu0 %v119
    %v179 = vpop.f32.mrb[0].mxu0
    %v180 = vadd.f32 0.0, %v179
    %v181 = vpop.f32.mrb[0].mxu0
    %v182 = vpop.f32.mrb[0].mxu0
    %v183 = vadd.f32 0.0, %v182
    %v184 = vpop.f32.mrb[0].mxu0
    %185 = vmatprep.mubr.bf16.mxu0 0
    %186 = vmatmul.mubr.bf16.gmra.mrb[0].mxu0 %v122
    %v187 = vpop.f32.mrb[0].mxu0
    %v188 = vadd.f32 0.0, %v187
    %v189 = vpop.f32.mrb[0].mxu0
    %v190 = vpop.f32.mrb[0].mxu0
    %v191 = vadd.f32 0.0, %v190
    %v192 = vpop.f32.mrb[0].mxu0
    %193 = vmatprep.mubr.bf16.mxu0 0
    %194 = vmatmul.mubr.bf16.gmra.mrb[0].mxu0 %v125
    %v195 = vpop.f32.mrb[0].mxu0
    %v196 = vadd.f32 0.0, %v195
    %v197 = vpop.f32.mrb[0].mxu0
    %v198 = vpop.f32.mrb[0].mxu0
    %v199 = vadd.f32 0.0, %v198
    %v200 = vpop.f32.mrb[0].mxu0
    %201 = vmatprep.mubr.bf16.mxu0 0
    %202 = vmatmul.mubr.bf16.gmra.mrb[0].mxu0 %v128
    %v203 = vpop.f32.mrb[0].mxu0
    %v204 = vadd.f32 0.0, %v203
    %v205 = vpop.f32.mrb[0].mxu0
    %v206 = vpop.f32.mrb[0].mxu0
    %v207 = vadd.f32 0.0, %v206
    %v208 = vpop.f32.mrb[0].mxu0
    %209 = vmatprep.mubr.bf16.mxu0 0
    %210 = vmatmul.mubr.bf16.gmra.mrb[0].mxu0 %v131
    %v211 = vpop.f32.mrb[0].mxu0
    %v212 = vadd.f32 0.0, %v211
    %v213 = vpop.f32.mrb[0].mxu0
    %v214 = vpop.f32.mrb[0].mxu0
    %v215 = vadd.f32 0.0, %v214
    %v216 = vpop.f32.mrb[0].mxu0
    %217 = vmatprep.mubr.bf16.mxu0 0
    %218 = vmatmul.mubr.bf16.gmra.mrb[0].mxu0 %v134
    %v219 = vpop.f32.mrb[0].mxu0
    %v220 = vadd.f32 0.0, %v219
    %v221 = vpop.f32.mrb[0].mxu0
    %v222 = vpop.f32.mrb[0].mxu0
    %v223 = vadd.f32 0.0, %v222
    %v224 = vpop.f32.mrb[0].mxu0
    %225 = vmatprep.mubr.bf16.mxu0 0
    %226 = vmatmul.mubr.bf16.gmra.mrb[0].mxu0 %v137
    %v227 = vpop.f32.mrb[0].mxu0
    %v228 = vadd.f32 0.0, %v227
    %v229 = vpop.f32.mrb[0].mxu0
    %v230 = vpop.f32.mrb[0].mxu0
    %v231 = vadd.f32 0.0, %v230
    %v232 = vpop.f32.mrb[0].mxu0
    %233 = vmatprep.mubr.bf16.mxu0 0
    %234 = vmatmul.mubr.bf16.gmra.mrb[0].mxu0 %v140
    %v235 = vpop.f32.mrb[0].mxu0
    %v236 = vadd.f32 0.0, %v235
    %v237 = vpop.f32.mrb[0].mxu0
    %v238 = vpop.f32.mrb[0].mxu0
    %v239 = vadd.f32 0.0, %v238
    %v240 = vpop.f32.mrb[0].mxu0
    %241 = vmatprep.mubr.bf16.mxu0 0
    %242 = vmatmul.mubr.bf16.gmra.mrb[0].mxu0 %v143
    %v243 = vpop.f32.mrb[0].mxu0
    %v244 = vadd.f32 0.0, %v243
    %v245 = vpop.f32.mrb[0].mxu0
    %v246 = vpop.f32.mrb[0].mxu0
    %v247 = vpop.f32.mrb[0].mxu0
    %248 = vdwg.mxu0
    %vm249 = vcmask 326656
    %250 = vst.msk [vmem:[#allocation7] sm:$0xff] %vm249, %v180
    %251 = vst.msk [vmem:[#allocation7 + $0x8] sm:$0xff] %vm249, %v183
    %252 = vst.msk [vmem:[#allocation7 + $0x10] sm:$0xff] %vm249, %v188
    %253 = vst.msk [vmem:[#allocation7 + $0x18] sm:$0xff] %vm249, %v191
    %254 = vst.msk [vmem:[#allocation7 + $0x20] sm:$0xff] %vm249, %v196
    %255 = vst.msk [vmem:[#allocation7 + $0x28] sm:$0xff] %vm249, %v199
    %256 = vst.msk [vmem:[#allocation7 + $0x30] sm:$0xff] %vm249, %v204
    %257 = vst.msk [vmem:[#allocation7 + $0x38] sm:$0xff] %vm249, %v207
    %258 = vst.msk [vmem:[#allocation7 + $0x40] sm:$0xff] %vm249, %v212
    %259 = vst.msk [vmem:[#allocation7 + $0x48] sm:$0xff] %vm249, %v215
    %260 = vst.msk [vmem:[#allocation7 + $0x50] sm:$0xff] %vm249, %v220
    %261 = vst.msk [vmem:[#allocation7 + $0x58] sm:$0xff] %vm249, %v223
    %262 = vst.msk [vmem:[#allocation7 + $0x60] sm:$0xff] %vm249, %v228
    %263 = vst.msk [vmem:[#allocation7 + $0x68] sm:$0xff] %vm249, %v231
    %264 = vst.msk [vmem:[#allocation7 + $0x70] sm:$0xff] %vm249, %v236
    %265 = vst.msk [vmem:[#allocation7 + $0x78] sm:$0xff] %vm249, %v239
    %266 = vst.msk [vmem:[#allocation7 + $0x80] sm:$0xff] %vm249, %v244
    // Predicated region
    $region18: #{model_forward.12} parent=1 // pred_check
      _
    $region19: #{model_forward.12} parent=1 // pred_check_branch
      %268 = sbr.rel (0) target = $region21
    $region20: #{model_forward.12} parent=1 // pred_region
      %s270 = ssub.s32 2176, 2176
      %271 = vsyncadd [#allocation4], %s270
      %s272 = sshll.u32 [#allocation7], 4
      %s273 = int_to_ptr.vmem [resolvable:$true] %s272
      %278 = dma.vmem_to_hbm [thread:$0]  %s273, 2176, %s2, [#allocation4], 128, 128, 8
    $region21: #{model_forward.12} parent=1 // pred_fallthru
      _
    // Predicated region
    $region22: #{model_forward.12} parent=1 // pred_check
      _
    $region23: #{model_forward.12} parent=1 // pred_check_branch
      %280 = sbr.rel (0) target = $region25
    $region24: #{model_forward.12} parent=1 // pred_region
      %281 = dma.done [#allocation4], 2176
    $region25: #{model_forward.12} parent=1 // pred_fallthru
      _
    %282 = vsyncpa [#allocation3], 1
    %283 = vsyncpa [#allocation6], 1
    %284 = vsyncpa [#allocation4], 1

// kernel: model_forward.14
$region0: #{model_forward.14}
  #allocation0 [shape = 'u32[]', space=smem, size = 0x4, offset = 0x4, fixed_abs, tag = 'smem constant byte address 0x4 - core index']
  #allocation1 [shape = 'u32[144,128]{1,0:T(1,128)}', space=vmem, size = 0x12000, scoped, tag = 'internal scratch']
  %s0 = inlined_call_operand.hbm [shape: bf16[128,32], index: 0, kind: input, shape index: {}]
  %s1 = inlined_call_operand.hbm [shape: bf16[128,288], index: 1, kind: input, shape index: {}]
  %s2 = inlined_call_operand.hbm [shape: bf16[288,16], index: 2, kind: input, shape index: {}]
  %s3 = inlined_call_operand.hbm [shape: f32[1,16], index: 3, kind: input, shape index: {}]
  %s4 = inlined_call_operand.hbm [shape: bf16[32,512], index: 4, kind: input, shape index: {}]
  %s5 = inlined_call_operand.hbm [shape: bf16[16,512], index: 5, kind: input, shape index: {}]
  %s6 = inlined_call_operand.hbm [shape: f32[1,512], index: 6, kind: input, shape index: {}]
  %s7 = inlined_call_operand.hbm [shape: bf16[512,256], index: 7, kind: input, shape index: {}]
  %s8 = inlined_call_operand.hbm [shape: f32[1,256], index: 8, kind: input, shape index: {}]
  %s9 = inlined_call_operand.hbm [shape: bf16[256,48], index: 9, kind: input, shape index: {}]
  %s10 = inlined_call_operand.hbm [shape: f32[1,48], index: 10, kind: input, shape index: {}]
  %s11 = inlined_call_operand.hbm [shape: f32[128,48], index: 11, kind: output, shape index: {}]
  %s12 = sld [smem:[#allocation0]]
  $region98: #{model_forward.14} parent=0
    _
  %s14 = ssub.s32 1, %s12
  %s15 = scalar_select 0, %s14, %s12
  $region1: #{model_forward.14} parent=0
    #allocation2 [shape = 'u8[32768]{0}', space=vmem, size = 0x8000, scoped, tag = 'input window, operand 0, single buffered']
    #allocation3 [shape = 's32[1]{0}', space=sflag, size = 0x4, scoped, tag = 'scoped memory for model_forward.14']
    #allocation4 [shape = 's32[1]{0}', space=sflag, size = 0x4, scoped, tag = 'scoped memory for model_forward.14']
    #allocation5 [shape = 'u8[98304]{0}', space=vmem, size = 0x18000, scoped, tag = 'input window, operand 1, single buffered']
    #allocation6 [shape = 's32[1]{0}', space=sflag, size = 0x4, scoped, tag = 'scoped memory for model_forward.14']
    #allocation7 [shape = 'u8[73728]{0}', space=vmem, size = 0x12000, scoped, tag = 'input window, operand 2, single buffered']
    #allocation8 [shape = 'u8[512]{0}', space=vmem, size = 0x400, scoped, tag = 'input window, operand 3, single buffered']
    #allocation9 [shape = 's32[1]{0}', space=sflag, size = 0x4, scoped, tag = 'scoped memory for model_forward.14']
    #allocation10 [shape = 'u8[32768]{0}', space=vmem, size = 0x8000, scoped, tag = 'input window, operand 4, single buffered']
    #allocation11 [shape = 'u8[16384]{0}', space=vmem, size = 0x4000, scoped, tag = 'input window, operand 5, single buffered']
    #allocation12 [shape = 's32[1]{0}', space=sflag, size = 0x4, scoped, tag = 'scoped memory for model_forward.14']
    #allocation13 [shape = 'u8[2048]{0}', space=vmem, size = 0x800, scoped, tag = 'input window, operand 6, single buffered']
    #allocation14 [shape = 'u8[262144]{0}', space=vmem, size = 0x40000, scoped, tag = 'input window, operand 7, single buffered']
    #allocation15 [shape = 's32[1]{0}', space=sflag, size = 0x4, scoped, tag = 'scoped memory for model_forward.14']
    #allocation16 [shape = 'u8[1024]{0}', space=vmem, size = 0x400, scoped, tag = 'input window, operand 8, single buffered']
    #allocation17 [shape = 'u8[65536]{0}', space=vmem, size = 0x10000, scoped, tag = 'input window, operand 9, single buffered']
    #allocation18 [shape = 's32[1]{0}', space=sflag, size = 0x4, scoped, tag = 'scoped memory for model_forward.14']
    #allocation19 [shape = 'u8[512]{0}', space=vmem, size = 0x400, scoped, tag = 'input window, operand 10, single buffered']
    #allocation20 [shape = 'u8[65536]{0}', space=vmem, size = 0x10000, scoped, tag = 'output window, operand 0, single buffered']
    %16 = vsyncpa [#allocation3], 0
    %17 = vsyncpa [#allocation6], 0
    %18 = vsyncpa [#allocation9], 0
    %19 = vsyncpa [#allocation12], 0
    %20 = vsyncpa [#allocation15], 0
    %21 = vsyncpa [#allocation18], 0
    %22 = vsyncpa [#allocation4], 0
    // Predicated region
    $region2: #{model_forward.14} parent=1 // pred_check
      _
    $region3: #{model_forward.14} parent=1 // pred_check_branch
      %24 = sbr.rel (0) target = $region5
    $region4: #{model_forward.14} parent=1 // pred_region
      %s26 = ssub.s32 1024, 1024
      %27 = vsyncadd [#allocation3], %s26
      %s28 = sshll.u32 [#allocation2], 4
      %s29 = int_to_ptr.vmem [resolvable:$true] %s28
      %34 = dma.hbm_to_vmem [thread:$0]  %s0, 1024, %s29, [#allocation3], 64, 64, 4
    $region5: #{model_forward.14} parent=1 // pred_fallthru
      _
    // Predicated region
    $region6: #{model_forward.14} parent=1 // pred_check
      _
    $region7: #{model_forward.14} parent=1 // pred_check_branch
      %36 = sbr.rel (0) target = $region9
    $region8: #{model_forward.14} parent=1 // pred_region
      %s38 = ssub.s32 3072, 3072
      %39 = vsyncadd [#allocation6], %s38
      %s40 = sshll.u32 [#allocation5], 4
      %s41 = int_to_ptr.vmem [resolvable:$true] %s40
      %46 = dma.hbm_to_vmem [thread:$0]  %s1, 3072, %s41, [#allocation6], 192, 192, 12
    $region9: #{model_forward.14} parent=1 // pred_fallthru
      _
    // Predicated region
    $region10: #{model_forward.14} parent=1 // pred_check
      _
    $region11: #{model_forward.14} parent=1 // pred_check_branch
      %48 = sbr.rel (0) target = $region13
    $region12: #{model_forward.14} parent=1 // pred_region
      %s50 = ssub.s32 2304, 2304
      %51 = vsyncadd [#allocation6], %s50
      %s52 = sshll.u32 [#allocation7], 4
      %s53 = int_to_ptr.vmem [resolvable:$true] %s52
      %58 = dma.hbm_to_vmem [thread:$0]  %s2, 2304, %s53, [#allocation6], 64, 64, 4
    $region13: #{model_forward.14} parent=1 // pred_fallthru
      _
    // Predicated region
    $region14: #{model_forward.14} parent=1 // pred_check
      _
    $region15: #{model_forward.14} parent=1 // pred_check_branch
      %60 = sbr.rel (0) target = $region17
    $region16: #{model_forward.14} parent=1 // pred_region
      %s62 = ssub.s32 16, 16
      %63 = vsyncadd [#allocation9], %s62
      %s65 = sshll.u32 [#allocation8], 4
      %s66 = int_to_ptr.vmem [resolvable:$true] %s65
      %68 = dma.hbm_to_vmem [thread:$0]  %s3, 16, %s66, [#allocation9]
    $region17: #{model_forward.14} parent=1 // pred_fallthru
      _
    // Predicated region
    $region18: #{model_forward.14} parent=1 // pred_check
      _
    $region19: #{model_forward.14} parent=1 // pred_check_branch
      %70 = sbr.rel (0) target = $region21
    $region20: #{model_forward.14} parent=1 // pred_region
      %s72 = ssub.s32 1024, 1024
      %73 = vsyncadd [#allocation9], %s72
      %s74 = sshll.u32 [#allocation10], 4
      %s75 = int_to_ptr.vmem [resolvable:$true] %s74
      %80 = dma.hbm_to_vmem [thread:$0]  %s4, 1024, %s75, [#allocation9], 256, 256, 16
    $region21: #{model_forward.14} parent=1 // pred_fallthru
      _
    // Predicated region
    $region22: #{model_forward.14} parent=1 // pred_check
      _
    $region23: #{model_forward.14} parent=1 // pred_check_branch
      %82 = sbr.rel (0) target = $region25
    $region24: #{model_forward.14} parent=1 // pred_region
      %s84 = ssub.s32 512, 512
      %85 = vsyncadd [#allocation12], %s84
      %s86 = sshll.u32 [#allocation11], 4
      %s87 = int_to_ptr.vmem [resolvable:$true] %s86
      %92 = dma.hbm_to_vmem [thread:$0]  %s5, 512, %s87, [#allocation12], 256, 256, 16
    $region25: #{model_forward.14} parent=1 // pred_fallthru
      _
    // Predicated region
    $region26: #{model_forward.14} parent=1 // pred_check
      _
    $region27: #{model_forward.14} parent=1 // pred_check_branch
      %94 = sbr.rel (0) target = $region29
    $region28: #{model_forward.14} parent=1 // pred_region
      %s96 = ssub.s32 64, 64
      %97 = vsyncadd [#allocation12], %s96
      %s99 = sshll.u32 [#allocation13], 4
      %s100 = int_to_ptr.vmem [resolvable:$true] %s99
      %102 = dma.hbm_to_vmem [thread:$0]  %s6, 64, %s100, [#allocation12]
    $region29: #{model_forward.14} parent=1 // pred_fallthru
      _
    // Predicated region
    $region30: #{model_forward.14} parent=1 // pred_check
      _
    $region31: #{model_forward.14} parent=1 // pred_check_branch
      %104 = sbr.rel (0) target = $region33
    $region32: #{model_forward.14} parent=1 // pred_region
      %s106 = ssub.s32 8192, 8192
      %107 = vsyncadd [#allocation15], %s106
      %s108 = sshll.u32 [#allocation14], 4
      %s109 = int_to_ptr.vmem [resolvable:$true] %s108
      %114 = dma.hbm_to_vmem [thread:$0]  %s7, 8192, %s109, [#allocation15], 128, 128, 8
    $region33: #{model_forward.14} parent=1 // pred_fallthru
      _
    // Predicated region
    $region34: #{model_forward.14} parent=1 // pred_check
      _
    $region35: #{model_forward.14} parent=1 // pred_check_branch
      %116 = sbr.rel (0) target = $region37
    $region36: #{model_forward.14} parent=1 // pred_region
      %s118 = ssub.s32 32, 32
      %119 = vsyncadd [#allocation15], %s118
      %s121 = sshll.u32 [#allocation16], 4
      %s122 = int_to_ptr.vmem [resolvable:$true] %s121
      %124 = dma.hbm_to_vmem [thread:$0]  %s8, 32, %s122, [#allocation15]
    $region37: #{model_forward.14} parent=1 // pred_fallthru
      _
    // Predicated region
    $region38: #{model_forward.14} parent=1 // pred_check
      _
    $region39: #{model_forward.14} parent=1 // pred_check_branch
      %126 = sbr.rel (0) target = $region41
    $region40: #{model_forward.14} parent=1 // pred_region
      %s128 = ssub.s32 2048, 2048
      %129 = vsyncadd [#allocation18], %s128
      %s130 = sshll.u32 [#allocation17], 4
      %s131 = int_to_ptr.vmem [resolvable:$true] %s130
      %136 = dma.hbm_to_vmem [thread:$0]  %s9, 2048, %s131, [#allocation18], 64, 64, 4
    $region41: #{model_forward.14} parent=1 // pred_fallthru
      _
    // Predicated region
    $region42: #{model_forward.14} parent=1 // pred_check
      _
    $region43: #{model_forward.14} parent=1 // pred_check_branch
      %138 = sbr.rel (0) target = $region45
    $region44: #{model_forward.14} parent=1 // pred_region
      %s140 = ssub.s32 16, 16
      %141 = vsyncadd [#allocation18], %s140
      %s143 = sshll.u32 [#allocation19], 4
      %s144 = int_to_ptr.vmem [resolvable:$true] %s143
      %146 = dma.hbm_to_vmem [thread:$0]  %s10, 16, %s144, [#allocation18]
    $region45: #{model_forward.14} parent=1 // pred_fallthru
      _
    // Predicated region
    $region46: #{model_forward.14} parent=1 // pred_check
      _
    $region47: #{model_forward.14} parent=1 // pred_check_branch
      %148 = sbr.rel (0) target = $region49
    $region48: #{model_forward.14} parent=1 // pred_region
      %149 = dma.done [#allocation3], 1024
    $region49: #{model_forward.14} parent=1 // pred_fallthru
      _
    // Predicated region
    $region50: #{model_forward.14} parent=1 // pred_check
      _
    $region51: #{model_forward.14} parent=1 // pred_check_branch
      %151 = sbr.rel (0) target = $region53
    $region52: #{model_forward.14} parent=1 // pred_region
      %152 = dma.done [#allocation6], 3072
    $region53: #{model_forward.14} parent=1 // pred_fallthru
      _
    // Predicated region
    $region54: #{model_forward.14} parent=1 // pred_check
      _
    $region55: #{model_forward.14} parent=1 // pred_check_branch
      %154 = sbr.rel (0) target = $region57
    $region56: #{model_forward.14} parent=1 // pred_region
      %155 = dma.done [#allocation6], 2304
    $region57: #{model_forward.14} parent=1 // pred_fallthru
      _
    // Predicated region
    $region58: #{model_forward.14} parent=1 // pred_check
      _
    $region59: #{model_forward.14} parent=1 // pred_check_branch
      %157 = sbr.rel (0) target = $region61
    $region60: #{model_forward.14} parent=1 // pred_region
      %158 = dma.done [#allocation9], 16
    $region61: #{model_forward.14} parent=1 // pred_fallthru
      _
    // Predicated region
    $region62: #{model_forward.14} parent=1 // pred_check
      _
    $region63: #{model_forward.14} parent=1 // pred_check_branch
      %160 = sbr.rel (0) target = $region65
    $region64: #{model_forward.14} parent=1 // pred_region
      %161 = dma.done [#allocation9], 1024
    $region65: #{model_forward.14} parent=1 // pred_fallthru
      _
    // Predicated region
    $region66: #{model_forward.14} parent=1 // pred_check
      _
    $region67: #{model_forward.14} parent=1 // pred_check_branch
      %163 = sbr.rel (0) target = $region69
    $region68: #{model_forward.14} parent=1 // pred_region
      %164 = dma.done [#allocation12], 512
    $region69: #{model_forward.14} parent=1 // pred_fallthru
      _
    // Predicated region
    $region70: #{model_forward.14} parent=1 // pred_check
      _
    $region71: #{model_forward.14} parent=1 // pred_check_branch
      %166 = sbr.rel (0) target = $region73
    $region72: #{model_forward.14} parent=1 // pred_region
      %167 = dma.done [#allocation12], 64
    $region73: #{model_forward.14} parent=1 // pred_fallthru
      _
    // Predicated region
    $region74: #{model_forward.14} parent=1 // pred_check
      _
    $region75: #{model_forward.14} parent=1 // pred_check_branch
      %169 = sbr.rel (0) target = $region77
    $region76: #{model_forward.14} parent=1 // pred_region
      %170 = dma.done [#allocation15], 8192
    $region77: #{model_forward.14} parent=1 // pred_fallthru
      _
    // Predicated region
    $region78: #{model_forward.14} parent=1 // pred_check
      _
    $region79: #{model_forward.14} parent=1 // pred_check_branch
      %172 = sbr.rel (0) target = $region81
    $region80: #{model_forward.14} parent=1 // pred_region
      %173 = dma.done [#allocation15], 32
    $region81: #{model_forward.14} parent=1 // pred_fallthru
      _
    // Predicated region
    $region82: #{model_forward.14} parent=1 // pred_check
      _
    $region83: #{model_forward.14} parent=1 // pred_check_branch
      %175 = sbr.rel (0) target = $region85
    $region84: #{model_forward.14} parent=1 // pred_region
      %176 = dma.done [#allocation18], 2048
    $region85: #{model_forward.14} parent=1 // pred_fallthru
      _
    // Predicated region
    $region86: #{model_forward.14} parent=1 // pred_check
      _
    $region87: #{model_forward.14} parent=1 // pred_check_branch
      %178 = sbr.rel (0) target = $region89
    $region88: #{model_forward.14} parent=1 // pred_region
      %179 = dma.done [#allocation18], 16
    $region89: #{model_forward.14} parent=1 // pred_fallthru
      _
    %v181 = vld [vmem:[#allocation5] sm:$0xff]
    %v182 = vld [vmem:[#allocation5 + $0x8] sm:$0xf]
    %v183 = vld [vmem:[#allocation5 + $0xc] sm:$0xff]
    %v184 = vld [vmem:[#allocation5 + $0x14] sm:$0xf]
    %v185 = vld [vmem:[#allocation5 + $0x18] sm:$0xff]
    %v186 = vld [vmem:[#allocation5 + $0x20] sm:$0xf]
    %v187 = vld [vmem:[#allocation5 + $0x24] sm:$0xff]
    %v188 = vld [vmem:[#allocation5 + $0x2c] sm:$0xf]
    %v189 = vld [vmem:[#allocation5 + $0x30] sm:$0xff]
    %v190 = vld [vmem:[#allocation5 + $0x38] sm:$0xf]
    %v191 = vld [vmem:[#allocation5 + $0x3c] sm:$0xff]
    %v192 = vld [vmem:[#allocation5 + $0x44] sm:$0xf]
    %v193 = vld [vmem:[#allocation5 + $0x48] sm:$0xff]
    %v194 = vld [vmem:[#allocation5 + $0x50] sm:$0xf]
    %v195 = vld [vmem:[#allocation5 + $0x54] sm:$0xff]
    %v196 = vld [vmem:[#allocation5 + $0x5c] sm:$0xf]
    %v197 = vld [vmem:[#allocation5 + $0x60] sm:$0xff]
    %v198 = vld [vmem:[#allocation5 + $0x68] sm:$0xf]
    %v199 = vld [vmem:[#allocation5 + $0x6c] sm:$0xff]
    %v200 = vld [vmem:[#allocation5 + $0x74] sm:$0xf]
    %v201 = vld [vmem:[#allocation5 + $0x78] sm:$0xff]
    %v202 = vld [vmem:[#allocation5 + $0x80] sm:$0xf]
    %v203 = vld [vmem:[#allocation5 + $0x84] sm:$0xff]
    %v204 = vld [vmem:[#allocation5 + $0x8c] sm:$0xf]
    %v205 = vld [vmem:[#allocation5 + $0x90] sm:$0xff]
    %v206 = vld [vmem:[#allocation5 + $0x98] sm:$0xf]
    %v207 = vld [vmem:[#allocation5 + $0x9c] sm:$0xff]
    %v208 = vld [vmem:[#allocation5 + $0xa4] sm:$0xf]
    %v209 = vld [vmem:[#allocation5 + $0xa8] sm:$0xff]
    %v210 = vld [vmem:[#allocation5 + $0xb0] sm:$0xf]
    %v211 = vld [vmem:[#allocation5 + $0xb4] sm:$0xff]
    %v212 = vld [vmem:[#allocation5 + $0xbc] sm:$0xf]
    %v213 = vld [vmem:[#allocation7] sm:$0xf]
    %v214 = vld [vmem:[#allocation7 + $0x4] sm:$0xf]
    %v215 = vld [vmem:[#allocation7 + $0x8] sm:$0xf]
    %v216 = vld [vmem:[#allocation7 + $0xc] sm:$0xf]
    %v217 = vld [vmem:[#allocation7 + $0x10] sm:$0xf]
    %v218 = vld [vmem:[#allocation7 + $0x14] sm:$0xf]
    %v219 = vld [vmem:[#allocation7 + $0x18] sm:$0xf]
    %v220 = vld [vmem:[#allocation7 + $0x1c] sm:$0xf]
    %v221 = vld [vmem:[#allocation7 + $0x20] sm:$0xf]
    %v222 = vld [vmem:[#allocation7 + $0x24] sm:$0xf]
    %v223 = vld [vmem:[#allocation7 + $0x28] sm:$0xf]
    %v224 = vld [vmem:[#allocation7 + $0x2c] sm:$0xf]
    %v225 = vld [vmem:[#allocation7 + $0x30] sm:$0xf]
    %v226 = vld [vmem:[#allocation7 + $0x34] sm:$0xf]
    %v227 = vld [vmem:[#allocation7 + $0x38] sm:$0xf]
    %v228 = vld [vmem:[#allocation7 + $0x3c] sm:$0xf]
    %v229 = vld [vmem:[#allocation7 + $0x40] sm:$0xf]
    %v230 = vld [vmem:[#allocation7 + $0x44] sm:$0xf]
    %v231 = vld [vmem:[#allocation7 + $0x48] sm:$0xf]
    %v232 = vld [vmem:[#allocation7 + $0x4c] sm:$0xf]
    %v233 = vld [vmem:[#allocation7 + $0x50] sm:$0xf]
    %v234 = vld [vmem:[#allocation7 + $0x54] sm:$0xf]
    %v235 = vld [vmem:[#allocation7 + $0x58] sm:$0xf]
    %v236 = vld [vmem:[#allocation7 + $0x5c] sm:$0xf]
    %v237 = vld [vmem:[#allocation7 + $0x60] sm:$0xf]
    %v238 = vld [vmem:[#allocation7 + $0x64] sm:$0xf]
    %v239 = vld [vmem:[#allocation7 + $0x68] sm:$0xf]
    %v240 = vld [vmem:[#allocation7 + $0x6c] sm:$0xf]
    %v241 = vld [vmem:[#allocation7 + $0x70] sm:$0xf]
    %v242 = vld [vmem:[#allocation7 + $0x74] sm:$0xf]
    %v243 = vld [vmem:[#allocation7 + $0x78] sm:$0xf]
    %v244 = vld [vmem:[#allocation7 + $0x7c] sm:$0xf]
    %v245 = vld [vmem:[#allocation7 + $0x80] sm:$0xf]
    %v246 = vld [vmem:[#allocation7 + $0x84] sm:$0xf]
    %v247 = vld [vmem:[#allocation7 + $0x88] sm:$0xf]
    %v248 = vld [vmem:[#allocation7 + $0x8c] sm:$0xf]
    %v249 = vld [vmem:[#allocation8] sm:$0x1]
    %v251 = vlaneseq
    %v252 = vshrl.u32 %v251, 7
    %v253 = vsub.s32 0, %v252
    %v254 = vrot.slane %v249, %v253
    %v288 = vunpack.c.l.b16 %v181
    %v289 = vunpack.c.h.b16 %v181
    %v290 = vunpack.c.l.b16 %v182
    %v291 = vunpack.c.l.b16 %v183
    %v292 = vunpack.c.h.b16 %v183
    %v293 = vunpack.c.l.b16 %v184
    %v294 = vunpack.c.l.b16 %v185
    %v295 = vunpack.c.h.b16 %v185
    %v296 = vunpack.c.l.b16 %v186
    %v297 = vunpack.c.l.b16 %v187
    %v298 = vunpack.c.h.b16 %v187
    %v299 = vunpack.c.l.b16 %v188
    %v300 = vunpack.c.l.b16 %v189
    %v301 = vunpack.c.h.b16 %v189
    %v302 = vunpack.c.l.b16 %v190
    %v303 = vunpack.c.l.b16 %v191
    %v304 = vunpack.c.h.b16 %v191
    %v305 = vunpack.c.l.b16 %v192
    %v306 = vunpack.c.l.b16 %v193
    %v307 = vunpack.c.h.b16 %v193
    %v308 = vunpack.c.l.b16 %v194
    %v309 = vunpack.c.l.b16 %v195
    %v310 = vunpack.c.h.b16 %v195
    %v311 = vunpack.c.l.b16 %v196
    %v312 = vunpack.c.l.b16 %v197
    %v313 = vunpack.c.h.b16 %v197
    %v314 = vunpack.c.l.b16 %v198
    %v315 = vunpack.c.l.b16 %v199
    %v316 = vunpack.c.h.b16 %v199
    %v317 = vunpack.c.l.b16 %v200
    %v318 = vunpack.c.l.b16 %v201
    %v319 = vunpack.c.h.b16 %v201
    %v320 = vunpack.c.l.b16 %v202
    %v321 = vunpack.c.l.b16 %v203
    %v322 = vunpack.c.h.b16 %v203
    %v323 = vunpack.c.l.b16 %v204
    %v324 = vunpack.c.l.b16 %v205
    %v325 = vunpack.c.h.b16 %v205
    %v326 = vunpack.c.l.b16 %v206
    %v327 = vunpack.c.l.b16 %v207
    %v328 = vunpack.c.h.b16 %v207
    %v329 = vunpack.c.l.b16 %v208
    %v330 = vunpack.c.l.b16 %v209
    %v331 = vunpack.c.h.b16 %v209
    %v332 = vunpack.c.l.b16 %v210
    %v333 = vunpack.c.l.b16 %v211
    %v334 = vunpack.c.h.b16 %v211
    %v335 = vunpack.c.l.b16 %v212
    %v336 = vpack.c.b16 %v291, %v288
    %v337 = vpack.c.b16 %v292, %v289
    %v338 = vpack.c.b16 %v293, %v290
    %v339 = vpack.c.b16 %v297, %v294
    %v340 = vpack.c.b16 %v298, %v295
    %v341 = vpack.c.b16 %v299, %v296
    %v342 = vpack.c.b16 %v303, %v300
    %v343 = vpack.c.b16 %v304, %v301
    %v344 = vpack.c.b16 %v305, %v302
    %v345 = vpack.c.b16 %v309, %v306
    %v346 = vpack.c.b16 %v310, %v307
    %v347 = vpack.c.b16 %v311, %v308
    %v348 = vpack.c.b16 %v315, %v312
    %v349 = vpack.c.b16 %v316, %v313
    %v350 = vpack.c.b16 %v317, %v314
    %v351 = vpack.c.b16 %v321, %v318
    %v352 = vpack.c.b16 %v322, %v319
    %v353 = vpack.c.b16 %v323, %v320
    %v354 = vpack.c.b16 %v327, %v324
    %v355 = vpack.c.b16 %v328, %v325
    %v356 = vpack.c.b16 %v329, %v326
    %v357 = vpack.c.b16 %v333, %v330
    %v358 = vpack.c.b16 %v334, %v331
    %v359 = vpack.c.b16 %v335, %v332
    %v412 = vunpack.c.l.b16 %v213
    %v413 = vunpack.c.l.b16 %v214
    %v414 = vunpack.c.l.b16 %v215
    %v415 = vunpack.c.l.b16 %v216
    %v416 = vunpack.c.l.b16 %v217
    %v417 = vunpack.c.l.b16 %v218
    %v418 = vunpack.c.l.b16 %v219
    %v419 = vunpack.c.l.b16 %v220
    %v420 = vunpack.c.l.b16 %v221
    %v421 = vunpack.c.l.b16 %v222
    %v422 = vunpack.c.l.b16 %v223
    %v423 = vunpack.c.l.b16 %v224
    %v424 = vunpack.c.l.b16 %v225
    %v425 = vunpack.c.l.b16 %v226
    %v426 = vunpack.c.l.b16 %v227
    %v427 = vunpack.c.l.b16 %v228
    %v428 = vunpack.c.l.b16 %v229
    %v429 = vunpack.c.l.b16 %v230
    %v430 = vunpack.c.l.b16 %v231
    %v431 = vunpack.c.l.b16 %v232
    %v432 = vunpack.c.l.b16 %v233
    %v433 = vunpack.c.l.b16 %v234
    %v434 = vunpack.c.l.b16 %v235
    %v435 = vunpack.c.l.b16 %v236
    %v436 = vunpack.c.l.b16 %v237
    %v437 = vunpack.c.l.b16 %v238
    %v438 = vunpack.c.l.b16 %v239
    %v439 = vunpack.c.l.b16 %v240
    %v440 = vunpack.c.l.b16 %v241
    %v441 = vunpack.c.l.b16 %v242
    %v442 = vunpack.c.l.b16 %v243
    %v443 = vunpack.c.l.b16 %v244
    %v444 = vunpack.c.l.b16 %v245
    %v445 = vunpack.c.l.b16 %v246
    %v446 = vunpack.c.l.b16 %v247
    %v447 = vunpack.c.l.b16 %v248
    %v448 = vpack.c.b16 %v413, %v412
    %v449 = vpack.c.b16 %v415, %v414
    %v450 = vpack.c.b16 %v417, %v416
    %v451 = vpack.c.b16 %v419, %v418
    %v452 = vpack.c.b16 %v421, %v420
    %v453 = vpack.c.b16 %v423, %v422
    %v454 = vpack.c.b16 %v425, %v424
    %v455 = vpack.c.b16 %v427, %v426
    %v456 = vpack.c.b16 %v429, %v428
    %v457 = vpack.c.b16 %v431, %v430
    %v458 = vpack.c.b16 %v433, %v432
    %v459 = vpack.c.b16 %v435, %v434
    %v460 = vpack.c.b16 %v437, %v436
    %v461 = vpack.c.b16 %v439, %v438
    %v462 = vpack.c.b16 %v441, %v440
    %v463 = vpack.c.b16 %v443, %v442
    %v464 = vpack.c.b16 %v445, %v444
    %v465 = vpack.c.b16 %v447, %v446
    %vm484 = vcmask 261120
    %v486 = vsel %vm484, %v338, 0
    %v489 = vsel %vm484, %v341, 0
    %v492 = vsel %vm484, %v344, 0
    %v495 = vsel %vm484, %v347, 0
    %v498 = vsel %vm484, %v350, 0
    %v501 = vsel %vm484, %v353, 0
    %v504 = vsel %vm484, %v356, 0
    %v507 = vsel %vm484, %v359, 0
    %509 = vmatprep.subr.bf16.mxu0 0
    %510 = vmatpush1.bf16.msra.mxu0 %v448
    %511 = vmatprep.subr.bf16.mxu0 0
    %512 = vmatpush1.bf16.msra.mxu0 %v449
    %513 = vmatprep.subr.bf16.mxu0 0
    %514 = vmatpush1.bf16.msra.mxu0 %v450
    %515 = vmatprep.subr.bf16.mxu0 0
    %516 = vmatpush1.bf16.msra.mxu0 %v451
    %517 = vmatprep.subr.bf16.mxu0 0
    %518 = vmatpush1.bf16.msra.mxu0 %v452
    %519 = vmatprep.subr.bf16.mxu0 0
    %520 = vmatpush1.bf16.msra.mxu0 %v453
    %521 = vmatprep.subr.bf16.mxu0 0
    %522 = vmatpush1.bf16.msra.mxu0 %v454
    %523 = vmatprep.subr.bf16.mxu0 0
    %524 = vmatpush1.bf16.msra.mxu0 %v455
    %525 = vmatprep.subr.bf16.mxu0 0
    %526 = vmatpush1.bf16.msra.mxu0 %v456
    %527 = vmatprep.subr.bf16.mxu0 0
    %528 = vmatpush1.bf16.msra.mxu0 %v457
    %529 = vmatprep.subr.bf16.mxu0 0
    %530 = vmatpush1.bf16.msra.mxu0 %v458
    %531 = vmatprep.subr.bf16.mxu0 0
    %532 = vmatpush1.bf16.msra.mxu0 %v459
    %533 = vmatprep.subr.bf16.mxu0 0
    %534 = vmatpush1.bf16.msra.mxu0 %v460
    %535 = vmatprep.subr.bf16.mxu0 0
    %536 = vmatpush1.bf16.msra.mxu0 %v461
    %537 = vmatprep.subr.bf16.mxu0 0
    %538 = vmatpush1.bf16.msra.mxu0 %v462
    %539 = vmatprep.subr.bf16.mxu0 0
    %540 = vmatpush1.bf16.msra.mxu0 %v463
    %541 = vmatprep.mubr.bf16.mxu0 %v337
    %542 = vmatmul.mubr.bf16.gmra.mrb[0].mxu0 %v336
    %v543 = vpop.f32.mrb[0].mxu0
    %v544 = vadd.f32 %v254, %v543
    %v545 = vpop.f32.mrb[0].mxu0
    %v546 = vpop.f32.mrb[0].mxu0
    %v547 = vadd.f32 %v254, %v546
    %v548 = vpop.f32.mrb[0].mxu0
    %549 = vmatprep.mubr.bf16.mxu0 %v340
    %550 = vmatmul.mubr.bf16.gmra.mrb[0].mxu0 %v339
    %v551 = vpop.f32.mrb[0].mxu0
    %v552 = vadd.f32 %v254, %v551
    %v553 = vpop.f32.mrb[0].mxu0
    %v554 = vpop.f32.mrb[0].mxu0
    %v555 = vadd.f32 %v254, %v554
    %v556 = vpop.f32.mrb[0].mxu0
    %557 = vmatprep.mubr.bf16.mxu0 %v343
    %558 = vmatmul.mubr.bf16.gmra.mrb[0].mxu0 %v342
    %v559 = vpop.f32.mrb[0].mxu0
    %v560 = vadd.f32 %v254, %v559
    %v561 = vpop.f32.mrb[0].mxu0
    %v562 = vpop.f32.mrb[0].mxu0
    %v563 = vadd.f32 %v254, %v562
    %v564 = vpop.f32.mrb[0].mxu0
    %565 = vmatprep.mubr.bf16.mxu0 %v346
    %566 = vmatmul.mubr.bf16.gmra.mrb[0].mxu0 %v345
    %v567 = vpop.f32.mrb[0].mxu0
    %v568 = vadd.f32 %v254, %v567
    %v569 = vpop.f32.mrb[0].mxu0
    %v570 = vpop.f32.mrb[0].mxu0
    %v571 = vadd.f32 %v254, %v570
    %v572 = vpop.f32.mrb[0].mxu0
    %573 = vmatprep.mubr.bf16.mxu0 %v349
    %574 = vmatmul.mubr.bf16.gmra.mrb[0].mxu0 %v348
    %v575 = vpop.f32.mrb[0].mxu0
    %v576 = vadd.f32 %v254, %v575
    %v577 = vpop.f32.mrb[0].mxu0
    %v578 = vpop.f32.mrb[0].mxu0
    %v579 = vadd.f32 %v254, %v578
    %v580 = vpop.f32.mrb[0].mxu0
    %581 = vmatprep.mubr.bf16.mxu0 %v352
    %582 = vmatmul.mubr.bf16.gmra.mrb[0].mxu0 %v351
    %v583 = vpop.f32.mrb[0].mxu0
    %v584 = vadd.f32 %v254, %v583
    %v585 = vpop.f32.mrb[0].mxu0
    %v586 = vpop.f32.mrb[0].mxu0
    %v587 = vadd.f32 %v254, %v586
    %v588 = vpop.f32.mrb[0].mxu0
    %589 = vmatprep.mubr.bf16.mxu0 %v355
    %590 = vmatmul.mubr.bf16.gmra.mrb[0].mxu0 %v354
    %v591 = vpop.f32.mrb[0].mxu0
    %v592 = vadd.f32 %v254, %v591
    %v593 = vpop.f32.mrb[0].mxu0
    %v594 = vpop.f32.mrb[0].mxu0
    %v595 = vadd.f32 %v254, %v594
    %v596 = vpop.f32.mrb[0].mxu0
    %597 = vmatprep.mubr.bf16.mxu0 %v358
    %598 = vmatmul.mubr.bf16.gmra.mrb[0].mxu0 %v357
    %v599 = vpop.f32.mrb[0].mxu0
    %v600 = vadd.f32 %v254, %v599
    %v601 = vpop.f32.mrb[0].mxu0
    %v602 = vpop.f32.mrb[0].mxu0
    %v603 = vadd.f32 %v254, %v602
    %v604 = vpop.f32.mrb[0].mxu0
    %605 = vdwg.mxu0
    %606 = vmatprep.subr.bf16.mxu0 0
    %607 = vmatpush1.bf16.msra.mxu0 %v464
    %608 = vmatprep.subr.bf16.mxu0 0
    %609 = vmatpush1.bf16.msra.mxu0 %v465
    %610 = vmatprep.subr.bf16.mxu0 0
    %611 = vmatpush1.bf16.msra.mxu0 0
    %612 = vmatprep.subr.bf16.mxu0 0
    %613 = vmatpush1.bf16.msra.mxu0 0
    %614 = vmatprep.subr.bf16.mxu0 0
    %615 = vmatpush1.bf16.msra.mxu0 0
    %616 = vmatprep.subr.bf16.mxu0 0
    %617 = vmatpush1.bf16.msra.mxu0 0
    %618 = vmatprep.subr.bf16.mxu0 0
    %619 = vmatpush1.bf16.msra.mxu0 0
    %620 = vmatprep.subr.bf16.mxu0 0
    %621 = vmatpush1.bf16.msra.mxu0 0
    %622 = vmatprep.subr.bf16.mxu0 0
    %623 = vmatpush1.bf16.msra.mxu0 0
    %624 = vmatprep.subr.bf16.mxu0 0
    %625 = vmatpush1.bf16.msra.mxu0 0
    %626 = vmatprep.subr.bf16.mxu0 0
    %627 = vmatpush1.bf16.msra.mxu0 0
    %628 = vmatprep.subr.bf16.mxu0 0
    %629 = vmatpush1.bf16.msra.mxu0 0
    %630 = vmatprep.subr.bf16.mxu0 0
    %631 = vmatpush1.bf16.msra.mxu0 0
    %632 = vmatprep.subr.bf16.mxu0 0
    %633 = vmatpush1.bf16.msra.mxu0 0
    %634 = vmatprep.subr.bf16.mxu0 0
    %635 = vmatpush1.bf16.msra.mxu0 0
    %636 = vmatprep.subr.bf16.mxu0 0
    %637 = vmatpush1.bf16.msra.mxu0 0
    %638 = vmatprep.mubr.bf16.mxu0 0
    %639 = vmatmul.mubr.bf16.gmra.mrb[0].mxu0 %v486
    %v640 = vpop.f32.mrb[0].mxu0
    %v641 = vadd.f32 %v544, %v640
    %v642 = vpop.f32.mrb[0].mxu0
    %v643 = vpop.f32.mrb[0].mxu0
    %v644 = vadd.f32 %v547, %v643
    %v645 = vpop.f32.mrb[0].mxu0
    %646 = vmatprep.mubr.bf16.mxu0 0
    %647 = vmatmul.mubr.bf16.gmra.mrb[0].mxu0 %v489
    %v648 = vpop.f32.mrb[0].mxu0
    %v649 = vadd.f32 %v552, %v648
    %v650 = vpop.f32.mrb[0].mxu0
    %v651 = vpop.f32.mrb[0].mxu0
    %v652 = vadd.f32 %v555, %v651
    %v653 = vpop.f32.mrb[0].mxu0
    %654 = vmatprep.mubr.bf16.mxu0 0
    %655 = vmatmul.mubr.bf16.gmra.mrb[0].mxu0 %v492
    %v656 = vpop.f32.mrb[0].mxu0
    %v657 = vadd.f32 %v560, %v656
    %v658 = vpop.f32.mrb[0].mxu0
    %v659 = vpop.f32.mrb[0].mxu0
    %v660 = vadd.f32 %v563, %v659
    %v661 = vpop.f32.mrb[0].mxu0
    %662 = vmatprep.mubr.bf16.mxu0 0
    %663 = vmatmul.mubr.bf16.gmra.mrb[0].mxu0 %v495
    %v664 = vpop.f32.mrb[0].mxu0
    %v665 = vadd.f32 %v568, %v664
    %v666 = vpop.f32.mrb[0].mxu0
    %v667 = vpop.f32.mrb[0].mxu0
    %v668 = vadd.f32 %v571, %v667
    %v669 = vpop.f32.mrb[0].mxu0
    %670 = vmatprep.mubr.bf16.mxu0 0
    %671 = vmatmul.mubr.bf16.gmra.mrb[0].mxu0 %v498
    %v672 = vpop.f32.mrb[0].mxu0
    %v673 = vadd.f32 %v576, %v672
    %v674 = vpop.f32.mrb[0].mxu0
    %v675 = vpop.f32.mrb[0].mxu0
    %v676 = vadd.f32 %v579, %v675
    %v677 = vpop.f32.mrb[0].mxu0
    %678 = vmatprep.mubr.bf16.mxu0 0
    %679 = vmatmul.mubr.bf16.gmra.mrb[0].mxu0 %v501
    %v680 = vpop.f32.mrb[0].mxu0
    %v681 = vadd.f32 %v584, %v680
    %v682 = vpop.f32.mrb[0].mxu0
    %v683 = vpop.f32.mrb[0].mxu0
    %v684 = vadd.f32 %v587, %v683
    %v685 = vpop.f32.mrb[0].mxu0
    %686 = vmatprep.mubr.bf16.mxu0 0
    %687 = vmatmul.mubr.bf16.gmra.mrb[0].mxu0 %v504
    %v688 = vpop.f32.mrb[0].mxu0
    %v689 = vadd.f32 %v592, %v688
    %v690 = vpop.f32.mrb[0].mxu0
    %v691 = vpop.f32.mrb[0].mxu0
    %v692 = vadd.f32 %v595, %v691
    %v693 = vpop.f32.mrb[0].mxu0
    %694 = vmatprep.mubr.bf16.mxu0 0
    %695 = vmatmul.mubr.bf16.gmra.mrb[0].mxu0 %v507
    %v696 = vpop.f32.mrb[0].mxu0
    %v697 = vadd.f32 %v600, %v696
    %v698 = vpop.f32.mrb[0].mxu0
    %v699 = vpop.f32.mrb[0].mxu0
    %v700 = vadd.f32 %v603, %v699
    %v701 = vpop.f32.mrb[0].mxu0
    %702 = vdwg.mxu0
    %vm703 = vcmp.ge.f32.partialorder %v641, 0.0
    %vm704 = vcmp.ge.f32.partialorder %v644, 0.0
    %vm705 = vcmp.ge.f32.partialorder %v649, 0.0
    %vm706 = vcmp.ge.f32.partialorder %v652, 0.0
    %vm707 = vcmp.ge.f32.partialorder %v657, 0.0
    %vm708 = vcmp.ge.f32.partialorder %v660, 0.0
    %vm709 = vcmp.ge.f32.partialorder %v665, 0.0
    %vm710 = vcmp.ge.f32.partialorder %v668, 0.0
    %vm711 = vcmp.ge.f32.partialorder %v673, 0.0
    %vm712 = vcmp.ge.f32.partialorder %v676, 0.0
    %vm713 = vcmp.ge.f32.partialorder %v681, 0.0
    %vm714 = vcmp.ge.f32.partialorder %v684, 0.0
    %vm715 = vcmp.ge.f32.partialorder %v689, 0.0
    %vm716 = vcmp.ge.f32.partialorder %v692, 0.0
    %vm717 = vcmp.ge.f32.partialorder %v697, 0.0
    %vm718 = vcmp.ge.f32.partialorder %v700, 0.0
    %v719 = vmul.f32 %v641, 0.01
    %v720 = vmul.f32 %v644, 0.01
    %v721 = vmul.f32 %v649, 0.01
    %v722 = vmul.f32 %v652, 0.01
    %v723 = vmul.f32 %v657, 0.01
    %v724 = vmul.f32 %v660, 0.01
    %v725 = vmul.f32 %v665, 0.01
    %v726 = vmul.f32 %v668, 0.01
    %v727 = vmul.f32 %v673, 0.01
    %v728 = vmul.f32 %v676, 0.01
    %v729 = vmul.f32 %v681, 0.01
    %v730 = vmul.f32 %v684, 0.01
    %v731 = vmul.f32 %v689, 0.01
    %v732 = vmul.f32 %v692, 0.01
    %v733 = vmul.f32 %v697, 0.01
    %v734 = vmul.f32 %v700, 0.01
    %v735 = vsel %vm703, %v641, %v719
    %v736 = vsel %vm704, %v644, %v720
    %v737 = vsel %vm705, %v649, %v721
    %v738 = vsel %vm706, %v652, %v722
    %v739 = vsel %vm707, %v657, %v723
    %v740 = vsel %vm708, %v660, %v724
    %v741 = vsel %vm709, %v665, %v725
    %v742 = vsel %vm710, %v668, %v726
    %v743 = vsel %vm711, %v673, %v727
    %v744 = vsel %vm712, %v676, %v728
    %v745 = vsel %vm713, %v681, %v729
    %v746 = vsel %vm714, %v684, %v730
    %v747 = vsel %vm715, %v689, %v731
    %v748 = vsel %vm716, %v692, %v732
    %v749 = vsel %vm717, %v697, %v733
    %v750 = vsel %vm718, %v700, %v734
    %v751 = vld [vmem:[#allocation2] sm:$0xf]
    %v752 = vld [vmem:[#allocation2 + $0x4] sm:$0xf]
    %v753 = vld [vmem:[#allocation2 + $0x8] sm:$0xf]
    %v754 = vld [vmem:[#allocation2 + $0xc] sm:$0xf]
    %v755 = vld [vmem:[#allocation2 + $0x10] sm:$0xf]
    %v756 = vld [vmem:[#allocation2 + $0x14] sm:$0xf]
    %v757 = vld [vmem:[#allocation2 + $0x18] sm:$0xf]
    %v758 = vld [vmem:[#allocation2 + $0x1c] sm:$0xf]
    %v759 = vld [vmem:[#allocation2 + $0x20] sm:$0xf]
    %v760 = vld [vmem:[#allocation2 + $0x24] sm:$0xf]
    %v761 = vld [vmem:[#allocation2 + $0x28] sm:$0xf]
    %v762 = vld [vmem:[#allocation2 + $0x2c] sm:$0xf]
    %v763 = vld [vmem:[#allocation2 + $0x30] sm:$0xf]
    %v764 = vld [vmem:[#allocation2 + $0x34] sm:$0xf]
    %v765 = vld [vmem:[#allocation2 + $0x38] sm:$0xf]
    %v766 = vld [vmem:[#allocation2 + $0x3c] sm:$0xf]
    %v767 = vld [vmem:[#allocation10] sm:$0xff]
    %v768 = vld [vmem:[#allocation10 + $0x8] sm:$0xff]
    %v769 = vld [vmem:[#allocation10 + $0x10] sm:$0xff]
    %v770 = vld [vmem:[#allocation10 + $0x18] sm:$0xff]
    %v771 = vld [vmem:[#allocation10 + $0x20] sm:$0xff]
    %v772 = vld [vmem:[#allocation10 + $0x28] sm:$0xff]
    %v773 = vld [vmem:[#allocation10 + $0x30] sm:$0xff]
    %v774 = vld [vmem:[#allocation10 + $0x38] sm:$0xff]
    %v775 = vpack.c.bf16 %v736, %v735
    %v776 = vpack.c.bf16 %v738, %v737
    %v777 = vpack.c.bf16 %v740, %v739
    %v778 = vpack.c.bf16 %v742, %v741
    %v779 = vpack.c.bf16 %v744, %v743
    %v780 = vpack.c.bf16 %v746, %v745
    %v781 = vpack.c.bf16 %v748, %v747
    %v782 = vpack.c.bf16 %v750, %v749
    %v783 = vld [vmem:[#allocation11] sm:$0xff]
    %v784 = vld [vmem:[#allocation11 + $0x8] sm:$0xff]
    %v785 = vld [vmem:[#allocation11 + $0x10] sm:$0xff]
    %v786 = vld [vmem:[#allocation11 + $0x18] sm:$0xff]
    %v791 = vunpack.c.l.b16 %v783
    %v792 = vunpack.c.h.b16 %v783
    %v793 = vunpack.c.l.b16 %v784
    %v794 = vunpack.c.h.b16 %v784
    %v795 = vunpack.c.l.b16 %v785
    %v796 = vunpack.c.h.b16 %v785
    %v797 = vunpack.c.l.b16 %v786
    %v798 = vunpack.c.h.b16 %v786
    %v799 = vpack.c.b16 %v795, %v791
    %v800 = vpack.c.b16 %v796, %v792
    %v801 = vpack.c.b16 %v797, %v793
    %v802 = vpack.c.b16 %v798, %v794
    %vm807 = vcmask 130048
    %v809 = vsel %vm807, %v775, 0
    %v812 = vsel %vm807, %v776, 0
    %v815 = vsel %vm807, %v777, 0
    %v818 = vsel %vm807, %v778, 0
    %v821 = vsel %vm807, %v779, 0
    %v824 = vsel %vm807, %v780, 0
    %v827 = vsel %vm807, %v781, 0
    %v830 = vsel %vm807, %v782, 0
    %832 = vmatprep.subr.bf16.mxu0 %v800
    %833 = vmatpush1.bf16.msra.mxu0 %v799
    %834 = vmatprep.subr.bf16.mxu0 0
    %835 = vmatpush1.bf16.msra.mxu0 0
    %836 = vmatprep.subr.bf16.mxu0 0
    %837 = vmatpush1.bf16.msra.mxu0 0
    %838 = vmatprep.subr.bf16.mxu0 0
    %839 = vmatpush1.bf16.msra.mxu0 0
    %840 = vmatprep.subr.bf16.mxu0 0
    %841 = vmatpush1.bf16.msra.mxu0 0
    %842 = vmatprep.subr.bf16.mxu0 0
    %843 = vmatpush1.bf16.msra.mxu0 0
    %844 = vmatprep.subr.bf16.mxu0 0
    %845 = vmatpush1.bf16.msra.mxu0 0
    %846 = vmatprep.subr.bf16.mxu0 0
    %847 = vmatpush1.bf16.msra.mxu0 0
    %848 = vmatprep.subr.bf16.mxu0 0
    %849 = vmatpush1.bf16.msra.mxu0 0
    %850 = vmatprep.subr.bf16.mxu0 0
    %851 = vmatpush1.bf16.msra.mxu0 0
    %852 = vmatprep.subr.bf16.mxu0 0
    %853 = vmatpush1.bf16.msra.mxu0 0
    %854 = vmatprep.subr.bf16.mxu0 0
    %855 = vmatpush1.bf16.msra.mxu0 0
    %856 = vmatprep.subr.bf16.mxu0 0
    %857 = vmatpush1.bf16.msra.mxu0 0
    %858 = vmatprep.subr.bf16.mxu0 0
    %859 = vmatpush1.bf16.msra.mxu0 0
    %860 = vmatprep.subr.bf16.mxu0 0
    %861 = vmatpush1.bf16.msra.mxu0 0
    %862 = vmatprep.subr.bf16.mxu0 0
    %863 = vmatpush1.bf16.msra.mxu0 0
    %864 = vmatprep.mubr.bf16.mxu0 0
    %865 = vmatmul.mubr.bf16.gmra.mrb[0].mxu0 %v809
    %v866 = vpop.f32.mrb[0].mxu0
    %v867 = vadd.f32 0.0, %v866
    %v868 = vpop.f32.mrb[0].mxu0
    %v869 = vadd.f32 0.0, %v868
    %v870 = vpop.f32.mrb[0].mxu0
    %v871 = vadd.f32 0.0, %v870
    %v872 = vpop.f32.mrb[0].mxu0
    %v873 = vadd.f32 0.0, %v872
    %874 = vmatprep.mubr.bf16.mxu0 0
    %875 = vmatmul.mubr.bf16.gmra.mrb[0].mxu0 %v812
    %v876 = vpop.f32.mrb[0].mxu0
    %v877 = vadd.f32 0.0, %v876
    %v878 = vpop.f32.mrb[0].mxu0
    %v879 = vadd.f32 0.0, %v878
    %v880 = vpop.f32.mrb[0].mxu0
    %v881 = vadd.f32 0.0, %v880
    %v882 = vpop.f32.mrb[0].mxu0
    %v883 = vadd.f32 0.0, %v882
    %884 = vmatprep.mubr.bf16.mxu0 0
    %885 = vmatmul.mubr.bf16.gmra.mrb[0].mxu0 %v815
    %v886 = vpop.f32.mrb[0].mxu0
    %v887 = vadd.f32 0.0, %v886
    %v888 = vpop.f32.mrb[0].mxu0
    %v889 = vadd.f32 0.0, %v888
    %v890 = vpop.f32.mrb[0].mxu0
    %v891 = vadd.f32 0.0, %v890
    %v892 = vpop.f32.mrb[0].mxu0
    %v893 = vadd.f32 0.0, %v892
    %894 = vmatprep.mubr.bf16.mxu0 0
    %895 = vmatmul.mubr.bf16.gmra.mrb[0].mxu0 %v818
    %v896 = vpop.f32.mrb[0].mxu0
    %v897 = vadd.f32 0.0, %v896
    %v898 = vpop.f32.mrb[0].mxu0
    %v899 = vadd.f32 0.0, %v898
    %v900 = vpop.f32.mrb[0].mxu0
    %v901 = vadd.f32 0.0, %v900
    %v902 = vpop.f32.mrb[0].mxu0
    %v903 = vadd.f32 0.0, %v902
    %904 = vmatprep.mubr.bf16.mxu0 0
    %905 = vmatmul.mubr.bf16.gmra.mrb[0].mxu0 %v821
    %v906 = vpop.f32.mrb[0].mxu0
    %v907 = vadd.f32 0.0, %v906
    %v908 = vpop.f32.mrb[0].mxu0
    %v909 = vadd.f32 0.0, %v908
    %v910 = vpop.f32.mrb[0].mxu0
    %v911 = vadd.f32 0.0, %v910
    %v912 = vpop.f32.mrb[0].mxu0
    %v913 = vadd.f32 0.0, %v912
    %914 = vmatprep.mubr.bf16.mxu0 0
    %915 = vmatmul.mubr.bf16.gmra.mrb[0].mxu0 %v824
    %v916 = vpop.f32.mrb[0].mxu0
    %v917 = vadd.f32 0.0, %v916
    %v918 = vpop.f32.mrb[0].mxu0
    %v919 = vadd.f32 0.0, %v918
    %v920 = vpop.f32.mrb[0].mxu0
    %v921 = vadd.f32 0.0, %v920
    %v922 = vpop.f32.mrb[0].mxu0
    %v923 = vadd.f32 0.0, %v922
    %924 = vmatprep.mubr.bf16.mxu0 0
    %925 = vmatmul.mubr.bf16.gmra.mrb[0].mxu0 %v827
    %v926 = vpop.f32.mrb[0].mxu0
    %v927 = vadd.f32 0.0, %v926
    %v928 = vpop.f32.mrb[0].mxu0
    %v929 = vadd.f32 0.0, %v928
    %v930 = vpop.f32.mrb[0].mxu0
    %v931 = vadd.f32 0.0, %v930
    %v932 = vpop.f32.mrb[0].mxu0
    %v933 = vadd.f32 0.0, %v932
    %934 = vmatprep.mubr.bf16.mxu0 0
    %935 = vmatmul.mubr.bf16.gmra.mrb[0].mxu0 %v830
    %v936 = vpop.f32.mrb[0].mxu0
    %v937 = vadd.f32 0.0, %v936
    %v938 = vpop.f32.mrb[0].mxu0
    %v939 = vadd.f32 0.0, %v938
    %v940 = vpop.f32.mrb[0].mxu0
    %v941 = vadd.f32 0.0, %v940
    %v942 = vpop.f32.mrb[0].mxu0
    %v943 = vadd.f32 0.0, %v942
    %944 = vdwg.mxu0
    %945 = vmatprep.subr.bf16.mxu0 %v802
    %946 = vmatpush1.bf16.msra.mxu0 %v801
    %947 = vmatprep.subr.bf16.mxu0 0
    %948 = vmatpush1.bf16.msra.mxu0 0
    %949 = vmatprep.subr.bf16.mxu0 0
    %950 = vmatpush1.bf16.msra.mxu0 0
    %951 = vmatprep.subr.bf16.mxu0 0
    %952 = vmatpush1.bf16.msra.mxu0 0
    %953 = vmatprep.subr.bf16.mxu0 0
    %954 = vmatpush1.bf16.msra.mxu0 0
    %955 = vmatprep.subr.bf16.mxu0 0
    %956 = vmatpush1.bf16.msra.mxu0 0
    %957 = vmatprep.subr.bf16.mxu0 0
    %958 = vmatpush1.bf16.msra.mxu0 0
    %959 = vmatprep.subr.bf16.mxu0 0
    %960 = vmatpush1.bf16.msra.mxu0 0
    %961 = vmatprep.subr.bf16.mxu0 0
    %962 = vmatpush1.bf16.msra.mxu0 0
    %963 = vmatprep.subr.bf16.mxu0 0
    %964 = vmatpush1.bf16.msra.mxu0 0
    %965 = vmatprep.subr.bf16.mxu0 0
    %966 = vmatpush1.bf16.msra.mxu0 0
    %967 = vmatprep.subr.bf16.mxu0 0
    %968 = vmatpush1.bf16.msra.mxu0 0
    %969 = vmatprep.subr.bf16.mxu0 0
    %970 = vmatpush1.bf16.msra.mxu0 0
    %971 = vmatprep.subr.bf16.mxu0 0
    %972 = vmatpush1.bf16.msra.mxu0 0
    %973 = vmatprep.subr.bf16.mxu0 0
    %974 = vmatpush1.bf16.msra.mxu0 0
    %975 = vmatprep.subr.bf16.mxu0 0
    %976 = vmatpush1.bf16.msra.mxu0 0
    %977 = vmatprep.mubr.bf16.mxu0 0
    %978 = vmatmul.mubr.bf16.gmra.mrb[0].mxu0 %v809
    %v979 = vpop.f32.mrb[0].mxu0
    %v980 = vadd.f32 0.0, %v979
    %v981 = vpop.f32.mrb[0].mxu0
    %v982 = vadd.f32 0.0, %v981
    %v983 = vpop.f32.mrb[0].mxu0
    %v984 = vadd.f32 0.0, %v983
    %v985 = vpop.f32.mrb[0].mxu0
    %v986 = vadd.f32 0.0, %v985
    %987 = vmatprep.mubr.bf16.mxu0 0
    %988 = vmatmul.mubr.bf16.gmra.mrb[0].mxu0 %v812
    %v989 = vpop.f32.mrb[0].mxu0
    %v990 = vadd.f32 0.0, %v989
    %v991 = vpop.f32.mrb[0].mxu0
    %v992 = vadd.f32 0.0, %v991
    %v993 = vpop.f32.mrb[0].mxu0
    %v994 = vadd.f32 0.0, %v993
    %v995 = vpop.f32.mrb[0].mxu0
    %v996 = vadd.f32 0.0, %v995
    %997 = vmatprep.mubr.bf16.mxu0 0
    %998 = vmatmul.mubr.bf16.gmra.mrb[0].mxu0 %v815
    %v999 = vpop.f32.mrb[0].mxu0
    %v1000 = vadd.f32 0.0, %v999
    %v1001 = vpop.f32.mrb[0].mxu0
    %v1002 = vadd.f32 0.0, %v1001
    %v1003 = vpop.f32.mrb[0].mxu0
    %v1004 = vadd.f32 0.0, %v1003
    %v1005 = vpop.f32.mrb[0].mxu0
    %v1006 = vadd.f32 0.0, %v1005
    %1007 = vmatprep.mubr.bf16.mxu0 0
    %1008 = vmatmul.mubr.bf16.gmra.mrb[0].mxu0 %v818
    %v1009 = vpop.f32.mrb[0].mxu0
    %v1010 = vadd.f32 0.0, %v1009
    %v1011 = vpop.f32.mrb[0].mxu0
    %v1012 = vadd.f32 0.0, %v1011
    %v1013 = vpop.f32.mrb[0].mxu0
    %v1014 = vadd.f32 0.0, %v1013
    %v1015 = vpop.f32.mrb[0].mxu0
    %v1016 = vadd.f32 0.0, %v1015
    %1017 = vmatprep.mubr.bf16.mxu0 0
    %1018 = vmatmul.mubr.bf16.gmra.mrb[0].mxu0 %v821
    %v1019 = vpop.f32.mrb[0].mxu0
    %v1020 = vadd.f32 0.0, %v1019
    %v1021 = vpop.f32.mrb[0].mxu0
    %v1022 = vadd.f32 0.0, %v1021
    %v1023 = vpop.f32.mrb[0].mxu0
    %v1024 = vadd.f32 0.0, %v1023
    %v1025 = vpop.f32.mrb[0].mxu0
    %v1026 = vadd.f32 0.0, %v1025
    %1027 = vmatprep.mubr.bf16.mxu0 0
    %1028 = vmatmul.mubr.bf16.gmra.mrb[0].mxu0 %v824
    %v1029 = vpop.f32.mrb[0].mxu0
    %v1030 = vadd.f32 0.0, %v1029
    %v1031 = vpop.f32.mrb[0].mxu0
    %v1032 = vadd.f32 0.0, %v1031
    %v1033 = vpop.f32.mrb[0].mxu0
    %v1034 = vadd.f32 0.0, %v1033
    %v1035 = vpop.f32.mrb[0].mxu0
    %v1036 = vadd.f32 0.0, %v1035
    %1037 = vmatprep.mubr.bf16.mxu0 0
    %1038 = vmatmul.mubr.bf16.gmra.mrb[0].mxu0 %v827
    %v1039 = vpop.f32.mrb[0].mxu0
    %v1040 = vadd.f32 0.0, %v1039
    %v1041 = vpop.f32.mrb[0].mxu0
    %v1042 = vadd.f32 0.0, %v1041
    %v1043 = vpop.f32.mrb[0].mxu0
    %v1044 = vadd.f32 0.0, %v1043
    %v1045 = vpop.f32.mrb[0].mxu0
    %v1046 = vadd.f32 0.0, %v1045
    %1047 = vmatprep.mubr.bf16.mxu0 0
    %1048 = vmatmul.mubr.bf16.gmra.mrb[0].mxu0 %v830
    %v1049 = vpop.f32.mrb[0].mxu0
    %v1050 = vadd.f32 0.0, %v1049
    %v1051 = vpop.f32.mrb[0].mxu0
    %v1052 = vadd.f32 0.0, %v1051
    %v1053 = vpop.f32.mrb[0].mxu0
    %v1054 = vadd.f32 0.0, %v1053
    %v1055 = vpop.f32.mrb[0].mxu0
    %v1056 = vadd.f32 0.0, %v1055
    %1057 = vdwg.mxu0
    %v1074 = vunpack.c.l.b16 %v751
    %v1075 = vunpack.c.l.b16 %v752
    %v1076 = vunpack.c.l.b16 %v753
    %v1077 = vunpack.c.l.b16 %v754
    %v1078 = vunpack.c.l.b16 %v755
    %v1079 = vunpack.c.l.b16 %v756
    %v1080 = vunpack.c.l.b16 %v757
    %v1081 = vunpack.c.l.b16 %v758
    %v1082 = vunpack.c.l.b16 %v759
    %v1083 = vunpack.c.l.b16 %v760
    %v1084 = vunpack.c.l.b16 %v761
    %v1085 = vunpack.c.l.b16 %v762
    %v1086 = vunpack.c.l.b16 %v763
    %v1087 = vunpack.c.l.b16 %v764
    %v1088 = vunpack.c.l.b16 %v765
    %v1089 = vunpack.c.l.b16 %v766
    %v1090 = vpack.c.b16 %v1075, %v1074
    %v1091 = vpack.c.b16 %v1077, %v1076
    %v1092 = vpack.c.b16 %v1079, %v1078
    %v1093 = vpack.c.b16 %v1081, %v1080
    %v1094 = vpack.c.b16 %v1083, %v1082
    %v1095 = vpack.c.b16 %v1085, %v1084
    %v1096 = vpack.c.b16 %v1087, %v1086
    %v1097 = vpack.c.b16 %v1089, %v1088
    %v1106 = vunpack.c.l.b16 %v767
    %v1107 = vunpack.c.h.b16 %v767
    %v1108 = vunpack.c.l.b16 %v768
    %v1109 = vunpack.c.h.b16 %v768
    %v1110 = vunpack.c.l.b16 %v769
    %v1111 = vunpack.c.h.b16 %v769
    %v1112 = vunpack.c.l.b16 %v770
    %v1113 = vunpack.c.h.b16 %v770
    %v1114 = vunpack.c.l.b16 %v771
    %v1115 = vunpack.c.h.b16 %v771
    %v1116 = vunpack.c.l.b16 %v772
    %v1117 = vunpack.c.h.b16 %v772
    %v1118 = vunpack.c.l.b16 %v773
    %v1119 = vunpack.c.h.b16 %v773
    %v1120 = vunpack.c.l.b16 %v774
    %v1121 = vunpack.c.h.b16 %v774
    %v1122 = vpack.c.b16 %v1110, %v1106
    %v1123 = vpack.c.b16 %v1111, %v1107
    %v1124 = vpack.c.b16 %v1112, %v1108
    %v1125 = vpack.c.b16 %v1113, %v1109
    %v1126 = vpack.c.b16 %v1118, %v1114
    %v1127 = vpack.c.b16 %v1119, %v1115
    %v1128 = vpack.c.b16 %v1120, %v1116
    %v1129 = vpack.c.b16 %v1121, %v1117
    %v1139 = vsel %vm484, %v1090, 0
    %v1142 = vsel %vm484, %v1091, 0
    %v1145 = vsel %vm484, %v1092, 0
    %v1148 = vsel %vm484, %v1093, 0
    %v1151 = vsel %vm484, %v1094, 0
    %v1154 = vsel %vm484, %v1095, 0
    %v1157 = vsel %vm484, %v1096, 0
    %v1160 = vsel %vm484, %v1097, 0
    %1162 = vmatprep.subr.bf16.mxu0 %v1123
    %1163 = vmatpush1.bf16.msra.mxu0 %v1122
    %1164 = vmatprep.subr.bf16.mxu0 %v1127
    %1165 = vmatpush1.bf16.msra.mxu0 %v1126
    %1166 = vmatprep.subr.bf16.mxu0 0
    %1167 = vmatpush1.bf16.msra.mxu0 0
    %1168 = vmatprep.subr.bf16.mxu0 0
    %1169 = vmatpush1.bf16.msra.mxu0 0
    %1170 = vmatprep.subr.bf16.mxu0 0
    %1171 = vmatpush1.bf16.msra.mxu0 0
    %1172 = vmatprep.subr.bf16.mxu0 0
    %1173 = vmatpush1.bf16.msra.mxu0 0
    %1174 = vmatprep.subr.bf16.mxu0 0
    %1175 = vmatpush1.bf16.msra.mxu0 0
    %1176 = vmatprep.subr.bf16.mxu0 0
    %1177 = vmatpush1.bf16.msra.mxu0 0
    %1178 = vmatprep.subr.bf16.mxu0 0
    %1179 = vmatpush1.bf16.msra.mxu0 0
    %1180 = vmatprep.subr.bf16.mxu0 0
    %1181 = vmatpush1.bf16.msra.mxu0 0
    %1182 = vmatprep.subr.bf16.mxu0 0
    %1183 = vmatpush1.bf16.msra.mxu0 0
    %1184 = vmatprep.subr.bf16.mxu0 0
    %1185 = vmatpush1.bf16.msra.mxu0 0
    %1186 = vmatprep.subr.bf16.mxu0 0
    %1187 = vmatpush1.bf16.msra.mxu0 0
    %1188 = vmatprep.subr.bf16.mxu0 0
    %1189 = vmatpush1.bf16.msra.mxu0 0
    %1190 = vmatprep.subr.bf16.mxu0 0
    %1191 = vmatpush1.bf16.msra.mxu0 0
    %1192 = vmatprep.subr.bf16.mxu0 0
    %1193 = vmatpush1.bf16.msra.mxu0 0
    %1194 = vmatprep.mubr.bf16.mxu0 0
    %1195 = vmatmul.mubr.bf16.gmra.mrb[0].mxu0 %v1139
    %v1196 = vpop.f32.mrb[0].mxu0
    %v1197 = vadd.f32 %v867, %v1196
    %v1198 = vpop.f32.mrb[0].mxu0
    %v1199 = vadd.f32 %v869, %v1198
    %v1200 = vpop.f32.mrb[0].mxu0
    %v1201 = vadd.f32 %v871, %v1200
    %v1202 = vpop.f32.mrb[0].mxu0
    %v1203 = vadd.f32 %v873, %v1202
    %1204 = vmatprep.mubr.bf16.mxu0 0
    %1205 = vmatmul.mubr.bf16.gmra.mrb[0].mxu0 %v1142
    %v1206 = vpop.f32.mrb[0].mxu0
    %v1207 = vadd.f32 %v877, %v1206
    %v1208 = vpop.f32.mrb[0].mxu0
    %v1209 = vadd.f32 %v879, %v1208
    %v1210 = vpop.f32.mrb[0].mxu0
    %v1211 = vadd.f32 %v881, %v1210
    %v1212 = vpop.f32.mrb[0].mxu0
    %v1213 = vadd.f32 %v883, %v1212
    %1214 = vmatprep.mubr.bf16.mxu0 0
    %1215 = vmatmul.mubr.bf16.gmra.mrb[0].mxu0 %v1145
    %v1216 = vpop.f32.mrb[0].mxu0
    %v1217 = vadd.f32 %v887, %v1216
    %v1218 = vpop.f32.mrb[0].mxu0
    %v1219 = vadd.f32 %v889, %v1218
    %v1220 = vpop.f32.mrb[0].mxu0
    %v1221 = vadd.f32 %v891, %v1220
    %v1222 = vpop.f32.mrb[0].mxu0
    %v1223 = vadd.f32 %v893, %v1222
    %1224 = vmatprep.mubr.bf16.mxu0 0
    %1225 = vmatmul.mubr.bf16.gmra.mrb[0].mxu0 %v1148
    %v1226 = vpop.f32.mrb[0].mxu0
    %v1227 = vadd.f32 %v897, %v1226
    %v1228 = vpop.f32.mrb[0].mxu0
    %v1229 = vadd.f32 %v899, %v1228
    %v1230 = vpop.f32.mrb[0].mxu0
    %v1231 = vadd.f32 %v901, %v1230
    %v1232 = vpop.f32.mrb[0].mxu0
    %v1233 = vadd.f32 %v903, %v1232
    %1234 = vmatprep.mubr.bf16.mxu0 0
    %1235 = vmatmul.mubr.bf16.gmra.mrb[0].mxu0 %v1151
    %v1236 = vpop.f32.mrb[0].mxu0
    %v1237 = vadd.f32 %v907, %v1236
    %v1238 = vpop.f32.mrb[0].mxu0
    %v1239 = vadd.f32 %v909, %v1238
    %v1240 = vpop.f32.mrb[0].mxu0
    %v1241 = vadd.f32 %v911, %v1240
    %v1242 = vpop.f32.mrb[0].mxu0
    %v1243 = vadd.f32 %v913, %v1242
    %1244 = vmatprep.mubr.bf16.mxu0 0
    %1245 = vmatmul.mubr.bf16.gmra.mrb[0].mxu0 %v1154
    %v1246 = vpop.f32.mrb[0].mxu0
    %v1247 = vadd.f32 %v917, %v1246
    %v1248 = vpop.f32.mrb[0].mxu0
    %v1249 = vadd.f32 %v919, %v1248
    %v1250 = vpop.f32.mrb[0].mxu0
    %v1251 = vadd.f32 %v921, %v1250
    %v1252 = vpop.f32.mrb[0].mxu0
    %v1253 = vadd.f32 %v923, %v1252
    %1254 = vmatprep.mubr.bf16.mxu0 0
    %1255 = vmatmul.mubr.bf16.gmra.mrb[0].mxu0 %v1157
    %v1256 = vpop.f32.mrb[0].mxu0
    %v1257 = vadd.f32 %v927, %v1256
    %v1258 = vpop.f32.mrb[0].mxu0
    %v1259 = vadd.f32 %v929, %v1258
    %v1260 = vpop.f32.mrb[0].mxu0
    %v1261 = vadd.f32 %v931, %v1260
    %v1262 = vpop.f32.mrb[0].mxu0
    %v1263 = vadd.f32 %v933, %v1262
    %1264 = vmatprep.mubr.bf16.mxu0 0
    %1265 = vmatmul.mubr.bf16.gmra.mrb[0].mxu0 %v1160
    %v1266 = vpop.f32.mrb[0].mxu0
    %v1267 = vadd.f32 %v937, %v1266
    %v1268 = vpop.f32.mrb[0].mxu0
    %v1269 = vadd.f32 %v939, %v1268
    %v1270 = vpop.f32.mrb[0].mxu0
    %v1271 = vadd.f32 %v941, %v1270
    %v1272 = vpop.f32.mrb[0].mxu0
    %v1273 = vadd.f32 %v943, %v1272
    %1274 = vdwg.mxu0
    %1275 = vmatprep.subr.bf16.mxu0 %v1125
    %1276 = vmatpush1.bf16.msra.mxu0 %v1124
    %1277 = vmatprep.subr.bf16.mxu0 %v1129
    %1278 = vmatpush1.bf16.msra.mxu0 %v1128
    %1279 = vmatprep.subr.bf16.mxu0 0
    %1280 = vmatpush1.bf16.msra.mxu0 0
    %1281 = vmatprep.subr.bf16.mxu0 0
    %1282 = vmatpush1.bf16.msra.mxu0 0
    %1283 = vmatprep.subr.bf16.mxu0 0
    %1284 = vmatpush1.bf16.msra.mxu0 0
    %1285 = vmatprep.subr.bf16.mxu0 0
    %1286 = vmatpush1.bf16.msra.mxu0 0
    %1287 = vmatprep.subr.bf16.mxu0 0
    %1288 = vmatpush1.bf16.msra.mxu0 0
    %1289 = vmatprep.subr.bf16.mxu0 0
    %1290 = vmatpush1.bf16.msra.mxu0 0
    %1291 = vmatprep.subr.bf16.mxu0 0
    %1292 = vmatpush1.bf16.msra.mxu0 0
    %1293 = vmatprep.subr.bf16.mxu0 0
    %1294 = vmatpush1.bf16.msra.mxu0 0
    %1295 = vmatprep.subr.bf16.mxu0 0
    %1296 = vmatpush1.bf16.msra.mxu0 0
    %1297 = vmatprep.subr.bf16.mxu0 0
    %1298 = vmatpush1.bf16.msra.mxu0 0
    %1299 = vmatprep.subr.bf16.mxu0 0
    %1300 = vmatpush1.bf16.msra.mxu0 0
    %1301 = vmatprep.subr.bf16.mxu0 0
    %1302 = vmatpush1.bf16.msra.mxu0 0
    %1303 = vmatprep.subr.bf16.mxu0 0
    %1304 = vmatpush1.bf16.msra.mxu0 0
    %1305 = vmatprep.subr.bf16.mxu0 0
    %1306 = vmatpush1.bf16.msra.mxu0 0
    %1307 = vmatprep.mubr.bf16.mxu0 0
    %1308 = vmatmul.mubr.bf16.gmra.mrb[0].mxu0 %v1139
    %v1309 = vpop.f32.mrb[0].mxu0
    %v1310 = vadd.f32 %v980, %v1309
    %v1311 = vpop.f32.mrb[0].mxu0
    %v1312 = vadd.f32 %v982, %v1311
    %v1313 = vpop.f32.mrb[0].mxu0
    %v1314 = vadd.f32 %v984, %v1313
    %v1315 = vpop.f32.mrb[0].mxu0
    %v1316 = vadd.f32 %v986, %v1315
    %1317 = vmatprep.mubr.bf16.mxu0 0
    %1318 = vmatmul.mubr.bf16.gmra.mrb[0].mxu0 %v1142
    %v1319 = vpop.f32.mrb[0].mxu0
    %v1320 = vadd.f32 %v990, %v1319
    %v1321 = vpop.f32.mrb[0].mxu0
    %v1322 = vadd.f32 %v992, %v1321
    %v1323 = vpop.f32.mrb[0].mxu0
    %v1324 = vadd.f32 %v994, %v1323
    %v1325 = vpop.f32.mrb[0].mxu0
    %v1326 = vadd.f32 %v996, %v1325
    %1327 = vmatprep.mubr.bf16.mxu0 0
    %1328 = vmatmul.mubr.bf16.gmra.mrb[0].mxu0 %v1145
    %v1329 = vpop.f32.mrb[0].mxu0
    %v1330 = vadd.f32 %v1000, %v1329
    %v1331 = vpop.f32.mrb[0].mxu0
    %v1332 = vadd.f32 %v1002, %v1331
    %v1333 = vpop.f32.mrb[0].mxu0
    %v1334 = vadd.f32 %v1004, %v1333
    %v1335 = vpop.f32.mrb[0].mxu0
    %v1336 = vadd.f32 %v1006, %v1335
    %1337 = vmatprep.mubr.bf16.mxu0 0
    %1338 = vmatmul.mubr.bf16.gmra.mrb[0].mxu0 %v1148
    %v1339 = vpop.f32.mrb[0].mxu0
    %v1340 = vadd.f32 %v1010, %v1339
    %v1341 = vpop.f32.mrb[0].mxu0
    %v1342 = vadd.f32 %v1012, %v1341
    %v1343 = vpop.f32.mrb[0].mxu0
    %v1344 = vadd.f32 %v1014, %v1343
    %v1345 = vpop.f32.mrb[0].mxu0
    %v1346 = vadd.f32 %v1016, %v1345
    %1347 = vmatprep.mubr.bf16.mxu0 0
    %1348 = vmatmul.mubr.bf16.gmra.mrb[0].mxu0 %v1151
    %v1349 = vpop.f32.mrb[0].mxu0
    %v1350 = vadd.f32 %v1020, %v1349
    %v1351 = vpop.f32.mrb[0].mxu0
    %v1352 = vadd.f32 %v1022, %v1351
    %v1353 = vpop.f32.mrb[0].mxu0
    %v1354 = vadd.f32 %v1024, %v1353
    %v1355 = vpop.f32.mrb[0].mxu0
    %v1356 = vadd.f32 %v1026, %v1355
    %1357 = vmatprep.mubr.bf16.mxu0 0
    %1358 = vmatmul.mubr.bf16.gmra.mrb[0].mxu0 %v1154
    %v1359 = vpop.f32.mrb[0].mxu0
    %v1360 = vadd.f32 %v1030, %v1359
    %v1361 = vpop.f32.mrb[0].mxu0
    %v1362 = vadd.f32 %v1032, %v1361
    %v1363 = vpop.f32.mrb[0].mxu0
    %v1364 = vadd.f32 %v1034, %v1363
    %v1365 = vpop.f32.mrb[0].mxu0
    %v1366 = vadd.f32 %v1036, %v1365
    %1367 = vmatprep.mubr.bf16.mxu0 0
    %1368 = vmatmul.mubr.bf16.gmra.mrb[0].mxu0 %v1157
    %v1369 = vpop.f32.mrb[0].mxu0
    %v1370 = vadd.f32 %v1040, %v1369
    %v1371 = vpop.f32.mrb[0].mxu0
    %v1372 = vadd.f32 %v1042, %v1371
    %v1373 = vpop.f32.mrb[0].mxu0
    %v1374 = vadd.f32 %v1044, %v1373
    %v1375 = vpop.f32.mrb[0].mxu0
    %v1376 = vadd.f32 %v1046, %v1375
    %1377 = vmatprep.mubr.bf16.mxu0 0
    %1378 = vmatmul.mubr.bf16.gmra.mrb[0].mxu0 %v1160
    %v1379 = vpop.f32.mrb[0].mxu0
    %v1380 = vadd.f32 %v1050, %v1379
    %v1381 = vpop.f32.mrb[0].mxu0
    %v1382 = vadd.f32 %v1052, %v1381
    %v1383 = vpop.f32.mrb[0].mxu0
    %v1384 = vadd.f32 %v1054, %v1383
    %v1385 = vpop.f32.mrb[0].mxu0
    %v1386 = vadd.f32 %v1056, %v1385
    %1387 = vdwg.mxu0
    %v1388 = vld [vmem:[#allocation13] sm:$0xf]
    %v1390 = vlaneseq
    %v1391 = vshrl.u32 %v1390, 7
    %v1392 = vsub.s32 0, %v1391
    %v1393 = vrot.slane %v1388, %v1392
    %v1394 = vlaneseq
    %v1395 = vshrl.u32 %v1394, 7
    %v1396 = vsub.s32 1, %v1395
    %v1397 = vrot.slane %v1388, %v1396
    %v1398 = vlaneseq
    %v1399 = vshrl.u32 %v1398, 7
    %v1400 = vsub.s32 2, %v1399
    %v1401 = vrot.slane %v1388, %v1400
    %v1402 = vlaneseq
    %v1403 = vshrl.u32 %v1402, 7
    %v1404 = vsub.s32 3, %v1403
    %v1405 = vrot.slane %v1388, %v1404
    %v1410 = vadd.f32 %v1197, %v1393
    %v1411 = vadd.f32 %v1199, %v1397
    %v1412 = vadd.f32 %v1310, %v1401
    %v1413 = vadd.f32 %v1312, %v1405
    %v1414 = vadd.f32 %v1201, %v1393
    %v1415 = vadd.f32 %v1203, %v1397
    %v1416 = vadd.f32 %v1314, %v1401
    %v1417 = vadd.f32 %v1316, %v1405
    %v1418 = vadd.f32 %v1207, %v1393
    %v1419 = vadd.f32 %v1209, %v1397
    %v1420 = vadd.f32 %v1320, %v1401
    %v1421 = vadd.f32 %v1322, %v1405
    %v1422 = vadd.f32 %v1211, %v1393
    %v1423 = vadd.f32 %v1213, %v1397
    %v1424 = vadd.f32 %v1324, %v1401
    %v1425 = vadd.f32 %v1326, %v1405
    %v1426 = vadd.f32 %v1217, %v1393
    %v1427 = vadd.f32 %v1219, %v1397
    %v1428 = vadd.f32 %v1330, %v1401
    %v1429 = vadd.f32 %v1332, %v1405
    %v1430 = vadd.f32 %v1221, %v1393
    %v1431 = vadd.f32 %v1223, %v1397
    %v1432 = vadd.f32 %v1334, %v1401
    %v1433 = vadd.f32 %v1336, %v1405
    %v1434 = vadd.f32 %v1227, %v1393
    %v1435 = vadd.f32 %v1229, %v1397
    %v1436 = vadd.f32 %v1340, %v1401
    %v1437 = vadd.f32 %v1342, %v1405
    %v1438 = vadd.f32 %v1231, %v1393
    %v1439 = vadd.f32 %v1233, %v1397
    %v1440 = vadd.f32 %v1344, %v1401
    %v1441 = vadd.f32 %v1346, %v1405
    %v1442 = vadd.f32 %v1237, %v1393
    %v1443 = vadd.f32 %v1239, %v1397
    %v1444 = vadd.f32 %v1350, %v1401
    %v1445 = vadd.f32 %v1352, %v1405
    %v1446 = vadd.f32 %v1241, %v1393
    %v1447 = vadd.f32 %v1243, %v1397
    %v1448 = vadd.f32 %v1354, %v1401
    %v1449 = vadd.f32 %v1356, %v1405
    %v1450 = vadd.f32 %v1247, %v1393
    %v1451 = vadd.f32 %v1249, %v1397
    %v1452 = vadd.f32 %v1360, %v1401
    %v1453 = vadd.f32 %v1362, %v1405
    %v1454 = vadd.f32 %v1251, %v1393
    %v1455 = vadd.f32 %v1253, %v1397
    %v1456 = vadd.f32 %v1364, %v1401
    %v1457 = vadd.f32 %v1366, %v1405
    %v1458 = vadd.f32 %v1257, %v1393
    %v1459 = vadd.f32 %v1259, %v1397
    %v1460 = vadd.f32 %v1370, %v1401
    %v1461 = vadd.f32 %v1372, %v1405
    %v1462 = vadd.f32 %v1261, %v1393
    %v1463 = vadd.f32 %v1263, %v1397
    %v1464 = vadd.f32 %v1374, %v1401
    %v1465 = vadd.f32 %v1376, %v1405
    %v1466 = vadd.f32 %v1267, %v1393
    %v1467 = vadd.f32 %v1269, %v1397
    %v1468 = vadd.f32 %v1380, %v1401
    %v1469 = vadd.f32 %v1382, %v1405
    %v1470 = vadd.f32 %v1271, %v1393
    %v1471 = vadd.f32 %v1273, %v1397
    %v1472 = vadd.f32 %v1384, %v1401
    %v1473 = vadd.f32 %v1386, %v1405
    %vm1474 = vcmp.ge.f32.partialorder %v1410, 0.0
    %vm1475 = vcmp.ge.f32.partialorder %v1411, 0.0
    %vm1476 = vcmp.ge.f32.partialorder %v1412, 0.0
    %vm1477 = vcmp.ge.f32.partialorder %v1413, 0.0
    %vm1478 = vcmp.ge.f32.partialorder %v1414, 0.0
    %vm1479 = vcmp.ge.f32.partialorder %v1415, 0.0
    %vm1480 = vcmp.ge.f32.partialorder %v1416, 0.0
    %vm1481 = vcmp.ge.f32.partialorder %v1417, 0.0
    %vm1482 = vcmp.ge.f32.partialorder %v1418, 0.0
    %vm1483 = vcmp.ge.f32.partialorder %v1419, 0.0
    %vm1484 = vcmp.ge.f32.partialorder %v1420, 0.0
    %vm1485 = vcmp.ge.f32.partialorder %v1421, 0.0
    %vm1486 = vcmp.ge.f32.partialorder %v1422, 0.0
    %vm1487 = vcmp.ge.f32.partialorder %v1423, 0.0
    %vm1488 = vcmp.ge.f32.partialorder %v1424, 0.0
    %vm1489 = vcmp.ge.f32.partialorder %v1425, 0.0
    %vm1490 = vcmp.ge.f32.partialorder %v1426, 0.0
    %vm1491 = vcmp.ge.f32.partialorder %v1427, 0.0
    %vm1492 = vcmp.ge.f32.partialorder %v1428, 0.0
    %vm1493 = vcmp.ge.f32.partialorder %v1429, 0.0
    %vm1494 = vcmp.ge.f32.partialorder %v1430, 0.0
    %vm1495 = vcmp.ge.f32.partialorder %v1431, 0.0
    %vm1496 = vcmp.ge.f32.partialorder %v1432, 0.0
    %vm1497 = vcmp.ge.f32.partialorder %v1433, 0.0
    %vm1498 = vcmp.ge.f32.partialorder %v1434, 0.0
    %vm1499 = vcmp.ge.f32.partialorder %v1435, 0.0
    %vm1500 = vcmp.ge.f32.partialorder %v1436, 0.0
    %vm1501 = vcmp.ge.f32.partialorder %v1437, 0.0
    %vm1502 = vcmp.ge.f32.partialorder %v1438, 0.0
    %vm1503 = vcmp.ge.f32.partialorder %v1439, 0.0
    %vm1504 = vcmp.ge.f32.partialorder %v1440, 0.0
    %vm1505 = vcmp.ge.f32.partialorder %v1441, 0.0
    %vm1506 = vcmp.ge.f32.partialorder %v1442, 0.0
    %vm1507 = vcmp.ge.f32.partialorder %v1443, 0.0
    %vm1508 = vcmp.ge.f32.partialorder %v1444, 0.0
    %vm1509 = vcmp.ge.f32.partialorder %v1445, 0.0
    %vm1510 = vcmp.ge.f32.partialorder %v1446, 0.0
    %vm1511 = vcmp.ge.f32.partialorder %v1447, 0.0
    %vm1512 = vcmp.ge.f32.partialorder %v1448, 0.0
    %vm1513 = vcmp.ge.f32.partialorder %v1449, 0.0
    %vm1514 = vcmp.ge.f32.partialorder %v1450, 0.0
    %vm1515 = vcmp.ge.f32.partialorder %v1451, 0.0
    %vm1516 = vcmp.ge.f32.partialorder %v1452, 0.0
    %vm1517 = vcmp.ge.f32.partialorder %v1453, 0.0
    %vm1518 = vcmp.ge.f32.partialorder %v1454, 0.0
    %vm1519 = vcmp.ge.f32.partialorder %v1455, 0.0
    %vm1520 = vcmp.ge.f32.partialorder %v1456, 0.0
    %vm1521 = vcmp.ge.f32.partialorder %v1457, 0.0
    %vm1522 = vcmp.ge.f32.partialorder %v1458, 0.0
    %vm1523 = vcmp.ge.f32.partialorder %v1459, 0.0
    %vm1524 = vcmp.ge.f32.partialorder %v1460, 0.0
    %vm1525 = vcmp.ge.f32.partialorder %v1461, 0.0
    %vm1526 = vcmp.ge.f32.partialorder %v1462, 0.0
    %vm1527 = vcmp.ge.f32.partialorder %v1463, 0.0
    %vm1528 = vcmp.ge.f32.partialorder %v1464, 0.0
    %vm1529 = vcmp.ge.f32.partialorder %v1465, 0.0
    %vm1530 = vcmp.ge.f32.partialorder %v1466, 0.0
    %vm1531 = vcmp.ge.f32.partialorder %v1467, 0.0
    %vm1532 = vcmp.ge.f32.partialorder %v1468, 0.0
    %vm1533 = vcmp.ge.f32.partialorder %v1469, 0.0
    %vm1534 = vcmp.ge.f32.partialorder %v1470, 0.0
    %vm1535 = vcmp.ge.f32.partialorder %v1471, 0.0
    %vm1536 = vcmp.ge.f32.partialorder %v1472, 0.0
    %vm1537 = vcmp.ge.f32.partialorder %v1473, 0.0
    %v1538 = vmul.f32 %v1410, 0.01
    %v1539 = vmul.f32 %v1411, 0.01
    %v1540 = vmul.f32 %v1412, 0.01
    %v1541 = vmul.f32 %v1413, 0.01
    %v1542 = vmul.f32 %v1414, 0.01
    %v1543 = vmul.f32 %v1415, 0.01
    %v1544 = vmul.f32 %v1416, 0.01
    %v1545 = vmul.f32 %v1417, 0.01
    %v1546 = vmul.f32 %v1418, 0.01
    %v1547 = vmul.f32 %v1419, 0.01
    %v1548 = vmul.f32 %v1420, 0.01
    %v1549 = vmul.f32 %v1421, 0.01
    %v1550 = vmul.f32 %v1422, 0.01
    %v1551 = vmul.f32 %v1423, 0.01
    %v1552 = vmul.f32 %v1424, 0.01
    %v1553 = vmul.f32 %v1425, 0.01
    %v1554 = vmul.f32 %v1426, 0.01
    %v1555 = vmul.f32 %v1427, 0.01
    %v1556 = vmul.f32 %v1428, 0.01
    %v1557 = vmul.f32 %v1429, 0.01
    %v1558 = vmul.f32 %v1430, 0.01
    %v1559 = vmul.f32 %v1431, 0.01
    %v1560 = vmul.f32 %v1432, 0.01
    %v1561 = vmul.f32 %v1433, 0.01
    %v1562 = vmul.f32 %v1434, 0.01
    %v1563 = vmul.f32 %v1435, 0.01
    %v1564 = vmul.f32 %v1436, 0.01
    %v1565 = vmul.f32 %v1437, 0.01
    %v1566 = vmul.f32 %v1438, 0.01
    %v1567 = vmul.f32 %v1439, 0.01
    %v1568 = vmul.f32 %v1440, 0.01
    %v1569 = vmul.f32 %v1441, 0.01
    %v1570 = vmul.f32 %v1442, 0.01
    %v1571 = vmul.f32 %v1443, 0.01
    %v1572 = vmul.f32 %v1444, 0.01
    %v1573 = vmul.f32 %v1445, 0.01
    %v1574 = vmul.f32 %v1446, 0.01
    %v1575 = vmul.f32 %v1447, 0.01
    %v1576 = vmul.f32 %v1448, 0.01
    %v1577 = vmul.f32 %v1449, 0.01
    %v1578 = vmul.f32 %v1450, 0.01
    %v1579 = vmul.f32 %v1451, 0.01
    %v1580 = vmul.f32 %v1452, 0.01
    %v1581 = vmul.f32 %v1453, 0.01
    %v1582 = vmul.f32 %v1454, 0.01
    %v1583 = vmul.f32 %v1455, 0.01
    %v1584 = vmul.f32 %v1456, 0.01
    %v1585 = vmul.f32 %v1457, 0.01
    %v1586 = vmul.f32 %v1458, 0.01
    %v1587 = vmul.f32 %v1459, 0.01
    %v1588 = vmul.f32 %v1460, 0.01
    %v1589 = vmul.f32 %v1461, 0.01
    %v1590 = vmul.f32 %v1462, 0.01
    %v1591 = vmul.f32 %v1463, 0.01
    %v1592 = vmul.f32 %v1464, 0.01
    %v1593 = vmul.f32 %v1465, 0.01
    %v1594 = vmul.f32 %v1466, 0.01
    %v1595 = vmul.f32 %v1467, 0.01
    %v1596 = vmul.f32 %v1468, 0.01
    %v1597 = vmul.f32 %v1469, 0.01
    %v1598 = vmul.f32 %v1470, 0.01
    %v1599 = vmul.f32 %v1471, 0.01
    %v1600 = vmul.f32 %v1472, 0.01
    %v1601 = vmul.f32 %v1473, 0.01
    %v1602 = vsel %vm1474, %v1410, %v1538
    %v1603 = vsel %vm1475, %v1411, %v1539
    %v1604 = vsel %vm1476, %v1412, %v1540
    %v1605 = vsel %vm1477, %v1413, %v1541
    %v1606 = vsel %vm1478, %v1414, %v1542
    %v1607 = vsel %vm1479, %v1415, %v1543
    %v1608 = vsel %vm1480, %v1416, %v1544
    %v1609 = vsel %vm1481, %v1417, %v1545
    %v1610 = vsel %vm1482, %v1418, %v1546
    %v1611 = vsel %vm1483, %v1419, %v1547
    %v1612 = vsel %vm1484, %v1420, %v1548
    %v1613 = vsel %vm1485, %v1421, %v1549
    %v1614 = vsel %vm1486, %v1422, %v1550
    %v1615 = vsel %vm1487, %v1423, %v1551
    %v1616 = vsel %vm1488, %v1424, %v1552
    %v1617 = vsel %vm1489, %v1425, %v1553
    %v1618 = vsel %vm1490, %v1426, %v1554
    %v1619 = vsel %vm1491, %v1427, %v1555
    %v1620 = vsel %vm1492, %v1428, %v1556
    %v1621 = vsel %vm1493, %v1429, %v1557
    %v1622 = vsel %vm1494, %v1430, %v1558
    %v1623 = vsel %vm1495, %v1431, %v1559
    %v1624 = vsel %vm1496, %v1432, %v1560
    %v1625 = vsel %vm1497, %v1433, %v1561
    %v1626 = vsel %vm1498, %v1434, %v1562
    %v1627 = vsel %vm1499, %v1435, %v1563
    %v1628 = vsel %vm1500, %v1436, %v1564
    %v1629 = vsel %vm1501, %v1437, %v1565
    %v1630 = vsel %vm1502, %v1438, %v1566
    %v1631 = vsel %vm1503, %v1439, %v1567
    %v1632 = vsel %vm1504, %v1440, %v1568
    %v1633 = vsel %vm1505, %v1441, %v1569
    %v1634 = vsel %vm1506, %v1442, %v1570
    %v1635 = vsel %vm1507, %v1443, %v1571
    %v1636 = vsel %vm1508, %v1444, %v1572
    %v1637 = vsel %vm1509, %v1445, %v1573
    %v1638 = vsel %vm1510, %v1446, %v1574
    %v1639 = vsel %vm1511, %v1447, %v1575
    %v1640 = vsel %vm1512, %v1448, %v1576
    %v1641 = vsel %vm1513, %v1449, %v1577
    %v1642 = vsel %vm1514, %v1450, %v1578
    %v1643 = vsel %vm1515, %v1451, %v1579
    %v1644 = vsel %vm1516, %v1452, %v1580
    %v1645 = vsel %vm1517, %v1453, %v1581
    %v1646 = vsel %vm1518, %v1454, %v1582
    %v1647 = vsel %vm1519, %v1455, %v1583
    %v1648 = vsel %vm1520, %v1456, %v1584
    %v1649 = vsel %vm1521, %v1457, %v1585
    %v1650 = vsel %vm1522, %v1458, %v1586
    %v1651 = vsel %vm1523, %v1459, %v1587
    %v1652 = vsel %vm1524, %v1460, %v1588
    %v1653 = vsel %vm1525, %v1461, %v1589
    %v1654 = vsel %vm1526, %v1462, %v1590
    %v1655 = vsel %vm1527, %v1463, %v1591
    %v1656 = vsel %vm1528, %v1464, %v1592
    %v1657 = vsel %vm1529, %v1465, %v1593
    %v1658 = vsel %vm1530, %v1466, %v1594
    %v1659 = vsel %vm1531, %v1467, %v1595
    %v1660 = vsel %vm1532, %v1468, %v1596
    %v1661 = vsel %vm1533, %v1469, %v1597
    %v1662 = vsel %vm1534, %v1470, %v1598
    %v1663 = vsel %vm1535, %v1471, %v1599
    %v1664 = vsel %vm1536, %v1472, %v1600
    %v1665 = vsel %vm1537, %v1473, %v1601
    %v1666 = vpack.c.bf16 %v1606, %v1602
    %v1667 = vpack.c.bf16 %v1607, %v1603
    %v1668 = vpack.c.bf16 %v1608, %v1604
    %v1669 = vpack.c.bf16 %v1609, %v1605
    %v1670 = vpack.c.bf16 %v1614, %v1610
    %v1671 = vpack.c.bf16 %v1615, %v1611
    %v1672 = vpack.c.bf16 %v1616, %v1612
    %v1673 = vpack.c.bf16 %v1617, %v1613
    %v1674 = vpack.c.bf16 %v1622, %v1618
    %v1675 = vpack.c.bf16 %v1623, %v1619
    %v1676 = vpack.c.bf16 %v1624, %v1620
    %v1677 = vpack.c.bf16 %v1625, %v1621
    %v1678 = vpack.c.bf16 %v1630, %v1626
    %v1679 = vpack.c.bf16 %v1631, %v1627
    %v1680 = vpack.c.bf16 %v1632, %v1628
    %v1681 = vpack.c.bf16 %v1633, %v1629
    %v1682 = vpack.c.bf16 %v1638, %v1634
    %v1683 = vpack.c.bf16 %v1639, %v1635
    %v1684 = vpack.c.bf16 %v1640, %v1636
    %v1685 = vpack.c.bf16 %v1641, %v1637
    %v1686 = vpack.c.bf16 %v1646, %v1642
    %v1687 = vpack.c.bf16 %v1647, %v1643
    %v1688 = vpack.c.bf16 %v1648, %v1644
    %v1689 = vpack.c.bf16 %v1649, %v1645
    %v1690 = vpack.c.bf16 %v1654, %v1650
    %v1691 = vpack.c.bf16 %v1655, %v1651
    %v1692 = vpack.c.bf16 %v1656, %v1652
    %v1693 = vpack.c.bf16 %v1657, %v1653
    %v1694 = vpack.c.bf16 %v1662, %v1658
    %v1695 = vpack.c.bf16 %v1663, %v1659
    %v1696 = vpack.c.bf16 %v1664, %v1660
    %v1697 = vpack.c.bf16 %v1665, %v1661
    %v1698 = vld [vmem:[#allocation14] sm:$0xff]
    %v1699 = vld [vmem:[#allocation14 + $0x8] sm:$0xff]
    %v1700 = vld [vmem:[#allocation14 + $0x10] sm:$0xff]
    %v1701 = vld [vmem:[#allocation14 + $0x18] sm:$0xff]
    %v1702 = vld [vmem:[#allocation14 + $0x20] sm:$0xff]
    %v1703 = vld [vmem:[#allocation14 + $0x28] sm:$0xff]
    %v1704 = vld [vmem:[#allocation14 + $0x30] sm:$0xff]
    %v1705 = vld [vmem:[#allocation14 + $0x38] sm:$0xff]
    %v1706 = vld [vmem:[#allocation14 + $0x40] sm:$0xff]
    %v1707 = vld [vmem:[#allocation14 + $0x48] sm:$0xff]
    %v1708 = vld [vmem:[#allocation14 + $0x50] sm:$0xff]
    %v1709 = vld [vmem:[#allocation14 + $0x58] sm:$0xff]
    %v1710 = vld [vmem:[#allocation14 + $0x60] sm:$0xff]
    %v1711 = vld [vmem:[#allocation14 + $0x68] sm:$0xff]
    %v1712 = vld [vmem:[#allocation14 + $0x70] sm:$0xff]
    %v1713 = vld [vmem:[#allocation14 + $0x78] sm:$0xff]
    %v1714 = vld [vmem:[#allocation14 + $0x80] sm:$0xff]
    %v1715 = vld [vmem:[#allocation14 + $0x88] sm:$0xff]
    %v1716 = vld [vmem:[#allocation14 + $0x90] sm:$0xff]
    %v1717 = vld [vmem:[#allocation14 + $0x98] sm:$0xff]
    %v1718 = vld [vmem:[#allocation14 + $0xa0] sm:$0xff]
    %v1719 = vld [vmem:[#allocation14 + $0xa8] sm:$0xff]
    %v1720 = vld [vmem:[#allocation14 + $0xb0] sm:$0xff]
    %v1721 = vld [vmem:[#allocation14 + $0xb8] sm:$0xff]
    %v1722 = vld [vmem:[#allocation14 + $0xc0] sm:$0xff]
    %v1723 = vld [vmem:[#allocation14 + $0xc8] sm:$0xff]
    %v1724 = vld [vmem:[#allocation14 + $0xd0] sm:$0xff]
    %v1725 = vld [vmem:[#allocation14 + $0xd8] sm:$0xff]
    %v1726 = vld [vmem:[#allocation14 + $0xe0] sm:$0xff]
    %v1727 = vld [vmem:[#allocation14 + $0xe8] sm:$0xff]
    %v1728 = vld [vmem:[#allocation14 + $0xf0] sm:$0xff]
    %v1729 = vld [vmem:[#allocation14 + $0xf8] sm:$0xff]
    %v1730 = vld [vmem:[#allocation14 + $0x100] sm:$0xff]
    %v1731 = vld [vmem:[#allocation14 + $0x108] sm:$0xff]
    %v1732 = vld [vmem:[#allocation14 + $0x110] sm:$0xff]
    %v1733 = vld [vmem:[#allocation14 + $0x118] sm:$0xff]
    %v1734 = vld [vmem:[#allocation14 + $0x120] sm:$0xff]
    %v1735 = vld [vmem:[#allocation14 + $0x128] sm:$0xff]
    %v1736 = vld [vmem:[#allocation14 + $0x130] sm:$0xff]
    %v1737 = vld [vmem:[#allocation14 + $0x138] sm:$0xff]
    %v1738 = vld [vmem:[#allocation14 + $0x140] sm:$0xff]
    %v1739 = vld [vmem:[#allocation14 + $0x148] sm:$0xff]
    %v1740 = vld [vmem:[#allocation14 + $0x150] sm:$0xff]
    %v1741 = vld [vmem:[#allocation14 + $0x158] sm:$0xff]
    %v1742 = vld [vmem:[#allocation14 + $0x160] sm:$0xff]
    %v1743 = vld [vmem:[#allocation14 + $0x168] sm:$0xff]
    %v1744 = vld [vmem:[#allocation14 + $0x170] sm:$0xff]
    %v1745 = vld [vmem:[#allocation14 + $0x178] sm:$0xff]
    %v1746 = vld [vmem:[#allocation14 + $0x180] sm:$0xff]
    %v1747 = vld [vmem:[#allocation14 + $0x188] sm:$0xff]
    %v1748 = vld [vmem:[#allocation14 + $0x190] sm:$0xff]
    %v1749 = vld [vmem:[#allocation14 + $0x198] sm:$0xff]
    %v1750 = vld [vmem:[#allocation14 + $0x1a0] sm:$0xff]
    %v1751 = vld [vmem:[#allocation14 + $0x1a8] sm:$0xff]
    %v1752 = vld [vmem:[#allocation14 + $0x1b0] sm:$0xff]
    %v1753 = vld [vmem:[#allocation14 + $0x1b8] sm:$0xff]
    %v1754 = vld [vmem:[#allocation14 + $0x1c0] sm:$0xff]
    %v1755 = vld [vmem:[#allocation14 + $0x1c8] sm:$0xff]
    %v1756 = vld [vmem:[#allocation14 + $0x1d0] sm:$0xff]
    %v1757 = vld [vmem:[#allocation14 + $0x1d8] sm:$0xff]
    %v1758 = vld [vmem:[#allocation14 + $0x1e0] sm:$0xff]
    %v1759 = vld [vmem:[#allocation14 + $0x1e8] sm:$0xff]
    %v1760 = vld [vmem:[#allocation14 + $0x1f0] sm:$0xff]
    %v1761 = vld [vmem:[#allocation14 + $0x1f8] sm:$0xff]
    %v1762 = vld [vmem:[#allocation16] sm:$0x3]
    %v1764 = vlaneseq
    %v1765 = vshrl.u32 %v1764, 7
    %v1766 = vsub.s32 0, %v1765
    %v1767 = vrot.slane %v1762, %v1766
    %v1768 = vlaneseq
    %v1769 = vshrl.u32 %v1768, 7
    %v1770 = vsub.s32 1, %v1769
    %v1771 = vrot.slane %v1762, %v1770
    %v1838 = vunpack.c.l.b16 %v1698
    %v1839 = vunpack.c.h.b16 %v1698
    %v1840 = vunpack.c.l.b16 %v1699
    %v1841 = vunpack.c.h.b16 %v1699
    %v1842 = vunpack.c.l.b16 %v1700
    %v1843 = vunpack.c.h.b16 %v1700
    %v1844 = vunpack.c.l.b16 %v1701
    %v1845 = vunpack.c.h.b16 %v1701
    %v1846 = vunpack.c.l.b16 %v1702
    %v1847 = vunpack.c.h.b16 %v1702
    %v1848 = vunpack.c.l.b16 %v1703
    %v1849 = vunpack.c.h.b16 %v1703
    %v1850 = vunpack.c.l.b16 %v1704
    %v1851 = vunpack.c.h.b16 %v1704
    %v1852 = vunpack.c.l.b16 %v1705
    %v1853 = vunpack.c.h.b16 %v1705
    %v1854 = vunpack.c.l.b16 %v1706
    %v1855 = vunpack.c.h.b16 %v1706
    %v1856 = vunpack.c.l.b16 %v1707
    %v1857 = vunpack.c.h.b16 %v1707
    %v1858 = vunpack.c.l.b16 %v1708
    %v1859 = vunpack.c.h.b16 %v1708
    %v1860 = vunpack.c.l.b16 %v1709
    %v1861 = vunpack.c.h.b16 %v1709
    %v1862 = vunpack.c.l.b16 %v1710
    %v1863 = vunpack.c.h.b16 %v1710
    %v1864 = vunpack.c.l.b16 %v1711
    %v1865 = vunpack.c.h.b16 %v1711
    %v1866 = vunpack.c.l.b16 %v1712
    %v1867 = vunpack.c.h.b16 %v1712
    %v1868 = vunpack.c.l.b16 %v1713
    %v1869 = vunpack.c.h.b16 %v1713
    %v1870 = vunpack.c.l.b16 %v1714
    %v1871 = vunpack.c.h.b16 %v1714
    %v1872 = vunpack.c.l.b16 %v1715
    %v1873 = vunpack.c.h.b16 %v1715
    %v1874 = vunpack.c.l.b16 %v1716
    %v1875 = vunpack.c.h.b16 %v1716
    %v1876 = vunpack.c.l.b16 %v1717
    %v1877 = vunpack.c.h.b16 %v1717
    %v1878 = vunpack.c.l.b16 %v1718
    %v1879 = vunpack.c.h.b16 %v1718
    %v1880 = vunpack.c.l.b16 %v1719
    %v1881 = vunpack.c.h.b16 %v1719
    %v1882 = vunpack.c.l.b16 %v1720
    %v1883 = vunpack.c.h.b16 %v1720
    %v1884 = vunpack.c.l.b16 %v1721
    %v1885 = vunpack.c.h.b16 %v1721
    %v1886 = vunpack.c.l.b16 %v1722
    %v1887 = vunpack.c.h.b16 %v1722
    %v1888 = vunpack.c.l.b16 %v1723
    %v1889 = vunpack.c.h.b16 %v1723
    %v1890 = vunpack.c.l.b16 %v1724
    %v1891 = vunpack.c.h.b16 %v1724
    %v1892 = vunpack.c.l.b16 %v1725
    %v1893 = vunpack.c.h.b16 %v1725
    %v1894 = vunpack.c.l.b16 %v1726
    %v1895 = vunpack.c.h.b16 %v1726
    %v1896 = vunpack.c.l.b16 %v1727
    %v1897 = vunpack.c.h.b16 %v1727
    %v1898 = vunpack.c.l.b16 %v1728
    %v1899 = vunpack.c.h.b16 %v1728
    %v1900 = vunpack.c.l.b16 %v1729
    %v1901 = vunpack.c.h.b16 %v1729
    %v1902 = vunpack.c.l.b16 %v1730
    %v1903 = vunpack.c.h.b16 %v1730
    %v1904 = vunpack.c.l.b16 %v1731
    %v1905 = vunpack.c.h.b16 %v1731
    %v1906 = vunpack.c.l.b16 %v1732
    %v1907 = vunpack.c.h.b16 %v1732
    %v1908 = vunpack.c.l.b16 %v1733
    %v1909 = vunpack.c.h.b16 %v1733
    %v1910 = vunpack.c.l.b16 %v1734
    %v1911 = vunpack.c.h.b16 %v1734
    %v1912 = vunpack.c.l.b16 %v1735
    %v1913 = vunpack.c.h.b16 %v1735
    %v1914 = vunpack.c.l.b16 %v1736
    %v1915 = vunpack.c.h.b16 %v1736
    %v1916 = vunpack.c.l.b16 %v1737
    %v1917 = vunpack.c.h.b16 %v1737
    %v1918 = vunpack.c.l.b16 %v1738
    %v1919 = vunpack.c.h.b16 %v1738
    %v1920 = vunpack.c.l.b16 %v1739
    %v1921 = vunpack.c.h.b16 %v1739
    %v1922 = vunpack.c.l.b16 %v1740
    %v1923 = vunpack.c.h.b16 %v1740
    %v1924 = vunpack.c.l.b16 %v1741
    %v1925 = vunpack.c.h.b16 %v1741
    %v1926 = vunpack.c.l.b16 %v1742
    %v1927 = vunpack.c.h.b16 %v1742
    %v1928 = vunpack.c.l.b16 %v1743
    %v1929 = vunpack.c.h.b16 %v1743
    %v1930 = vunpack.c.l.b16 %v1744
    %v1931 = vunpack.c.h.b16 %v1744
    %v1932 = vunpack.c.l.b16 %v1745
    %v1933 = vunpack.c.h.b16 %v1745
    %v1934 = vunpack.c.l.b16 %v1746
    %v1935 = vunpack.c.h.b16 %v1746
    %v1936 = vunpack.c.l.b16 %v1747
    %v1937 = vunpack.c.h.b16 %v1747
    %v1938 = vunpack.c.l.b16 %v1748
    %v1939 = vunpack.c.h.b16 %v1748
    %v1940 = vunpack.c.l.b16 %v1749
    %v1941 = vunpack.c.h.b16 %v1749
    %v1942 = vunpack.c.l.b16 %v1750
    %v1943 = vunpack.c.h.b16 %v1750
    %v1944 = vunpack.c.l.b16 %v1751
    %v1945 = vunpack.c.h.b16 %v1751
    %v1946 = vunpack.c.l.b16 %v1752
    %v1947 = vunpack.c.h.b16 %v1752
    %v1948 = vunpack.c.l.b16 %v1753
    %v1949 = vunpack.c.h.b16 %v1753
    %v1950 = vunpack.c.l.b16 %v1754
    %v1951 = vunpack.c.h.b16 %v1754
    %v1952 = vunpack.c.l.b16 %v1755
    %v1953 = vunpack.c.h.b16 %v1755
    %v1954 = vunpack.c.l.b16 %v1756
    %v1955 = vunpack.c.h.b16 %v1756
    %v1956 = vunpack.c.l.b16 %v1757
    %v1957 = vunpack.c.h.b16 %v1757
    %v1958 = vunpack.c.l.b16 %v1758
    %v1959 = vunpack.c.h.b16 %v1758
    %v1960 = vunpack.c.l.b16 %v1759
    %v1961 = vunpack.c.h.b16 %v1759
    %v1962 = vunpack.c.l.b16 %v1760
    %v1963 = vunpack.c.h.b16 %v1760
    %v1964 = vunpack.c.l.b16 %v1761
    %v1965 = vunpack.c.h.b16 %v1761
    %v1966 = vpack.c.b16 %v1840, %v1838
    %v1967 = vpack.c.b16 %v1841, %v1839
    %v1968 = vpack.c.b16 %v1844, %v1842
    %v1969 = vpack.c.b16 %v1845, %v1843
    %v1970 = vpack.c.b16 %v1848, %v1846
    %v1971 = vpack.c.b16 %v1849, %v1847
    %v1972 = vpack.c.b16 %v1852, %v1850
    %v1973 = vpack.c.b16 %v1853, %v1851
    %v1974 = vpack.c.b16 %v1856, %v1854
    %v1975 = vpack.c.b16 %v1857, %v1855
    %v1976 = vpack.c.b16 %v1860, %v1858
    %v1977 = vpack.c.b16 %v1861, %v1859
    %v1978 = vpack.c.b16 %v1864, %v1862
    %v1979 = vpack.c.b16 %v1865, %v1863
    %v1980 = vpack.c.b16 %v1868, %v1866
    %v1981 = vpack.c.b16 %v1869, %v1867
    %v1982 = vpack.c.b16 %v1872, %v1870
    %v1983 = vpack.c.b16 %v1873, %v1871
    %v1984 = vpack.c.b16 %v1876, %v1874
    %v1985 = vpack.c.b16 %v1877, %v1875
    %v1986 = vpack.c.b16 %v1880, %v1878
    %v1987 = vpack.c.b16 %v1881, %v1879
    %v1988 = vpack.c.b16 %v1884, %v1882
    %v1989 = vpack.c.b16 %v1885, %v1883
    %v1990 = vpack.c.b16 %v1888, %v1886
    %v1991 = vpack.c.b16 %v1889, %v1887
    %v1992 = vpack.c.b16 %v1892, %v1890
    %v1993 = vpack.c.b16 %v1893, %v1891
    %v1994 = vpack.c.b16 %v1896, %v1894
    %v1995 = vpack.c.b16 %v1897, %v1895
    %v1996 = vpack.c.b16 %v1900, %v1898
    %v1997 = vpack.c.b16 %v1901, %v1899
    %v1998 = vpack.c.b16 %v1904, %v1902
    %v1999 = vpack.c.b16 %v1905, %v1903
    %v2000 = vpack.c.b16 %v1908, %v1906
    %v2001 = vpack.c.b16 %v1909, %v1907
    %v2002 = vpack.c.b16 %v1912, %v1910
    %v2003 = vpack.c.b16 %v1913, %v1911
    %v2004 = vpack.c.b16 %v1916, %v1914
    %v2005 = vpack.c.b16 %v1917, %v1915
    %v2006 = vpack.c.b16 %v1920, %v1918
    %v2007 = vpack.c.b16 %v1921, %v1919
    %v2008 = vpack.c.b16 %v1924, %v1922
    %v2009 = vpack.c.b16 %v1925, %v1923
    %v2010 = vpack.c.b16 %v1928, %v1926
    %v2011 = vpack.c.b16 %v1929, %v1927
    %v2012 = vpack.c.b16 %v1932, %v1930
    %v2013 = vpack.c.b16 %v1933, %v1931
    %v2014 = vpack.c.b16 %v1936, %v1934
    %v2015 = vpack.c.b16 %v1937, %v1935
    %v2016 = vpack.c.b16 %v1940, %v1938
    %v2017 = vpack.c.b16 %v1941, %v1939
    %v2018 = vpack.c.b16 %v1944, %v1942
    %v2019 = vpack.c.b16 %v1945, %v1943
    %v2020 = vpack.c.b16 %v1948, %v1946
    %v2021 = vpack.c.b16 %v1949, %v1947
    %v2022 = vpack.c.b16 %v1952, %v1950
    %v2023 = vpack.c.b16 %v1953, %v1951
    %v2024 = vpack.c.b16 %v1956, %v1954
    %v2025 = vpack.c.b16 %v1957, %v1955
    %v2026 = vpack.c.b16 %v1960, %v1958
    %v2027 = vpack.c.b16 %v1961, %v1959
    %v2028 = vpack.c.b16 %v1964, %v1962
    %v2029 = vpack.c.b16 %v1965, %v1963
    %2094 = vmatprep.subr.bf16.mxu0 %v1967
    %2095 = vmatpush1.bf16.msra.mxu0 %v1966
    %2096 = vmatprep.subr.bf16.mxu0 %v1969
    %2097 = vmatpush1.bf16.msra.mxu0 %v1968
    %2098 = vmatprep.subr.bf16.mxu0 %v1971
    %2099 = vmatpush1.bf16.msra.mxu0 %v1970
    %2100 = vmatprep.subr.bf16.mxu0 %v1973
    %2101 = vmatpush1.bf16.msra.mxu0 %v1972
    %2102 = vmatprep.subr.bf16.mxu0 %v1975
    %2103 = vmatpush1.bf16.msra.mxu0 %v1974
    %2104 = vmatprep.subr.bf16.mxu0 %v1977
    %2105 = vmatpush1.bf16.msra.mxu0 %v1976
    %2106 = vmatprep.subr.bf16.mxu0 %v1979
    %2107 = vmatpush1.bf16.msra.mxu0 %v1978
    %2108 = vmatprep.subr.bf16.mxu0 %v1981
    %2109 = vmatpush1.bf16.msra.mxu0 %v1980
    %2110 = vmatprep.subr.bf16.mxu0 %v1983
    %2111 = vmatpush1.bf16.msra.mxu0 %v1982
    %2112 = vmatprep.subr.bf16.mxu0 %v1985
    %2113 = vmatpush1.bf16.msra.mxu0 %v1984
    %2114 = vmatprep.subr.bf16.mxu0 %v1987
    %2115 = vmatpush1.bf16.msra.mxu0 %v1986
    %2116 = vmatprep.subr.bf16.mxu0 %v1989
    %2117 = vmatpush1.bf16.msra.mxu0 %v1988
    %2118 = vmatprep.subr.bf16.mxu0 %v1991
    %2119 = vmatpush1.bf16.msra.mxu0 %v1990
    %2120 = vmatprep.subr.bf16.mxu0 %v1993
    %2121 = vmatpush1.bf16.msra.mxu0 %v1992
    %2122 = vmatprep.subr.bf16.mxu0 %v1995
    %2123 = vmatpush1.bf16.msra.mxu0 %v1994
    %2124 = vmatprep.subr.bf16.mxu0 %v1997
    %2125 = vmatpush1.bf16.msra.mxu0 %v1996
    %2126 = vmatprep.mubr.bf16.mxu0 %v1667
    %2127 = vmatmul.mubr.bf16.gmra.mrb[0].mxu0 %v1666
    %v2128 = vpop.f32.mrb[0].mxu0
    %v2129 = vadd.f32 %v1767, %v2128
    %v2130 = vpop.f32.mrb[0].mxu0
    %v2131 = vadd.f32 %v1771, %v2130
    %v2132 = vpop.f32.mrb[0].mxu0
    %v2133 = vadd.f32 %v1767, %v2132
    %v2134 = vpop.f32.mrb[0].mxu0
    %v2135 = vadd.f32 %v1771, %v2134
    %2136 = vmatprep.mubr.bf16.mxu0 %v1671
    %2137 = vmatmul.mubr.bf16.gmra.mrb[0].mxu0 %v1670
    %v2138 = vpop.f32.mrb[0].mxu0
    %v2139 = vadd.f32 %v1767, %v2138
    %v2140 = vpop.f32.mrb[0].mxu0
    %v2141 = vadd.f32 %v1771, %v2140
    %v2142 = vpop.f32.mrb[0].mxu0
    %v2143 = vadd.f32 %v1767, %v2142
    %v2144 = vpop.f32.mrb[0].mxu0
    %v2145 = vadd.f32 %v1771, %v2144
    %2146 = vmatprep.mubr.bf16.mxu0 %v1675
    %2147 = vmatmul.mubr.bf16.gmra.mrb[0].mxu0 %v1674
    %v2148 = vpop.f32.mrb[0].mxu0
    %v2149 = vadd.f32 %v1767, %v2148
    %v2150 = vpop.f32.mrb[0].mxu0
    %v2151 = vadd.f32 %v1771, %v2150
    %v2152 = vpop.f32.mrb[0].mxu0
    %v2153 = vadd.f32 %v1767, %v2152
    %v2154 = vpop.f32.mrb[0].mxu0
    %v2155 = vadd.f32 %v1771, %v2154
    %2156 = vmatprep.mubr.bf16.mxu0 %v1679
    %2157 = vmatmul.mubr.bf16.gmra.mrb[0].mxu0 %v1678
    %v2158 = vpop.f32.mrb[0].mxu0
    %v2159 = vadd.f32 %v1767, %v2158
    %v2160 = vpop.f32.mrb[0].mxu0
    %v2161 = vadd.f32 %v1771, %v2160
    %v2162 = vpop.f32.mrb[0].mxu0
    %v2163 = vadd.f32 %v1767, %v2162
    %v2164 = vpop.f32.mrb[0].mxu0
    %v2165 = vadd.f32 %v1771, %v2164
    %2166 = vmatprep.mubr.bf16.mxu0 %v1683
    %2167 = vmatmul.mubr.bf16.gmra.mrb[0].mxu0 %v1682
    %v2168 = vpop.f32.mrb[0].mxu0
    %v2169 = vadd.f32 %v1767, %v2168
    %v2170 = vpop.f32.mrb[0].mxu0
    %v2171 = vadd.f32 %v1771, %v2170
    %v2172 = vpop.f32.mrb[0].mxu0
    %v2173 = vadd.f32 %v1767, %v2172
    %v2174 = vpop.f32.mrb[0].mxu0
    %v2175 = vadd.f32 %v1771, %v2174
    %2176 = vmatprep.mubr.bf16.mxu0 %v1687
    %2177 = vmatmul.mubr.bf16.gmra.mrb[0].mxu0 %v1686
    %v2178 = vpop.f32.mrb[0].mxu0
    %v2179 = vadd.f32 %v1767, %v2178
    %v2180 = vpop.f32.mrb[0].mxu0
    %v2181 = vadd.f32 %v1771, %v2180
    %v2182 = vpop.f32.mrb[0].mxu0
    %v2183 = vadd.f32 %v1767, %v2182
    %v2184 = vpop.f32.mrb[0].mxu0
    %v2185 = vadd.f32 %v1771, %v2184
    %2186 = vmatprep.mubr.bf16.mxu0 %v1691
    %2187 = vmatmul.mubr.bf16.gmra.mrb[0].mxu0 %v1690
    %v2188 = vpop.f32.mrb[0].mxu0
    %v2189 = vadd.f32 %v1767, %v2188
    %v2190 = vpop.f32.mrb[0].mxu0
    %v2191 = vadd.f32 %v1771, %v2190
    %v2192 = vpop.f32.mrb[0].mxu0
    %v2193 = vadd.f32 %v1767, %v2192
    %v2194 = vpop.f32.mrb[0].mxu0
    %v2195 = vadd.f32 %v1771, %v2194
    %2196 = vmatprep.mubr.bf16.mxu0 %v1695
    %2197 = vmatmul.mubr.bf16.gmra.mrb[0].mxu0 %v1694
    %v2198 = vpop.f32.mrb[0].mxu0
    %v2199 = vadd.f32 %v1767, %v2198
    %v2200 = vpop.f32.mrb[0].mxu0
    %v2201 = vadd.f32 %v1771, %v2200
    %v2202 = vpop.f32.mrb[0].mxu0
    %v2203 = vadd.f32 %v1767, %v2202
    %v2204 = vpop.f32.mrb[0].mxu0
    %v2205 = vadd.f32 %v1771, %v2204
    %2206 = vdwg.mxu0
    %2207 = vmatprep.subr.bf16.mxu0 %v1999
    %2208 = vmatpush1.bf16.msra.mxu0 %v1998
    %2209 = vmatprep.subr.bf16.mxu0 %v2001
    %2210 = vmatpush1.bf16.msra.mxu0 %v2000
    %2211 = vmatprep.subr.bf16.mxu0 %v2003
    %2212 = vmatpush1.bf16.msra.mxu0 %v2002
    %2213 = vmatprep.subr.bf16.mxu0 %v2005
    %2214 = vmatpush1.bf16.msra.mxu0 %v2004
    %2215 = vmatprep.subr.bf16.mxu0 %v2007
    %2216 = vmatpush1.bf16.msra.mxu0 %v2006
    %2217 = vmatprep.subr.bf16.mxu0 %v2009
    %2218 = vmatpush1.bf16.msra.mxu0 %v2008
    %2219 = vmatprep.subr.bf16.mxu0 %v2011
    %2220 = vmatpush1.bf16.msra.mxu0 %v2010
    %2221 = vmatprep.subr.bf16.mxu0 %v2013
    %2222 = vmatpush1.bf16.msra.mxu0 %v2012
    %2223 = vmatprep.subr.bf16.mxu0 %v2015
    %2224 = vmatpush1.bf16.msra.mxu0 %v2014
    %2225 = vmatprep.subr.bf16.mxu0 %v2017
    %2226 = vmatpush1.bf16.msra.mxu0 %v2016
    %2227 = vmatprep.subr.bf16.mxu0 %v2019
    %2228 = vmatpush1.bf16.msra.mxu0 %v2018
    %2229 = vmatprep.subr.bf16.mxu0 %v2021
    %2230 = vmatpush1.bf16.msra.mxu0 %v2020
    %2231 = vmatprep.subr.bf16.mxu0 %v2023
    %2232 = vmatpush1.bf16.msra.mxu0 %v2022
    %2233 = vmatprep.subr.bf16.mxu0 %v2025
    %2234 = vmatpush1.bf16.msra.mxu0 %v2024
    %2235 = vmatprep.subr.bf16.mxu0 %v2027
    %2236 = vmatpush1.bf16.msra.mxu0 %v2026
    %2237 = vmatprep.subr.bf16.mxu0 %v2029
    %2238 = vmatpush1.bf16.msra.mxu0 %v2028
    %2239 = vmatprep.mubr.bf16.mxu0 %v1669
    %2240 = vmatmul.mubr.bf16.gmra.mrb[0].mxu0 %v1668
    %v2241 = vpop.f32.mrb[0].mxu0
    %v2242 = vadd.f32 %v2129, %v2241
    %v2243 = vpop.f32.mrb[0].mxu0
    %v2244 = vadd.f32 %v2131, %v2243
    %v2245 = vpop.f32.mrb[0].mxu0
    %v2246 = vadd.f32 %v2133, %v2245
    %v2247 = vpop.f32.mrb[0].mxu0
    %v2248 = vadd.f32 %v2135, %v2247
    %2249 = vmatprep.mubr.bf16.mxu0 %v1673
    %2250 = vmatmul.mubr.bf16.gmra.mrb[0].mxu0 %v1672
    %v2251 = vpop.f32.mrb[0].mxu0
    %v2252 = vadd.f32 %v2139, %v2251
    %v2253 = vpop.f32.mrb[0].mxu0
    %v2254 = vadd.f32 %v2141, %v2253
    %v2255 = vpop.f32.mrb[0].mxu0
    %v2256 = vadd.f32 %v2143, %v2255
    %v2257 = vpop.f32.mrb[0].mxu0
    %v2258 = vadd.f32 %v2145, %v2257
    %2259 = vmatprep.mubr.bf16.mxu0 %v1677
    %2260 = vmatmul.mubr.bf16.gmra.mrb[0].mxu0 %v1676
    %v2261 = vpop.f32.mrb[0].mxu0
    %v2262 = vadd.f32 %v2149, %v2261
    %v2263 = vpop.f32.mrb[0].mxu0
    %v2264 = vadd.f32 %v2151, %v2263
    %v2265 = vpop.f32.mrb[0].mxu0
    %v2266 = vadd.f32 %v2153, %v2265
    %v2267 = vpop.f32.mrb[0].mxu0
    %v2268 = vadd.f32 %v2155, %v2267
    %2269 = vmatprep.mubr.bf16.mxu0 %v1681
    %2270 = vmatmul.mubr.bf16.gmra.mrb[0].mxu0 %v1680
    %v2271 = vpop.f32.mrb[0].mxu0
    %v2272 = vadd.f32 %v2159, %v2271
    %v2273 = vpop.f32.mrb[0].mxu0
    %v2274 = vadd.f32 %v2161, %v2273
    %v2275 = vpop.f32.mrb[0].mxu0
    %v2276 = vadd.f32 %v2163, %v2275
    %v2277 = vpop.f32.mrb[0].mxu0
    %v2278 = vadd.f32 %v2165, %v2277
    %2279 = vmatprep.mubr.bf16.mxu0 %v1685
    %2280 = vmatmul.mubr.bf16.gmra.mrb[0].mxu0 %v1684
    %v2281 = vpop.f32.mrb[0].mxu0
    %v2282 = vadd.f32 %v2169, %v2281
    %v2283 = vpop.f32.mrb[0].mxu0
    %v2284 = vadd.f32 %v2171, %v2283
    %v2285 = vpop.f32.mrb[0].mxu0
    %v2286 = vadd.f32 %v2173, %v2285
    %v2287 = vpop.f32.mrb[0].mxu0
    %v2288 = vadd.f32 %v2175, %v2287
    %2289 = vmatprep.mubr.bf16.mxu0 %v1689
    %2290 = vmatmul.mubr.bf16.gmra.mrb[0].mxu0 %v1688
    %v2291 = vpop.f32.mrb[0].mxu0
    %v2292 = vadd.f32 %v2179, %v2291
    %v2293 = vpop.f32.mrb[0].mxu0
    %v2294 = vadd.f32 %v2181, %v2293
    %v2295 = vpop.f32.mrb[0].mxu0
    %v2296 = vadd.f32 %v2183, %v2295
    %v2297 = vpop.f32.mrb[0].mxu0
    %v2298 = vadd.f32 %v2185, %v2297
    %2299 = vmatprep.mubr.bf16.mxu0 %v1693
    %2300 = vmatmul.mubr.bf16.gmra.mrb[0].mxu0 %v1692
    %v2301 = vpop.f32.mrb[0].mxu0
    %v2302 = vadd.f32 %v2189, %v2301
    %v2303 = vpop.f32.mrb[0].mxu0
    %v2304 = vadd.f32 %v2191, %v2303
    %v2305 = vpop.f32.mrb[0].mxu0
    %v2306 = vadd.f32 %v2193, %v2305
    %v2307 = vpop.f32.mrb[0].mxu0
    %v2308 = vadd.f32 %v2195, %v2307
    %2309 = vmatprep.mubr.bf16.mxu0 %v1697
    %2310 = vmatmul.mubr.bf16.gmra.mrb[0].mxu0 %v1696
    %v2311 = vpop.f32.mrb[0].mxu0
    %v2312 = vadd.f32 %v2199, %v2311
    %v2313 = vpop.f32.mrb[0].mxu0
    %v2314 = vadd.f32 %v2201, %v2313
    %v2315 = vpop.f32.mrb[0].mxu0
    %v2316 = vadd.f32 %v2203, %v2315
    %v2317 = vpop.f32.mrb[0].mxu0
    %v2318 = vadd.f32 %v2205, %v2317
    %2319 = vdwg.mxu0
    %vm2320 = vcmp.ge.f32.partialorder %v2242, 0.0
    %vm2321 = vcmp.ge.f32.partialorder %v2244, 0.0
    %vm2322 = vcmp.ge.f32.partialorder %v2246, 0.0
    %vm2323 = vcmp.ge.f32.partialorder %v2248, 0.0
    %vm2324 = vcmp.ge.f32.partialorder %v2252, 0.0
    %vm2325 = vcmp.ge.f32.partialorder %v2254, 0.0
    %vm2326 = vcmp.ge.f32.partialorder %v2256, 0.0
    %vm2327 = vcmp.ge.f32.partialorder %v2258, 0.0
    %vm2328 = vcmp.ge.f32.partialorder %v2262, 0.0
    %vm2329 = vcmp.ge.f32.partialorder %v2264, 0.0
    %vm2330 = vcmp.ge.f32.partialorder %v2266, 0.0
    %vm2331 = vcmp.ge.f32.partialorder %v2268, 0.0
    %vm2332 = vcmp.ge.f32.partialorder %v2272, 0.0
    %vm2333 = vcmp.ge.f32.partialorder %v2274, 0.0
    %vm2334 = vcmp.ge.f32.partialorder %v2276, 0.0
    %vm2335 = vcmp.ge.f32.partialorder %v2278, 0.0
    %vm2336 = vcmp.ge.f32.partialorder %v2282, 0.0
    %vm2337 = vcmp.ge.f32.partialorder %v2284, 0.0
    %vm2338 = vcmp.ge.f32.partialorder %v2286, 0.0
    %vm2339 = vcmp.ge.f32.partialorder %v2288, 0.0
    %vm2340 = vcmp.ge.f32.partialorder %v2292, 0.0
    %vm2341 = vcmp.ge.f32.partialorder %v2294, 0.0
    %vm2342 = vcmp.ge.f32.partialorder %v2296, 0.0
    %vm2343 = vcmp.ge.f32.partialorder %v2298, 0.0
    %vm2344 = vcmp.ge.f32.partialorder %v2302, 0.0
    %vm2345 = vcmp.ge.f32.partialorder %v2304, 0.0
    %vm2346 = vcmp.ge.f32.partialorder %v2306, 0.0
    %vm2347 = vcmp.ge.f32.partialorder %v2308, 0.0
    %vm2348 = vcmp.ge.f32.partialorder %v2312, 0.0
    %vm2349 = vcmp.ge.f32.partialorder %v2314, 0.0
    %vm2350 = vcmp.ge.f32.partialorder %v2316, 0.0
    %vm2351 = vcmp.ge.f32.partialorder %v2318, 0.0
    %v2352 = vmul.f32 %v2242, 0.01
    %v2353 = vmul.f32 %v2244, 0.01
    %v2354 = vmul.f32 %v2246, 0.01
    %v2355 = vmul.f32 %v2248, 0.01
    %v2356 = vmul.f32 %v2252, 0.01
    %v2357 = vmul.f32 %v2254, 0.01
    %v2358 = vmul.f32 %v2256, 0.01
    %v2359 = vmul.f32 %v2258, 0.01
    %v2360 = vmul.f32 %v2262, 0.01
    %v2361 = vmul.f32 %v2264, 0.01
    %v2362 = vmul.f32 %v2266, 0.01
    %v2363 = vmul.f32 %v2268, 0.01
    %v2364 = vmul.f32 %v2272, 0.01
    %v2365 = vmul.f32 %v2274, 0.01
    %v2366 = vmul.f32 %v2276, 0.01
    %v2367 = vmul.f32 %v2278, 0.01
    %v2368 = vmul.f32 %v2282, 0.01
    %v2369 = vmul.f32 %v2284, 0.01
    %v2370 = vmul.f32 %v2286, 0.01
    %v2371 = vmul.f32 %v2288, 0.01
    %v2372 = vmul.f32 %v2292, 0.01
    %v2373 = vmul.f32 %v2294, 0.01
    %v2374 = vmul.f32 %v2296, 0.01
    %v2375 = vmul.f32 %v2298, 0.01
    %v2376 = vmul.f32 %v2302, 0.01
    %v2377 = vmul.f32 %v2304, 0.01
    %v2378 = vmul.f32 %v2306, 0.01
    %v2379 = vmul.f32 %v2308, 0.01
    %v2380 = vmul.f32 %v2312, 0.01
    %v2381 = vmul.f32 %v2314, 0.01
    %v2382 = vmul.f32 %v2316, 0.01
    %v2383 = vmul.f32 %v2318, 0.01
    %v2384 = vsel %vm2320, %v2242, %v2352
    %v2385 = vsel %vm2321, %v2244, %v2353
    %v2386 = vsel %vm2322, %v2246, %v2354
    %v2387 = vsel %vm2323, %v2248, %v2355
    %v2388 = vsel %vm2324, %v2252, %v2356
    %v2389 = vsel %vm2325, %v2254, %v2357
    %v2390 = vsel %vm2326, %v2256, %v2358
    %v2391 = vsel %vm2327, %v2258, %v2359
    %v2392 = vsel %vm2328, %v2262, %v2360
    %v2393 = vsel %vm2329, %v2264, %v2361
    %v2394 = vsel %vm2330, %v2266, %v2362
    %v2395 = vsel %vm2331, %v2268, %v2363
    %v2396 = vsel %vm2332, %v2272, %v2364
    %v2397 = vsel %vm2333, %v2274, %v2365
    %v2398 = vsel %vm2334, %v2276, %v2366
    %v2399 = vsel %vm2335, %v2278, %v2367
    %v2400 = vsel %vm2336, %v2282, %v2368
    %v2401 = vsel %vm2337, %v2284, %v2369
    %v2402 = vsel %vm2338, %v2286, %v2370
    %v2403 = vsel %vm2339, %v2288, %v2371
    %v2404 = vsel %vm2340, %v2292, %v2372
    %v2405 = vsel %vm2341, %v2294, %v2373
    %v2406 = vsel %vm2342, %v2296, %v2374
    %v2407 = vsel %vm2343, %v2298, %v2375
    %v2408 = vsel %vm2344, %v2302, %v2376
    %v2409 = vsel %vm2345, %v2304, %v2377
    %v2410 = vsel %vm2346, %v2306, %v2378
    %v2411 = vsel %vm2347, %v2308, %v2379
    %v2412 = vsel %vm2348, %v2312, %v2380
    %v2413 = vsel %vm2349, %v2314, %v2381
    %v2414 = vsel %vm2350, %v2316, %v2382
    %v2415 = vsel %vm2351, %v2318, %v2383
    %v2416 = vpack.c.bf16 %v2386, %v2384
    %v2417 = vpack.c.bf16 %v2387, %v2385
    %v2418 = vpack.c.bf16 %v2390, %v2388
    %v2419 = vpack.c.bf16 %v2391, %v2389
    %v2420 = vpack.c.bf16 %v2394, %v2392
    %v2421 = vpack.c.bf16 %v2395, %v2393
    %v2422 = vpack.c.bf16 %v2398, %v2396
    %v2423 = vpack.c.bf16 %v2399, %v2397
    %v2424 = vpack.c.bf16 %v2402, %v2400
    %v2425 = vpack.c.bf16 %v2403, %v2401
    %v2426 = vpack.c.bf16 %v2406, %v2404
    %v2427 = vpack.c.bf16 %v2407, %v2405
    %v2428 = vpack.c.bf16 %v2410, %v2408
    %v2429 = vpack.c.bf16 %v2411, %v2409
    %v2430 = vpack.c.bf16 %v2414, %v2412
    %v2431 = vpack.c.bf16 %v2415, %v2413
    %v2432 = vld [vmem:[#allocation17] sm:$0xf]
    %v2433 = vld [vmem:[#allocation17 + $0x4] sm:$0xf]
    %v2434 = vld [vmem:[#allocation17 + $0x8] sm:$0xf]
    %v2435 = vld [vmem:[#allocation17 + $0xc] sm:$0xf]
    %v2436 = vld [vmem:[#allocation17 + $0x10] sm:$0xf]
    %v2437 = vld [vmem:[#allocation17 + $0x14] sm:$0xf]
    %v2438 = vld [vmem:[#allocation17 + $0x18] sm:$0xf]
    %v2439 = vld [vmem:[#allocation17 + $0x1c] sm:$0xf]
    %v2440 = vld [vmem:[#allocation17 + $0x20] sm:$0xf]
    %v2441 = vld [vmem:[#allocation17 + $0x24] sm:$0xf]
    %v2442 = vld [vmem:[#allocation17 + $0x28] sm:$0xf]
    %v2443 = vld [vmem:[#allocation17 + $0x2c] sm:$0xf]
    %v2444 = vld [vmem:[#allocation17 + $0x30] sm:$0xf]
    %v2445 = vld [vmem:[#allocation17 + $0x34] sm:$0xf]
    %v2446 = vld [vmem:[#allocation17 + $0x38] sm:$0xf]
    %v2447 = vld [vmem:[#allocation17 + $0x3c] sm:$0xf]
    %v2448 = vld [vmem:[#allocation17 + $0x40] sm:$0xf]
    %v2449 = vld [vmem:[#allocation17 + $0x44] sm:$0xf]
    %v2450 = vld [vmem:[#allocation17 + $0x48] sm:$0xf]
    %v2451 = vld [vmem:[#allocation17 + $0x4c] sm:$0xf]
    %v2452 = vld [vmem:[#allocation17 + $0x50] sm:$0xf]
    %v2453 = vld [vmem:[#allocation17 + $0x54] sm:$0xf]
    %v2454 = vld [vmem:[#allocation17 + $0x58] sm:$0xf]
    %v2455 = vld [vmem:[#allocation17 + $0x5c] sm:$0xf]
    %v2456 = vld [vmem:[#allocation17 + $0x60] sm:$0xf]
    %v2457 = vld [vmem:[#allocation17 + $0x64] sm:$0xf]
    %v2458 = vld [vmem:[#allocation17 + $0x68] sm:$0xf]
    %v2459 = vld [vmem:[#allocation17 + $0x6c] sm:$0xf]
    %v2460 = vld [vmem:[#allocation17 + $0x70] sm:$0xf]
    %v2461 = vld [vmem:[#allocation17 + $0x74] sm:$0xf]
    %v2462 = vld [vmem:[#allocation17 + $0x78] sm:$0xf]
    %v2463 = vld [vmem:[#allocation17 + $0x7c] sm:$0xf]
    %v2464 = vld [vmem:[#allocation19] sm:$0x1]
    %v2466 = vlaneseq
    %v2467 = vshrl.u32 %v2466, 7
    %v2468 = vsub.s32 0, %v2467
    %v2469 = vrot.slane %v2464, %v2468
    %v2503 = vunpack.c.l.b16 %v2432
    %v2504 = vunpack.c.l.b16 %v2433
    %v2505 = vunpack.c.l.b16 %v2434
    %v2506 = vunpack.c.l.b16 %v2435
    %v2507 = vunpack.c.l.b16 %v2436
    %v2508 = vunpack.c.l.b16 %v2437
    %v2509 = vunpack.c.l.b16 %v2438
    %v2510 = vunpack.c.l.b16 %v2439
    %v2511 = vunpack.c.l.b16 %v2440
    %v2512 = vunpack.c.l.b16 %v2441
    %v2513 = vunpack.c.l.b16 %v2442
    %v2514 = vunpack.c.l.b16 %v2443
    %v2515 = vunpack.c.l.b16 %v2444
    %v2516 = vunpack.c.l.b16 %v2445
    %v2517 = vunpack.c.l.b16 %v2446
    %v2518 = vunpack.c.l.b16 %v2447
    %v2519 = vunpack.c.l.b16 %v2448
    %v2520 = vunpack.c.l.b16 %v2449
    %v2521 = vunpack.c.l.b16 %v2450
    %v2522 = vunpack.c.l.b16 %v2451
    %v2523 = vunpack.c.l.b16 %v2452
    %v2524 = vunpack.c.l.b16 %v2453
    %v2525 = vunpack.c.l.b16 %v2454
    %v2526 = vunpack.c.l.b16 %v2455
    %v2527 = vunpack.c.l.b16 %v2456
    %v2528 = vunpack.c.l.b16 %v2457
    %v2529 = vunpack.c.l.b16 %v2458
    %v2530 = vunpack.c.l.b16 %v2459
    %v2531 = vunpack.c.l.b16 %v2460
    %v2532 = vunpack.c.l.b16 %v2461
    %v2533 = vunpack.c.l.b16 %v2462
    %v2534 = vunpack.c.l.b16 %v2463
    %v2535 = vpack.c.b16 %v2504, %v2503
    %v2536 = vpack.c.b16 %v2506, %v2505
    %v2537 = vpack.c.b16 %v2508, %v2507
    %v2538 = vpack.c.b16 %v2510, %v2509
    %v2539 = vpack.c.b16 %v2512, %v2511
    %v2540 = vpack.c.b16 %v2514, %v2513
    %v2541 = vpack.c.b16 %v2516, %v2515
    %v2542 = vpack.c.b16 %v2518, %v2517
    %v2543 = vpack.c.b16 %v2520, %v2519
    %v2544 = vpack.c.b16 %v2522, %v2521
    %v2545 = vpack.c.b16 %v2524, %v2523
    %v2546 = vpack.c.b16 %v2526, %v2525
    %v2547 = vpack.c.b16 %v2528, %v2527
    %v2548 = vpack.c.b16 %v2530, %v2529
    %v2549 = vpack.c.b16 %v2532, %v2531
    %v2550 = vpack.c.b16 %v2534, %v2533
    %2567 = vmatprep.subr.bf16.mxu0 0
    %2568 = vmatpush1.bf16.msra.mxu0 %v2535
    %2569 = vmatprep.subr.bf16.mxu0 0
    %2570 = vmatpush1.bf16.msra.mxu0 %v2536
    %2571 = vmatprep.subr.bf16.mxu0 0
    %2572 = vmatpush1.bf16.msra.mxu0 %v2537
    %2573 = vmatprep.subr.bf16.mxu0 0
    %2574 = vmatpush1.bf16.msra.mxu0 %v2538
    %2575 = vmatprep.subr.bf16.mxu0 0
    %2576 = vmatpush1.bf16.msra.mxu0 %v2539
    %2577 = vmatprep.subr.bf16.mxu0 0
    %2578 = vmatpush1.bf16.msra.mxu0 %v2540
    %2579 = vmatprep.subr.bf16.mxu0 0
    %2580 = vmatpush1.bf16.msra.mxu0 %v2541
    %2581 = vmatprep.subr.bf16.mxu0 0
    %2582 = vmatpush1.bf16.msra.mxu0 %v2542
    %2583 = vmatprep.subr.bf16.mxu0 0
    %2584 = vmatpush1.bf16.msra.mxu0 %v2543
    %2585 = vmatprep.subr.bf16.mxu0 0
    %2586 = vmatpush1.bf16.msra.mxu0 %v2544
    %2587 = vmatprep.subr.bf16.mxu0 0
    %2588 = vmatpush1.bf16.msra.mxu0 %v2545
    %2589 = vmatprep.subr.bf16.mxu0 0
    %2590 = vmatpush1.bf16.msra.mxu0 %v2546
    %2591 = vmatprep.subr.bf16.mxu0 0
    %2592 = vmatpush1.bf16.msra.mxu0 %v2547
    %2593 = vmatprep.subr.bf16.mxu0 0
    %2594 = vmatpush1.bf16.msra.mxu0 %v2548
    %2595 = vmatprep.subr.bf16.mxu0 0
    %2596 = vmatpush1.bf16.msra.mxu0 %v2549
    %2597 = vmatprep.subr.bf16.mxu0 0
    %2598 = vmatpush1.bf16.msra.mxu0 %v2550
    %2599 = vmatprep.mubr.bf16.mxu0 %v2417
    %2600 = vmatmul.mubr.bf16.gmra.mrb[0].mxu0 %v2416
    %v2601 = vpop.f32.mrb[0].mxu0
    %v2602 = vadd.f32 %v2469, %v2601
    %v2603 = vpop.f32.mrb[0].mxu0
    %v2604 = vpop.f32.mrb[0].mxu0
    %v2605 = vadd.f32 %v2469, %v2604
    %v2606 = vpop.f32.mrb[0].mxu0
    %2607 = vmatprep.mubr.bf16.mxu0 %v2419
    %2608 = vmatmul.mubr.bf16.gmra.mrb[0].mxu0 %v2418
    %v2609 = vpop.f32.mrb[0].mxu0
    %v2610 = vadd.f32 %v2469, %v2609
    %v2611 = vpop.f32.mrb[0].mxu0
    %v2612 = vpop.f32.mrb[0].mxu0
    %v2613 = vadd.f32 %v2469, %v2612
    %v2614 = vpop.f32.mrb[0].mxu0
    %2615 = vmatprep.mubr.bf16.mxu0 %v2421
    %2616 = vmatmul.mubr.bf16.gmra.mrb[0].mxu0 %v2420
    %v2617 = vpop.f32.mrb[0].mxu0
    %v2618 = vadd.f32 %v2469, %v2617
    %v2619 = vpop.f32.mrb[0].mxu0
    %v2620 = vpop.f32.mrb[0].mxu0
    %v2621 = vadd.f32 %v2469, %v2620
    %v2622 = vpop.f32.mrb[0].mxu0
    %2623 = vmatprep.mubr.bf16.mxu0 %v2423
    %2624 = vmatmul.mubr.bf16.gmra.mrb[0].mxu0 %v2422
    %v2625 = vpop.f32.mrb[0].mxu0
    %v2626 = vadd.f32 %v2469, %v2625
    %v2627 = vpop.f32.mrb[0].mxu0
    %v2628 = vpop.f32.mrb[0].mxu0
    %v2629 = vadd.f32 %v2469, %v2628
    %v2630 = vpop.f32.mrb[0].mxu0
    %2631 = vmatprep.mubr.bf16.mxu0 %v2425
    %2632 = vmatmul.mubr.bf16.gmra.mrb[0].mxu0 %v2424
    %v2633 = vpop.f32.mrb[0].mxu0
    %v2634 = vadd.f32 %v2469, %v2633
    %v2635 = vpop.f32.mrb[0].mxu0
    %v2636 = vpop.f32.mrb[0].mxu0
    %v2637 = vadd.f32 %v2469, %v2636
    %v2638 = vpop.f32.mrb[0].mxu0
    %2639 = vmatprep.mubr.bf16.mxu0 %v2427
    %2640 = vmatmul.mubr.bf16.gmra.mrb[0].mxu0 %v2426
    %v2641 = vpop.f32.mrb[0].mxu0
    %v2642 = vadd.f32 %v2469, %v2641
    %v2643 = vpop.f32.mrb[0].mxu0
    %v2644 = vpop.f32.mrb[0].mxu0
    %v2645 = vadd.f32 %v2469, %v2644
    %v2646 = vpop.f32.mrb[0].mxu0
    %2647 = vmatprep.mubr.bf16.mxu0 %v2429
    %2648 = vmatmul.mubr.bf16.gmra.mrb[0].mxu0 %v2428
    %v2649 = vpop.f32.mrb[0].mxu0
    %v2650 = vadd.f32 %v2469, %v2649
    %v2651 = vpop.f32.mrb[0].mxu0
    %v2652 = vpop.f32.mrb[0].mxu0
    %v2653 = vadd.f32 %v2469, %v2652
    %v2654 = vpop.f32.mrb[0].mxu0
    %2655 = vmatprep.mubr.bf16.mxu0 %v2431
    %2656 = vmatmul.mubr.bf16.gmra.mrb[0].mxu0 %v2430
    %v2657 = vpop.f32.mrb[0].mxu0
    %v2658 = vadd.f32 %v2469, %v2657
    %v2659 = vpop.f32.mrb[0].mxu0
    %v2660 = vpop.f32.mrb[0].mxu0
    %v2661 = vadd.f32 %v2469, %v2660
    %v2662 = vpop.f32.mrb[0].mxu0
    %2663 = vdwg.mxu0
    %vm2664 = vcmask 392192
    %2665 = vst.msk [vmem:[#allocation20] sm:$0xff] %vm2664, %v2602
    %2666 = vst.msk [vmem:[#allocation20 + $0x8] sm:$0xff] %vm2664, %v2605
    %2667 = vst.msk [vmem:[#allocation20 + $0x10] sm:$0xff] %vm2664, %v2610
    %2668 = vst.msk [vmem:[#allocation20 + $0x18] sm:$0xff] %vm2664, %v2613
    %2669 = vst.msk [vmem:[#allocation20 + $0x20] sm:$0xff] %vm2664, %v2618
    %2670 = vst.msk [vmem:[#allocation20 + $0x28] sm:$0xff] %vm2664, %v2621
    %2671 = vst.msk [vmem:[#allocation20 + $0x30] sm:$0xff] %vm2664, %v2626
    %2672 = vst.msk [vmem:[#allocation20 + $0x38] sm:$0xff] %vm2664, %v2629
    %2673 = vst.msk [vmem:[#allocation20 + $0x40] sm:$0xff] %vm2664, %v2634
    %2674 = vst.msk [vmem:[#allocation20 + $0x48] sm:$0xff] %vm2664, %v2637
    %2675 = vst.msk [vmem:[#allocation20 + $0x50] sm:$0xff] %vm2664, %v2642
    %2676 = vst.msk [vmem:[#allocation20 + $0x58] sm:$0xff] %vm2664, %v2645
    %2677 = vst.msk [vmem:[#allocation20 + $0x60] sm:$0xff] %vm2664, %v2650
    %2678 = vst.msk [vmem:[#allocation20 + $0x68] sm:$0xff] %vm2664, %v2653
    %2679 = vst.msk [vmem:[#allocation20 + $0x70] sm:$0xff] %vm2664, %v2658
    %2680 = vst.msk [vmem:[#allocation20 + $0x78] sm:$0xff] %vm2664, %v2661
    // Predicated region
    $region90: #{model_forward.14} parent=1 // pred_check
      _
    $region91: #{model_forward.14} parent=1 // pred_check_branch
      %2682 = sbr.rel (0) target = $region93
    $region92: #{model_forward.14} parent=1 // pred_region
      %s2684 = ssub.s32 2048, 2048
      %2685 = vsyncadd [#allocation4], %s2684
      %s2686 = sshll.u32 [#allocation20], 4
      %s2687 = int_to_ptr.vmem [resolvable:$true] %s2686
      %2692 = dma.vmem_to_hbm [thread:$0]  %s2687, 2048, %s11, [#allocation4], 128, 128, 8
    $region93: #{model_forward.14} parent=1 // pred_fallthru
      _
    // Predicated region
    $region94: #{model_forward.14} parent=1 // pred_check
      _
    $region95: #{model_forward.14} parent=1 // pred_check_branch
      %2694 = sbr.rel (0) target = $region97
    $region96: #{model_forward.14} parent=1 // pred_region
      %2695 = dma.done [#allocation4], 2048
    $region97: #{model_forward.14} parent=1 // pred_fallthru
      _
    %2696 = vsyncpa [#allocation3], 1
    %2697 = vsyncpa [#allocation6], 1
    %2698 = vsyncpa [#allocation9], 1
    %2699 = vsyncpa [#allocation12], 1
    %2700 = vsyncpa [#allocation15], 1
    %2701 = vsyncpa [#allocation18], 1
    %2702 = vsyncpa [#allocation4], 1

// kernel: model_forward.19
$region0: #{model_forward.19}
  #allocation0 [shape = 'u32[]', space=smem, size = 0x4, offset = 0x4, fixed_abs, tag = 'smem constant byte address 0x4 - core index']
  #allocation1 [shape = 'u32[144,128]{1,0:T(1,128)}', space=vmem, size = 0x12000, scoped, tag = 'internal scratch']
  %s0 = inlined_call_operand.hbm [shape: bf16[128,32], index: 0, kind: input, shape index: {}]
  %s1 = inlined_call_operand.hbm [shape: bf16[128,288], index: 1, kind: input, shape index: {}]
  %s2 = inlined_call_operand.hbm [shape: bf16[288,16], index: 2, kind: input, shape index: {}]
  %s3 = inlined_call_operand.hbm [shape: f32[1,16], index: 3, kind: input, shape index: {}]
  %s4 = inlined_call_operand.hbm [shape: bf16[32,512], index: 4, kind: input, shape index: {}]
  %s5 = inlined_call_operand.hbm [shape: bf16[16,512], index: 5, kind: input, shape index: {}]
  %s6 = inlined_call_operand.hbm [shape: f32[1,512], index: 6, kind: input, shape index: {}]
  %s7 = inlined_call_operand.hbm [shape: bf16[512,256], index: 7, kind: input, shape index: {}]
  %s8 = inlined_call_operand.hbm [shape: f32[1,256], index: 8, kind: input, shape index: {}]
  %s9 = inlined_call_operand.hbm [shape: bf16[256,16], index: 9, kind: input, shape index: {}]
  %s10 = inlined_call_operand.hbm [shape: f32[1,16], index: 10, kind: input, shape index: {}]
  %s11 = inlined_call_operand.hbm [shape: f32[128,16], index: 11, kind: output, shape index: {}]
  %s12 = sld [smem:[#allocation0]]
  $region98: #{model_forward.19} parent=0
    _
  %s14 = ssub.s32 1, %s12
  %s15 = scalar_select 0, %s14, %s12
  $region1: #{model_forward.19} parent=0
    #allocation2 [shape = 'u8[32768]{0}', space=vmem, size = 0x8000, scoped, tag = 'input window, operand 0, single buffered']
    #allocation3 [shape = 's32[1]{0}', space=sflag, size = 0x4, scoped, tag = 'scoped memory for model_forward.19']
    #allocation4 [shape = 's32[1]{0}', space=sflag, size = 0x4, scoped, tag = 'scoped memory for model_forward.19']
    #allocation5 [shape = 'u8[98304]{0}', space=vmem, size = 0x18000, scoped, tag = 'input window, operand 1, single buffered']
    #allocation6 [shape = 's32[1]{0}', space=sflag, size = 0x4, scoped, tag = 'scoped memory for model_forward.19']
    #allocation7 [shape = 'u8[73728]{0}', space=vmem, size = 0x12000, scoped, tag = 'input window, operand 2, single buffered']
    #allocation8 [shape = 'u8[512]{0}', space=vmem, size = 0x400, scoped, tag = 'input window, operand 3, single buffered']
    #allocation9 [shape = 's32[1]{0}', space=sflag, size = 0x4, scoped, tag = 'scoped memory for model_forward.19']
    #allocation10 [shape = 'u8[32768]{0}', space=vmem, size = 0x8000, scoped, tag = 'input window, operand 4, single buffered']
    #allocation11 [shape = 'u8[16384]{0}', space=vmem, size = 0x4000, scoped, tag = 'input window, operand 5, single buffered']
    #allocation12 [shape = 's32[1]{0}', space=sflag, size = 0x4, scoped, tag = 'scoped memory for model_forward.19']
    #allocation13 [shape = 'u8[2048]{0}', space=vmem, size = 0x800, scoped, tag = 'input window, operand 6, single buffered']
    #allocation14 [shape = 'u8[262144]{0}', space=vmem, size = 0x40000, scoped, tag = 'input window, operand 7, single buffered']
    #allocation15 [shape = 's32[1]{0}', space=sflag, size = 0x4, scoped, tag = 'scoped memory for model_forward.19']
    #allocation16 [shape = 'u8[1024]{0}', space=vmem, size = 0x400, scoped, tag = 'input window, operand 8, single buffered']
    #allocation17 [shape = 'u8[65536]{0}', space=vmem, size = 0x10000, scoped, tag = 'input window, operand 9, single buffered']
    #allocation18 [shape = 's32[1]{0}', space=sflag, size = 0x4, scoped, tag = 'scoped memory for model_forward.19']
    #allocation19 [shape = 'u8[512]{0}', space=vmem, size = 0x400, scoped, tag = 'input window, operand 10, single buffered']
    #allocation20 [shape = 'u8[65536]{0}', space=vmem, size = 0x10000, scoped, tag = 'output window, operand 0, single buffered']
    %16 = vsyncpa [#allocation3], 0
    %17 = vsyncpa [#allocation6], 0
    %18 = vsyncpa [#allocation9], 0
    %19 = vsyncpa [#allocation12], 0
    %20 = vsyncpa [#allocation15], 0
    %21 = vsyncpa [#allocation18], 0
    %22 = vsyncpa [#allocation4], 0
    // Predicated region
    $region2: #{model_forward.19} parent=1 // pred_check
      _
    $region3: #{model_forward.19} parent=1 // pred_check_branch
      %24 = sbr.rel (0) target = $region5
    $region4: #{model_forward.19} parent=1 // pred_region
      %s26 = ssub.s32 1024, 1024
      %27 = vsyncadd [#allocation3], %s26
      %s28 = sshll.u32 [#allocation2], 4
      %s29 = int_to_ptr.vmem [resolvable:$true] %s28
      %34 = dma.hbm_to_vmem [thread:$0]  %s0, 1024, %s29, [#allocation3], 64, 64, 4
    $region5: #{model_forward.19} parent=1 // pred_fallthru
      _
    // Predicated region
    $region6: #{model_forward.19} parent=1 // pred_check
      _
    $region7: #{model_forward.19} parent=1 // pred_check_branch
      %36 = sbr.rel (0) target = $region9
    $region8: #{model_forward.19} parent=1 // pred_region
      %s38 = ssub.s32 3072, 3072
      %39 = vsyncadd [#allocation6], %s38
      %s40 = sshll.u32 [#allocation5], 4
      %s41 = int_to_ptr.vmem [resolvable:$true] %s40
      %46 = dma.hbm_to_vmem [thread:$0]  %s1, 3072, %s41, [#allocation6], 192, 192, 12
    $region9: #{model_forward.19} parent=1 // pred_fallthru
      _
    // Predicated region
    $region10: #{model_forward.19} parent=1 // pred_check
      _
    $region11: #{model_forward.19} parent=1 // pred_check_branch
      %48 = sbr.rel (0) target = $region13
    $region12: #{model_forward.19} parent=1 // pred_region
      %s50 = ssub.s32 2304, 2304
      %51 = vsyncadd [#allocation6], %s50
      %s52 = sshll.u32 [#allocation7], 4
      %s53 = int_to_ptr.vmem [resolvable:$true] %s52
      %58 = dma.hbm_to_vmem [thread:$0]  %s2, 2304, %s53, [#allocation6], 64, 64, 4
    $region13: #{model_forward.19} parent=1 // pred_fallthru
      _
    // Predicated region
    $region14: #{model_forward.19} parent=1 // pred_check
      _
    $region15: #{model_forward.19} parent=1 // pred_check_branch
      %60 = sbr.rel (0) target = $region17
    $region16: #{model_forward.19} parent=1 // pred_region
      %s62 = ssub.s32 16, 16
      %63 = vsyncadd [#allocation9], %s62
      %s65 = sshll.u32 [#allocation8], 4
      %s66 = int_to_ptr.vmem [resolvable:$true] %s65
      %68 = dma.hbm_to_vmem [thread:$0]  %s3, 16, %s66, [#allocation9]
    $region17: #{model_forward.19} parent=1 // pred_fallthru
      _
    // Predicated region
    $region18: #{model_forward.19} parent=1 // pred_check
      _
    $region19: #{model_forward.19} parent=1 // pred_check_branch
      %70 = sbr.rel (0) target = $region21
    $region20: #{model_forward.19} parent=1 // pred_region
      %s72 = ssub.s32 1024, 1024
      %73 = vsyncadd [#allocation9], %s72
      %s74 = sshll.u32 [#allocation10], 4
      %s75 = int_to_ptr.vmem [resolvable:$true] %s74
      %80 = dma.hbm_to_vmem [thread:$0]  %s4, 1024, %s75, [#allocation9], 256, 256, 16
    $region21: #{model_forward.19} parent=1 // pred_fallthru
      _
    // Predicated region
    $region22: #{model_forward.19} parent=1 // pred_check
      _
    $region23: #{model_forward.19} parent=1 // pred_check_branch
      %82 = sbr.rel (0) target = $region25
    $region24: #{model_forward.19} parent=1 // pred_region
      %s84 = ssub.s32 512, 512
      %85 = vsyncadd [#allocation12], %s84
      %s86 = sshll.u32 [#allocation11], 4
      %s87 = int_to_ptr.vmem [resolvable:$true] %s86
      %92 = dma.hbm_to_vmem [thread:$0]  %s5, 512, %s87, [#allocation12], 256, 256, 16
    $region25: #{model_forward.19} parent=1 // pred_fallthru
      _
    // Predicated region
    $region26: #{model_forward.19} parent=1 // pred_check
      _
    $region27: #{model_forward.19} parent=1 // pred_check_branch
      %94 = sbr.rel (0) target = $region29
    $region28: #{model_forward.19} parent=1 // pred_region
      %s96 = ssub.s32 64, 64
      %97 = vsyncadd [#allocation12], %s96
      %s99 = sshll.u32 [#allocation13], 4
      %s100 = int_to_ptr.vmem [resolvable:$true] %s99
      %102 = dma.hbm_to_vmem [thread:$0]  %s6, 64, %s100, [#allocation12]
    $region29: #{model_forward.19} parent=1 // pred_fallthru
      _
    // Predicated region
    $region30: #{model_forward.19} parent=1 // pred_check
      _
    $region31: #{model_forward.19} parent=1 // pred_check_branch
      %104 = sbr.rel (0) target = $region33
    $region32: #{model_forward.19} parent=1 // pred_region
      %s106 = ssub.s32 8192, 8192
      %107 = vsyncadd [#allocation15], %s106
      %s108 = sshll.u32 [#allocation14], 4
      %s109 = int_to_ptr.vmem [resolvable:$true] %s108
      %114 = dma.hbm_to_vmem [thread:$0]  %s7, 8192, %s109, [#allocation15], 128, 128, 8
    $region33: #{model_forward.19} parent=1 // pred_fallthru
      _
    // Predicated region
    $region34: #{model_forward.19} parent=1 // pred_check
      _
    $region35: #{model_forward.19} parent=1 // pred_check_branch
      %116 = sbr.rel (0) target = $region37
    $region36: #{model_forward.19} parent=1 // pred_region
      %s118 = ssub.s32 32, 32
      %119 = vsyncadd [#allocation15], %s118
      %s121 = sshll.u32 [#allocation16], 4
      %s122 = int_to_ptr.vmem [resolvable:$true] %s121
      %124 = dma.hbm_to_vmem [thread:$0]  %s8, 32, %s122, [#allocation15]
    $region37: #{model_forward.19} parent=1 // pred_fallthru
      _
    // Predicated region
    $region38: #{model_forward.19} parent=1 // pred_check
      _
    $region39: #{model_forward.19} parent=1 // pred_check_branch
      %126 = sbr.rel (0) target = $region41
    $region40: #{model_forward.19} parent=1 // pred_region
      %s128 = ssub.s32 2048, 2048
      %129 = vsyncadd [#allocation18], %s128
      %s130 = sshll.u32 [#allocation17], 4
      %s131 = int_to_ptr.vmem [resolvable:$true] %s130
      %136 = dma.hbm_to_vmem [thread:$0]  %s9, 2048, %s131, [#allocation18], 64, 64, 4
    $region41: #{model_forward.19} parent=1 // pred_fallthru
      _
    // Predicated region
    $region42: #{model_forward.19} parent=1 // pred_check
      _
    $region43: #{model_forward.19} parent=1 // pred_check_branch
      %138 = sbr.rel (0) target = $region45
    $region44: #{model_forward.19} parent=1 // pred_region
      %s140 = ssub.s32 16, 16
      %141 = vsyncadd [#allocation18], %s140
      %s143 = sshll.u32 [#allocation19], 4
      %s144 = int_to_ptr.vmem [resolvable:$true] %s143
      %146 = dma.hbm_to_vmem [thread:$0]  %s10, 16, %s144, [#allocation18]
    $region45: #{model_forward.19} parent=1 // pred_fallthru
      _
    // Predicated region
    $region46: #{model_forward.19} parent=1 // pred_check
      _
    $region47: #{model_forward.19} parent=1 // pred_check_branch
      %148 = sbr.rel (0) target = $region49
    $region48: #{model_forward.19} parent=1 // pred_region
      %149 = dma.done [#allocation3], 1024
    $region49: #{model_forward.19} parent=1 // pred_fallthru
      _
    // Predicated region
    $region50: #{model_forward.19} parent=1 // pred_check
      _
    $region51: #{model_forward.19} parent=1 // pred_check_branch
      %151 = sbr.rel (0) target = $region53
    $region52: #{model_forward.19} parent=1 // pred_region
      %152 = dma.done [#allocation6], 3072
    $region53: #{model_forward.19} parent=1 // pred_fallthru
      _
    // Predicated region
    $region54: #{model_forward.19} parent=1 // pred_check
      _
    $region55: #{model_forward.19} parent=1 // pred_check_branch
      %154 = sbr.rel (0) target = $region57
    $region56: #{model_forward.19} parent=1 // pred_region
      %155 = dma.done [#allocation6], 2304
    $region57: #{model_forward.19} parent=1 // pred_fallthru
      _
    // Predicated region
    $region58: #{model_forward.19} parent=1 // pred_check
      _
    $region59: #{model_forward.19} parent=1 // pred_check_branch
      %157 = sbr.rel (0) target = $region61
    $region60: #{model_forward.19} parent=1 // pred_region
      %158 = dma.done [#allocation9], 16
    $region61: #{model_forward.19} parent=1 // pred_fallthru
      _
    // Predicated region
    $region62: #{model_forward.19} parent=1 // pred_check
      _
    $region63: #{model_forward.19} parent=1 // pred_check_branch
      %160 = sbr.rel (0) target = $region65
    $region64: #{model_forward.19} parent=1 // pred_region
      %161 = dma.done [#allocation9], 1024
    $region65: #{model_forward.19} parent=1 // pred_fallthru
      _
    // Predicated region
    $region66: #{model_forward.19} parent=1 // pred_check
      _
    $region67: #{model_forward.19} parent=1 // pred_check_branch
      %163 = sbr.rel (0) target = $region69
    $region68: #{model_forward.19} parent=1 // pred_region
      %164 = dma.done [#allocation12], 512
    $region69: #{model_forward.19} parent=1 // pred_fallthru
      _
    // Predicated region
    $region70: #{model_forward.19} parent=1 // pred_check
      _
    $region71: #{model_forward.19} parent=1 // pred_check_branch
      %166 = sbr.rel (0) target = $region73
    $region72: #{model_forward.19} parent=1 // pred_region
      %167 = dma.done [#allocation12], 64
    $region73: #{model_forward.19} parent=1 // pred_fallthru
      _
    // Predicated region
    $region74: #{model_forward.19} parent=1 // pred_check
      _
    $region75: #{model_forward.19} parent=1 // pred_check_branch
      %169 = sbr.rel (0) target = $region77
    $region76: #{model_forward.19} parent=1 // pred_region
      %170 = dma.done [#allocation15], 8192
    $region77: #{model_forward.19} parent=1 // pred_fallthru
      _
    // Predicated region
    $region78: #{model_forward.19} parent=1 // pred_check
      _
    $region79: #{model_forward.19} parent=1 // pred_check_branch
      %172 = sbr.rel (0) target = $region81
    $region80: #{model_forward.19} parent=1 // pred_region
      %173 = dma.done [#allocation15], 32
    $region81: #{model_forward.19} parent=1 // pred_fallthru
      _
    // Predicated region
    $region82: #{model_forward.19} parent=1 // pred_check
      _
    $region83: #{model_forward.19} parent=1 // pred_check_branch
      %175 = sbr.rel (0) target = $region85
    $region84: #{model_forward.19} parent=1 // pred_region
      %176 = dma.done [#allocation18], 2048
    $region85: #{model_forward.19} parent=1 // pred_fallthru
      _
    // Predicated region
    $region86: #{model_forward.19} parent=1 // pred_check
      _
    $region87: #{model_forward.19} parent=1 // pred_check_branch
      %178 = sbr.rel (0) target = $region89
    $region88: #{model_forward.19} parent=1 // pred_region
      %179 = dma.done [#allocation18], 16
    $region89: #{model_forward.19} parent=1 // pred_fallthru
      _
    %v181 = vld [vmem:[#allocation5] sm:$0xff]
    %v182 = vld [vmem:[#allocation5 + $0x8] sm:$0xf]
    %v183 = vld [vmem:[#allocation5 + $0xc] sm:$0xff]
    %v184 = vld [vmem:[#allocation5 + $0x14] sm:$0xf]
    %v185 = vld [vmem:[#allocation5 + $0x18] sm:$0xff]
    %v186 = vld [vmem:[#allocation5 + $0x20] sm:$0xf]
    %v187 = vld [vmem:[#allocation5 + $0x24] sm:$0xff]
    %v188 = vld [vmem:[#allocation5 + $0x2c] sm:$0xf]
    %v189 = vld [vmem:[#allocation5 + $0x30] sm:$0xff]
    %v190 = vld [vmem:[#allocation5 + $0x38] sm:$0xf]
    %v191 = vld [vmem:[#allocation5 + $0x3c] sm:$0xff]
    %v192 = vld [vmem:[#allocation5 + $0x44] sm:$0xf]
    %v193 = vld [vmem:[#allocation5 + $0x48] sm:$0xff]
    %v194 = vld [vmem:[#allocation5 + $0x50] sm:$0xf]
    %v195 = vld [vmem:[#allocation5 + $0x54] sm:$0xff]
    %v196 = vld [vmem:[#allocation5 + $0x5c] sm:$0xf]
    %v197 = vld [vmem:[#allocation5 + $0x60] sm:$0xff]
    %v198 = vld [vmem:[#allocation5 + $0x68] sm:$0xf]
    %v199 = vld [vmem:[#allocation5 + $0x6c] sm:$0xff]
    %v200 = vld [vmem:[#allocation5 + $0x74] sm:$0xf]
    %v201 = vld [vmem:[#allocation5 + $0x78] sm:$0xff]
    %v202 = vld [vmem:[#allocation5 + $0x80] sm:$0xf]
    %v203 = vld [vmem:[#allocation5 + $0x84] sm:$0xff]
    %v204 = vld [vmem:[#allocation5 + $0x8c] sm:$0xf]
    %v205 = vld [vmem:[#allocation5 + $0x90] sm:$0xff]
    %v206 = vld [vmem:[#allocation5 + $0x98] sm:$0xf]
    %v207 = vld [vmem:[#allocation5 + $0x9c] sm:$0xff]
    %v208 = vld [vmem:[#allocation5 + $0xa4] sm:$0xf]
    %v209 = vld [vmem:[#allocation5 + $0xa8] sm:$0xff]
    %v210 = vld [vmem:[#allocation5 + $0xb0] sm:$0xf]
    %v211 = vld [vmem:[#allocation5 + $0xb4] sm:$0xff]
    %v212 = vld [vmem:[#allocation5 + $0xbc] sm:$0xf]
    %v213 = vld [vmem:[#allocation7] sm:$0xf]
    %v214 = vld [vmem:[#allocation7 + $0x4] sm:$0xf]
    %v215 = vld [vmem:[#allocation7 + $0x8] sm:$0xf]
    %v216 = vld [vmem:[#allocation7 + $0xc] sm:$0xf]
    %v217 = vld [vmem:[#allocation7 + $0x10] sm:$0xf]
    %v218 = vld [vmem:[#allocation7 + $0x14] sm:$0xf]
    %v219 = vld [vmem:[#allocation7 + $0x18] sm:$0xf]
    %v220 = vld [vmem:[#allocation7 + $0x1c] sm:$0xf]
    %v221 = vld [vmem:[#allocation7 + $0x20] sm:$0xf]
    %v222 = vld [vmem:[#allocation7 + $0x24] sm:$0xf]
    %v223 = vld [vmem:[#allocation7 + $0x28] sm:$0xf]
    %v224 = vld [vmem:[#allocation7 + $0x2c] sm:$0xf]
    %v225 = vld [vmem:[#allocation7 + $0x30] sm:$0xf]
    %v226 = vld [vmem:[#allocation7 + $0x34] sm:$0xf]
    %v227 = vld [vmem:[#allocation7 + $0x38] sm:$0xf]
    %v228 = vld [vmem:[#allocation7 + $0x3c] sm:$0xf]
    %v229 = vld [vmem:[#allocation7 + $0x40] sm:$0xf]
    %v230 = vld [vmem:[#allocation7 + $0x44] sm:$0xf]
    %v231 = vld [vmem:[#allocation7 + $0x48] sm:$0xf]
    %v232 = vld [vmem:[#allocation7 + $0x4c] sm:$0xf]
    %v233 = vld [vmem:[#allocation7 + $0x50] sm:$0xf]
    %v234 = vld [vmem:[#allocation7 + $0x54] sm:$0xf]
    %v235 = vld [vmem:[#allocation7 + $0x58] sm:$0xf]
    %v236 = vld [vmem:[#allocation7 + $0x5c] sm:$0xf]
    %v237 = vld [vmem:[#allocation7 + $0x60] sm:$0xf]
    %v238 = vld [vmem:[#allocation7 + $0x64] sm:$0xf]
    %v239 = vld [vmem:[#allocation7 + $0x68] sm:$0xf]
    %v240 = vld [vmem:[#allocation7 + $0x6c] sm:$0xf]
    %v241 = vld [vmem:[#allocation7 + $0x70] sm:$0xf]
    %v242 = vld [vmem:[#allocation7 + $0x74] sm:$0xf]
    %v243 = vld [vmem:[#allocation7 + $0x78] sm:$0xf]
    %v244 = vld [vmem:[#allocation7 + $0x7c] sm:$0xf]
    %v245 = vld [vmem:[#allocation7 + $0x80] sm:$0xf]
    %v246 = vld [vmem:[#allocation7 + $0x84] sm:$0xf]
    %v247 = vld [vmem:[#allocation7 + $0x88] sm:$0xf]
    %v248 = vld [vmem:[#allocation7 + $0x8c] sm:$0xf]
    %v249 = vld [vmem:[#allocation8] sm:$0x1]
    %v251 = vlaneseq
    %v252 = vshrl.u32 %v251, 7
    %v253 = vsub.s32 0, %v252
    %v254 = vrot.slane %v249, %v253
    %v288 = vunpack.c.l.b16 %v181
    %v289 = vunpack.c.h.b16 %v181
    %v290 = vunpack.c.l.b16 %v182
    %v291 = vunpack.c.l.b16 %v183
    %v292 = vunpack.c.h.b16 %v183
    %v293 = vunpack.c.l.b16 %v184
    %v294 = vunpack.c.l.b16 %v185
    %v295 = vunpack.c.h.b16 %v185
    %v296 = vunpack.c.l.b16 %v186
    %v297 = vunpack.c.l.b16 %v187
    %v298 = vunpack.c.h.b16 %v187
    %v299 = vunpack.c.l.b16 %v188
    %v300 = vunpack.c.l.b16 %v189
    %v301 = vunpack.c.h.b16 %v189
    %v302 = vunpack.c.l.b16 %v190
    %v303 = vunpack.c.l.b16 %v191
    %v304 = vunpack.c.h.b16 %v191
    %v305 = vunpack.c.l.b16 %v192
    %v306 = vunpack.c.l.b16 %v193
    %v307 = vunpack.c.h.b16 %v193
    %v308 = vunpack.c.l.b16 %v194
    %v309 = vunpack.c.l.b16 %v195
    %v310 = vunpack.c.h.b16 %v195
    %v311 = vunpack.c.l.b16 %v196
    %v312 = vunpack.c.l.b16 %v197
    %v313 = vunpack.c.h.b16 %v197
    %v314 = vunpack.c.l.b16 %v198
    %v315 = vunpack.c.l.b16 %v199
    %v316 = vunpack.c.h.b16 %v199
    %v317 = vunpack.c.l.b16 %v200
    %v318 = vunpack.c.l.b16 %v201
    %v319 = vunpack.c.h.b16 %v201
    %v320 = vunpack.c.l.b16 %v202
    %v321 = vunpack.c.l.b16 %v203
    %v322 = vunpack.c.h.b16 %v203
    %v323 = vunpack.c.l.b16 %v204
    %v324 = vunpack.c.l.b16 %v205
    %v325 = vunpack.c.h.b16 %v205
    %v326 = vunpack.c.l.b16 %v206
    %v327 = vunpack.c.l.b16 %v207
    %v328 = vunpack.c.h.b16 %v207
    %v329 = vunpack.c.l.b16 %v208
    %v330 = vunpack.c.l.b16 %v209
    %v331 = vunpack.c.h.b16 %v209
    %v332 = vunpack.c.l.b16 %v210
    %v333 = vunpack.c.l.b16 %v211
    %v334 = vunpack.c.h.b16 %v211
    %v335 = vunpack.c.l.b16 %v212
    %v336 = vpack.c.b16 %v291, %v288
    %v337 = vpack.c.b16 %v292, %v289
    %v338 = vpack.c.b16 %v293, %v290
    %v339 = vpack.c.b16 %v297, %v294
    %v340 = vpack.c.b16 %v298, %v295
    %v341 = vpack.c.b16 %v299, %v296
    %v342 = vpack.c.b16 %v303, %v300
    %v343 = vpack.c.b16 %v304, %v301
    %v344 = vpack.c.b16 %v305, %v302
    %v345 = vpack.c.b16 %v309, %v306
    %v346 = vpack.c.b16 %v310, %v307
    %v347 = vpack.c.b16 %v311, %v308
    %v348 = vpack.c.b16 %v315, %v312
    %v349 = vpack.c.b16 %v316, %v313
    %v350 = vpack.c.b16 %v317, %v314
    %v351 = vpack.c.b16 %v321, %v318
    %v352 = vpack.c.b16 %v322, %v319
    %v353 = vpack.c.b16 %v323, %v320
    %v354 = vpack.c.b16 %v327, %v324
    %v355 = vpack.c.b16 %v328, %v325
    %v356 = vpack.c.b16 %v329, %v326
    %v357 = vpack.c.b16 %v333, %v330
    %v358 = vpack.c.b16 %v334, %v331
    %v359 = vpack.c.b16 %v335, %v332
    %v412 = vunpack.c.l.b16 %v213
    %v413 = vunpack.c.l.b16 %v214
    %v414 = vunpack.c.l.b16 %v215
    %v415 = vunpack.c.l.b16 %v216
    %v416 = vunpack.c.l.b16 %v217
    %v417 = vunpack.c.l.b16 %v218
    %v418 = vunpack.c.l.b16 %v219
    %v419 = vunpack.c.l.b16 %v220
    %v420 = vunpack.c.l.b16 %v221
    %v421 = vunpack.c.l.b16 %v222
    %v422 = vunpack.c.l.b16 %v223
    %v423 = vunpack.c.l.b16 %v224
    %v424 = vunpack.c.l.b16 %v225
    %v425 = vunpack.c.l.b16 %v226
    %v426 = vunpack.c.l.b16 %v227
    %v427 = vunpack.c.l.b16 %v228
    %v428 = vunpack.c.l.b16 %v229
    %v429 = vunpack.c.l.b16 %v230
    %v430 = vunpack.c.l.b16 %v231
    %v431 = vunpack.c.l.b16 %v232
    %v432 = vunpack.c.l.b16 %v233
    %v433 = vunpack.c.l.b16 %v234
    %v434 = vunpack.c.l.b16 %v235
    %v435 = vunpack.c.l.b16 %v236
    %v436 = vunpack.c.l.b16 %v237
    %v437 = vunpack.c.l.b16 %v238
    %v438 = vunpack.c.l.b16 %v239
    %v439 = vunpack.c.l.b16 %v240
    %v440 = vunpack.c.l.b16 %v241
    %v441 = vunpack.c.l.b16 %v242
    %v442 = vunpack.c.l.b16 %v243
    %v443 = vunpack.c.l.b16 %v244
    %v444 = vunpack.c.l.b16 %v245
    %v445 = vunpack.c.l.b16 %v246
    %v446 = vunpack.c.l.b16 %v247
    %v447 = vunpack.c.l.b16 %v248
    %v448 = vpack.c.b16 %v413, %v412
    %v449 = vpack.c.b16 %v415, %v414
    %v450 = vpack.c.b16 %v417, %v416
    %v451 = vpack.c.b16 %v419, %v418
    %v452 = vpack.c.b16 %v421, %v420
    %v453 = vpack.c.b16 %v423, %v422
    %v454 = vpack.c.b16 %v425, %v424
    %v455 = vpack.c.b16 %v427, %v426
    %v456 = vpack.c.b16 %v429, %v428
    %v457 = vpack.c.b16 %v431, %v430
    %v458 = vpack.c.b16 %v433, %v432
    %v459 = vpack.c.b16 %v435, %v434
    %v460 = vpack.c.b16 %v437, %v436
    %v461 = vpack.c.b16 %v439, %v438
    %v462 = vpack.c.b16 %v441, %v440
    %v463 = vpack.c.b16 %v443, %v442
    %v464 = vpack.c.b16 %v445, %v444
    %v465 = vpack.c.b16 %v447, %v446
    %vm484 = vcmask 261120
    %v486 = vsel %vm484, %v338, 0
    %v489 = vsel %vm484, %v341, 0
    %v492 = vsel %vm484, %v344, 0
    %v495 = vsel %vm484, %v347, 0
    %v498 = vsel %vm484, %v350, 0
    %v501 = vsel %vm484, %v353, 0
    %v504 = vsel %vm484, %v356, 0
    %v507 = vsel %vm484, %v359, 0
    %509 = vmatprep.subr.bf16.mxu0 0
    %510 = vmatpush1.bf16.msra.mxu0 %v448
    %511 = vmatprep.subr.bf16.mxu0 0
    %512 = vmatpush1.bf16.msra.mxu0 %v449
    %513 = vmatprep.subr.bf16.mxu0 0
    %514 = vmatpush1.bf16.msra.mxu0 %v450
    %515 = vmatprep.subr.bf16.mxu0 0
    %516 = vmatpush1.bf16.msra.mxu0 %v451
    %517 = vmatprep.subr.bf16.mxu0 0
    %518 = vmatpush1.bf16.msra.mxu0 %v452
    %519 = vmatprep.subr.bf16.mxu0 0
    %520 = vmatpush1.bf16.msra.mxu0 %v453
    %521 = vmatprep.subr.bf16.mxu0 0
    %522 = vmatpush1.bf16.msra.mxu0 %v454
    %523 = vmatprep.subr.bf16.mxu0 0
    %524 = vmatpush1.bf16.msra.mxu0 %v455
    %525 = vmatprep.subr.bf16.mxu0 0
    %526 = vmatpush1.bf16.msra.mxu0 %v456
    %527 = vmatprep.subr.bf16.mxu0 0
    %528 = vmatpush1.bf16.msra.mxu0 %v457
    %529 = vmatprep.subr.bf16.mxu0 0
    %530 = vmatpush1.bf16.msra.mxu0 %v458
    %531 = vmatprep.subr.bf16.mxu0 0
    %532 = vmatpush1.bf16.msra.mxu0 %v459
    %533 = vmatprep.subr.bf16.mxu0 0
    %534 = vmatpush1.bf16.msra.mxu0 %v460
    %535 = vmatprep.subr.bf16.mxu0 0
    %536 = vmatpush1.bf16.msra.mxu0 %v461
    %537 = vmatprep.subr.bf16.mxu0 0
    %538 = vmatpush1.bf16.msra.mxu0 %v462
    %539 = vmatprep.subr.bf16.mxu0 0
    %540 = vmatpush1.bf16.msra.mxu0 %v463
    %541 = vmatprep.mubr.bf16.mxu0 %v337
    %542 = vmatmul.mubr.bf16.gmra.mrb[0].mxu0 %v336
    %v543 = vpop.f32.mrb[0].mxu0
    %v544 = vadd.f32 %v254, %v543
    %v545 = vpop.f32.mrb[0].mxu0
    %v546 = vpop.f32.mrb[0].mxu0
    %v547 = vadd.f32 %v254, %v546
    %v548 = vpop.f32.mrb[0].mxu0
    %549 = vmatprep.mubr.bf16.mxu0 %v340
    %550 = vmatmul.mubr.bf16.gmra.mrb[0].mxu0 %v339
    %v551 = vpop.f32.mrb[0].mxu0
    %v552 = vadd.f32 %v254, %v551
    %v553 = vpop.f32.mrb[0].mxu0
    %v554 = vpop.f32.mrb[0].mxu0
    %v555 = vadd.f32 %v254, %v554
    %v556 = vpop.f32.mrb[0].mxu0
    %557 = vmatprep.mubr.bf16.mxu0 %v343
    %558 = vmatmul.mubr.bf16.gmra.mrb[0].mxu0 %v342
    %v559 = vpop.f32.mrb[0].mxu0
    %v560 = vadd.f32 %v254, %v559
    %v561 = vpop.f32.mrb[0].mxu0
    %v562 = vpop.f32.mrb[0].mxu0
    %v563 = vadd.f32 %v254, %v562
    %v564 = vpop.f32.mrb[0].mxu0
    %565 = vmatprep.mubr.bf16.mxu0 %v346
    %566 = vmatmul.mubr.bf16.gmra.mrb[0].mxu0 %v345
    %v567 = vpop.f32.mrb[0].mxu0
    %v568 = vadd.f32 %v254, %v567
    %v569 = vpop.f32.mrb[0].mxu0
    %v570 = vpop.f32.mrb[0].mxu0
    %v571 = vadd.f32 %v254, %v570
    %v572 = vpop.f32.mrb[0].mxu0
    %573 = vmatprep.mubr.bf16.mxu0 %v349
    %574 = vmatmul.mubr.bf16.gmra.mrb[0].mxu0 %v348
    %v575 = vpop.f32.mrb[0].mxu0
    %v576 = vadd.f32 %v254, %v575
    %v577 = vpop.f32.mrb[0].mxu0
    %v578 = vpop.f32.mrb[0].mxu0
    %v579 = vadd.f32 %v254, %v578
    %v580 = vpop.f32.mrb[0].mxu0
    %581 = vmatprep.mubr.bf16.mxu0 %v352
    %582 = vmatmul.mubr.bf16.gmra.mrb[0].mxu0 %v351
    %v583 = vpop.f32.mrb[0].mxu0
    %v584 = vadd.f32 %v254, %v583
    %v585 = vpop.f32.mrb[0].mxu0
    %v586 = vpop.f32.mrb[0].mxu0
    %v587 = vadd.f32 %v254, %v586
    %v588 = vpop.f32.mrb[0].mxu0
    %589 = vmatprep.mubr.bf16.mxu0 %v355
    %590 = vmatmul.mubr.bf16.gmra.mrb[0].mxu0 %v354
    %v591 = vpop.f32.mrb[0].mxu0
    %v592 = vadd.f32 %v254, %v591
    %v593 = vpop.f32.mrb[0].mxu0
    %v594 = vpop.f32.mrb[0].mxu0
    %v595 = vadd.f32 %v254, %v594
    %v596 = vpop.f32.mrb[0].mxu0
    %597 = vmatprep.mubr.bf16.mxu0 %v358
    %598 = vmatmul.mubr.bf16.gmra.mrb[0].mxu0 %v357
    %v599 = vpop.f32.mrb[0].mxu0
    %v600 = vadd.f32 %v254, %v599
    %v601 = vpop.f32.mrb[0].mxu0
    %v602 = vpop.f32.mrb[0].mxu0
    %v603 = vadd.f32 %v254, %v602
    %v604 = vpop.f32.mrb[0].mxu0
    %605 = vdwg.mxu0
    %606 = vmatprep.subr.bf16.mxu0 0
    %607 = vmatpush1.bf16.msra.mxu0 %v464
    %608 = vmatprep.subr.bf16.mxu0 0
    %609 = vmatpush1.bf16.msra.mxu0 %v465
    %610 = vmatprep.subr.bf16.mxu0 0
    %611 = vmatpush1.bf16.msra.mxu0 0
    %612 = vmatprep.subr.bf16.mxu0 0
    %613 = vmatpush1.bf16.msra.mxu0 0
    %614 = vmatprep.subr.bf16.mxu0 0
    %615 = vmatpush1.bf16.msra.mxu0 0
    %616 = vmatprep.subr.bf16.mxu0 0
    %617 = vmatpush1.bf16.msra.mxu0 0
    %618 = vmatprep.subr.bf16.mxu0 0
    %619 = vmatpush1.bf16.msra.mxu0 0
    %620 = vmatprep.subr.bf16.mxu0 0
    %621 = vmatpush1.bf16.msra.mxu0 0
    %622 = vmatprep.subr.bf16.mxu0 0
    %623 = vmatpush1.bf16.msra.mxu0 0
    %624 = vmatprep.subr.bf16.mxu0 0
    %625 = vmatpush1.bf16.msra.mxu0 0
    %626 = vmatprep.subr.bf16.mxu0 0
    %627 = vmatpush1.bf16.msra.mxu0 0
    %628 = vmatprep.subr.bf16.mxu0 0
    %629 = vmatpush1.bf16.msra.mxu0 0
    %630 = vmatprep.subr.bf16.mxu0 0
    %631 = vmatpush1.bf16.msra.mxu0 0
    %632 = vmatprep.subr.bf16.mxu0 0
    %633 = vmatpush1.bf16.msra.mxu0 0
    %634 = vmatprep.subr.bf16.mxu0 0
    %635 = vmatpush1.bf16.msra.mxu0 0
    %636 = vmatprep.subr.bf16.mxu0 0
    %637 = vmatpush1.bf16.msra.mxu0 0
    %638 = vmatprep.mubr.bf16.mxu0 0
    %639 = vmatmul.mubr.bf16.gmra.mrb[0].mxu0 %v486
    %v640 = vpop.f32.mrb[0].mxu0
    %v641 = vadd.f32 %v544, %v640
    %v642 = vpop.f32.mrb[0].mxu0
    %v643 = vpop.f32.mrb[0].mxu0
    %v644 = vadd.f32 %v547, %v643
    %v645 = vpop.f32.mrb[0].mxu0
    %646 = vmatprep.mubr.bf16.mxu0 0
    %647 = vmatmul.mubr.bf16.gmra.mrb[0].mxu0 %v489
    %v648 = vpop.f32.mrb[0].mxu0
    %v649 = vadd.f32 %v552, %v648
    %v650 = vpop.f32.mrb[0].mxu0
    %v651 = vpop.f32.mrb[0].mxu0
    %v652 = vadd.f32 %v555, %v651
    %v653 = vpop.f32.mrb[0].mxu0
    %654 = vmatprep.mubr.bf16.mxu0 0
    %655 = vmatmul.mubr.bf16.gmra.mrb[0].mxu0 %v492
    %v656 = vpop.f32.mrb[0].mxu0
    %v657 = vadd.f32 %v560, %v656
    %v658 = vpop.f32.mrb[0].mxu0
    %v659 = vpop.f32.mrb[0].mxu0
    %v660 = vadd.f32 %v563, %v659
    %v661 = vpop.f32.mrb[0].mxu0
    %662 = vmatprep.mubr.bf16.mxu0 0
    %663 = vmatmul.mubr.bf16.gmra.mrb[0].mxu0 %v495
    %v664 = vpop.f32.mrb[0].mxu0
    %v665 = vadd.f32 %v568, %v664
    %v666 = vpop.f32.mrb[0].mxu0
    %v667 = vpop.f32.mrb[0].mxu0
    %v668 = vadd.f32 %v571, %v667
    %v669 = vpop.f32.mrb[0].mxu0
    %670 = vmatprep.mubr.bf16.mxu0 0
    %671 = vmatmul.mubr.bf16.gmra.mrb[0].mxu0 %v498
    %v672 = vpop.f32.mrb[0].mxu0
    %v673 = vadd.f32 %v576, %v672
    %v674 = vpop.f32.mrb[0].mxu0
    %v675 = vpop.f32.mrb[0].mxu0
    %v676 = vadd.f32 %v579, %v675
    %v677 = vpop.f32.mrb[0].mxu0
    %678 = vmatprep.mubr.bf16.mxu0 0
    %679 = vmatmul.mubr.bf16.gmra.mrb[0].mxu0 %v501
    %v680 = vpop.f32.mrb[0].mxu0
    %v681 = vadd.f32 %v584, %v680
    %v682 = vpop.f32.mrb[0].mxu0
    %v683 = vpop.f32.mrb[0].mxu0
    %v684 = vadd.f32 %v587, %v683
    %v685 = vpop.f32.mrb[0].mxu0
    %686 = vmatprep.mubr.bf16.mxu0 0
    %687 = vmatmul.mubr.bf16.gmra.mrb[0].mxu0 %v504
    %v688 = vpop.f32.mrb[0].mxu0
    %v689 = vadd.f32 %v592, %v688
    %v690 = vpop.f32.mrb[0].mxu0
    %v691 = vpop.f32.mrb[0].mxu0
    %v692 = vadd.f32 %v595, %v691
    %v693 = vpop.f32.mrb[0].mxu0
    %694 = vmatprep.mubr.bf16.mxu0 0
    %695 = vmatmul.mubr.bf16.gmra.mrb[0].mxu0 %v507
    %v696 = vpop.f32.mrb[0].mxu0
    %v697 = vadd.f32 %v600, %v696
    %v698 = vpop.f32.mrb[0].mxu0
    %v699 = vpop.f32.mrb[0].mxu0
    %v700 = vadd.f32 %v603, %v699
    %v701 = vpop.f32.mrb[0].mxu0
    %702 = vdwg.mxu0
    %vm703 = vcmp.ge.f32.partialorder %v641, 0.0
    %vm704 = vcmp.ge.f32.partialorder %v644, 0.0
    %vm705 = vcmp.ge.f32.partialorder %v649, 0.0
    %vm706 = vcmp.ge.f32.partialorder %v652, 0.0
    %vm707 = vcmp.ge.f32.partialorder %v657, 0.0
    %vm708 = vcmp.ge.f32.partialorder %v660, 0.0
    %vm709 = vcmp.ge.f32.partialorder %v665, 0.0
    %vm710 = vcmp.ge.f32.partialorder %v668, 0.0
    %vm711 = vcmp.ge.f32.partialorder %v673, 0.0
    %vm712 = vcmp.ge.f32.partialorder %v676, 0.0
    %vm713 = vcmp.ge.f32.partialorder %v681, 0.0
    %vm714 = vcmp.ge.f32.partialorder %v684, 0.0
    %vm715 = vcmp.ge.f32.partialorder %v689, 0.0
    %vm716 = vcmp.ge.f32.partialorder %v692, 0.0
    %vm717 = vcmp.ge.f32.partialorder %v697, 0.0
    %vm718 = vcmp.ge.f32.partialorder %v700, 0.0
    %v719 = vmul.f32 %v641, 0.01
    %v720 = vmul.f32 %v644, 0.01
    %v721 = vmul.f32 %v649, 0.01
    %v722 = vmul.f32 %v652, 0.01
    %v723 = vmul.f32 %v657, 0.01
    %v724 = vmul.f32 %v660, 0.01
    %v725 = vmul.f32 %v665, 0.01
    %v726 = vmul.f32 %v668, 0.01
    %v727 = vmul.f32 %v673, 0.01
    %v728 = vmul.f32 %v676, 0.01
    %v729 = vmul.f32 %v681, 0.01
    %v730 = vmul.f32 %v684, 0.01
    %v731 = vmul.f32 %v689, 0.01
    %v732 = vmul.f32 %v692, 0.01
    %v733 = vmul.f32 %v697, 0.01
    %v734 = vmul.f32 %v700, 0.01
    %v735 = vsel %vm703, %v641, %v719
    %v736 = vsel %vm704, %v644, %v720
    %v737 = vsel %vm705, %v649, %v721
    %v738 = vsel %vm706, %v652, %v722
    %v739 = vsel %vm707, %v657, %v723
    %v740 = vsel %vm708, %v660, %v724
    %v741 = vsel %vm709, %v665, %v725
    %v742 = vsel %vm710, %v668, %v726
    %v743 = vsel %vm711, %v673, %v727
    %v744 = vsel %vm712, %v676, %v728
    %v745 = vsel %vm713, %v681, %v729
    %v746 = vsel %vm714, %v684, %v730
    %v747 = vsel %vm715, %v689, %v731
    %v748 = vsel %vm716, %v692, %v732
    %v749 = vsel %vm717, %v697, %v733
    %v750 = vsel %vm718, %v700, %v734
    %v751 = vld [vmem:[#allocation2] sm:$0xf]
    %v752 = vld [vmem:[#allocation2 + $0x4] sm:$0xf]
    %v753 = vld [vmem:[#allocation2 + $0x8] sm:$0xf]
    %v754 = vld [vmem:[#allocation2 + $0xc] sm:$0xf]
    %v755 = vld [vmem:[#allocation2 + $0x10] sm:$0xf]
    %v756 = vld [vmem:[#allocation2 + $0x14] sm:$0xf]
    %v757 = vld [vmem:[#allocation2 + $0x18] sm:$0xf]
    %v758 = vld [vmem:[#allocation2 + $0x1c] sm:$0xf]
    %v759 = vld [vmem:[#allocation2 + $0x20] sm:$0xf]
    %v760 = vld [vmem:[#allocation2 + $0x24] sm:$0xf]
    %v761 = vld [vmem:[#allocation2 + $0x28] sm:$0xf]
    %v762 = vld [vmem:[#allocation2 + $0x2c] sm:$0xf]
    %v763 = vld [vmem:[#allocation2 + $0x30] sm:$0xf]
    %v764 = vld [vmem:[#allocation2 + $0x34] sm:$0xf]
    %v765 = vld [vmem:[#allocation2 + $0x38] sm:$0xf]
    %v766 = vld [vmem:[#allocation2 + $0x3c] sm:$0xf]
    %v767 = vld [vmem:[#allocation10] sm:$0xff]
    %v768 = vld [vmem:[#allocation10 + $0x8] sm:$0xff]
    %v769 = vld [vmem:[#allocation10 + $0x10] sm:$0xff]
    %v770 = vld [vmem:[#allocation10 + $0x18] sm:$0xff]
    %v771 = vld [vmem:[#allocation10 + $0x20] sm:$0xff]
    %v772 = vld [vmem:[#allocation10 + $0x28] sm:$0xff]
    %v773 = vld [vmem:[#allocation10 + $0x30] sm:$0xff]
    %v774 = vld [vmem:[#allocation10 + $0x38] sm:$0xff]
    %v775 = vpack.c.bf16 %v736, %v735
    %v776 = vpack.c.bf16 %v738, %v737
    %v777 = vpack.c.bf16 %v740, %v739
    %v778 = vpack.c.bf16 %v742, %v741
    %v779 = vpack.c.bf16 %v744, %v743
    %v780 = vpack.c.bf16 %v746, %v745
    %v781 = vpack.c.bf16 %v748, %v747
    %v782 = vpack.c.bf16 %v750, %v749
    %v783 = vld [vmem:[#allocation11] sm:$0xff]
    %v784 = vld [vmem:[#allocation11 + $0x8] sm:$0xff]
    %v785 = vld [vmem:[#allocation11 + $0x10] sm:$0xff]
    %v786 = vld [vmem:[#allocation11 + $0x18] sm:$0xff]
    %v791 = vunpack.c.l.b16 %v783
    %v792 = vunpack.c.h.b16 %v783
    %v793 = vunpack.c.l.b16 %v784
    %v794 = vunpack.c.h.b16 %v784
    %v795 = vunpack.c.l.b16 %v785
    %v796 = vunpack.c.h.b16 %v785
    %v797 = vunpack.c.l.b16 %v786
    %v798 = vunpack.c.h.b16 %v786
    %v799 = vpack.c.b16 %v795, %v791
    %v800 = vpack.c.b16 %v796, %v792
    %v801 = vpack.c.b16 %v797, %v793
    %v802 = vpack.c.b16 %v798, %v794
    %vm807 = vcmask 130048
    %v809 = vsel %vm807, %v775, 0
    %v812 = vsel %vm807, %v776, 0
    %v815 = vsel %vm807, %v777, 0
    %v818 = vsel %vm807, %v778, 0
    %v821 = vsel %vm807, %v779, 0
    %v824 = vsel %vm807, %v780, 0
    %v827 = vsel %vm807, %v781, 0
    %v830 = vsel %vm807, %v782, 0
    %832 = vmatprep.subr.bf16.mxu0 %v800
    %833 = vmatpush1.bf16.msra.mxu0 %v799
    %834 = vmatprep.subr.bf16.mxu0 0
    %835 = vmatpush1.bf16.msra.mxu0 0
    %836 = vmatprep.subr.bf16.mxu0 0
    %837 = vmatpush1.bf16.msra.mxu0 0
    %838 = vmatprep.subr.bf16.mxu0 0
    %839 = vmatpush1.bf16.msra.mxu0 0
    %840 = vmatprep.subr.bf16.mxu0 0
    %841 = vmatpush1.bf16.msra.mxu0 0
    %842 = vmatprep.subr.bf16.mxu0 0
    %843 = vmatpush1.bf16.msra.mxu0 0
    %844 = vmatprep.subr.bf16.mxu0 0
    %845 = vmatpush1.bf16.msra.mxu0 0
    %846 = vmatprep.subr.bf16.mxu0 0
    %847 = vmatpush1.bf16.msra.mxu0 0
    %848 = vmatprep.subr.bf16.mxu0 0
    %849 = vmatpush1.bf16.msra.mxu0 0
    %850 = vmatprep.subr.bf16.mxu0 0
    %851 = vmatpush1.bf16.msra.mxu0 0
    %852 = vmatprep.subr.bf16.mxu0 0
    %853 = vmatpush1.bf16.msra.mxu0 0
    %854 = vmatprep.subr.bf16.mxu0 0
    %855 = vmatpush1.bf16.msra.mxu0 0
    %856 = vmatprep.subr.bf16.mxu0 0
    %857 = vmatpush1.bf16.msra.mxu0 0
    %858 = vmatprep.subr.bf16.mxu0 0
    %859 = vmatpush1.bf16.msra.mxu0 0
    %860 = vmatprep.subr.bf16.mxu0 0
    %861 = vmatpush1.bf16.msra.mxu0 0
    %862 = vmatprep.subr.bf16.mxu0 0
    %863 = vmatpush1.bf16.msra.mxu0 0
    %864 = vmatprep.mubr.bf16.mxu0 0
    %865 = vmatmul.mubr.bf16.gmra.mrb[0].mxu0 %v809
    %v866 = vpop.f32.mrb[0].mxu0
    %v867 = vadd.f32 0.0, %v866
    %v868 = vpop.f32.mrb[0].mxu0
    %v869 = vadd.f32 0.0, %v868
    %v870 = vpop.f32.mrb[0].mxu0
    %v871 = vadd.f32 0.0, %v870
    %v872 = vpop.f32.mrb[0].mxu0
    %v873 = vadd.f32 0.0, %v872
    %874 = vmatprep.mubr.bf16.mxu0 0
    %875 = vmatmul.mubr.bf16.gmra.mrb[0].mxu0 %v812
    %v876 = vpop.f32.mrb[0].mxu0
    %v877 = vadd.f32 0.0, %v876
    %v878 = vpop.f32.mrb[0].mxu0
    %v879 = vadd.f32 0.0, %v878
    %v880 = vpop.f32.mrb[0].mxu0
    %v881 = vadd.f32 0.0, %v880
    %v882 = vpop.f32.mrb[0].mxu0
    %v883 = vadd.f32 0.0, %v882
    %884 = vmatprep.mubr.bf16.mxu0 0
    %885 = vmatmul.mubr.bf16.gmra.mrb[0].mxu0 %v815
    %v886 = vpop.f32.mrb[0].mxu0
    %v887 = vadd.f32 0.0, %v886
    %v888 = vpop.f32.mrb[0].mxu0
    %v889 = vadd.f32 0.0, %v888
    %v890 = vpop.f32.mrb[0].mxu0
    %v891 = vadd.f32 0.0, %v890
    %v892 = vpop.f32.mrb[0].mxu0
    %v893 = vadd.f32 0.0, %v892
    %894 = vmatprep.mubr.bf16.mxu0 0
    %895 = vmatmul.mubr.bf16.gmra.mrb[0].mxu0 %v818
    %v896 = vpop.f32.mrb[0].mxu0
    %v897 = vadd.f32 0.0, %v896
    %v898 = vpop.f32.mrb[0].mxu0
    %v899 = vadd.f32 0.0, %v898
    %v900 = vpop.f32.mrb[0].mxu0
    %v901 = vadd.f32 0.0, %v900
    %v902 = vpop.f32.mrb[0].mxu0
    %v903 = vadd.f32 0.0, %v902
    %904 = vmatprep.mubr.bf16.mxu0 0
    %905 = vmatmul.mubr.bf16.gmra.mrb[0].mxu0 %v821
    %v906 = vpop.f32.mrb[0].mxu0
    %v907 = vadd.f32 0.0, %v906
    %v908 = vpop.f32.mrb[0].mxu0
    %v909 = vadd.f32 0.0, %v908
    %v910 = vpop.f32.mrb[0].mxu0
    %v911 = vadd.f32 0.0, %v910
    %v912 = vpop.f32.mrb[0].mxu0
    %v913 = vadd.f32 0.0, %v912
    %914 = vmatprep.mubr.bf16.mxu0 0
    %915 = vmatmul.mubr.bf16.gmra.mrb[0].mxu0 %v824
    %v916 = vpop.f32.mrb[0].mxu0
    %v917 = vadd.f32 0.0, %v916
    %v918 = vpop.f32.mrb[0].mxu0
    %v919 = vadd.f32 0.0, %v918
    %v920 = vpop.f32.mrb[0].mxu0
    %v921 = vadd.f32 0.0, %v920
    %v922 = vpop.f32.mrb[0].mxu0
    %v923 = vadd.f32 0.0, %v922
    %924 = vmatprep.mubr.bf16.mxu0 0
    %925 = vmatmul.mubr.bf16.gmra.mrb[0].mxu0 %v827
    %v926 = vpop.f32.mrb[0].mxu0
    %v927 = vadd.f32 0.0, %v926
    %v928 = vpop.f32.mrb[0].mxu0
    %v929 = vadd.f32 0.0, %v928
    %v930 = vpop.f32.mrb[0].mxu0
    %v931 = vadd.f32 0.0, %v930
    %v932 = vpop.f32.mrb[0].mxu0
    %v933 = vadd.f32 0.0, %v932
    %934 = vmatprep.mubr.bf16.mxu0 0
    %935 = vmatmul.mubr.bf16.gmra.mrb[0].mxu0 %v830
    %v936 = vpop.f32.mrb[0].mxu0
    %v937 = vadd.f32 0.0, %v936
    %v938 = vpop.f32.mrb[0].mxu0
    %v939 = vadd.f32 0.0, %v938
    %v940 = vpop.f32.mrb[0].mxu0
    %v941 = vadd.f32 0.0, %v940
    %v942 = vpop.f32.mrb[0].mxu0
    %v943 = vadd.f32 0.0, %v942
    %944 = vdwg.mxu0
    %945 = vmatprep.subr.bf16.mxu0 %v802
    %946 = vmatpush1.bf16.msra.mxu0 %v801
    %947 = vmatprep.subr.bf16.mxu0 0
    %948 = vmatpush1.bf16.msra.mxu0 0
    %949 = vmatprep.subr.bf16.mxu0 0
    %950 = vmatpush1.bf16.msra.mxu0 0
    %951 = vmatprep.subr.bf16.mxu0 0
    %952 = vmatpush1.bf16.msra.mxu0 0
    %953 = vmatprep.subr.bf16.mxu0 0
    %954 = vmatpush1.bf16.msra.mxu0 0
    %955 = vmatprep.subr.bf16.mxu0 0
    %956 = vmatpush1.bf16.msra.mxu0 0
    %957 = vmatprep.subr.bf16.mxu0 0
    %958 = vmatpush1.bf16.msra.mxu0 0
    %959 = vmatprep.subr.bf16.mxu0 0
    %960 = vmatpush1.bf16.msra.mxu0 0
    %961 = vmatprep.subr.bf16.mxu0 0
    %962 = vmatpush1.bf16.msra.mxu0 0
    %963 = vmatprep.subr.bf16.mxu0 0
    %964 = vmatpush1.bf16.msra.mxu0 0
    %965 = vmatprep.subr.bf16.mxu0 0
    %966 = vmatpush1.bf16.msra.mxu0 0
    %967 = vmatprep.subr.bf16.mxu0 0
    %968 = vmatpush1.bf16.msra.mxu0 0
    %969 = vmatprep.subr.bf16.mxu0 0
    %970 = vmatpush1.bf16.msra.mxu0 0
    %971 = vmatprep.subr.bf16.mxu0 0
    %972 = vmatpush1.bf16.msra.mxu0 0
    %973 = vmatprep.subr.bf16.mxu0 0
    %974 = vmatpush1.bf16.msra.mxu0 0
    %975 = vmatprep.subr.bf16.mxu0 0
    %976 = vmatpush1.bf16.msra.mxu0 0
    %977 = vmatprep.mubr.bf16.mxu0 0
    %978 = vmatmul.mubr.bf16.gmra.mrb[0].mxu0 %v809
    %v979 = vpop.f32.mrb[0].mxu0
    %v980 = vadd.f32 0.0, %v979
    %v981 = vpop.f32.mrb[0].mxu0
    %v982 = vadd.f32 0.0, %v981
    %v983 = vpop.f32.mrb[0].mxu0
    %v984 = vadd.f32 0.0, %v983
    %v985 = vpop.f32.mrb[0].mxu0
    %v986 = vadd.f32 0.0, %v985
    %987 = vmatprep.mubr.bf16.mxu0 0
    %988 = vmatmul.mubr.bf16.gmra.mrb[0].mxu0 %v812
    %v989 = vpop.f32.mrb[0].mxu0
    %v990 = vadd.f32 0.0, %v989
    %v991 = vpop.f32.mrb[0].mxu0
    %v992 = vadd.f32 0.0, %v991
    %v993 = vpop.f32.mrb[0].mxu0
    %v994 = vadd.f32 0.0, %v993
    %v995 = vpop.f32.mrb[0].mxu0
    %v996 = vadd.f32 0.0, %v995
    %997 = vmatprep.mubr.bf16.mxu0 0
    %998 = vmatmul.mubr.bf16.gmra.mrb[0].mxu0 %v815
    %v999 = vpop.f32.mrb[0].mxu0
    %v1000 = vadd.f32 0.0, %v999
    %v1001 = vpop.f32.mrb[0].mxu0
    %v1002 = vadd.f32 0.0, %v1001
    %v1003 = vpop.f32.mrb[0].mxu0
    %v1004 = vadd.f32 0.0, %v1003
    %v1005 = vpop.f32.mrb[0].mxu0
    %v1006 = vadd.f32 0.0, %v1005
    %1007 = vmatprep.mubr.bf16.mxu0 0
    %1008 = vmatmul.mubr.bf16.gmra.mrb[0].mxu0 %v818
    %v1009 = vpop.f32.mrb[0].mxu0
    %v1010 = vadd.f32 0.0, %v1009
    %v1011 = vpop.f32.mrb[0].mxu0
    %v1012 = vadd.f32 0.0, %v1011
    %v1013 = vpop.f32.mrb[0].mxu0
    %v1014 = vadd.f32 0.0, %v1013
    %v1015 = vpop.f32.mrb[0].mxu0
    %v1016 = vadd.f32 0.0, %v1015
    %1017 = vmatprep.mubr.bf16.mxu0 0
    %1018 = vmatmul.mubr.bf16.gmra.mrb[0].mxu0 %v821
    %v1019 = vpop.f32.mrb[0].mxu0
    %v1020 = vadd.f32 0.0, %v1019
    %v1021 = vpop.f32.mrb[0].mxu0
    %v1022 = vadd.f32 0.0, %v1021
    %v1023 = vpop.f32.mrb[0].mxu0
    %v1024 = vadd.f32 0.0, %v1023
    %v1025 = vpop.f32.mrb[0].mxu0
    %v1026 = vadd.f32 0.0, %v1025
    %1027 = vmatprep.mubr.bf16.mxu0 0
    %1028 = vmatmul.mubr.bf16.gmra.mrb[0].mxu0 %v824
    %v1029 = vpop.f32.mrb[0].mxu0
    %v1030 = vadd.f32 0.0, %v1029
    %v1031 = vpop.f32.mrb[0].mxu0
    %v1032 = vadd.f32 0.0, %v1031
    %v1033 = vpop.f32.mrb[0].mxu0
    %v1034 = vadd.f32 0.0, %v1033
    %v1035 = vpop.f32.mrb[0].mxu0
    %v1036 = vadd.f32 0.0, %v1035
    %1037 = vmatprep.mubr.bf16.mxu0 0
    %1038 = vmatmul.mubr.bf16.gmra.mrb[0].mxu0 %v827
    %v1039 = vpop.f32.mrb[0].mxu0
    %v1040 = vadd.f32 0.0, %v1039
    %v1041 = vpop.f32.mrb[0].mxu0
    %v1042 = vadd.f32 0.0, %v1041
    %v1043 = vpop.f32.mrb[0].mxu0
    %v1044 = vadd.f32 0.0, %v1043
    %v1045 = vpop.f32.mrb[0].mxu0
    %v1046 = vadd.f32 0.0, %v1045
    %1047 = vmatprep.mubr.bf16.mxu0 0
    %1048 = vmatmul.mubr.bf16.gmra.mrb[0].mxu0 %v830
    %v1049 = vpop.f32.mrb[0].mxu0
    %v1050 = vadd.f32 0.0, %v1049
    %v1051 = vpop.f32.mrb[0].mxu0
    %v1052 = vadd.f32 0.0, %v1051
    %v1053 = vpop.f32.mrb[0].mxu0
    %v1054 = vadd.f32 0.0, %v1053
    %v1055 = vpop.f32.mrb[0].mxu0
    %v1056 = vadd.f32 0.0, %v1055
    %1057 = vdwg.mxu0
    %v1074 = vunpack.c.l.b16 %v751
    %v1075 = vunpack.c.l.b16 %v752
    %v1076 = vunpack.c.l.b16 %v753
    %v1077 = vunpack.c.l.b16 %v754
    %v1078 = vunpack.c.l.b16 %v755
    %v1079 = vunpack.c.l.b16 %v756
    %v1080 = vunpack.c.l.b16 %v757
    %v1081 = vunpack.c.l.b16 %v758
    %v1082 = vunpack.c.l.b16 %v759
    %v1083 = vunpack.c.l.b16 %v760
    %v1084 = vunpack.c.l.b16 %v761
    %v1085 = vunpack.c.l.b16 %v762
    %v1086 = vunpack.c.l.b16 %v763
    %v1087 = vunpack.c.l.b16 %v764
    %v1088 = vunpack.c.l.b16 %v765
    %v1089 = vunpack.c.l.b16 %v766
    %v1090 = vpack.c.b16 %v1075, %v1074
    %v1091 = vpack.c.b16 %v1077, %v1076
    %v1092 = vpack.c.b16 %v1079, %v1078
    %v1093 = vpack.c.b16 %v1081, %v1080
    %v1094 = vpack.c.b16 %v1083, %v1082
    %v1095 = vpack.c.b16 %v1085, %v1084
    %v1096 = vpack.c.b16 %v1087, %v1086
    %v1097 = vpack.c.b16 %v1089, %v1088
    %v1106 = vunpack.c.l.b16 %v767
    %v1107 = vunpack.c.h.b16 %v767
    %v1108 = vunpack.c.l.b16 %v768
    %v1109 = vunpack.c.h.b16 %v768
    %v1110 = vunpack.c.l.b16 %v769
    %v1111 = vunpack.c.h.b16 %v769
    %v1112 = vunpack.c.l.b16 %v770
    %v1113 = vunpack.c.h.b16 %v770
    %v1114 = vunpack.c.l.b16 %v771
    %v1115 = vunpack.c.h.b16 %v771
    %v1116 = vunpack.c.l.b16 %v772
    %v1117 = vunpack.c.h.b16 %v772
    %v1118 = vunpack.c.l.b16 %v773
    %v1119 = vunpack.c.h.b16 %v773
    %v1120 = vunpack.c.l.b16 %v774
    %v1121 = vunpack.c.h.b16 %v774
    %v1122 = vpack.c.b16 %v1110, %v1106
    %v1123 = vpack.c.b16 %v1111, %v1107
    %v1124 = vpack.c.b16 %v1112, %v1108
    %v1125 = vpack.c.b16 %v1113, %v1109
    %v1126 = vpack.c.b16 %v1118, %v1114
    %v1127 = vpack.c.b16 %v1119, %v1115
    %v1128 = vpack.c.b16 %v1120, %v1116
    %v1129 = vpack.c.b16 %v1121, %v1117
    %v1139 = vsel %vm484, %v1090, 0
    %v1142 = vsel %vm484, %v1091, 0
    %v1145 = vsel %vm484, %v1092, 0
    %v1148 = vsel %vm484, %v1093, 0
    %v1151 = vsel %vm484, %v1094, 0
    %v1154 = vsel %vm484, %v1095, 0
    %v1157 = vsel %vm484, %v1096, 0
    %v1160 = vsel %vm484, %v1097, 0
    %1162 = vmatprep.subr.bf16.mxu0 %v1123
    %1163 = vmatpush1.bf16.msra.mxu0 %v1122
    %1164 = vmatprep.subr.bf16.mxu0 %v1127
    %1165 = vmatpush1.bf16.msra.mxu0 %v1126
    %1166 = vmatprep.subr.bf16.mxu0 0
    %1167 = vmatpush1.bf16.msra.mxu0 0
    %1168 = vmatprep.subr.bf16.mxu0 0
    %1169 = vmatpush1.bf16.msra.mxu0 0
    %1170 = vmatprep.subr.bf16.mxu0 0
    %1171 = vmatpush1.bf16.msra.mxu0 0
    %1172 = vmatprep.subr.bf16.mxu0 0
    %1173 = vmatpush1.bf16.msra.mxu0 0
    %1174 = vmatprep.subr.bf16.mxu0 0
    %1175 = vmatpush1.bf16.msra.mxu0 0
    %1176 = vmatprep.subr.bf16.mxu0 0
    %1177 = vmatpush1.bf16.msra.mxu0 0
    %1178 = vmatprep.subr.bf16.mxu0 0
    %1179 = vmatpush1.bf16.msra.mxu0 0
    %1180 = vmatprep.subr.bf16.mxu0 0
    %1181 = vmatpush1.bf16.msra.mxu0 0
    %1182 = vmatprep.subr.bf16.mxu0 0
    %1183 = vmatpush1.bf16.msra.mxu0 0
    %1184 = vmatprep.subr.bf16.mxu0 0
    %1185 = vmatpush1.bf16.msra.mxu0 0
    %1186 = vmatprep.subr.bf16.mxu0 0
    %1187 = vmatpush1.bf16.msra.mxu0 0
    %1188 = vmatprep.subr.bf16.mxu0 0
    %1189 = vmatpush1.bf16.msra.mxu0 0
    %1190 = vmatprep.subr.bf16.mxu0 0
    %1191 = vmatpush1.bf16.msra.mxu0 0
    %1192 = vmatprep.subr.bf16.mxu0 0
    %1193 = vmatpush1.bf16.msra.mxu0 0
    %1194 = vmatprep.mubr.bf16.mxu0 0
    %1195 = vmatmul.mubr.bf16.gmra.mrb[0].mxu0 %v1139
    %v1196 = vpop.f32.mrb[0].mxu0
    %v1197 = vadd.f32 %v867, %v1196
    %v1198 = vpop.f32.mrb[0].mxu0
    %v1199 = vadd.f32 %v869, %v1198
    %v1200 = vpop.f32.mrb[0].mxu0
    %v1201 = vadd.f32 %v871, %v1200
    %v1202 = vpop.f32.mrb[0].mxu0
    %v1203 = vadd.f32 %v873, %v1202
    %1204 = vmatprep.mubr.bf16.mxu0 0
    %1205 = vmatmul.mubr.bf16.gmra.mrb[0].mxu0 %v1142
    %v1206 = vpop.f32.mrb[0].mxu0
    %v1207 = vadd.f32 %v877, %v1206
    %v1208 = vpop.f32.mrb[0].mxu0
    %v1209 = vadd.f32 %v879, %v1208
    %v1210 = vpop.f32.mrb[0].mxu0
    %v1211 = vadd.f32 %v881, %v1210
    %v1212 = vpop.f32.mrb[0].mxu0
    %v1213 = vadd.f32 %v883, %v1212
    %1214 = vmatprep.mubr.bf16.mxu0 0
    %1215 = vmatmul.mubr.bf16.gmra.mrb[0].mxu0 %v1145
    %v1216 = vpop.f32.mrb[0].mxu0
    %v1217 = vadd.f32 %v887, %v1216
    %v1218 = vpop.f32.mrb[0].mxu0
    %v1219 = vadd.f32 %v889, %v1218
    %v1220 = vpop.f32.mrb[0].mxu0
    %v1221 = vadd.f32 %v891, %v1220
    %v1222 = vpop.f32.mrb[0].mxu0
    %v1223 = vadd.f32 %v893, %v1222
    %1224 = vmatprep.mubr.bf16.mxu0 0
    %1225 = vmatmul.mubr.bf16.gmra.mrb[0].mxu0 %v1148
    %v1226 = vpop.f32.mrb[0].mxu0
    %v1227 = vadd.f32 %v897, %v1226
    %v1228 = vpop.f32.mrb[0].mxu0
    %v1229 = vadd.f32 %v899, %v1228
    %v1230 = vpop.f32.mrb[0].mxu0
    %v1231 = vadd.f32 %v901, %v1230
    %v1232 = vpop.f32.mrb[0].mxu0
    %v1233 = vadd.f32 %v903, %v1232
    %1234 = vmatprep.mubr.bf16.mxu0 0
    %1235 = vmatmul.mubr.bf16.gmra.mrb[0].mxu0 %v1151
    %v1236 = vpop.f32.mrb[0].mxu0
    %v1237 = vadd.f32 %v907, %v1236
    %v1238 = vpop.f32.mrb[0].mxu0
    %v1239 = vadd.f32 %v909, %v1238
    %v1240 = vpop.f32.mrb[0].mxu0
    %v1241 = vadd.f32 %v911, %v1240
    %v1242 = vpop.f32.mrb[0].mxu0
    %v1243 = vadd.f32 %v913, %v1242
    %1244 = vmatprep.mubr.bf16.mxu0 0
    %1245 = vmatmul.mubr.bf16.gmra.mrb[0].mxu0 %v1154
    %v1246 = vpop.f32.mrb[0].mxu0
    %v1247 = vadd.f32 %v917, %v1246
    %v1248 = vpop.f32.mrb[0].mxu0
    %v1249 = vadd.f32 %v919, %v1248
    %v1250 = vpop.f32.mrb[0].mxu0
    %v1251 = vadd.f32 %v921, %v1250
    %v1252 = vpop.f32.mrb[0].mxu0
    %v1253 = vadd.f32 %v923, %v1252
    %1254 = vmatprep.mubr.bf16.mxu0 0
    %1255 = vmatmul.mubr.bf16.gmra.mrb[0].mxu0 %v1157
    %v1256 = vpop.f32.mrb[0].mxu0
    %v1257 = vadd.f32 %v927, %v1256
    %v1258 = vpop.f32.mrb[0].mxu0
    %v1259 = vadd.f32 %v929, %v1258
    %v1260 = vpop.f32.mrb[0].mxu0
    %v1261 = vadd.f32 %v931, %v1260
    %v1262 = vpop.f32.mrb[0].mxu0
    %v1263 = vadd.f32 %v933, %v1262
    %1264 = vmatprep.mubr.bf16.mxu0 0
    %1265 = vmatmul.mubr.bf16.gmra.mrb[0].mxu0 %v1160
    %v1266 = vpop.f32.mrb[0].mxu0
    %v1267 = vadd.f32 %v937, %v1266
    %v1268 = vpop.f32.mrb[0].mxu0
    %v1269 = vadd.f32 %v939, %v1268
    %v1270 = vpop.f32.mrb[0].mxu0
    %v1271 = vadd.f32 %v941, %v1270
    %v1272 = vpop.f32.mrb[0].mxu0
    %v1273 = vadd.f32 %v943, %v1272
    %1274 = vdwg.mxu0
    %1275 = vmatprep.subr.bf16.mxu0 %v1125
    %1276 = vmatpush1.bf16.msra.mxu0 %v1124
    %1277 = vmatprep.subr.bf16.mxu0 %v1129
    %1278 = vmatpush1.bf16.msra.mxu0 %v1128
    %1279 = vmatprep.subr.bf16.mxu0 0
    %1280 = vmatpush1.bf16.msra.mxu0 0
    %1281 = vmatprep.subr.bf16.mxu0 0
    %1282 = vmatpush1.bf16.msra.mxu0 0
    %1283 = vmatprep.subr.bf16.mxu0 0
    %1284 = vmatpush1.bf16.msra.mxu0 0
    %1285 = vmatprep.subr.bf16.mxu0 0
    %1286 = vmatpush1.bf16.msra.mxu0 0
    %1287 = vmatprep.subr.bf16.mxu0 0
    %1288 = vmatpush1.bf16.msra.mxu0 0
    %1289 = vmatprep.subr.bf16.mxu0 0
    %1290 = vmatpush1.bf16.msra.mxu0 0
    %1291 = vmatprep.subr.bf16.mxu0 0
    %1292 = vmatpush1.bf16.msra.mxu0 0
    %1293 = vmatprep.subr.bf16.mxu0 0
    %1294 = vmatpush1.bf16.msra.mxu0 0
    %1295 = vmatprep.subr.bf16.mxu0 0
    %1296 = vmatpush1.bf16.msra.mxu0 0
    %1297 = vmatprep.subr.bf16.mxu0 0
    %1298 = vmatpush1.bf16.msra.mxu0 0
    %1299 = vmatprep.subr.bf16.mxu0 0
    %1300 = vmatpush1.bf16.msra.mxu0 0
    %1301 = vmatprep.subr.bf16.mxu0 0
    %1302 = vmatpush1.bf16.msra.mxu0 0
    %1303 = vmatprep.subr.bf16.mxu0 0
    %1304 = vmatpush1.bf16.msra.mxu0 0
    %1305 = vmatprep.subr.bf16.mxu0 0
    %1306 = vmatpush1.bf16.msra.mxu0 0
    %1307 = vmatprep.mubr.bf16.mxu0 0
    %1308 = vmatmul.mubr.bf16.gmra.mrb[0].mxu0 %v1139
    %v1309 = vpop.f32.mrb[0].mxu0
    %v1310 = vadd.f32 %v980, %v1309
    %v1311 = vpop.f32.mrb[0].mxu0
    %v1312 = vadd.f32 %v982, %v1311
    %v1313 = vpop.f32.mrb[0].mxu0
    %v1314 = vadd.f32 %v984, %v1313
    %v1315 = vpop.f32.mrb[0].mxu0
    %v1316 = vadd.f32 %v986, %v1315
    %1317 = vmatprep.mubr.bf16.mxu0 0
    %1318 = vmatmul.mubr.bf16.gmra.mrb[0].mxu0 %v1142
    %v1319 = vpop.f32.mrb[0].mxu0
    %v1320 = vadd.f32 %v990, %v1319
    %v1321 = vpop.f32.mrb[0].mxu0
    %v1322 = vadd.f32 %v992, %v1321
    %v1323 = vpop.f32.mrb[0].mxu0
    %v1324 = vadd.f32 %v994, %v1323
    %v1325 = vpop.f32.mrb[0].mxu0
    %v1326 = vadd.f32 %v996, %v1325
    %1327 = vmatprep.mubr.bf16.mxu0 0
    %1328 = vmatmul.mubr.bf16.gmra.mrb[0].mxu0 %v1145
    %v1329 = vpop.f32.mrb[0].mxu0
    %v1330 = vadd.f32 %v1000, %v1329
    %v1331 = vpop.f32.mrb[0].mxu0
    %v1332 = vadd.f32 %v1002, %v1331
    %v1333 = vpop.f32.mrb[0].mxu0
    %v1334 = vadd.f32 %v1004, %v1333
    %v1335 = vpop.f32.mrb[0].mxu0
    %v1336 = vadd.f32 %v1006, %v1335
    %1337 = vmatprep.mubr.bf16.mxu0 0
    %1338 = vmatmul.mubr.bf16.gmra.mrb[0].mxu0 %v1148
    %v1339 = vpop.f32.mrb[0].mxu0
    %v1340 = vadd.f32 %v1010, %v1339
    %v1341 = vpop.f32.mrb[0].mxu0
    %v1342 = vadd.f32 %v1012, %v1341
    %v1343 = vpop.f32.mrb[0].mxu0
    %v1344 = vadd.f32 %v1014, %v1343
    %v1345 = vpop.f32.mrb[0].mxu0
    %v1346 = vadd.f32 %v1016, %v1345
    %1347 = vmatprep.mubr.bf16.mxu0 0
    %1348 = vmatmul.mubr.bf16.gmra.mrb[0].mxu0 %v1151
    %v1349 = vpop.f32.mrb[0].mxu0
    %v1350 = vadd.f32 %v1020, %v1349
    %v1351 = vpop.f32.mrb[0].mxu0
    %v1352 = vadd.f32 %v1022, %v1351
    %v1353 = vpop.f32.mrb[0].mxu0
    %v1354 = vadd.f32 %v1024, %v1353
    %v1355 = vpop.f32.mrb[0].mxu0
    %v1356 = vadd.f32 %v1026, %v1355
    %1357 = vmatprep.mubr.bf16.mxu0 0
    %1358 = vmatmul.mubr.bf16.gmra.mrb[0].mxu0 %v1154
    %v1359 = vpop.f32.mrb[0].mxu0
    %v1360 = vadd.f32 %v1030, %v1359
    %v1361 = vpop.f32.mrb[0].mxu0
    %v1362 = vadd.f32 %v1032, %v1361
    %v1363 = vpop.f32.mrb[0].mxu0
    %v1364 = vadd.f32 %v1034, %v1363
    %v1365 = vpop.f32.mrb[0].mxu0
    %v1366 = vadd.f32 %v1036, %v1365
    %1367 = vmatprep.mubr.bf16.mxu0 0
    %1368 = vmatmul.mubr.bf16.gmra.mrb[0].mxu0 %v1157
    %v1369 = vpop.f32.mrb[0].mxu0
    %v1370 = vadd.f32 %v1040, %v1369
    %v1371 = vpop.f32.mrb[0].mxu0
    %v1372 = vadd.f32 %v1042, %v1371
    %v1373 = vpop.f32.mrb[0].mxu0
    %v1374 = vadd.f32 %v1044, %v1373
    %v1375 = vpop.f32.mrb[0].mxu0
    %v1376 = vadd.f32 %v1046, %v1375
    %1377 = vmatprep.mubr.bf16.mxu0 0
    %1378 = vmatmul.mubr.bf16.gmra.mrb[0].mxu0 %v1160
    %v1379 = vpop.f32.mrb[0].mxu0
    %v1380 = vadd.f32 %v1050, %v1379
    %v1381 = vpop.f32.mrb[0].mxu0
    %v1382 = vadd.f32 %v1052, %v1381
    %v1383 = vpop.f32.mrb[0].mxu0
    %v1384 = vadd.f32 %v1054, %v1383
    %v1385 = vpop.f32.mrb[0].mxu0
    %v1386 = vadd.f32 %v1056, %v1385
    %1387 = vdwg.mxu0
    %v1388 = vld [vmem:[#allocation13] sm:$0xf]
    %v1390 = vlaneseq
    %v1391 = vshrl.u32 %v1390, 7
    %v1392 = vsub.s32 0, %v1391
    %v1393 = vrot.slane %v1388, %v1392
    %v1394 = vlaneseq
    %v1395 = vshrl.u32 %v1394, 7
    %v1396 = vsub.s32 1, %v1395
    %v1397 = vrot.slane %v1388, %v1396
    %v1398 = vlaneseq
    %v1399 = vshrl.u32 %v1398, 7
    %v1400 = vsub.s32 2, %v1399
    %v1401 = vrot.slane %v1388, %v1400
    %v1402 = vlaneseq
    %v1403 = vshrl.u32 %v1402, 7
    %v1404 = vsub.s32 3, %v1403
    %v1405 = vrot.slane %v1388, %v1404
    %v1410 = vadd.f32 %v1197, %v1393
    %v1411 = vadd.f32 %v1199, %v1397
    %v1412 = vadd.f32 %v1310, %v1401
    %v1413 = vadd.f32 %v1312, %v1405
    %v1414 = vadd.f32 %v1201, %v1393
    %v1415 = vadd.f32 %v1203, %v1397
    %v1416 = vadd.f32 %v1314, %v1401
    %v1417 = vadd.f32 %v1316, %v1405
    %v1418 = vadd.f32 %v1207, %v1393
    %v1419 = vadd.f32 %v1209, %v1397
    %v1420 = vadd.f32 %v1320, %v1401
    %v1421 = vadd.f32 %v1322, %v1405
    %v1422 = vadd.f32 %v1211, %v1393
    %v1423 = vadd.f32 %v1213, %v1397
    %v1424 = vadd.f32 %v1324, %v1401
    %v1425 = vadd.f32 %v1326, %v1405
    %v1426 = vadd.f32 %v1217, %v1393
    %v1427 = vadd.f32 %v1219, %v1397
    %v1428 = vadd.f32 %v1330, %v1401
    %v1429 = vadd.f32 %v1332, %v1405
    %v1430 = vadd.f32 %v1221, %v1393
    %v1431 = vadd.f32 %v1223, %v1397
    %v1432 = vadd.f32 %v1334, %v1401
    %v1433 = vadd.f32 %v1336, %v1405
    %v1434 = vadd.f32 %v1227, %v1393
    %v1435 = vadd.f32 %v1229, %v1397
    %v1436 = vadd.f32 %v1340, %v1401
    %v1437 = vadd.f32 %v1342, %v1405
    %v1438 = vadd.f32 %v1231, %v1393
    %v1439 = vadd.f32 %v1233, %v1397
    %v1440 = vadd.f32 %v1344, %v1401
    %v1441 = vadd.f32 %v1346, %v1405
    %v1442 = vadd.f32 %v1237, %v1393
    %v1443 = vadd.f32 %v1239, %v1397
    %v1444 = vadd.f32 %v1350, %v1401
    %v1445 = vadd.f32 %v1352, %v1405
    %v1446 = vadd.f32 %v1241, %v1393
    %v1447 = vadd.f32 %v1243, %v1397
    %v1448 = vadd.f32 %v1354, %v1401
    %v1449 = vadd.f32 %v1356, %v1405
    %v1450 = vadd.f32 %v1247, %v1393
    %v1451 = vadd.f32 %v1249, %v1397
    %v1452 = vadd.f32 %v1360, %v1401
    %v1453 = vadd.f32 %v1362, %v1405
    %v1454 = vadd.f32 %v1251, %v1393
    %v1455 = vadd.f32 %v1253, %v1397
    %v1456 = vadd.f32 %v1364, %v1401
    %v1457 = vadd.f32 %v1366, %v1405
    %v1458 = vadd.f32 %v1257, %v1393
    %v1459 = vadd.f32 %v1259, %v1397
    %v1460 = vadd.f32 %v1370, %v1401
    %v1461 = vadd.f32 %v1372, %v1405
    %v1462 = vadd.f32 %v1261, %v1393
    %v1463 = vadd.f32 %v1263, %v1397
    %v1464 = vadd.f32 %v1374, %v1401
    %v1465 = vadd.f32 %v1376, %v1405
    %v1466 = vadd.f32 %v1267, %v1393
    %v1467 = vadd.f32 %v1269, %v1397
    %v1468 = vadd.f32 %v1380, %v1401
    %v1469 = vadd.f32 %v1382, %v1405
    %v1470 = vadd.f32 %v1271, %v1393
    %v1471 = vadd.f32 %v1273, %v1397
    %v1472 = vadd.f32 %v1384, %v1401
    %v1473 = vadd.f32 %v1386, %v1405
    %vm1474 = vcmp.ge.f32.partialorder %v1410, 0.0
    %vm1475 = vcmp.ge.f32.partialorder %v1411, 0.0
    %vm1476 = vcmp.ge.f32.partialorder %v1412, 0.0
    %vm1477 = vcmp.ge.f32.partialorder %v1413, 0.0
    %vm1478 = vcmp.ge.f32.partialorder %v1414, 0.0
    %vm1479 = vcmp.ge.f32.partialorder %v1415, 0.0
    %vm1480 = vcmp.ge.f32.partialorder %v1416, 0.0
    %vm1481 = vcmp.ge.f32.partialorder %v1417, 0.0
    %vm1482 = vcmp.ge.f32.partialorder %v1418, 0.0
    %vm1483 = vcmp.ge.f32.partialorder %v1419, 0.0
    %vm1484 = vcmp.ge.f32.partialorder %v1420, 0.0
    %vm1485 = vcmp.ge.f32.partialorder %v1421, 0.0
    %vm1486 = vcmp.ge.f32.partialorder %v1422, 0.0
    %vm1487 = vcmp.ge.f32.partialorder %v1423, 0.0
    %vm1488 = vcmp.ge.f32.partialorder %v1424, 0.0
    %vm1489 = vcmp.ge.f32.partialorder %v1425, 0.0
    %vm1490 = vcmp.ge.f32.partialorder %v1426, 0.0
    %vm1491 = vcmp.ge.f32.partialorder %v1427, 0.0
    %vm1492 = vcmp.ge.f32.partialorder %v1428, 0.0
    %vm1493 = vcmp.ge.f32.partialorder %v1429, 0.0
    %vm1494 = vcmp.ge.f32.partialorder %v1430, 0.0
    %vm1495 = vcmp.ge.f32.partialorder %v1431, 0.0
    %vm1496 = vcmp.ge.f32.partialorder %v1432, 0.0
    %vm1497 = vcmp.ge.f32.partialorder %v1433, 0.0
    %vm1498 = vcmp.ge.f32.partialorder %v1434, 0.0
    %vm1499 = vcmp.ge.f32.partialorder %v1435, 0.0
    %vm1500 = vcmp.ge.f32.partialorder %v1436, 0.0
    %vm1501 = vcmp.ge.f32.partialorder %v1437, 0.0
    %vm1502 = vcmp.ge.f32.partialorder %v1438, 0.0
    %vm1503 = vcmp.ge.f32.partialorder %v1439, 0.0
    %vm1504 = vcmp.ge.f32.partialorder %v1440, 0.0
    %vm1505 = vcmp.ge.f32.partialorder %v1441, 0.0
    %vm1506 = vcmp.ge.f32.partialorder %v1442, 0.0
    %vm1507 = vcmp.ge.f32.partialorder %v1443, 0.0
    %vm1508 = vcmp.ge.f32.partialorder %v1444, 0.0
    %vm1509 = vcmp.ge.f32.partialorder %v1445, 0.0
    %vm1510 = vcmp.ge.f32.partialorder %v1446, 0.0
    %vm1511 = vcmp.ge.f32.partialorder %v1447, 0.0
    %vm1512 = vcmp.ge.f32.partialorder %v1448, 0.0
    %vm1513 = vcmp.ge.f32.partialorder %v1449, 0.0
    %vm1514 = vcmp.ge.f32.partialorder %v1450, 0.0
    %vm1515 = vcmp.ge.f32.partialorder %v1451, 0.0
    %vm1516 = vcmp.ge.f32.partialorder %v1452, 0.0
    %vm1517 = vcmp.ge.f32.partialorder %v1453, 0.0
    %vm1518 = vcmp.ge.f32.partialorder %v1454, 0.0
    %vm1519 = vcmp.ge.f32.partialorder %v1455, 0.0
    %vm1520 = vcmp.ge.f32.partialorder %v1456, 0.0
    %vm1521 = vcmp.ge.f32.partialorder %v1457, 0.0
    %vm1522 = vcmp.ge.f32.partialorder %v1458, 0.0
    %vm1523 = vcmp.ge.f32.partialorder %v1459, 0.0
    %vm1524 = vcmp.ge.f32.partialorder %v1460, 0.0
    %vm1525 = vcmp.ge.f32.partialorder %v1461, 0.0
    %vm1526 = vcmp.ge.f32.partialorder %v1462, 0.0
    %vm1527 = vcmp.ge.f32.partialorder %v1463, 0.0
    %vm1528 = vcmp.ge.f32.partialorder %v1464, 0.0
    %vm1529 = vcmp.ge.f32.partialorder %v1465, 0.0
    %vm1530 = vcmp.ge.f32.partialorder %v1466, 0.0
    %vm1531 = vcmp.ge.f32.partialorder %v1467, 0.0
    %vm1532 = vcmp.ge.f32.partialorder %v1468, 0.0
    %vm1533 = vcmp.ge.f32.partialorder %v1469, 0.0
    %vm1534 = vcmp.ge.f32.partialorder %v1470, 0.0
    %vm1535 = vcmp.ge.f32.partialorder %v1471, 0.0
    %vm1536 = vcmp.ge.f32.partialorder %v1472, 0.0
    %vm1537 = vcmp.ge.f32.partialorder %v1473, 0.0
    %v1538 = vmul.f32 %v1410, 0.01
    %v1539 = vmul.f32 %v1411, 0.01
    %v1540 = vmul.f32 %v1412, 0.01
    %v1541 = vmul.f32 %v1413, 0.01
    %v1542 = vmul.f32 %v1414, 0.01
    %v1543 = vmul.f32 %v1415, 0.01
    %v1544 = vmul.f32 %v1416, 0.01
    %v1545 = vmul.f32 %v1417, 0.01
    %v1546 = vmul.f32 %v1418, 0.01
    %v1547 = vmul.f32 %v1419, 0.01
    %v1548 = vmul.f32 %v1420, 0.01
    %v1549 = vmul.f32 %v1421, 0.01
    %v1550 = vmul.f32 %v1422, 0.01
    %v1551 = vmul.f32 %v1423, 0.01
    %v1552 = vmul.f32 %v1424, 0.01
    %v1553 = vmul.f32 %v1425, 0.01
    %v1554 = vmul.f32 %v1426, 0.01
    %v1555 = vmul.f32 %v1427, 0.01
    %v1556 = vmul.f32 %v1428, 0.01
    %v1557 = vmul.f32 %v1429, 0.01
    %v1558 = vmul.f32 %v1430, 0.01
    %v1559 = vmul.f32 %v1431, 0.01
    %v1560 = vmul.f32 %v1432, 0.01
    %v1561 = vmul.f32 %v1433, 0.01
    %v1562 = vmul.f32 %v1434, 0.01
    %v1563 = vmul.f32 %v1435, 0.01
    %v1564 = vmul.f32 %v1436, 0.01
    %v1565 = vmul.f32 %v1437, 0.01
    %v1566 = vmul.f32 %v1438, 0.01
    %v1567 = vmul.f32 %v1439, 0.01
    %v1568 = vmul.f32 %v1440, 0.01
    %v1569 = vmul.f32 %v1441, 0.01
    %v1570 = vmul.f32 %v1442, 0.01
    %v1571 = vmul.f32 %v1443, 0.01
    %v1572 = vmul.f32 %v1444, 0.01
    %v1573 = vmul.f32 %v1445, 0.01
    %v1574 = vmul.f32 %v1446, 0.01
    %v1575 = vmul.f32 %v1447, 0.01
    %v1576 = vmul.f32 %v1448, 0.01
    %v1577 = vmul.f32 %v1449, 0.01
    %v1578 = vmul.f32 %v1450, 0.01
    %v1579 = vmul.f32 %v1451, 0.01
    %v1580 = vmul.f32 %v1452, 0.01
    %v1581 = vmul.f32 %v1453, 0.01
    %v1582 = vmul.f32 %v1454, 0.01
    %v1583 = vmul.f32 %v1455, 0.01
    %v1584 = vmul.f32 %v1456, 0.01
    %v1585 = vmul.f32 %v1457, 0.01
    %v1586 = vmul.f32 %v1458, 0.01
    %v1587 = vmul.f32 %v1459, 0.01
    %v1588 = vmul.f32 %v1460, 0.01
    %v1589 = vmul.f32 %v1461, 0.01
    %v1590 = vmul.f32 %v1462, 0.01
    %v1591 = vmul.f32 %v1463, 0.01
    %v1592 = vmul.f32 %v1464, 0.01
    %v1593 = vmul.f32 %v1465, 0.01
    %v1594 = vmul.f32 %v1466, 0.01
    %v1595 = vmul.f32 %v1467, 0.01
    %v1596 = vmul.f32 %v1468, 0.01
    %v1597 = vmul.f32 %v1469, 0.01
    %v1598 = vmul.f32 %v1470, 0.01
    %v1599 = vmul.f32 %v1471, 0.01
    %v1600 = vmul.f32 %v1472, 0.01
    %v1601 = vmul.f32 %v1473, 0.01
    %v1602 = vsel %vm1474, %v1410, %v1538
    %v1603 = vsel %vm1475, %v1411, %v1539
    %v1604 = vsel %vm1476, %v1412, %v1540
    %v1605 = vsel %vm1477, %v1413, %v1541
    %v1606 = vsel %vm1478, %v1414, %v1542
    %v1607 = vsel %vm1479, %v1415, %v1543
    %v1608 = vsel %vm1480, %v1416, %v1544
    %v1609 = vsel %vm1481, %v1417, %v1545
    %v1610 = vsel %vm1482, %v1418, %v1546
    %v1611 = vsel %vm1483, %v1419, %v1547
    %v1612 = vsel %vm1484, %v1420, %v1548
    %v1613 = vsel %vm1485, %v1421, %v1549
    %v1614 = vsel %vm1486, %v1422, %v1550
    %v1615 = vsel %vm1487, %v1423, %v1551
    %v1616 = vsel %vm1488, %v1424, %v1552
    %v1617 = vsel %vm1489, %v1425, %v1553
    %v1618 = vsel %vm1490, %v1426, %v1554
    %v1619 = vsel %vm1491, %v1427, %v1555
    %v1620 = vsel %vm1492, %v1428, %v1556
    %v1621 = vsel %vm1493, %v1429, %v1557
    %v1622 = vsel %vm1494, %v1430, %v1558
    %v1623 = vsel %vm1495, %v1431, %v1559
    %v1624 = vsel %vm1496, %v1432, %v1560
    %v1625 = vsel %vm1497, %v1433, %v1561
    %v1626 = vsel %vm1498, %v1434, %v1562
    %v1627 = vsel %vm1499, %v1435, %v1563
    %v1628 = vsel %vm1500, %v1436, %v1564
    %v1629 = vsel %vm1501, %v1437, %v1565
    %v1630 = vsel %vm1502, %v1438, %v1566
    %v1631 = vsel %vm1503, %v1439, %v1567
    %v1632 = vsel %vm1504, %v1440, %v1568
    %v1633 = vsel %vm1505, %v1441, %v1569
    %v1634 = vsel %vm1506, %v1442, %v1570
    %v1635 = vsel %vm1507, %v1443, %v1571
    %v1636 = vsel %vm1508, %v1444, %v1572
    %v1637 = vsel %vm1509, %v1445, %v1573
    %v1638 = vsel %vm1510, %v1446, %v1574
    %v1639 = vsel %vm1511, %v1447, %v1575
    %v1640 = vsel %vm1512, %v1448, %v1576
    %v1641 = vsel %vm1513, %v1449, %v1577
    %v1642 = vsel %vm1514, %v1450, %v1578
    %v1643 = vsel %vm1515, %v1451, %v1579
    %v1644 = vsel %vm1516, %v1452, %v1580
    %v1645 = vsel %vm1517, %v1453, %v1581
    %v1646 = vsel %vm1518, %v1454, %v1582
    %v1647 = vsel %vm1519, %v1455, %v1583
    %v1648 = vsel %vm1520, %v1456, %v1584
    %v1649 = vsel %vm1521, %v1457, %v1585
    %v1650 = vsel %vm1522, %v1458, %v1586
    %v1651 = vsel %vm1523, %v1459, %v1587
    %v1652 = vsel %vm1524, %v1460, %v1588
    %v1653 = vsel %vm1525, %v1461, %v1589
    %v1654 = vsel %vm1526, %v1462, %v1590
    %v1655 = vsel %vm1527, %v1463, %v1591
    %v1656 = vsel %vm1528, %v1464, %v1592
    %v1657 = vsel %vm1529, %v1465, %v1593
    %v1658 = vsel %vm1530, %v1466, %v1594
    %v1659 = vsel %vm1531, %v1467, %v1595
    %v1660 = vsel %vm1532, %v1468, %v1596
    %v1661 = vsel %vm1533, %v1469, %v1597
    %v1662 = vsel %vm1534, %v1470, %v1598
    %v1663 = vsel %vm1535, %v1471, %v1599
    %v1664 = vsel %vm1536, %v1472, %v1600
    %v1665 = vsel %vm1537, %v1473, %v1601
    %v1666 = vpack.c.bf16 %v1606, %v1602
    %v1667 = vpack.c.bf16 %v1607, %v1603
    %v1668 = vpack.c.bf16 %v1608, %v1604
    %v1669 = vpack.c.bf16 %v1609, %v1605
    %v1670 = vpack.c.bf16 %v1614, %v1610
    %v1671 = vpack.c.bf16 %v1615, %v1611
    %v1672 = vpack.c.bf16 %v1616, %v1612
    %v1673 = vpack.c.bf16 %v1617, %v1613
    %v1674 = vpack.c.bf16 %v1622, %v1618
    %v1675 = vpack.c.bf16 %v1623, %v1619
    %v1676 = vpack.c.bf16 %v1624, %v1620
    %v1677 = vpack.c.bf16 %v1625, %v1621
    %v1678 = vpack.c.bf16 %v1630, %v1626
    %v1679 = vpack.c.bf16 %v1631, %v1627
    %v1680 = vpack.c.bf16 %v1632, %v1628
    %v1681 = vpack.c.bf16 %v1633, %v1629
    %v1682 = vpack.c.bf16 %v1638, %v1634
    %v1683 = vpack.c.bf16 %v1639, %v1635
    %v1684 = vpack.c.bf16 %v1640, %v1636
    %v1685 = vpack.c.bf16 %v1641, %v1637
    %v1686 = vpack.c.bf16 %v1646, %v1642
    %v1687 = vpack.c.bf16 %v1647, %v1643
    %v1688 = vpack.c.bf16 %v1648, %v1644
    %v1689 = vpack.c.bf16 %v1649, %v1645
    %v1690 = vpack.c.bf16 %v1654, %v1650
    %v1691 = vpack.c.bf16 %v1655, %v1651
    %v1692 = vpack.c.bf16 %v1656, %v1652
    %v1693 = vpack.c.bf16 %v1657, %v1653
    %v1694 = vpack.c.bf16 %v1662, %v1658
    %v1695 = vpack.c.bf16 %v1663, %v1659
    %v1696 = vpack.c.bf16 %v1664, %v1660
    %v1697 = vpack.c.bf16 %v1665, %v1661
    %v1698 = vld [vmem:[#allocation14] sm:$0xff]
    %v1699 = vld [vmem:[#allocation14 + $0x8] sm:$0xff]
    %v1700 = vld [vmem:[#allocation14 + $0x10] sm:$0xff]
    %v1701 = vld [vmem:[#allocation14 + $0x18] sm:$0xff]
    %v1702 = vld [vmem:[#allocation14 + $0x20] sm:$0xff]
    %v1703 = vld [vmem:[#allocation14 + $0x28] sm:$0xff]
    %v1704 = vld [vmem:[#allocation14 + $0x30] sm:$0xff]
    %v1705 = vld [vmem:[#allocation14 + $0x38] sm:$0xff]
    %v1706 = vld [vmem:[#allocation14 + $0x40] sm:$0xff]
    %v1707 = vld [vmem:[#allocation14 + $0x48] sm:$0xff]
    %v1708 = vld [vmem:[#allocation14 + $0x50] sm:$0xff]
    %v1709 = vld [vmem:[#allocation14 + $0x58] sm:$0xff]
    %v1710 = vld [vmem:[#allocation14 + $0x60] sm:$0xff]
    %v1711 = vld [vmem:[#allocation14 + $0x68] sm:$0xff]
    %v1712 = vld [vmem:[#allocation14 + $0x70] sm:$0xff]
    %v1713 = vld [vmem:[#allocation14 + $0x78] sm:$0xff]
    %v1714 = vld [vmem:[#allocation14 + $0x80] sm:$0xff]
    %v1715 = vld [vmem:[#allocation14 + $0x88] sm:$0xff]
    %v1716 = vld [vmem:[#allocation14 + $0x90] sm:$0xff]
    %v1717 = vld [vmem:[#allocation14 + $0x98] sm:$0xff]
    %v1718 = vld [vmem:[#allocation14 + $0xa0] sm:$0xff]
    %v1719 = vld [vmem:[#allocation14 + $0xa8] sm:$0xff]
    %v1720 = vld [vmem:[#allocation14 + $0xb0] sm:$0xff]
    %v1721 = vld [vmem:[#allocation14 + $0xb8] sm:$0xff]
    %v1722 = vld [vmem:[#allocation14 + $0xc0] sm:$0xff]
    %v1723 = vld [vmem:[#allocation14 + $0xc8] sm:$0xff]
    %v1724 = vld [vmem:[#allocation14 + $0xd0] sm:$0xff]
    %v1725 = vld [vmem:[#allocation14 + $0xd8] sm:$0xff]
    %v1726 = vld [vmem:[#allocation14 + $0xe0] sm:$0xff]
    %v1727 = vld [vmem:[#allocation14 + $0xe8] sm:$0xff]
    %v1728 = vld [vmem:[#allocation14 + $0xf0] sm:$0xff]
    %v1729 = vld [vmem:[#allocation14 + $0xf8] sm:$0xff]
    %v1730 = vld [vmem:[#allocation14 + $0x100] sm:$0xff]
    %v1731 = vld [vmem:[#allocation14 + $0x108] sm:$0xff]
    %v1732 = vld [vmem:[#allocation14 + $0x110] sm:$0xff]
    %v1733 = vld [vmem:[#allocation14 + $0x118] sm:$0xff]
    %v1734 = vld [vmem:[#allocation14 + $0x120] sm:$0xff]
    %v1735 = vld [vmem:[#allocation14 + $0x128] sm:$0xff]
    %v1736 = vld [vmem:[#allocation14 + $0x130] sm:$0xff]
    %v1737 = vld [vmem:[#allocation14 + $0x138] sm:$0xff]
    %v1738 = vld [vmem:[#allocation14 + $0x140] sm:$0xff]
    %v1739 = vld [vmem:[#allocation14 + $0x148] sm:$0xff]
    %v1740 = vld [vmem:[#allocation14 + $0x150] sm:$0xff]
    %v1741 = vld [vmem:[#allocation14 + $0x158] sm:$0xff]
    %v1742 = vld [vmem:[#allocation14 + $0x160] sm:$0xff]
    %v1743 = vld [vmem:[#allocation14 + $0x168] sm:$0xff]
    %v1744 = vld [vmem:[#allocation14 + $0x170] sm:$0xff]
    %v1745 = vld [vmem:[#allocation14 + $0x178] sm:$0xff]
    %v1746 = vld [vmem:[#allocation14 + $0x180] sm:$0xff]
    %v1747 = vld [vmem:[#allocation14 + $0x188] sm:$0xff]
    %v1748 = vld [vmem:[#allocation14 + $0x190] sm:$0xff]
    %v1749 = vld [vmem:[#allocation14 + $0x198] sm:$0xff]
    %v1750 = vld [vmem:[#allocation14 + $0x1a0] sm:$0xff]
    %v1751 = vld [vmem:[#allocation14 + $0x1a8] sm:$0xff]
    %v1752 = vld [vmem:[#allocation14 + $0x1b0] sm:$0xff]
    %v1753 = vld [vmem:[#allocation14 + $0x1b8] sm:$0xff]
    %v1754 = vld [vmem:[#allocation14 + $0x1c0] sm:$0xff]
    %v1755 = vld [vmem:[#allocation14 + $0x1c8] sm:$0xff]
    %v1756 = vld [vmem:[#allocation14 + $0x1d0] sm:$0xff]
    %v1757 = vld [vmem:[#allocation14 + $0x1d8] sm:$0xff]
    %v1758 = vld [vmem:[#allocation14 + $0x1e0] sm:$0xff]
    %v1759 = vld [vmem:[#allocation14 + $0x1e8] sm:$0xff]
    %v1760 = vld [vmem:[#allocation14 + $0x1f0] sm:$0xff]
    %v1761 = vld [vmem:[#allocation14 + $0x1f8] sm:$0xff]
    %v1762 = vld [vmem:[#allocation16] sm:$0x3]
    %v1764 = vlaneseq
    %v1765 = vshrl.u32 %v1764, 7
    %v1766 = vsub.s32 0, %v1765
    %v1767 = vrot.slane %v1762, %v1766
    %v1768 = vlaneseq
    %v1769 = vshrl.u32 %v1768, 7
    %v1770 = vsub.s32 1, %v1769
    %v1771 = vrot.slane %v1762, %v1770
    %v1838 = vunpack.c.l.b16 %v1698
    %v1839 = vunpack.c.h.b16 %v1698
    %v1840 = vunpack.c.l.b16 %v1699
    %v1841 = vunpack.c.h.b16 %v1699
    %v1842 = vunpack.c.l.b16 %v1700
    %v1843 = vunpack.c.h.b16 %v1700
    %v1844 = vunpack.c.l.b16 %v1701
    %v1845 = vunpack.c.h.b16 %v1701
    %v1846 = vunpack.c.l.b16 %v1702
    %v1847 = vunpack.c.h.b16 %v1702
    %v1848 = vunpack.c.l.b16 %v1703
    %v1849 = vunpack.c.h.b16 %v1703
    %v1850 = vunpack.c.l.b16 %v1704
    %v1851 = vunpack.c.h.b16 %v1704
    %v1852 = vunpack.c.l.b16 %v1705
    %v1853 = vunpack.c.h.b16 %v1705
    %v1854 = vunpack.c.l.b16 %v1706
    %v1855 = vunpack.c.h.b16 %v1706
    %v1856 = vunpack.c.l.b16 %v1707
    %v1857 = vunpack.c.h.b16 %v1707
    %v1858 = vunpack.c.l.b16 %v1708
    %v1859 = vunpack.c.h.b16 %v1708
    %v1860 = vunpack.c.l.b16 %v1709
    %v1861 = vunpack.c.h.b16 %v1709
    %v1862 = vunpack.c.l.b16 %v1710
    %v1863 = vunpack.c.h.b16 %v1710
    %v1864 = vunpack.c.l.b16 %v1711
    %v1865 = vunpack.c.h.b16 %v1711
    %v1866 = vunpack.c.l.b16 %v1712
    %v1867 = vunpack.c.h.b16 %v1712
    %v1868 = vunpack.c.l.b16 %v1713
    %v1869 = vunpack.c.h.b16 %v1713
    %v1870 = vunpack.c.l.b16 %v1714
    %v1871 = vunpack.c.h.b16 %v1714
    %v1872 = vunpack.c.l.b16 %v1715
    %v1873 = vunpack.c.h.b16 %v1715
    %v1874 = vunpack.c.l.b16 %v1716
    %v1875 = vunpack.c.h.b16 %v1716
    %v1876 = vunpack.c.l.b16 %v1717
    %v1877 = vunpack.c.h.b16 %v1717
    %v1878 = vunpack.c.l.b16 %v1718
    %v1879 = vunpack.c.h.b16 %v1718
    %v1880 = vunpack.c.l.b16 %v1719
    %v1881 = vunpack.c.h.b16 %v1719
    %v1882 = vunpack.c.l.b16 %v1720
    %v1883 = vunpack.c.h.b16 %v1720
    %v1884 = vunpack.c.l.b16 %v1721
    %v1885 = vunpack.c.h.b16 %v1721
    %v1886 = vunpack.c.l.b16 %v1722
    %v1887 = vunpack.c.h.b16 %v1722
    %v1888 = vunpack.c.l.b16 %v1723
    %v1889 = vunpack.c.h.b16 %v1723
    %v1890 = vunpack.c.l.b16 %v1724
    %v1891 = vunpack.c.h.b16 %v1724
    %v1892 = vunpack.c.l.b16 %v1725
    %v1893 = vunpack.c.h.b16 %v1725
    %v1894 = vunpack.c.l.b16 %v1726
    %v1895 = vunpack.c.h.b16 %v1726
    %v1896 = vunpack.c.l.b16 %v1727
    %v1897 = vunpack.c.h.b16 %v1727
    %v1898 = vunpack.c.l.b16 %v1728
    %v1899 = vunpack.c.h.b16 %v1728
    %v1900 = vunpack.c.l.b16 %v1729
    %v1901 = vunpack.c.h.b16 %v1729
    %v1902 = vunpack.c.l.b16 %v1730
    %v1903 = vunpack.c.h.b16 %v1730
    %v1904 = vunpack.c.l.b16 %v1731
    %v1905 = vunpack.c.h.b16 %v1731
    %v1906 = vunpack.c.l.b16 %v1732
    %v1907 = vunpack.c.h.b16 %v1732
    %v1908 = vunpack.c.l.b16 %v1733
    %v1909 = vunpack.c.h.b16 %v1733
    %v1910 = vunpack.c.l.b16 %v1734
    %v1911 = vunpack.c.h.b16 %v1734
    %v1912 = vunpack.c.l.b16 %v1735
    %v1913 = vunpack.c.h.b16 %v1735
    %v1914 = vunpack.c.l.b16 %v1736
    %v1915 = vunpack.c.h.b16 %v1736
    %v1916 = vunpack.c.l.b16 %v1737
    %v1917 = vunpack.c.h.b16 %v1737
    %v1918 = vunpack.c.l.b16 %v1738
    %v1919 = vunpack.c.h.b16 %v1738
    %v1920 = vunpack.c.l.b16 %v1739
    %v1921 = vunpack.c.h.b16 %v1739
    %v1922 = vunpack.c.l.b16 %v1740
    %v1923 = vunpack.c.h.b16 %v1740
    %v1924 = vunpack.c.l.b16 %v1741
    %v1925 = vunpack.c.h.b16 %v1741
    %v1926 = vunpack.c.l.b16 %v1742
    %v1927 = vunpack.c.h.b16 %v1742
    %v1928 = vunpack.c.l.b16 %v1743
    %v1929 = vunpack.c.h.b16 %v1743
    %v1930 = vunpack.c.l.b16 %v1744
    %v1931 = vunpack.c.h.b16 %v1744
    %v1932 = vunpack.c.l.b16 %v1745
    %v1933 = vunpack.c.h.b16 %v1745
    %v1934 = vunpack.c.l.b16 %v1746
    %v1935 = vunpack.c.h.b16 %v1746
    %v1936 = vunpack.c.l.b16 %v1747
    %v1937 = vunpack.c.h.b16 %v1747
    %v1938 = vunpack.c.l.b16 %v1748
    %v1939 = vunpack.c.h.b16 %v1748
    %v1940 = vunpack.c.l.b16 %v1749
    %v1941 = vunpack.c.h.b16 %v1749
    %v1942 = vunpack.c.l.b16 %v1750
    %v1943 = vunpack.c.h.b16 %v1750
    %v1944 = vunpack.c.l.b16 %v1751
    %v1945 = vunpack.c.h.b16 %v1751
    %v1946 = vunpack.c.l.b16 %v1752
    %v1947 = vunpack.c.h.b16 %v1752
    %v1948 = vunpack.c.l.b16 %v1753
    %v1949 = vunpack.c.h.b16 %v1753
    %v1950 = vunpack.c.l.b16 %v1754
    %v1951 = vunpack.c.h.b16 %v1754
    %v1952 = vunpack.c.l.b16 %v1755
    %v1953 = vunpack.c.h.b16 %v1755
    %v1954 = vunpack.c.l.b16 %v1756
    %v1955 = vunpack.c.h.b16 %v1756
    %v1956 = vunpack.c.l.b16 %v1757
    %v1957 = vunpack.c.h.b16 %v1757
    %v1958 = vunpack.c.l.b16 %v1758
    %v1959 = vunpack.c.h.b16 %v1758
    %v1960 = vunpack.c.l.b16 %v1759
    %v1961 = vunpack.c.h.b16 %v1759
    %v1962 = vunpack.c.l.b16 %v1760
    %v1963 = vunpack.c.h.b16 %v1760
    %v1964 = vunpack.c.l.b16 %v1761
    %v1965 = vunpack.c.h.b16 %v1761
    %v1966 = vpack.c.b16 %v1840, %v1838
    %v1967 = vpack.c.b16 %v1841, %v1839
    %v1968 = vpack.c.b16 %v1844, %v1842
    %v1969 = vpack.c.b16 %v1845, %v1843
    %v1970 = vpack.c.b16 %v1848, %v1846
    %v1971 = vpack.c.b16 %v1849, %v1847
    %v1972 = vpack.c.b16 %v1852, %v1850
    %v1973 = vpack.c.b16 %v1853, %v1851
    %v1974 = vpack.c.b16 %v1856, %v1854
    %v1975 = vpack.c.b16 %v1857, %v1855
    %v1976 = vpack.c.b16 %v1860, %v1858
    %v1977 = vpack.c.b16 %v1861, %v1859
    %v1978 = vpack.c.b16 %v1864, %v1862
    %v1979 = vpack.c.b16 %v1865, %v1863
    %v1980 = vpack.c.b16 %v1868, %v1866
    %v1981 = vpack.c.b16 %v1869, %v1867
    %v1982 = vpack.c.b16 %v1872, %v1870
    %v1983 = vpack.c.b16 %v1873, %v1871
    %v1984 = vpack.c.b16 %v1876, %v1874
    %v1985 = vpack.c.b16 %v1877, %v1875
    %v1986 = vpack.c.b16 %v1880, %v1878
    %v1987 = vpack.c.b16 %v1881, %v1879
    %v1988 = vpack.c.b16 %v1884, %v1882
    %v1989 = vpack.c.b16 %v1885, %v1883
    %v1990 = vpack.c.b16 %v1888, %v1886
    %v1991 = vpack.c.b16 %v1889, %v1887
    %v1992 = vpack.c.b16 %v1892, %v1890
    %v1993 = vpack.c.b16 %v1893, %v1891
    %v1994 = vpack.c.b16 %v1896, %v1894
    %v1995 = vpack.c.b16 %v1897, %v1895
    %v1996 = vpack.c.b16 %v1900, %v1898
    %v1997 = vpack.c.b16 %v1901, %v1899
    %v1998 = vpack.c.b16 %v1904, %v1902
    %v1999 = vpack.c.b16 %v1905, %v1903
    %v2000 = vpack.c.b16 %v1908, %v1906
    %v2001 = vpack.c.b16 %v1909, %v1907
    %v2002 = vpack.c.b16 %v1912, %v1910
    %v2003 = vpack.c.b16 %v1913, %v1911
    %v2004 = vpack.c.b16 %v1916, %v1914
    %v2005 = vpack.c.b16 %v1917, %v1915
    %v2006 = vpack.c.b16 %v1920, %v1918
    %v2007 = vpack.c.b16 %v1921, %v1919
    %v2008 = vpack.c.b16 %v1924, %v1922
    %v2009 = vpack.c.b16 %v1925, %v1923
    %v2010 = vpack.c.b16 %v1928, %v1926
    %v2011 = vpack.c.b16 %v1929, %v1927
    %v2012 = vpack.c.b16 %v1932, %v1930
    %v2013 = vpack.c.b16 %v1933, %v1931
    %v2014 = vpack.c.b16 %v1936, %v1934
    %v2015 = vpack.c.b16 %v1937, %v1935
    %v2016 = vpack.c.b16 %v1940, %v1938
    %v2017 = vpack.c.b16 %v1941, %v1939
    %v2018 = vpack.c.b16 %v1944, %v1942
    %v2019 = vpack.c.b16 %v1945, %v1943
    %v2020 = vpack.c.b16 %v1948, %v1946
    %v2021 = vpack.c.b16 %v1949, %v1947
    %v2022 = vpack.c.b16 %v1952, %v1950
    %v2023 = vpack.c.b16 %v1953, %v1951
    %v2024 = vpack.c.b16 %v1956, %v1954
    %v2025 = vpack.c.b16 %v1957, %v1955
    %v2026 = vpack.c.b16 %v1960, %v1958
    %v2027 = vpack.c.b16 %v1961, %v1959
    %v2028 = vpack.c.b16 %v1964, %v1962
    %v2029 = vpack.c.b16 %v1965, %v1963
    %2094 = vmatprep.subr.bf16.mxu0 %v1967
    %2095 = vmatpush1.bf16.msra.mxu0 %v1966
    %2096 = vmatprep.subr.bf16.mxu0 %v1969
    %2097 = vmatpush1.bf16.msra.mxu0 %v1968
    %2098 = vmatprep.subr.bf16.mxu0 %v1971
    %2099 = vmatpush1.bf16.msra.mxu0 %v1970
    %2100 = vmatprep.subr.bf16.mxu0 %v1973
    %2101 = vmatpush1.bf16.msra.mxu0 %v1972
    %2102 = vmatprep.subr.bf16.mxu0 %v1975
    %2103 = vmatpush1.bf16.msra.mxu0 %v1974
    %2104 = vmatprep.subr.bf16.mxu0 %v1977
    %2105 = vmatpush1.bf16.msra.mxu0 %v1976
    %2106 = vmatprep.subr.bf16.mxu0 %v1979
    %2107 = vmatpush1.bf16.msra.mxu0 %v1978
    %2108 = vmatprep.subr.bf16.mxu0 %v1981
    %2109 = vmatpush1.bf16.msra.mxu0 %v1980
    %2110 = vmatprep.subr.bf16.mxu0 %v1983
    %2111 = vmatpush1.bf16.msra.mxu0 %v1982
    %2112 = vmatprep.subr.bf16.mxu0 %v1985
    %2113 = vmatpush1.bf16.msra.mxu0 %v1984
    %2114 = vmatprep.subr.bf16.mxu0 %v1987
    %2115 = vmatpush1.bf16.msra.mxu0 %v1986
    %2116 = vmatprep.subr.bf16.mxu0 %v1989
    %2117 = vmatpush1.bf16.msra.mxu0 %v1988
    %2118 = vmatprep.subr.bf16.mxu0 %v1991
    %2119 = vmatpush1.bf16.msra.mxu0 %v1990
    %2120 = vmatprep.subr.bf16.mxu0 %v1993
    %2121 = vmatpush1.bf16.msra.mxu0 %v1992
    %2122 = vmatprep.subr.bf16.mxu0 %v1995
    %2123 = vmatpush1.bf16.msra.mxu0 %v1994
    %2124 = vmatprep.subr.bf16.mxu0 %v1997
    %2125 = vmatpush1.bf16.msra.mxu0 %v1996
    %2126 = vmatprep.mubr.bf16.mxu0 %v1667
    %2127 = vmatmul.mubr.bf16.gmra.mrb[0].mxu0 %v1666
    %v2128 = vpop.f32.mrb[0].mxu0
    %v2129 = vadd.f32 %v1767, %v2128
    %v2130 = vpop.f32.mrb[0].mxu0
    %v2131 = vadd.f32 %v1771, %v2130
    %v2132 = vpop.f32.mrb[0].mxu0
    %v2133 = vadd.f32 %v1767, %v2132
    %v2134 = vpop.f32.mrb[0].mxu0
    %v2135 = vadd.f32 %v1771, %v2134
    %2136 = vmatprep.mubr.bf16.mxu0 %v1671
    %2137 = vmatmul.mubr.bf16.gmra.mrb[0].mxu0 %v1670
    %v2138 = vpop.f32.mrb[0].mxu0
    %v2139 = vadd.f32 %v1767, %v2138
    %v2140 = vpop.f32.mrb[0].mxu0
    %v2141 = vadd.f32 %v1771, %v2140
    %v2142 = vpop.f32.mrb[0].mxu0
    %v2143 = vadd.f32 %v1767, %v2142
    %v2144 = vpop.f32.mrb[0].mxu0
    %v2145 = vadd.f32 %v1771, %v2144
    %2146 = vmatprep.mubr.bf16.mxu0 %v1675
    %2147 = vmatmul.mubr.bf16.gmra.mrb[0].mxu0 %v1674
    %v2148 = vpop.f32.mrb[0].mxu0
    %v2149 = vadd.f32 %v1767, %v2148
    %v2150 = vpop.f32.mrb[0].mxu0
    %v2151 = vadd.f32 %v1771, %v2150
    %v2152 = vpop.f32.mrb[0].mxu0
    %v2153 = vadd.f32 %v1767, %v2152
    %v2154 = vpop.f32.mrb[0].mxu0
    %v2155 = vadd.f32 %v1771, %v2154
    %2156 = vmatprep.mubr.bf16.mxu0 %v1679
    %2157 = vmatmul.mubr.bf16.gmra.mrb[0].mxu0 %v1678
    %v2158 = vpop.f32.mrb[0].mxu0
    %v2159 = vadd.f32 %v1767, %v2158
    %v2160 = vpop.f32.mrb[0].mxu0
    %v2161 = vadd.f32 %v1771, %v2160
    %v2162 = vpop.f32.mrb[0].mxu0
    %v2163 = vadd.f32 %v1767, %v2162
    %v2164 = vpop.f32.mrb[0].mxu0
    %v2165 = vadd.f32 %v1771, %v2164
    %2166 = vmatprep.mubr.bf16.mxu0 %v1683
    %2167 = vmatmul.mubr.bf16.gmra.mrb[0].mxu0 %v1682
    %v2168 = vpop.f32.mrb[0].mxu0
    %v2169 = vadd.f32 %v1767, %v2168
    %v2170 = vpop.f32.mrb[0].mxu0
    %v2171 = vadd.f32 %v1771, %v2170
    %v2172 = vpop.f32.mrb[0].mxu0
    %v2173 = vadd.f32 %v1767, %v2172
    %v2174 = vpop.f32.mrb[0].mxu0
    %v2175 = vadd.f32 %v1771, %v2174
    %2176 = vmatprep.mubr.bf16.mxu0 %v1687
    %2177 = vmatmul.mubr.bf16.gmra.mrb[0].mxu0 %v1686
    %v2178 = vpop.f32.mrb[0].mxu0
    %v2179 = vadd.f32 %v1767, %v2178
    %v2180 = vpop.f32.mrb[0].mxu0
    %v2181 = vadd.f32 %v1771, %v2180
    %v2182 = vpop.f32.mrb[0].mxu0
    %v2183 = vadd.f32 %v1767, %v2182
    %v2184 = vpop.f32.mrb[0].mxu0
    %v2185 = vadd.f32 %v1771, %v2184
    %2186 = vmatprep.mubr.bf16.mxu0 %v1691
    %2187 = vmatmul.mubr.bf16.gmra.mrb[0].mxu0 %v1690
    %v2188 = vpop.f32.mrb[0].mxu0
    %v2189 = vadd.f32 %v1767, %v2188
    %v2190 = vpop.f32.mrb[0].mxu0
    %v2191 = vadd.f32 %v1771, %v2190
    %v2192 = vpop.f32.mrb[0].mxu0
    %v2193 = vadd.f32 %v1767, %v2192
    %v2194 = vpop.f32.mrb[0].mxu0
    %v2195 = vadd.f32 %v1771, %v2194
    %2196 = vmatprep.mubr.bf16.mxu0 %v1695
    %2197 = vmatmul.mubr.bf16.gmra.mrb[0].mxu0 %v1694
    %v2198 = vpop.f32.mrb[0].mxu0
    %v2199 = vadd.f32 %v1767, %v2198
    %v2200 = vpop.f32.mrb[0].mxu0
    %v2201 = vadd.f32 %v1771, %v2200
    %v2202 = vpop.f32.mrb[0].mxu0
    %v2203 = vadd.f32 %v1767, %v2202
    %v2204 = vpop.f32.mrb[0].mxu0
    %v2205 = vadd.f32 %v1771, %v2204
    %2206 = vdwg.mxu0
    %2207 = vmatprep.subr.bf16.mxu0 %v1999
    %2208 = vmatpush1.bf16.msra.mxu0 %v1998
    %2209 = vmatprep.subr.bf16.mxu0 %v2001
    %2210 = vmatpush1.bf16.msra.mxu0 %v2000
    %2211 = vmatprep.subr.bf16.mxu0 %v2003
    %2212 = vmatpush1.bf16.msra.mxu0 %v2002
    %2213 = vmatprep.subr.bf16.mxu0 %v2005
    %2214 = vmatpush1.bf16.msra.mxu0 %v2004
    %2215 = vmatprep.subr.bf16.mxu0 %v2007
    %2216 = vmatpush1.bf16.msra.mxu0 %v2006
    %2217 = vmatprep.subr.bf16.mxu0 %v2009
    %2218 = vmatpush1.bf16.msra.mxu0 %v2008
    %2219 = vmatprep.subr.bf16.mxu0 %v2011
    %2220 = vmatpush1.bf16.msra.mxu0 %v2010
    %2221 = vmatprep.subr.bf16.mxu0 %v2013
    %2222 = vmatpush1.bf16.msra.mxu0 %v2012
    %2223 = vmatprep.subr.bf16.mxu0 %v2015
    %2224 = vmatpush1.bf16.msra.mxu0 %v2014
    %2225 = vmatprep.subr.bf16.mxu0 %v2017
    %2226 = vmatpush1.bf16.msra.mxu0 %v2016
    %2227 = vmatprep.subr.bf16.mxu0 %v2019
    %2228 = vmatpush1.bf16.msra.mxu0 %v2018
    %2229 = vmatprep.subr.bf16.mxu0 %v2021
    %2230 = vmatpush1.bf16.msra.mxu0 %v2020
    %2231 = vmatprep.subr.bf16.mxu0 %v2023
    %2232 = vmatpush1.bf16.msra.mxu0 %v2022
    %2233 = vmatprep.subr.bf16.mxu0 %v2025
    %2234 = vmatpush1.bf16.msra.mxu0 %v2024
    %2235 = vmatprep.subr.bf16.mxu0 %v2027
    %2236 = vmatpush1.bf16.msra.mxu0 %v2026
    %2237 = vmatprep.subr.bf16.mxu0 %v2029
    %2238 = vmatpush1.bf16.msra.mxu0 %v2028
    %2239 = vmatprep.mubr.bf16.mxu0 %v1669
    %2240 = vmatmul.mubr.bf16.gmra.mrb[0].mxu0 %v1668
    %v2241 = vpop.f32.mrb[0].mxu0
    %v2242 = vadd.f32 %v2129, %v2241
    %v2243 = vpop.f32.mrb[0].mxu0
    %v2244 = vadd.f32 %v2131, %v2243
    %v2245 = vpop.f32.mrb[0].mxu0
    %v2246 = vadd.f32 %v2133, %v2245
    %v2247 = vpop.f32.mrb[0].mxu0
    %v2248 = vadd.f32 %v2135, %v2247
    %2249 = vmatprep.mubr.bf16.mxu0 %v1673
    %2250 = vmatmul.mubr.bf16.gmra.mrb[0].mxu0 %v1672
    %v2251 = vpop.f32.mrb[0].mxu0
    %v2252 = vadd.f32 %v2139, %v2251
    %v2253 = vpop.f32.mrb[0].mxu0
    %v2254 = vadd.f32 %v2141, %v2253
    %v2255 = vpop.f32.mrb[0].mxu0
    %v2256 = vadd.f32 %v2143, %v2255
    %v2257 = vpop.f32.mrb[0].mxu0
    %v2258 = vadd.f32 %v2145, %v2257
    %2259 = vmatprep.mubr.bf16.mxu0 %v1677
    %2260 = vmatmul.mubr.bf16.gmra.mrb[0].mxu0 %v1676
    %v2261 = vpop.f32.mrb[0].mxu0
    %v2262 = vadd.f32 %v2149, %v2261
    %v2263 = vpop.f32.mrb[0].mxu0
    %v2264 = vadd.f32 %v2151, %v2263
    %v2265 = vpop.f32.mrb[0].mxu0
    %v2266 = vadd.f32 %v2153, %v2265
    %v2267 = vpop.f32.mrb[0].mxu0
    %v2268 = vadd.f32 %v2155, %v2267
    %2269 = vmatprep.mubr.bf16.mxu0 %v1681
    %2270 = vmatmul.mubr.bf16.gmra.mrb[0].mxu0 %v1680
    %v2271 = vpop.f32.mrb[0].mxu0
    %v2272 = vadd.f32 %v2159, %v2271
    %v2273 = vpop.f32.mrb[0].mxu0
    %v2274 = vadd.f32 %v2161, %v2273
    %v2275 = vpop.f32.mrb[0].mxu0
    %v2276 = vadd.f32 %v2163, %v2275
    %v2277 = vpop.f32.mrb[0].mxu0
    %v2278 = vadd.f32 %v2165, %v2277
    %2279 = vmatprep.mubr.bf16.mxu0 %v1685
    %2280 = vmatmul.mubr.bf16.gmra.mrb[0].mxu0 %v1684
    %v2281 = vpop.f32.mrb[0].mxu0
    %v2282 = vadd.f32 %v2169, %v2281
    %v2283 = vpop.f32.mrb[0].mxu0
    %v2284 = vadd.f32 %v2171, %v2283
    %v2285 = vpop.f32.mrb[0].mxu0
    %v2286 = vadd.f32 %v2173, %v2285
    %v2287 = vpop.f32.mrb[0].mxu0
    %v2288 = vadd.f32 %v2175, %v2287
    %2289 = vmatprep.mubr.bf16.mxu0 %v1689
    %2290 = vmatmul.mubr.bf16.gmra.mrb[0].mxu0 %v1688
    %v2291 = vpop.f32.mrb[0].mxu0
    %v2292 = vadd.f32 %v2179, %v2291
    %v2293 = vpop.f32.mrb[0].mxu0
    %v2294 = vadd.f32 %v2181, %v2293
    %v2295 = vpop.f32.mrb[0].mxu0
    %v2296 = vadd.f32 %v2183, %v2295
    %v2297 = vpop.f32.mrb[0].mxu0
    %v2298 = vadd.f32 %v2185, %v2297
    %2299 = vmatprep.mubr.bf16.mxu0 %v1693
    %2300 = vmatmul.mubr.bf16.gmra.mrb[0].mxu0 %v1692
    %v2301 = vpop.f32.mrb[0].mxu0
    %v2302 = vadd.f32 %v2189, %v2301
    %v2303 = vpop.f32.mrb[0].mxu0
    %v2304 = vadd.f32 %v2191, %v2303
    %v2305 = vpop.f32.mrb[0].mxu0
    %v2306 = vadd.f32 %v2193, %v2305
    %v2307 = vpop.f32.mrb[0].mxu0
    %v2308 = vadd.f32 %v2195, %v2307
    %2309 = vmatprep.mubr.bf16.mxu0 %v1697
    %2310 = vmatmul.mubr.bf16.gmra.mrb[0].mxu0 %v1696
    %v2311 = vpop.f32.mrb[0].mxu0
    %v2312 = vadd.f32 %v2199, %v2311
    %v2313 = vpop.f32.mrb[0].mxu0
    %v2314 = vadd.f32 %v2201, %v2313
    %v2315 = vpop.f32.mrb[0].mxu0
    %v2316 = vadd.f32 %v2203, %v2315
    %v2317 = vpop.f32.mrb[0].mxu0
    %v2318 = vadd.f32 %v2205, %v2317
    %2319 = vdwg.mxu0
    %vm2320 = vcmp.ge.f32.partialorder %v2242, 0.0
    %vm2321 = vcmp.ge.f32.partialorder %v2244, 0.0
    %vm2322 = vcmp.ge.f32.partialorder %v2246, 0.0
    %vm2323 = vcmp.ge.f32.partialorder %v2248, 0.0
    %vm2324 = vcmp.ge.f32.partialorder %v2252, 0.0
    %vm2325 = vcmp.ge.f32.partialorder %v2254, 0.0
    %vm2326 = vcmp.ge.f32.partialorder %v2256, 0.0
    %vm2327 = vcmp.ge.f32.partialorder %v2258, 0.0
    %vm2328 = vcmp.ge.f32.partialorder %v2262, 0.0
    %vm2329 = vcmp.ge.f32.partialorder %v2264, 0.0
    %vm2330 = vcmp.ge.f32.partialorder %v2266, 0.0
    %vm2331 = vcmp.ge.f32.partialorder %v2268, 0.0
    %vm2332 = vcmp.ge.f32.partialorder %v2272, 0.0
    %vm2333 = vcmp.ge.f32.partialorder %v2274, 0.0
    %vm2334 = vcmp.ge.f32.partialorder %v2276, 0.0
    %vm2335 = vcmp.ge.f32.partialorder %v2278, 0.0
    %vm2336 = vcmp.ge.f32.partialorder %v2282, 0.0
    %vm2337 = vcmp.ge.f32.partialorder %v2284, 0.0
    %vm2338 = vcmp.ge.f32.partialorder %v2286, 0.0
    %vm2339 = vcmp.ge.f32.partialorder %v2288, 0.0
    %vm2340 = vcmp.ge.f32.partialorder %v2292, 0.0
    %vm2341 = vcmp.ge.f32.partialorder %v2294, 0.0
    %vm2342 = vcmp.ge.f32.partialorder %v2296, 0.0
    %vm2343 = vcmp.ge.f32.partialorder %v2298, 0.0
    %vm2344 = vcmp.ge.f32.partialorder %v2302, 0.0
    %vm2345 = vcmp.ge.f32.partialorder %v2304, 0.0
    %vm2346 = vcmp.ge.f32.partialorder %v2306, 0.0
    %vm2347 = vcmp.ge.f32.partialorder %v2308, 0.0
    %vm2348 = vcmp.ge.f32.partialorder %v2312, 0.0
    %vm2349 = vcmp.ge.f32.partialorder %v2314, 0.0
    %vm2350 = vcmp.ge.f32.partialorder %v2316, 0.0
    %vm2351 = vcmp.ge.f32.partialorder %v2318, 0.0
    %v2352 = vmul.f32 %v2242, 0.01
    %v2353 = vmul.f32 %v2244, 0.01
    %v2354 = vmul.f32 %v2246, 0.01
    %v2355 = vmul.f32 %v2248, 0.01
    %v2356 = vmul.f32 %v2252, 0.01
    %v2357 = vmul.f32 %v2254, 0.01
    %v2358 = vmul.f32 %v2256, 0.01
    %v2359 = vmul.f32 %v2258, 0.01
    %v2360 = vmul.f32 %v2262, 0.01
    %v2361 = vmul.f32 %v2264, 0.01
    %v2362 = vmul.f32 %v2266, 0.01
    %v2363 = vmul.f32 %v2268, 0.01
    %v2364 = vmul.f32 %v2272, 0.01
    %v2365 = vmul.f32 %v2274, 0.01
    %v2366 = vmul.f32 %v2276, 0.01
    %v2367 = vmul.f32 %v2278, 0.01
    %v2368 = vmul.f32 %v2282, 0.01
    %v2369 = vmul.f32 %v2284, 0.01
    %v2370 = vmul.f32 %v2286, 0.01
    %v2371 = vmul.f32 %v2288, 0.01
    %v2372 = vmul.f32 %v2292, 0.01
    %v2373 = vmul.f32 %v2294, 0.01
    %v2374 = vmul.f32 %v2296, 0.01
    %v2375 = vmul.f32 %v2298, 0.01
    %v2376 = vmul.f32 %v2302, 0.01
    %v2377 = vmul.f32 %v2304, 0.01
    %v2378 = vmul.f32 %v2306, 0.01
    %v2379 = vmul.f32 %v2308, 0.01
    %v2380 = vmul.f32 %v2312, 0.01
    %v2381 = vmul.f32 %v2314, 0.01
    %v2382 = vmul.f32 %v2316, 0.01
    %v2383 = vmul.f32 %v2318, 0.01
    %v2384 = vsel %vm2320, %v2242, %v2352
    %v2385 = vsel %vm2321, %v2244, %v2353
    %v2386 = vsel %vm2322, %v2246, %v2354
    %v2387 = vsel %vm2323, %v2248, %v2355
    %v2388 = vsel %vm2324, %v2252, %v2356
    %v2389 = vsel %vm2325, %v2254, %v2357
    %v2390 = vsel %vm2326, %v2256, %v2358
    %v2391 = vsel %vm2327, %v2258, %v2359
    %v2392 = vsel %vm2328, %v2262, %v2360
    %v2393 = vsel %vm2329, %v2264, %v2361
    %v2394 = vsel %vm2330, %v2266, %v2362
    %v2395 = vsel %vm2331, %v2268, %v2363
    %v2396 = vsel %vm2332, %v2272, %v2364
    %v2397 = vsel %vm2333, %v2274, %v2365
    %v2398 = vsel %vm2334, %v2276, %v2366
    %v2399 = vsel %vm2335, %v2278, %v2367
    %v2400 = vsel %vm2336, %v2282, %v2368
    %v2401 = vsel %vm2337, %v2284, %v2369
    %v2402 = vsel %vm2338, %v2286, %v2370
    %v2403 = vsel %vm2339, %v2288, %v2371
    %v2404 = vsel %vm2340, %v2292, %v2372
    %v2405 = vsel %vm2341, %v2294, %v2373
    %v2406 = vsel %vm2342, %v2296, %v2374
    %v2407 = vsel %vm2343, %v2298, %v2375
    %v2408 = vsel %vm2344, %v2302, %v2376
    %v2409 = vsel %vm2345, %v2304, %v2377
    %v2410 = vsel %vm2346, %v2306, %v2378
    %v2411 = vsel %vm2347, %v2308, %v2379
    %v2412 = vsel %vm2348, %v2312, %v2380
    %v2413 = vsel %vm2349, %v2314, %v2381
    %v2414 = vsel %vm2350, %v2316, %v2382
    %v2415 = vsel %vm2351, %v2318, %v2383
    %v2416 = vpack.c.bf16 %v2386, %v2384
    %v2417 = vpack.c.bf16 %v2387, %v2385
    %v2418 = vpack.c.bf16 %v2390, %v2388
    %v2419 = vpack.c.bf16 %v2391, %v2389
    %v2420 = vpack.c.bf16 %v2394, %v2392
    %v2421 = vpack.c.bf16 %v2395, %v2393
    %v2422 = vpack.c.bf16 %v2398, %v2396
    %v2423 = vpack.c.bf16 %v2399, %v2397
    %v2424 = vpack.c.bf16 %v2402, %v2400
    %v2425 = vpack.c.bf16 %v2403, %v2401
    %v2426 = vpack.c.bf16 %v2406, %v2404
    %v2427 = vpack.c.bf16 %v2407, %v2405
    %v2428 = vpack.c.bf16 %v2410, %v2408
    %v2429 = vpack.c.bf16 %v2411, %v2409
    %v2430 = vpack.c.bf16 %v2414, %v2412
    %v2431 = vpack.c.bf16 %v2415, %v2413
    %v2432 = vld [vmem:[#allocation17] sm:$0xf]
    %v2433 = vld [vmem:[#allocation17 + $0x4] sm:$0xf]
    %v2434 = vld [vmem:[#allocation17 + $0x8] sm:$0xf]
    %v2435 = vld [vmem:[#allocation17 + $0xc] sm:$0xf]
    %v2436 = vld [vmem:[#allocation17 + $0x10] sm:$0xf]
    %v2437 = vld [vmem:[#allocation17 + $0x14] sm:$0xf]
    %v2438 = vld [vmem:[#allocation17 + $0x18] sm:$0xf]
    %v2439 = vld [vmem:[#allocation17 + $0x1c] sm:$0xf]
    %v2440 = vld [vmem:[#allocation17 + $0x20] sm:$0xf]
    %v2441 = vld [vmem:[#allocation17 + $0x24] sm:$0xf]
    %v2442 = vld [vmem:[#allocation17 + $0x28] sm:$0xf]
    %v2443 = vld [vmem:[#allocation17 + $0x2c] sm:$0xf]
    %v2444 = vld [vmem:[#allocation17 + $0x30] sm:$0xf]
    %v2445 = vld [vmem:[#allocation17 + $0x34] sm:$0xf]
    %v2446 = vld [vmem:[#allocation17 + $0x38] sm:$0xf]
    %v2447 = vld [vmem:[#allocation17 + $0x3c] sm:$0xf]
    %v2448 = vld [vmem:[#allocation17 + $0x40] sm:$0xf]
    %v2449 = vld [vmem:[#allocation17 + $0x44] sm:$0xf]
    %v2450 = vld [vmem:[#allocation17 + $0x48] sm:$0xf]
    %v2451 = vld [vmem:[#allocation17 + $0x4c] sm:$0xf]
    %v2452 = vld [vmem:[#allocation17 + $0x50] sm:$0xf]
    %v2453 = vld [vmem:[#allocation17 + $0x54] sm:$0xf]
    %v2454 = vld [vmem:[#allocation17 + $0x58] sm:$0xf]
    %v2455 = vld [vmem:[#allocation17 + $0x5c] sm:$0xf]
    %v2456 = vld [vmem:[#allocation17 + $0x60] sm:$0xf]
    %v2457 = vld [vmem:[#allocation17 + $0x64] sm:$0xf]
    %v2458 = vld [vmem:[#allocation17 + $0x68] sm:$0xf]
    %v2459 = vld [vmem:[#allocation17 + $0x6c] sm:$0xf]
    %v2460 = vld [vmem:[#allocation17 + $0x70] sm:$0xf]
    %v2461 = vld [vmem:[#allocation17 + $0x74] sm:$0xf]
    %v2462 = vld [vmem:[#allocation17 + $0x78] sm:$0xf]
    %v2463 = vld [vmem:[#allocation17 + $0x7c] sm:$0xf]
    %v2464 = vld [vmem:[#allocation19] sm:$0x1]
    %v2466 = vlaneseq
    %v2467 = vshrl.u32 %v2466, 7
    %v2468 = vsub.s32 0, %v2467
    %v2469 = vrot.slane %v2464, %v2468
    %v2503 = vunpack.c.l.b16 %v2432
    %v2504 = vunpack.c.l.b16 %v2433
    %v2505 = vunpack.c.l.b16 %v2434
    %v2506 = vunpack.c.l.b16 %v2435
    %v2507 = vunpack.c.l.b16 %v2436
    %v2508 = vunpack.c.l.b16 %v2437
    %v2509 = vunpack.c.l.b16 %v2438
    %v2510 = vunpack.c.l.b16 %v2439
    %v2511 = vunpack.c.l.b16 %v2440
    %v2512 = vunpack.c.l.b16 %v2441
    %v2513 = vunpack.c.l.b16 %v2442
    %v2514 = vunpack.c.l.b16 %v2443
    %v2515 = vunpack.c.l.b16 %v2444
    %v2516 = vunpack.c.l.b16 %v2445
    %v2517 = vunpack.c.l.b16 %v2446
    %v2518 = vunpack.c.l.b16 %v2447
    %v2519 = vunpack.c.l.b16 %v2448
    %v2520 = vunpack.c.l.b16 %v2449
    %v2521 = vunpack.c.l.b16 %v2450
    %v2522 = vunpack.c.l.b16 %v2451
    %v2523 = vunpack.c.l.b16 %v2452
    %v2524 = vunpack.c.l.b16 %v2453
    %v2525 = vunpack.c.l.b16 %v2454
    %v2526 = vunpack.c.l.b16 %v2455
    %v2527 = vunpack.c.l.b16 %v2456
    %v2528 = vunpack.c.l.b16 %v2457
    %v2529 = vunpack.c.l.b16 %v2458
    %v2530 = vunpack.c.l.b16 %v2459
    %v2531 = vunpack.c.l.b16 %v2460
    %v2532 = vunpack.c.l.b16 %v2461
    %v2533 = vunpack.c.l.b16 %v2462
    %v2534 = vunpack.c.l.b16 %v2463
    %v2535 = vpack.c.b16 %v2504, %v2503
    %v2536 = vpack.c.b16 %v2506, %v2505
    %v2537 = vpack.c.b16 %v2508, %v2507
    %v2538 = vpack.c.b16 %v2510, %v2509
    %v2539 = vpack.c.b16 %v2512, %v2511
    %v2540 = vpack.c.b16 %v2514, %v2513
    %v2541 = vpack.c.b16 %v2516, %v2515
    %v2542 = vpack.c.b16 %v2518, %v2517
    %v2543 = vpack.c.b16 %v2520, %v2519
    %v2544 = vpack.c.b16 %v2522, %v2521
    %v2545 = vpack.c.b16 %v2524, %v2523
    %v2546 = vpack.c.b16 %v2526, %v2525
    %v2547 = vpack.c.b16 %v2528, %v2527
    %v2548 = vpack.c.b16 %v2530, %v2529
    %v2549 = vpack.c.b16 %v2532, %v2531
    %v2550 = vpack.c.b16 %v2534, %v2533
    %2567 = vmatprep.subr.bf16.mxu0 0
    %2568 = vmatpush1.bf16.msra.mxu0 %v2535
    %2569 = vmatprep.subr.bf16.mxu0 0
    %2570 = vmatpush1.bf16.msra.mxu0 %v2536
    %2571 = vmatprep.subr.bf16.mxu0 0
    %2572 = vmatpush1.bf16.msra.mxu0 %v2537
    %2573 = vmatprep.subr.bf16.mxu0 0
    %2574 = vmatpush1.bf16.msra.mxu0 %v2538
    %2575 = vmatprep.subr.bf16.mxu0 0
    %2576 = vmatpush1.bf16.msra.mxu0 %v2539
    %2577 = vmatprep.subr.bf16.mxu0 0
    %2578 = vmatpush1.bf16.msra.mxu0 %v2540
    %2579 = vmatprep.subr.bf16.mxu0 0
    %2580 = vmatpush1.bf16.msra.mxu0 %v2541
    %2581 = vmatprep.subr.bf16.mxu0 0
    %2582 = vmatpush1.bf16.msra.mxu0 %v2542
    %2583 = vmatprep.subr.bf16.mxu0 0
    %2584 = vmatpush1.bf16.msra.mxu0 %v2543
    %2585 = vmatprep.subr.bf16.mxu0 0
    %2586 = vmatpush1.bf16.msra.mxu0 %v2544
    %2587 = vmatprep.subr.bf16.mxu0 0
    %2588 = vmatpush1.bf16.msra.mxu0 %v2545
    %2589 = vmatprep.subr.bf16.mxu0 0
    %2590 = vmatpush1.bf16.msra.mxu0 %v2546
    %2591 = vmatprep.subr.bf16.mxu0 0
    %2592 = vmatpush1.bf16.msra.mxu0 %v2547
    %2593 = vmatprep.subr.bf16.mxu0 0
    %2594 = vmatpush1.bf16.msra.mxu0 %v2548
    %2595 = vmatprep.subr.bf16.mxu0 0
    %2596 = vmatpush1.bf16.msra.mxu0 %v2549
    %2597 = vmatprep.subr.bf16.mxu0 0
    %2598 = vmatpush1.bf16.msra.mxu0 %v2550
    %2599 = vmatprep.mubr.bf16.mxu0 %v2417
    %2600 = vmatmul.mubr.bf16.gmra.mrb[0].mxu0 %v2416
    %v2601 = vpop.f32.mrb[0].mxu0
    %v2602 = vadd.f32 %v2469, %v2601
    %v2603 = vpop.f32.mrb[0].mxu0
    %v2604 = vpop.f32.mrb[0].mxu0
    %v2605 = vadd.f32 %v2469, %v2604
    %v2606 = vpop.f32.mrb[0].mxu0
    %2607 = vmatprep.mubr.bf16.mxu0 %v2419
    %2608 = vmatmul.mubr.bf16.gmra.mrb[0].mxu0 %v2418
    %v2609 = vpop.f32.mrb[0].mxu0
    %v2610 = vadd.f32 %v2469, %v2609
    %v2611 = vpop.f32.mrb[0].mxu0
    %v2612 = vpop.f32.mrb[0].mxu0
    %v2613 = vadd.f32 %v2469, %v2612
    %v2614 = vpop.f32.mrb[0].mxu0
    %2615 = vmatprep.mubr.bf16.mxu0 %v2421
    %2616 = vmatmul.mubr.bf16.gmra.mrb[0].mxu0 %v2420
    %v2617 = vpop.f32.mrb[0].mxu0
    %v2618 = vadd.f32 %v2469, %v2617
    %v2619 = vpop.f32.mrb[0].mxu0
    %v2620 = vpop.f32.mrb[0].mxu0
    %v2621 = vadd.f32 %v2469, %v2620
    %v2622 = vpop.f32.mrb[0].mxu0
    %2623 = vmatprep.mubr.bf16.mxu0 %v2423
    %2624 = vmatmul.mubr.bf16.gmra.mrb[0].mxu0 %v2422
    %v2625 = vpop.f32.mrb[0].mxu0
    %v2626 = vadd.f32 %v2469, %v2625
    %v2627 = vpop.f32.mrb[0].mxu0
    %v2628 = vpop.f32.mrb[0].mxu0
    %v2629 = vadd.f32 %v2469, %v2628
    %v2630 = vpop.f32.mrb[0].mxu0
    %2631 = vmatprep.mubr.bf16.mxu0 %v2425
    %2632 = vmatmul.mubr.bf16.gmra.mrb[0].mxu0 %v2424
    %v2633 = vpop.f32.mrb[0].mxu0
    %v2634 = vadd.f32 %v2469, %v2633
    %v2635 = vpop.f32.mrb[0].mxu0
    %v2636 = vpop.f32.mrb[0].mxu0
    %v2637 = vadd.f32 %v2469, %v2636
    %v2638 = vpop.f32.mrb[0].mxu0
    %2639 = vmatprep.mubr.bf16.mxu0 %v2427
    %2640 = vmatmul.mubr.bf16.gmra.mrb[0].mxu0 %v2426
    %v2641 = vpop.f32.mrb[0].mxu0
    %v2642 = vadd.f32 %v2469, %v2641
    %v2643 = vpop.f32.mrb[0].mxu0
    %v2644 = vpop.f32.mrb[0].mxu0
    %v2645 = vadd.f32 %v2469, %v2644
    %v2646 = vpop.f32.mrb[0].mxu0
    %2647 = vmatprep.mubr.bf16.mxu0 %v2429
    %2648 = vmatmul.mubr.bf16.gmra.mrb[0].mxu0 %v2428
    %v2649 = vpop.f32.mrb[0].mxu0
    %v2650 = vadd.f32 %v2469, %v2649
    %v2651 = vpop.f32.mrb[0].mxu0
    %v2652 = vpop.f32.mrb[0].mxu0
    %v2653 = vadd.f32 %v2469, %v2652
    %v2654 = vpop.f32.mrb[0].mxu0
    %2655 = vmatprep.mubr.bf16.mxu0 %v2431
    %2656 = vmatmul.mubr.bf16.gmra.mrb[0].mxu0 %v2430
    %v2657 = vpop.f32.mrb[0].mxu0
    %v2658 = vadd.f32 %v2469, %v2657
    %v2659 = vpop.f32.mrb[0].mxu0
    %v2660 = vpop.f32.mrb[0].mxu0
    %v2661 = vadd.f32 %v2469, %v2660
    %v2662 = vpop.f32.mrb[0].mxu0
    %2663 = vdwg.mxu0
    %2664 = vst.msk [vmem:[#allocation20] sm:$0xff] %vm807, %v2602
    %2665 = vst.msk [vmem:[#allocation20 + $0x8] sm:$0xff] %vm807, %v2605
    %2666 = vst.msk [vmem:[#allocation20 + $0x10] sm:$0xff] %vm807, %v2610
    %2667 = vst.msk [vmem:[#allocation20 + $0x18] sm:$0xff] %vm807, %v2613
    %2668 = vst.msk [vmem:[#allocation20 + $0x20] sm:$0xff] %vm807, %v2618
    %2669 = vst.msk [vmem:[#allocation20 + $0x28] sm:$0xff] %vm807, %v2621
    %2670 = vst.msk [vmem:[#allocation20 + $0x30] sm:$0xff] %vm807, %v2626
    %2671 = vst.msk [vmem:[#allocation20 + $0x38] sm:$0xff] %vm807, %v2629
    %2672 = vst.msk [vmem:[#allocation20 + $0x40] sm:$0xff] %vm807, %v2634
    %2673 = vst.msk [vmem:[#allocation20 + $0x48] sm:$0xff] %vm807, %v2637
    %2674 = vst.msk [vmem:[#allocation20 + $0x50] sm:$0xff] %vm807, %v2642
    %2675 = vst.msk [vmem:[#allocation20 + $0x58] sm:$0xff] %vm807, %v2645
    %2676 = vst.msk [vmem:[#allocation20 + $0x60] sm:$0xff] %vm807, %v2650
    %2677 = vst.msk [vmem:[#allocation20 + $0x68] sm:$0xff] %vm807, %v2653
    %2678 = vst.msk [vmem:[#allocation20 + $0x70] sm:$0xff] %vm807, %v2658
    %2679 = vst.msk [vmem:[#allocation20 + $0x78] sm:$0xff] %vm807, %v2661
    // Predicated region
    $region90: #{model_forward.19} parent=1 // pred_check
      _
    $region91: #{model_forward.19} parent=1 // pred_check_branch
      %2681 = sbr.rel (0) target = $region93
    $region92: #{model_forward.19} parent=1 // pred_region
      %s2683 = ssub.s32 2048, 2048
      %2684 = vsyncadd [#allocation4], %s2683
      %s2685 = sshll.u32 [#allocation20], 4
      %s2686 = int_to_ptr.vmem [resolvable:$true] %s2685
      %2691 = dma.vmem_to_hbm [thread:$0]  %s2686, 2048, %s11, [#allocation4], 128, 128, 8
    $region93: #{model_forward.19} parent=1 // pred_fallthru
      _
    // Predicated region
    $region94: #{model_forward.19} parent=1 // pred_check
      _
    $region95: #{model_forward.19} parent=1 // pred_check_branch
      %2693 = sbr.rel (0) target = $region97
    $region96: #{model_forward.19} parent=1 // pred_region
      %2694 = dma.done [#allocation4], 2048
    $region97: #{model_forward.19} parent=1 // pred_fallthru
      _
    %2695 = vsyncpa [#allocation3], 1
    %2696 = vsyncpa [#allocation6], 1
    %2697 = vsyncpa [#allocation9], 1
    %2698 = vsyncpa [#allocation12], 1
    %2699 = vsyncpa [#allocation15], 1
    %2700 = vsyncpa [#allocation18], 1
    %2701 = vsyncpa [#allocation4], 1

</llo_original>
